<compile_context>
chip_gen: v7x
topology: tpu7x:2x2x1
jax: 0.10.0
libtpu: 0.0.40
codegen_flags: <defaults>
</compile_context>

<pallas_src>
import jax
import jax.numpy as jnp
from jax import lax
from jax.experimental import pallas as pl
from jax.experimental.pallas import tpu as pltpu

LRELU_SLOPE = 0.2
BN_EPS = 1e-5


def _leaky(x):
    return jnp.maximum(x, LRELU_SLOPE * x)


# ----------------------------- fused Pallas kernel --------------------------

def _make_kernel(bt):
    """Fused conv1+lrelu -> conv2+BN+lrelu -> linear+sigmoid for `bt` images."""

    def kernel(p1_ref, mask_ref, w1_ref, b1_ref, w2_ref, sh_ref, wl_ref, cb_ref,
               o_ref, h1s_ref, slab_ref):
        # ---- Conv2d(1,64,3,s2,p1) + bias + LeakyReLU over the WHOLE tile ----
        # one (bt*256, 9) @ (9, 64) bf16 MXU matmul instead of bt tiny ones.
        p1 = p1_ref[...].reshape(bt * 256, 9)                        # bf16
        h1 = jnp.dot(p1, w1_ref[...], preferred_element_type=jnp.float32)
        h1 = h1 + b1_ref[...]
        h1 = _leaky(h1)                                              # (bt*256,64)
        # zero the conv2 zero-padding cells (they'd otherwise hold leaky(b1))
        h1 = h1.reshape(bt, 256, 64) * mask_ref[...]

        # ---- scatter the 4 (row,col)-parity groups into the padded conv1
        #      activation scratch (layout: group g occupies rows g*72..g*72+63
        #      per image).  Only row 64 of a group is ever read past the
        #      written region (the s0=9 tap), so zero just that row.
        zrow = jnp.zeros((bt, 1, 64), jnp.float32)
        for g in range(4):
            h1s_ref[:, g * 72:g * 72 + 64, :] = h1[:, g * 64:(g + 1) * 64, :]
            h1s_ref[:, g * 72 + 64:g * 72 + 65, :] = zrow

        # ---- Conv2d(64,128,3,s2,p1): K-concatenate the nine taps into a
        #      single (bt*56, 576) bf16 slab, then ONE MXU matmul. ----
        for ki in range(3):
            for kj in range(3):
                k = ki * 3 + kj
                g = (1 - ki % 2) * 2 + (1 - kj % 2)
                s0 = (ki // 2) * 8 + (kj // 2)
                piece = h1s_ref[:, g * 72 + s0:g * 72 + s0 + 56, :]  # (bt,56,64) f32
                slab_ref[:, k * 64:(k + 1) * 64] = (
                    piece.reshape(bt * 56, 64).astype(jnp.bfloat16))
        acc = jnp.dot(slab_ref[...], w2_ref[...],
                      preferred_element_type=jnp.float32)            # (bt*56,128)

        # ---- ZeroPad2d handled in cb; BN scale folded into w2; shift carries
        #      conv2 bias + BN offset.  LeakyReLU (Dropout = identity). ----
        h2 = _leaky(acc + sh_ref[...])                               # (bt*56,128)

        # ---- Flatten + Linear(8192,1) + Sigmoid, batched over the tile ----
        prod = h2.reshape(bt, 56, 128) * wl_ref[...]                 # (bt,56,128)
        tot = jnp.sum(jnp.sum(prod, axis=2), axis=1, keepdims=True)  # (bt,1)
        tot = tot + cb_ref[0]
        z = jnp.exp(-jnp.abs(tot))                 # numerically stable sigmoid
        pos = 1.0 / (1.0 + z)
        o_ref[...] = jnp.where(tot >= 0, pos, 1.0 - pos)

    return kernel


# ------------------------------ parameters ----------------------------------

def init_params(key):
    ks = jax.random.split(key, 9)
    # conv weights in HWIO layout [kh, kw, C_in, C_out]
    w1 = jax.random.normal(ks[0], (3, 3, 1, 64), jnp.float32) * 0.10
    b1 = jax.random.normal(ks[1], (64,), jnp.float32) * 0.10
    w2 = jax.random.normal(ks[2], (3, 3, 64, 128), jnp.float32) * 0.05
    b2 = jax.random.normal(ks[3], (128,), jnp.float32) * 0.05
    gamma = 1.0 + 0.1 * jax.random.normal(ks[4], (128,), jnp.float32)
    beta = 0.1 * jax.random.normal(ks[5], (128,), jnp.float32)
    rmean = 0.1 * jax.random.normal(ks[6], (128,), jnp.float32)
    rvar = jnp.abs(jax.random.normal(ks[7], (128,), jnp.float32)) + 0.5
    w_lin = jax.random.normal(ks[8], (128 * 8 * 8, 1), jnp.float32) * 0.01
    b_lin = jnp.zeros((1,), jnp.float32)
    return dict(w1=w1, b1=b1, w2=w2, b2=b2, gamma=gamma, beta=beta,
                rmean=rmean, rvar=rvar, w_lin=w_lin, b_lin=b_lin)


def prepare_params(p):
    """One-time packing of PyTorch-style parameters into kernel layout."""
    scale = p["gamma"] / jnp.sqrt(p["rvar"] + BN_EPS)              # (128,)
    bn_shift = p["beta"] - p["rmean"] * scale                      # BN of a literal 0
    shift2 = p["b2"] * scale + bn_shift                            # conv2 bias folded in

    # conv2 weight: (3,3,64,128) -> (576,128), tap-major rows, BN scale folded in.
    w2cat = (p["w2"].reshape(9 * 64, 128) * scale[None, :]).astype(jnp.bfloat16)

    # Linear weight: PyTorch flatten order is (C, H, W) over the padded 8x8 map.
    wl_full = p["w_lin"].reshape(128, 8, 8)                        # [c, h, w]
    wl_hwc = jnp.transpose(wl_full, (1, 2, 0))                     # [h, w, c]
    wl = wl_hwc[:7].at[:, 7, :].set(0.0).reshape(56, 128)          # rows = h*8 + w

    # Constant contribution of the ZeroPad2d((0,1,0,1)) cells (h==7 or w==7):
    # those cells equal leaky(BN(0)) per channel, independent of the input.
    pad_val = _leaky(bn_shift)                                     # (128,)
    hw_pad = jnp.zeros((8, 8), jnp.float32).at[7, :].set(1.0).at[:, 7].set(1.0)
    pad_contrib = jnp.sum(wl_full * pad_val[:, None, None] * hw_pad[None])
    cbias = (p["b_lin"][0] + pad_contrib).reshape(1)               # scalar (SMEM)

    # Mask that zeroes the conv2 zero-padding cells of the parity-grouped
    # conv1 output (they would otherwise contain leaky(b1) from zero patches).
    idx = jnp.arange(256)
    g = idx // 64
    rem = idx % 64
    r_half, c_half = rem // 8, rem % 8
    t = jnp.where(g < 2, 1, 0)
    s = jnp.where(g % 2 == 0, 1, 0)
    is_pad = (((t == 1) & (r_half == 7)) | ((t == 0) & (r_half == 0)) |
              ((s == 1) & (c_half == 7)) | ((s == 0) & (c_half == 0)))
    h1_mask = jnp.where(is_pad, 0.0, 1.0).astype(jnp.float32).reshape(256, 1)

    return dict(w1m=p["w1"].reshape(9, 64).astype(jnp.bfloat16),
                b1r=p["b1"].reshape(1, 64),
                w2cat=w2cat,
                bn_shift2=shift2.reshape(1, 128),
                wl=wl, cbias=cbias, h1_mask=h1_mask)


# ------------------------------ forward pass --------------------------------

def _pick_batch_tile(B):
    # Prefer big tiles (amortize the ~0.35us per-grid-step overhead), keep the
    # output block a multiple of 8 rows, and leave >=2 grid steps when possible
    # so v7x megacore can split the batch across both TensorCores.
    for bt in (32, 24, 16, 8):
        if B % bt == 0 and B // bt >= 2:
            return bt
    for bt in (32, 24, 16, 8):
        if B % bt == 0:
            return bt
    return B


def _const_spec(shape):
    zeros = (0,) * len(shape)
    return pl.BlockSpec(shape, lambda i, z=zeros: z)


def discriminator_forward(img_nchw, prep, batch_tile=None):
    B = img_nchw.shape[0]
    bt = _pick_batch_tile(B) if batch_tile is None else batch_tile
    assert B % bt == 0

    x = img_nchw[:, 0, :, :].astype(jnp.float32)                 # (B, 28, 28)
    xpad = jnp.pad(x, ((0, 0), (1, 1), (1, 1)))                  # (B, 30, 30)

    # conv1 im2col keeping spatial structure:
    #   patches[b, i, j, ki*3+kj] = xpad[b, 2i+ki, 2j+kj]
    cols = []
    for ki in range(3):
        for kj in range(3):
            cols.append(xpad[:, ki:ki + 27:2, kj:kj + 27:2])
    patches = jnp.stack(cols, axis=-1)                           # (B, 14, 14, 9)

    # Re-order rows into the 4 (row, col)-parity groups of the zero-padded
    # 16x16 conv1 output map, so the kernel can write conv1's output with
    # contiguous stores and read conv2's taps with contiguous slices.
    q = jnp.pad(patches, ((0, 0), (1, 1), (1, 1), (0, 0)))       # (B, 16, 16, 9)
    groups = [q[:, 1::2, 1::2, :], q[:, 1::2, 0::2, :],
              q[:, 0::2, 1::2, :], q[:, 0::2, 0::2, :]]
    p1 = jnp.concatenate([grp.reshape(B, 64, 9) for grp in groups],
                         axis=1).astype(jnp.bfloat16)            # (B, 256, 9)

    out = pl.pallas_call(
        _make_kernel(bt),
        grid=(B // bt,),
        in_specs=[
            pl.BlockSpec((bt, 256, 9), lambda i: (i, 0, 0)),
            _const_spec((256, 1)),
            _const_spec((9, 64)),
            _const_spec((1, 64)),
            _const_spec((576, 128)),
            _const_spec((1, 128)),
            _const_spec((56, 128)),
            pl.BlockSpec(memory_space=pltpu.MemorySpace.SMEM),
        ],
        out_specs=pl.BlockSpec((bt, 1), lambda i: (i, 0)),
        out_shape=jax.ShapeDtypeStruct((B, 1), jnp.float32),
        scratch_shapes=[
            pltpu.VMEM((bt, 4 * 72, 64), jnp.float32),     # parity-grouped conv1 act
            pltpu.VMEM((bt * 56, 576), jnp.bfloat16),      # K-concatenated conv2 slab
        ],
        compiler_params=pltpu.CompilerParams(
            dimension_semantics=("parallel",),
            vmem_limit_bytes=32 * 1024 * 1024),
    )(p1, prep["h1_mask"], prep["w1m"], prep["b1r"], prep["w2cat"],
      prep["bn_shift2"], prep["wl"], prep["cbias"])
    return out


# ------------------------- pure-JAX reference (check) ------------------------

def reference_forward(img_nchw, p):
    x = jnp.transpose(img_nchw, (0, 2, 3, 1)).astype(jnp.float32)   # NHWC
    dn = ("NHWC", "HWIO", "NHWC")
    h1 = lax.conv_general_dilated(x, p["w1"], (2, 2), ((1, 1), (1, 1)),
                                  dimension_numbers=dn,
                                  precision=lax.Precision.HIGHEST) + p["b1"]
    h1 = _leaky(h1)
    h2 = lax.conv_general_dilated(h1, p["w2"], (2, 2), ((1, 1), (1, 1)),
                                  dimension_numbers=dn,
                                  precision=lax.Precision.HIGHEST) + p["b2"]
    h2p = jnp.pad(h2, ((0, 0), (0, 1), (0, 1), (0, 0)))   # ZeroPad2d((0,1,0,1))
    scale = p["gamma"] / jnp.sqrt(p["rvar"] + BN_EPS)
    shift = p["beta"] - p["rmean"] * scale
    h2p = _leaky(h2p * scale + shift)
    flat = jnp.transpose(h2p, (0, 3, 1, 2)).reshape(x.shape[0], -1)
    z = jnp.dot(flat, p["w_lin"], precision=lax.Precision.HIGHEST) + p["b_lin"]
    return jax.nn.sigmoid(z)


# ---------------------------------- main -------------------------------------

if __name__ == "__main__":
    key = jax.random.PRNGKey(0)
    k_img, k_params = jax.random.split(key)
    B = 16
    # Linear(128*8*8, 1) implies a 28x28 single-channel input (MNIST-like).
    img = jax.random.normal(k_img, (B, 1, 28, 28), jnp.float32)
    params = init_params(k_params)
    prep = prepare_params(params)          # one-time parameter packing

    out = jax.jit(discriminator_forward)(img, prep)   # bt=8 -> 2 grid steps
    out = jax.block_until_ready(out)
    assert out.shape == (B, 1)
    assert bool(jnp.all((out > 0.0) & (out < 1.0)))

    ref = reference_forward(img, params)
    err = float(jnp.max(jnp.abs(out - ref)))
    # bf16 matmul operands vs. f32 HIGHEST reference -> relaxed tolerance.
    assert err < 1.5e-2, f"max abs err {err}"
    # TODO(synk): Dropout(0.25) is modeled as identity (eval mode); training-mode
    # RNG-matched dropout is not reproduced.
    print("KERNEL_OK")
</pallas_src>

<mosaic_0001>
module attributes {stable_mosaic.version = 11 : i64} {
  func.func @kernel(%arg0: i32, %arg1: memref<8x256x9xbf16, #tpu.memory_space<vmem>>, %arg2: memref<256x1xf32, #tpu.memory_space<vmem>>, %arg3: memref<9x64xbf16, #tpu.memory_space<vmem>>, %arg4: memref<1x64xf32, #tpu.memory_space<vmem>>, %arg5: memref<576x128xbf16, #tpu.memory_space<vmem>>, %arg6: memref<1x128xf32, #tpu.memory_space<vmem>>, %arg7: memref<56x128xf32, #tpu.memory_space<vmem>>, %arg8: memref<1xf32, #tpu.memory_space<smem>>, %arg9: memref<8x1xf32, #tpu.memory_space<vmem>>, %arg10: memref<8x288x64xf32, #tpu.memory_space<vmem>>, %arg11: memref<448x576xbf16, #tpu.memory_space<vmem>>) attributes {dimension_semantics = [#tpu.dimension_semantics<parallel>], iteration_bounds = array<i64: 2>, scalar_prefetch = 0 : i64, scratch_operands = 2 : i64, tpu.core_type = #tpu.core_type<tc>, window_params = [{transform_indices = @transform_0, window_bounds = array<i64: 8, 256, 9>}, {pipeline_mode = #tpu.pipeline_mode<synchronous>, transform_indices = @transform_1, window_bounds = array<i64: 256, 1>}, {pipeline_mode = #tpu.pipeline_mode<synchronous>, transform_indices = @transform_2, window_bounds = array<i64: 9, 64>}, {pipeline_mode = #tpu.pipeline_mode<synchronous>, transform_indices = @transform_3, window_bounds = array<i64: 1, 64>}, {pipeline_mode = #tpu.pipeline_mode<synchronous>, transform_indices = @transform_4, window_bounds = array<i64: 576, 128>}, {pipeline_mode = #tpu.pipeline_mode<synchronous>, transform_indices = @transform_5, window_bounds = array<i64: 1, 128>}, {pipeline_mode = #tpu.pipeline_mode<synchronous>, transform_indices = @transform_6, window_bounds = array<i64: 56, 128>}, {transform_indices = @transform_7, window_bounds = array<i64: 1>}, {transform_indices = @transform_8, window_bounds = array<i64: 8, 1>}]} {
    %c0 = arith.constant 0 : index
    %c0_0 = arith.constant 0 : index
    %c0_1 = arith.constant 0 : index
    %0 = vector.load %arg1[%c0, %c0_0, %c0_1] : memref<8x256x9xbf16, #tpu.memory_space<vmem>>, vector<8x256x9xbf16>
    %1 = vector.shape_cast %0 : vector<8x256x9xbf16> to vector<2048x9xbf16>
    %c0_2 = arith.constant 0 : index
    %c0_3 = arith.constant 0 : index
    %2 = vector.load %arg3[%c0_2, %c0_3] : memref<9x64xbf16, #tpu.memory_space<vmem>>, vector<9x64xbf16>
    %cst = arith.constant dense<0.000000e+00> : vector<2048x64xf32>
    %3 = tpu.matmul %1, %2, %cst {dimension_numbers = #tpu.dot_dimension_numbers<[1], [0], [0], [1], [0, 0, 1, 1], [], []>} : vector<2048x9xbf16>, vector<9x64xbf16>, vector<2048x64xf32> -> vector<2048x64xf32>
    %c0_4 = arith.constant 0 : index
    %c0_5 = arith.constant 0 : index
    %4 = vector.load %arg4[%c0_4, %c0_5] : memref<1x64xf32, #tpu.memory_space<vmem>>, vector<1x64xf32>
    %5 = vector.broadcast %4 : vector<1x64xf32> to vector<2048x64xf32>
    %6 = arith.addf %3, %5 : vector<2048x64xf32>
    %cst_6 = arith.constant 2.000000e-01 : f32
    %7 = vector.broadcast %cst_6 : f32 to vector<2048x64xf32>
    %8 = arith.mulf %7, %6 : vector<2048x64xf32>
    %9 = arith.maximumf %6, %8 : vector<2048x64xf32>
    %10 = vector.shape_cast %9 : vector<2048x64xf32> to vector<8x256x64xf32>
    %c0_7 = arith.constant 0 : index
    %c0_8 = arith.constant 0 : index
    %11 = vector.load %arg2[%c0_7, %c0_8] : memref<256x1xf32, #tpu.memory_space<vmem>>, vector<256x1xf32>
    %12 = vector.shape_cast %11 : vector<256x1xf32> to vector<1x256x1xf32>
    %13 = vector.broadcast %12 : vector<1x256x1xf32> to vector<8x256x64xf32>
    %14 = arith.mulf %10, %13 : vector<8x256x64xf32>
    %cst_9 = arith.constant 0.000000e+00 : f32
    %15 = vector.broadcast %cst_9 : f32 to vector<8x1x64xf32>
    %16 = vector.extract_strided_slice %14 {offsets = [0, 0, 0], sizes = [8, 64, 64], strides = [1, 1, 1]} : vector<8x256x64xf32> to vector<8x64x64xf32>
    %c0_10 = arith.constant 0 : index
    %c0_11 = arith.constant 0 : index
    %c0_12 = arith.constant 0 : index
    %17 = vector.load %arg10[%c0_10, %c0_11, %c0_12] : memref<8x288x64xf32, #tpu.memory_space<vmem>>, vector<8x64x64xf32>
    tpu.vector_store %arg10[%c0_10, %c0_11, %c0_12], %16 {strides = array<i32>} : memref<8x288x64xf32, #tpu.memory_space<vmem>>, vector<8x64x64xf32>,
    %c0_13 = arith.constant 0 : index
    %c64 = arith.constant 64 : index
    %c0_14 = arith.constant 0 : index
    %18 = vector.load %arg10[%c0_13, %c64, %c0_14] : memref<8x288x64xf32, #tpu.memory_space<vmem>>, vector<8x1x64xf32>
    tpu.vector_store %arg10[%c0_13, %c64, %c0_14], %15 {strides = array<i32>} : memref<8x288x64xf32, #tpu.memory_space<vmem>>, vector<8x1x64xf32>,
    %19 = vector.extract_strided_slice %14 {offsets = [0, 64, 0], sizes = [8, 64, 64], strides = [1, 1, 1]} : vector<8x256x64xf32> to vector<8x64x64xf32>
    %c0_15 = arith.constant 0 : index
    %c72 = arith.constant 72 : index
    %c0_16 = arith.constant 0 : index
    %20 = vector.load %arg10[%c0_15, %c72, %c0_16] : memref<8x288x64xf32, #tpu.memory_space<vmem>>, vector<8x64x64xf32>
    tpu.vector_store %arg10[%c0_15, %c72, %c0_16], %19 {strides = array<i32>} : memref<8x288x64xf32, #tpu.memory_space<vmem>>, vector<8x64x64xf32>,
    %c0_17 = arith.constant 0 : index
    %c136 = arith.constant 136 : index
    %c0_18 = arith.constant 0 : index
    %21 = vector.load %arg10[%c0_17, %c136, %c0_18] : memref<8x288x64xf32, #tpu.memory_space<vmem>>, vector<8x1x64xf32>
    tpu.vector_store %arg10[%c0_17, %c136, %c0_18], %15 {strides = array<i32>} : memref<8x288x64xf32, #tpu.memory_space<vmem>>, vector<8x1x64xf32>,
    %22 = vector.extract_strided_slice %14 {offsets = [0, 128, 0], sizes = [8, 64, 64], strides = [1, 1, 1]} : vector<8x256x64xf32> to vector<8x64x64xf32>
    %c0_19 = arith.constant 0 : index
    %c144 = arith.constant 144 : index
    %c0_20 = arith.constant 0 : index
    %23 = vector.load %arg10[%c0_19, %c144, %c0_20] : memref<8x288x64xf32, #tpu.memory_space<vmem>>, vector<8x64x64xf32>
    tpu.vector_store %arg10[%c0_19, %c144, %c0_20], %22 {strides = array<i32>} : memref<8x288x64xf32, #tpu.memory_space<vmem>>, vector<8x64x64xf32>,
    %c0_21 = arith.constant 0 : index
    %c208 = arith.constant 208 : index
    %c0_22 = arith.constant 0 : index
    %24 = vector.load %arg10[%c0_21, %c208, %c0_22] : memref<8x288x64xf32, #tpu.memory_space<vmem>>, vector<8x1x64xf32>
    tpu.vector_store %arg10[%c0_21, %c208, %c0_22], %15 {strides = array<i32>} : memref<8x288x64xf32, #tpu.memory_space<vmem>>, vector<8x1x64xf32>,
    %25 = vector.extract_strided_slice %14 {offsets = [0, 192, 0], sizes = [8, 64, 64], strides = [1, 1, 1]} : vector<8x256x64xf32> to vector<8x64x64xf32>
    %c0_23 = arith.constant 0 : index
    %c216 = arith.constant 216 : index
    %c0_24 = arith.constant 0 : index
    %26 = vector.load %arg10[%c0_23, %c216, %c0_24] : memref<8x288x64xf32, #tpu.memory_space<vmem>>, vector<8x64x64xf32>
    tpu.vector_store %arg10[%c0_23, %c216, %c0_24], %25 {strides = array<i32>} : memref<8x288x64xf32, #tpu.memory_space<vmem>>, vector<8x64x64xf32>,
    %c0_25 = arith.constant 0 : index
    %c280 = arith.constant 280 : index
    %c0_26 = arith.constant 0 : index
    %27 = vector.load %arg10[%c0_25, %c280, %c0_26] : memref<8x288x64xf32, #tpu.memory_space<vmem>>, vector<8x1x64xf32>
    tpu.vector_store %arg10[%c0_25, %c280, %c0_26], %15 {strides = array<i32>} : memref<8x288x64xf32, #tpu.memory_space<vmem>>, vector<8x1x64xf32>,
    %c0_27 = arith.constant 0 : index
    %c216_28 = arith.constant 216 : index
    %c0_29 = arith.constant 0 : index
    %28 = vector.load %arg10[%c0_27, %c216_28, %c0_29] : memref<8x288x64xf32, #tpu.memory_space<vmem>>, vector<8x56x64xf32>
    %29 = vector.shape_cast %28 : vector<8x56x64xf32> to vector<448x64xf32>
    %30 = arith.truncf %29 : vector<448x64xf32> to vector<448x64xbf16>
    %c0_30 = arith.constant 0 : index
    %c0_31 = arith.constant 0 : index
    %31 = vector.load %arg11[%c0_30, %c0_31] : memref<448x576xbf16, #tpu.memory_space<vmem>>, vector<448x64xbf16>
    tpu.vector_store %arg11[%c0_30, %c0_31], %30 {strides = array<i32>} : memref<448x576xbf16, #tpu.memory_space<vmem>>, vector<448x64xbf16>,
    %c0_32 = arith.constant 0 : index
    %c144_33 = arith.constant 144 : index
    %c0_34 = arith.constant 0 : index
    %32 = vector.load %arg10[%c0_32, %c144_33, %c0_34] : memref<8x288x64xf32, #tpu.memory_space<vmem>>, vector<8x56x64xf32>
    %33 = vector.shape_cast %32 : vector<8x56x64xf32> to vector<448x64xf32>
    %34 = arith.truncf %33 : vector<448x64xf32> to vector<448x64xbf16>
    %c0_35 = arith.constant 0 : index
    %c64_36 = arith.constant 64 : index
    %35 = vector.load %arg11[%c0_35, %c64_36] : memref<448x576xbf16, #tpu.memory_space<vmem>>, vector<448x64xbf16>
    tpu.vector_store %arg11[%c0_35, %c64_36], %34 {strides = array<i32>} : memref<448x576xbf16, #tpu.memory_space<vmem>>, vector<448x64xbf16>,
    %c0_37 = arith.constant 0 : index
    %c217 = arith.constant 217 : index
    %c0_38 = arith.constant 0 : index
    %36 = vector.load %arg10[%c0_37, %c217, %c0_38] : memref<8x288x64xf32, #tpu.memory_space<vmem>>, vector<8x56x64xf32>
    %37 = vector.shape_cast %36 : vector<8x56x64xf32> to vector<448x64xf32>
    %38 = arith.truncf %37 : vector<448x64xf32> to vector<448x64xbf16>
    %c0_39 = arith.constant 0 : index
    %c128 = arith.constant 128 : index
    %39 = vector.load %arg11[%c0_39, %c128] : memref<448x576xbf16, #tpu.memory_space<vmem>>, vector<448x64xbf16>
    tpu.vector_store %arg11[%c0_39, %c128], %38 {strides = array<i32>} : memref<448x576xbf16, #tpu.memory_space<vmem>>, vector<448x64xbf16>,
    %c0_40 = arith.constant 0 : index
    %c72_41 = arith.constant 72 : index
    %c0_42 = arith.constant 0 : index
    %40 = vector.load %arg10[%c0_40, %c72_41, %c0_42] : memref<8x288x64xf32, #tpu.memory_space<vmem>>, vector<8x56x64xf32>
    %41 = vector.shape_cast %40 : vector<8x56x64xf32> to vector<448x64xf32>
    %42 = arith.truncf %41 : vector<448x64xf32> to vector<448x64xbf16>
    %c0_43 = arith.constant 0 : index
    %c192 = arith.constant 192 : index
    %43 = vector.load %arg11[%c0_43, %c192] : memref<448x576xbf16, #tpu.memory_space<vmem>>, vector<448x64xbf16>
    tpu.vector_store %arg11[%c0_43, %c192], %42 {strides = array<i32>} : memref<448x576xbf16, #tpu.memory_space<vmem>>, vector<448x64xbf16>,
    %c0_44 = arith.constant 0 : index
    %c0_45 = arith.constant 0 : index
    %c0_46 = arith.constant 0 : index
    %44 = vector.load %arg10[%c0_44, %c0_45, %c0_46] : memref<8x288x64xf32, #tpu.memory_space<vmem>>, vector<8x56x64xf32>
    %45 = vector.shape_cast %44 : vector<8x56x64xf32> to vector<448x64xf32>
    %46 = arith.truncf %45 : vector<448x64xf32> to vector<448x64xbf16>
    %c0_47 = arith.constant 0 : index
    %c256 = arith.constant 256 : index
    %47 = vector.load %arg11[%c0_47, %c256] : memref<448x576xbf16, #tpu.memory_space<vmem>>, vector<448x64xbf16>
    tpu.vector_store %arg11[%c0_47, %c256], %46 {strides = array<i32>} : memref<448x576xbf16, #tpu.memory_space<vmem>>, vector<448x64xbf16>,
    %c0_48 = arith.constant 0 : index
    %c73 = arith.constant 73 : index
    %c0_49 = arith.constant 0 : index
    %48 = vector.load %arg10[%c0_48, %c73, %c0_49] : memref<8x288x64xf32, #tpu.memory_space<vmem>>, vector<8x56x64xf32>
    %49 = vector.shape_cast %48 : vector<8x56x64xf32> to vector<448x64xf32>
    %50 = arith.truncf %49 : vector<448x64xf32> to vector<448x64xbf16>
    %c0_50 = arith.constant 0 : index
    %c320 = arith.constant 320 : index
    %51 = vector.load %arg11[%c0_50, %c320] : memref<448x576xbf16, #tpu.memory_space<vmem>>, vector<448x64xbf16>
    tpu.vector_store %arg11[%c0_50, %c320], %50 {strides = array<i32>} : memref<448x576xbf16, #tpu.memory_space<vmem>>, vector<448x64xbf16>,
    %c0_51 = arith.constant 0 : index
    %c224 = arith.constant 224 : index
    %c0_52 = arith.constant 0 : index
    %52 = vector.load %arg10[%c0_51, %c224, %c0_52] : memref<8x288x64xf32, #tpu.memory_space<vmem>>, vector<8x56x64xf32>
    %53 = vector.shape_cast %52 : vector<8x56x64xf32> to vector<448x64xf32>
    %54 = arith.truncf %53 : vector<448x64xf32> to vector<448x64xbf16>
    %c0_53 = arith.constant 0 : index
    %c384 = arith.constant 384 : index
    %55 = vector.load %arg11[%c0_53, %c384] : memref<448x576xbf16, #tpu.memory_space<vmem>>, vector<448x64xbf16>
    tpu.vector_store %arg11[%c0_53, %c384], %54 {strides = array<i32>} : memref<448x576xbf16, #tpu.memory_space<vmem>>, vector<448x64xbf16>,
    %c0_54 = arith.constant 0 : index
    %c152 = arith.constant 152 : index
    %c0_55 = arith.constant 0 : index
    %56 = vector.load %arg10[%c0_54, %c152, %c0_55] : memref<8x288x64xf32, #tpu.memory_space<vmem>>, vector<8x56x64xf32>
    %57 = vector.shape_cast %56 : vector<8x56x64xf32> to vector<448x64xf32>
    %58 = arith.truncf %57 : vector<448x64xf32> to vector<448x64xbf16>
    %c0_56 = arith.constant 0 : index
    %c448 = arith.constant 448 : index
    %59 = vector.load %arg11[%c0_56, %c448] : memref<448x576xbf16, #tpu.memory_space<vmem>>, vector<448x64xbf16>
    tpu.vector_store %arg11[%c0_56, %c448], %58 {strides = array<i32>} : memref<448x576xbf16, #tpu.memory_space<vmem>>, vector<448x64xbf16>,
    %c0_57 = arith.constant 0 : index
    %c225 = arith.constant 225 : index
    %c0_58 = arith.constant 0 : index
    %60 = vector.load %arg10[%c0_57, %c225, %c0_58] : memref<8x288x64xf32, #tpu.memory_space<vmem>>, vector<8x56x64xf32>
    %61 = vector.shape_cast %60 : vector<8x56x64xf32> to vector<448x64xf32>
    %62 = arith.truncf %61 : vector<448x64xf32> to vector<448x64xbf16>
    %c0_59 = arith.constant 0 : index
    %c512 = arith.constant 512 : index
    %63 = vector.load %arg11[%c0_59, %c512] : memref<448x576xbf16, #tpu.memory_space<vmem>>, vector<448x64xbf16>
    tpu.vector_store %arg11[%c0_59, %c512], %62 {strides = array<i32>} : memref<448x576xbf16, #tpu.memory_space<vmem>>, vector<448x64xbf16>,
    %c0_60 = arith.constant 0 : index
    %c0_61 = arith.constant 0 : index
    %64 = vector.load %arg11[%c0_60, %c0_61] : memref<448x576xbf16, #tpu.memory_space<vmem>>, vector<448x576xbf16>
    %c0_62 = arith.constant 0 : index
    %c0_63 = arith.constant 0 : index
    %65 = vector.load %arg5[%c0_62, %c0_63] : memref<576x128xbf16, #tpu.memory_space<vmem>>, vector<576x128xbf16>
    %cst_64 = arith.constant dense<0.000000e+00> : vector<448x128xf32>
    %66 = tpu.matmul %64, %65, %cst_64 {dimension_numbers = #tpu.dot_dimension_numbers<[1], [0], [0], [1], [0, 0, 1, 1], [], []>} : vector<448x576xbf16>, vector<576x128xbf16>, vector<448x128xf32> -> vector<448x128xf32>
    %c0_65 = arith.constant 0 : index
    %c0_66 = arith.constant 0 : index
    %67 = vector.load %arg6[%c0_65, %c0_66] : memref<1x128xf32, #tpu.memory_space<vmem>>, vector<1x128xf32>
    %68 = vector.broadcast %67 : vector<1x128xf32> to vector<448x128xf32>
    %69 = arith.addf %66, %68 : vector<448x128xf32>
    %cst_67 = arith.constant 2.000000e-01 : f32
    %70 = vector.broadcast %cst_67 : f32 to vector<448x128xf32>
    %71 = arith.mulf %70, %69 : vector<448x128xf32>
    %72 = arith.maximumf %69, %71 : vector<448x128xf32>
    %73 = vector.shape_cast %72 : vector<448x128xf32> to vector<8x56x128xf32>
    %c0_68 = arith.constant 0 : index
    %c0_69 = arith.constant 0 : index
    %74 = vector.load %arg7[%c0_68, %c0_69] : memref<56x128xf32, #tpu.memory_space<vmem>>, vector<56x128xf32>
    %75 = vector.shape_cast %74 : vector<56x128xf32> to vector<1x56x128xf32>
    %76 = vector.broadcast %75 : vector<1x56x128xf32> to vector<8x56x128xf32>
    %77 = arith.mulf %73, %76 : vector<8x56x128xf32>
    %cst_70 = arith.constant dense<0.000000e+00> : vector<8x56xf32>
    %78 = vector.multi_reduction <add>, %77, %cst_70 [2] : vector<8x56x128xf32> to vector<8x56xf32>
    %cst_71 = arith.constant dense<0.000000e+00> : vector<8xf32>
    %79 = vector.multi_reduction <add>, %78, %cst_71 [1] : vector<8x56xf32> to vector<8xf32>
    %80 = vector.shape_cast %79 : vector<8xf32> to vector<8x1xf32>
    %c0_72 = arith.constant 0 : index
    %81 = memref.load %arg8[%c0_72] : memref<1xf32, #tpu.memory_space<smem>>
    %82 = vector.broadcast %81 : f32 to vector<8x1xf32>
    %83 = arith.addf %80, %82 : vector<8x1xf32>
    %84 = math.absf %83 : vector<8x1xf32>
    %cst_73 = arith.constant 0.000000e+00 : f32
    %85 = vector.broadcast %cst_73 : f32 to vector<8x1xf32>
    %86 = arith.subf %85, %84 : vector<8x1xf32>
    %87 = math.exp %86 : vector<8x1xf32>
    %cst_74 = arith.constant 1.000000e+00 : f32
    %88 = vector.broadcast %cst_74 : f32 to vector<8x1xf32>
    %89 = arith.addf %88, %87 : vector<8x1xf32>
    %cst_75 = arith.constant 1.000000e+00 : f32
    %90 = vector.broadcast %cst_75 : f32 to vector<8x1xf32>
    %91 = arith.divf %90, %89 : vector<8x1xf32>
    %cst_76 = arith.constant 0.000000e+00 : f32
    %92 = vector.broadcast %cst_76 : f32 to vector<8x1xf32>
    %93 = arith.cmpf oge, %83, %92 : vector<8x1xf32>
    %cst_77 = arith.constant 1.000000e+00 : f32
    %94 = vector.broadcast %cst_77 : f32 to vector<8x1xf32>
    %95 = arith.subf %94, %91 : vector<8x1xf32>
    %96 = arith.select %93, %91, %95 : vector<8x1xi1>, vector<8x1xf32>
    %c0_78 = arith.constant 0 : index
    %c0_79 = arith.constant 0 : index
    %97 = vector.load %arg9[%c0_78, %c0_79] : memref<8x1xf32, #tpu.memory_space<vmem>>, vector<8x1xf32>
    tpu.vector_store %arg9[%c0_78, %c0_79], %96 {strides = array<i32>} : memref<8x1xf32, #tpu.memory_space<vmem>>, vector<8x1xf32>,
    return
  }
  func.func @transform_0(%arg0: i32) -> (i32, i32, i32) {
    %c0_i32 = arith.constant 0 : i32
    %c0_i32_0 = arith.constant 0 : i32
    %c0_i32_1 = arith.constant 0 : i32
    return %arg0, %c0_i32, %c0_i32_0 : i32, i32, i32
  }
  func.func @transform_1(%arg0: i32) -> (i32, i32) {
    %c0_i32 = arith.constant 0 : i32
    %c0_i32_0 = arith.constant 0 : i32
    %c0_i32_1 = arith.constant 0 : i32
    return %c0_i32, %c0_i32_0 : i32, i32
  }
  func.func @transform_2(%arg0: i32) -> (i32, i32) {
    %c0_i32 = arith.constant 0 : i32
    %c0_i32_0 = arith.constant 0 : i32
    %c0_i32_1 = arith.constant 0 : i32
    return %c0_i32, %c0_i32_0 : i32, i32
  }
  func.func @transform_3(%arg0: i32) -> (i32, i32) {
    %c0_i32 = arith.constant 0 : i32
    %c0_i32_0 = arith.constant 0 : i32
    %c0_i32_1 = arith.constant 0 : i32
    return %c0_i32, %c0_i32_0 : i32, i32
  }
  func.func @transform_4(%arg0: i32) -> (i32, i32) {
    %c0_i32 = arith.constant 0 : i32
    %c0_i32_0 = arith.constant 0 : i32
    %c0_i32_1 = arith.constant 0 : i32
    return %c0_i32, %c0_i32_0 : i32, i32
  }
  func.func @transform_5(%arg0: i32) -> (i32, i32) {
    %c0_i32 = arith.constant 0 : i32
    %c0_i32_0 = arith.constant 0 : i32
    %c0_i32_1 = arith.constant 0 : i32
    return %c0_i32, %c0_i32_0 : i32, i32
  }
  func.func @transform_6(%arg0: i32) -> (i32, i32) {
    %c0_i32 = arith.constant 0 : i32
    %c0_i32_0 = arith.constant 0 : i32
    %c0_i32_1 = arith.constant 0 : i32
    return %c0_i32, %c0_i32_0 : i32, i32
  }
  func.func @transform_7(%arg0: i32) -> i32 {
    %c0_i32 = arith.constant 0 : i32
    %c0_i32_0 = arith.constant 0 : i32
    return %c0_i32 : i32
  }
  func.func @transform_8(%arg0: i32) -> (i32, i32) {
    %c0_i32 = arith.constant 0 : i32
    %c0_i32_0 = arith.constant 0 : i32
    return %arg0, %c0_i32 : i32, i32
  }
}

</mosaic_0001>

<llo_original>
// kernel: discriminator_forward.1
$region0: #{discriminator_forward.1}
  #allocation0 [shape = 'u32[]', space=smem, size = 0x4, offset = 0x4, fixed_abs, tag = 'smem constant byte address 0x4 - core index']
  #allocation1 [shape = 'u32[144,128]{1,0:T(1,128)}', space=vmem, size = 0x12000, scoped, tag = 'internal scratch']
  #allocation2 [shape = 'f32[8,288,64]{2,1,0:T(8,128)}', space=vmem, size = 0x120000, scoped, tag = 'scratch operand']
  #allocation3 [shape = 'bf16[448,576]{1,0:T(16,128)(2,1)}', space=vmem, size = 0x8c000, scoped, tag = 'scratch operand']
  #allocation4 [shape = 'f32[1]{0:T(128)S(6)}', space=smem, size = 0x200, scoped, tag = 'scoped memory for discriminator_forward.1']
  %s0 = inlined_call_operand.vmem [shape: bf16[16,256,9], index: 0, kind: input, shape index: {}]
  %s1 = inlined_call_operand.vmem [shape: f32[256,1], index: 1, kind: input, shape index: {}]
  %s2 = inlined_call_operand.vmem [shape: bf16[9,64], index: 2, kind: input, shape index: {}]
  %s3 = inlined_call_operand.vmem [shape: f32[1,64], index: 3, kind: input, shape index: {}]
  %s4 = inlined_call_operand.vmem [shape: bf16[576,128], index: 4, kind: input, shape index: {}]
  %s5 = inlined_call_operand.vmem [shape: f32[1,128], index: 5, kind: input, shape index: {}]
  %s6 = inlined_call_operand.vmem [shape: f32[56,128], index: 6, kind: input, shape index: {}]
  %s7 = inlined_call_operand.<no memory space> [shape: f32[1], index: 7, kind: input, shape index: {}]
  %s8 = inlined_call_operand.vmem [shape: f32[16,1], index: 8, kind: output, shape index: {}]
  %s9 = sld [smem:[#allocation0]]
  $region65: #{discriminator_forward.1} parent=0
    _
  %s11 = ssub.s32 1, %s9
  %s12 = scalar_select 0, %s11, %s9
  %13 = sst [smem:[#allocation4]] %s7
  loop: start=0, step=1, limit=4
  $region2: #{discriminator_forward.1} parent=0 // loop_pre_header
    _
  $region3: #{discriminator_forward.1} parent=0 // loop_header
    %s15 = sphi 0, %s19
    %p16 = scmp.ge.s32.totalorder %s15, 4
    %s25 = sphi 0, %s27
    %s28 = sphi 0, %s25
    %s29 = sphi 0, %s28
    %s45 = sphi 0, %s29
    %s49 = sphi 0, %s49
    %s51 = sphi 0, %s49
    %s52 = sphi 0, %s51
    %s66 = sphi 0, %s52
    %s70 = sphi 0, %s70
    %s72 = sphi 0, %s70
    %s73 = sphi 0, %s72
    %s87 = sphi 0, %s73
    %s91 = sphi 0, %s91
    %s93 = sphi 0, %s91
    %s94 = sphi 0, %s93
    %s108 = sphi 0, %s94
    %s112 = sphi 0, %s112
    %s114 = sphi 0, %s112
    %s115 = sphi 0, %s114
    %s129 = sphi 0, %s115
    %s133 = sphi 0, %s133
    %s135 = sphi 0, %s133
    %s136 = sphi 0, %s135
    %s150 = sphi 0, %s136
    %s154 = sphi 0, %s154
    %s156 = sphi 0, %s154
    %s157 = sphi 0, %s156
    %s171 = sphi 0, %s157
    %s175 = sphi 0, %s175
    %s177 = sphi 0, %s175
    %s178 = sphi 0, %s177
    %s192 = sphi 0, %s178
    %s198 = sphi 0, %s200
    %s201 = sphi 0, %s198
    %s202 = sphi 0, %s201
    %s218 = sphi 0, %s202
  $region4: #{discriminator_forward.1} parent=0 // loop_header_branch
    %18 = sbr.rel (%p16) target = $region8
  $region5: #{discriminator_forward.1} parent=0 // loop_body
    %s20 = ssub.s32 %s15, 1
    %s21 = ssub.s32 %s15, 2
    %s22 = sadd.s32 %s15, 1
    %s23 = ssub.s32 %s15, %s22
    %p24 = scmp.eq.s32.totalorder %s23, 0
    %s26 = sadd.s32 %s25, 1
    %s27 = scalar_select %p24, %s25, %s26
    %p30 = pneg %p24
    %p31 = scmp.eq.s32.totalorder %s15, 1
    %p32 = por %p30, %p31
    %p33 = scmp.ne.s32.totalorder %s25, %s28
    %p34 = scmp.eq.s32.totalorder %s15, 0
    %p35 = por %p33, %p34
    %p36 = scmp.ne.s32.totalorder %s25, %s28
    %p37 = scmp.eq.s32.totalorder %s20, 1
    %p38 = por %p36, %p37
    %p39 = scmp.ne.s32.totalorder %s28, %s29
    %p40 = scmp.eq.s32.totalorder %s20, 0
    %p41 = por %p39, %p40
    %p42 = scmp.ne.s32.totalorder %s28, %s29
    %p43 = scmp.eq.s32.totalorder %s21, 1
    %p44 = por %p42, %p43
    %p46 = scmp.ne.s32.totalorder %s29, %s45
    %p47 = scmp.eq.s32.totalorder %s21, 0
    %p48 = por %p46, %p47
    %s50 = sadd.s32 %s49, 1
    %p53 = scmp.eq.s32.totalorder %s15, 1
    %p54 = scmp.ne.s32.totalorder %s49, %s51
    %p55 = scmp.eq.s32.totalorder %s15, 0
    %p56 = por %p54, %p55
    %p57 = scmp.ne.s32.totalorder %s49, %s51
    %p58 = scmp.eq.s32.totalorder %s20, 1
    %p59 = por %p57, %p58
    %p60 = scmp.ne.s32.totalorder %s51, %s52
    %p61 = scmp.eq.s32.totalorder %s20, 0
    %p62 = por %p60, %p61
    %p63 = scmp.ne.s32.totalorder %s51, %s52
    %p64 = scmp.eq.s32.totalorder %s21, 1
    %p65 = por %p63, %p64
    %p67 = scmp.ne.s32.totalorder %s52, %s66
    %p68 = scmp.eq.s32.totalorder %s21, 0
    %p69 = por %p67, %p68
    %s71 = sadd.s32 %s70, 1
    %p74 = scmp.eq.s32.totalorder %s15, 1
    %p75 = scmp.ne.s32.totalorder %s70, %s72
    %p76 = scmp.eq.s32.totalorder %s15, 0
    %p77 = por %p75, %p76
    %p78 = scmp.ne.s32.totalorder %s70, %s72
    %p79 = scmp.eq.s32.totalorder %s20, 1
    %p80 = por %p78, %p79
    %p81 = scmp.ne.s32.totalorder %s72, %s73
    %p82 = scmp.eq.s32.totalorder %s20, 0
    %p83 = por %p81, %p82
    %p84 = scmp.ne.s32.totalorder %s72, %s73
    %p85 = scmp.eq.s32.totalorder %s21, 1
    %p86 = por %p84, %p85
    %p88 = scmp.ne.s32.totalorder %s73, %s87
    %p89 = scmp.eq.s32.totalorder %s21, 0
    %p90 = por %p88, %p89
    %s92 = sadd.s32 %s91, 1
    %p95 = scmp.eq.s32.totalorder %s15, 1
    %p96 = scmp.ne.s32.totalorder %s91, %s93
    %p97 = scmp.eq.s32.totalorder %s15, 0
    %p98 = por %p96, %p97
    %p99 = scmp.ne.s32.totalorder %s91, %s93
    %p100 = scmp.eq.s32.totalorder %s20, 1
    %p101 = por %p99, %p100
    %p102 = scmp.ne.s32.totalorder %s93, %s94
    %p103 = scmp.eq.s32.totalorder %s20, 0
    %p104 = por %p102, %p103
    %p105 = scmp.ne.s32.totalorder %s93, %s94
    %p106 = scmp.eq.s32.totalorder %s21, 1
    %p107 = por %p105, %p106
    %p109 = scmp.ne.s32.totalorder %s94, %s108
    %p110 = scmp.eq.s32.totalorder %s21, 0
    %p111 = por %p109, %p110
    %s113 = sadd.s32 %s112, 1
    %p116 = scmp.eq.s32.totalorder %s15, 1
    %p117 = scmp.ne.s32.totalorder %s112, %s114
    %p118 = scmp.eq.s32.totalorder %s15, 0
    %p119 = por %p117, %p118
    %p120 = scmp.ne.s32.totalorder %s112, %s114
    %p121 = scmp.eq.s32.totalorder %s20, 1
    %p122 = por %p120, %p121
    %p123 = scmp.ne.s32.totalorder %s114, %s115
    %p124 = scmp.eq.s32.totalorder %s20, 0
    %p125 = por %p123, %p124
    %p126 = scmp.ne.s32.totalorder %s114, %s115
    %p127 = scmp.eq.s32.totalorder %s21, 1
    %p128 = por %p126, %p127
    %p130 = scmp.ne.s32.totalorder %s115, %s129
    %p131 = scmp.eq.s32.totalorder %s21, 0
    %p132 = por %p130, %p131
    %s134 = sadd.s32 %s133, 1
    %p137 = scmp.eq.s32.totalorder %s15, 1
    %p138 = scmp.ne.s32.totalorder %s133, %s135
    %p139 = scmp.eq.s32.totalorder %s15, 0
    %p140 = por %p138, %p139
    %p141 = scmp.ne.s32.totalorder %s133, %s135
    %p142 = scmp.eq.s32.totalorder %s20, 1
    %p143 = por %p141, %p142
    %p144 = scmp.ne.s32.totalorder %s135, %s136
    %p145 = scmp.eq.s32.totalorder %s20, 0
    %p146 = por %p144, %p145
    %p147 = scmp.ne.s32.totalorder %s135, %s136
    %p148 = scmp.eq.s32.totalorder %s21, 1
    %p149 = por %p147, %p148
    %p151 = scmp.ne.s32.totalorder %s136, %s150
    %p152 = scmp.eq.s32.totalorder %s21, 0
    %p153 = por %p151, %p152
    %s155 = sadd.s32 %s154, 1
    %p158 = scmp.eq.s32.totalorder %s15, 1
    %p159 = scmp.ne.s32.totalorder %s154, %s156
    %p160 = scmp.eq.s32.totalorder %s15, 0
    %p161 = por %p159, %p160
    %p162 = scmp.ne.s32.totalorder %s154, %s156
    %p163 = scmp.eq.s32.totalorder %s20, 1
    %p164 = por %p162, %p163
    %p165 = scmp.ne.s32.totalorder %s156, %s157
    %p166 = scmp.eq.s32.totalorder %s20, 0
    %p167 = por %p165, %p166
    %p168 = scmp.ne.s32.totalorder %s156, %s157
    %p169 = scmp.eq.s32.totalorder %s21, 1
    %p170 = por %p168, %p169
    %p172 = scmp.ne.s32.totalorder %s157, %s171
    %p173 = scmp.eq.s32.totalorder %s21, 0
    %p174 = por %p172, %p173
    %s176 = sadd.s32 %s175, 1
    %p179 = scmp.eq.s32.totalorder %s15, 1
    %p180 = scmp.ne.s32.totalorder %s175, %s177
    %p181 = scmp.eq.s32.totalorder %s15, 0
    %p182 = por %p180, %p181
    %p183 = scmp.ne.s32.totalorder %s175, %s177
    %p184 = scmp.eq.s32.totalorder %s20, 1
    %p185 = por %p183, %p184
    %p186 = scmp.ne.s32.totalorder %s177, %s178
    %p187 = scmp.eq.s32.totalorder %s20, 0
    %p188 = por %p186, %p187
    %p189 = scmp.ne.s32.totalorder %s177, %s178
    %p190 = scmp.eq.s32.totalorder %s21, 1
    %p191 = por %p189, %p190
    %p193 = scmp.ne.s32.totalorder %s178, %s192
    %p194 = scmp.eq.s32.totalorder %s21, 0
    %p195 = por %p193, %p194
    %s196 = ssub.s32 %s15, %s22
    %p197 = scmp.eq.s32.totalorder %s196, 0
    %s199 = sadd.s32 %s198, 1
    %s200 = scalar_select %p197, %s198, %s199
    %p203 = pneg %p197
    %p204 = scmp.eq.s32.totalorder %s15, 1
    %p205 = por %p203, %p204
    %p206 = scmp.ne.s32.totalorder %s198, %s201
    %p207 = scmp.eq.s32.totalorder %s15, 0
    %p208 = por %p206, %p207
    %p209 = scmp.ne.s32.totalorder %s198, %s201
    %p210 = scmp.eq.s32.totalorder %s20, 1
    %p211 = por %p209, %p210
    %p212 = scmp.ne.s32.totalorder %s201, %s202
    %p213 = scmp.eq.s32.totalorder %s20, 0
    %p214 = por %p212, %p213
    %p215 = scmp.ne.s32.totalorder %s201, %s202
    %p216 = scmp.eq.s32.totalorder %s21, 1
    %p217 = por %p215, %p216
    %p219 = scmp.ne.s32.totalorder %s202, %s218
    %p220 = scmp.eq.s32.totalorder %s21, 0
    %p221 = por %p219, %p220
    %p222 = scmp.le.s32.totalorder 1, %s15
    %p223 = scmp.lt.s32.totalorder %s15, 3
    %p224 = pnand %p222, %p223
    %p225 = pneg %p224
    // Predicated region
    $region9: #{discriminator_forward.1} parent=5 // pred_check
      _
    $region10: #{discriminator_forward.1} parent=5 // pred_check_branch
      %227 = sbr.rel (%p224) target = $region12
    $region11: #{discriminator_forward.1} parent=5 // pred_region
      %s228 = ssub.s32 %s15, 1
      // Predicated region
      $region13: #{discriminator_forward.1} parent=11 // pred_check
        %p229 = pneg %p62
      $region14: #{discriminator_forward.1} parent=11 // pred_check_branch
        %231 = sbr.rel (%p229) target = $region16
      $region15: #{discriminator_forward.1} parent=11 // pred_region
        _
      $region16: #{discriminator_forward.1} parent=11 // pred_fallthru
        _
      // Predicated region
      $region17: #{discriminator_forward.1} parent=11 // pred_check
        %p232 = pneg %p83
      $region18: #{discriminator_forward.1} parent=11 // pred_check_branch
        %234 = sbr.rel (%p232) target = $region20
      $region19: #{discriminator_forward.1} parent=11 // pred_region
        _
      $region20: #{discriminator_forward.1} parent=11 // pred_fallthru
        _
      // Predicated region
      $region21: #{discriminator_forward.1} parent=11 // pred_check
        %p235 = pneg %p104
      $region22: #{discriminator_forward.1} parent=11 // pred_check_branch
        %237 = sbr.rel (%p235) target = $region24
      $region23: #{discriminator_forward.1} parent=11 // pred_region
        _
      $region24: #{discriminator_forward.1} parent=11 // pred_fallthru
        _
      // Predicated region
      $region25: #{discriminator_forward.1} parent=11 // pred_check
        %p238 = pneg %p125
      $region26: #{discriminator_forward.1} parent=11 // pred_check_branch
        %240 = sbr.rel (%p238) target = $region28
      $region27: #{discriminator_forward.1} parent=11 // pred_region
        _
      $region28: #{discriminator_forward.1} parent=11 // pred_fallthru
        _
      // Predicated region
      $region29: #{discriminator_forward.1} parent=11 // pred_check
        %p241 = pneg %p146
      $region30: #{discriminator_forward.1} parent=11 // pred_check_branch
        %243 = sbr.rel (%p241) target = $region32
      $region31: #{discriminator_forward.1} parent=11 // pred_region
        _
      $region32: #{discriminator_forward.1} parent=11 // pred_fallthru
        _
      // Predicated region
      $region33: #{discriminator_forward.1} parent=11 // pred_check
        %p244 = pneg %p167
      $region34: #{discriminator_forward.1} parent=11 // pred_check_branch
        %246 = sbr.rel (%p244) target = $region36
      $region35: #{discriminator_forward.1} parent=11 // pred_region
        _
      $region36: #{discriminator_forward.1} parent=11 // pred_fallthru
        _
      // Predicated region
      $region37: #{discriminator_forward.1} parent=11 // pred_check
        %p247 = pneg %p188
      $region38: #{discriminator_forward.1} parent=11 // pred_check_branch
        %249 = sbr.rel (%p247) target = $region40
      $region39: #{discriminator_forward.1} parent=11 // pred_region
        _
      $region40: #{discriminator_forward.1} parent=11 // pred_fallthru
        _
    $region12: #{discriminator_forward.1} parent=5 // pred_fallthru
      _
    %p250 = scmp.lt.s32.totalorder %s15, 2
    // Predicated region
    $region41: #{discriminator_forward.1} parent=5 // pred_check
      %p251 = pneg %p250
    $region42: #{discriminator_forward.1} parent=5 // pred_check_branch
      %253 = sbr.rel (%p251) target = $region44
    $region43: #{discriminator_forward.1} parent=5 // pred_region
      // Predicated region
      $region45: #{discriminator_forward.1} parent=43 // pred_check
        %p254 = pneg %p35
      $region46: #{discriminator_forward.1} parent=43 // pred_check_branch
        %256 = sbr.rel (%p254) target = $region48
      $region47: #{discriminator_forward.1} parent=43 // pred_region
        %s257 = smul.u32 8, %s15
        %p258 = scmp.lt.s32.totalorder %s257, 15
        %s259 = scalar_select %p258, %s257, 15
        %s260 = smul.addr %s259, 32
        %s261 = smul.addr %s260, 4
        %s262 = scalar_lea.vmem %s0, %s261
        %s263 = smul.u32 8, %s15
      $region48: #{discriminator_forward.1} parent=43 // pred_fallthru
        _
    $region44: #{discriminator_forward.1} parent=5 // pred_fallthru
      _
    %p264 = scmp.le.s32.totalorder 1, %s15
    %p265 = scmp.lt.s32.totalorder %s15, 3
    %p266 = pnand %p264, %p265
    %p267 = pneg %p266
    // Predicated region
    $region49: #{discriminator_forward.1} parent=5 // pred_check
      _
    $region50: #{discriminator_forward.1} parent=5 // pred_check_branch
      %269 = sbr.rel (%p266) target = $region52
    $region51: #{discriminator_forward.1} parent=5 // pred_region
      %s270 = ssub.s32 %s15, 1
      %s271 = smul.u32 8, %s20
      %p272 = scmp.lt.s32.totalorder %s271, 15
      %s273 = scalar_select %p272, %s271, 15
      %s274 = smul.addr %s273, 32
      %s275 = smul.addr %s274, 4
      %s276 = scalar_lea.vmem %s0, %s275
      %p277 = pneg %p41
      %p278 = pneg %p38
      %p279 = pneg %p62
      %p280 = pneg %p59
      %p281 = pneg %p83
      %p282 = pneg %p80
      %p283 = pneg %p104
      %p284 = pneg %p101
      %p285 = pneg %p125
      %p286 = pneg %p122
      %p287 = pneg %p146
      %p288 = pneg %p143
      %p289 = pneg %p167
      %p290 = pneg %p164
      %p291 = pneg %p188
      %p292 = pneg %p185
      %p293 = pneg %p214
      %p294 = pneg %p211
      %p295 = scmp.lt.s32.totalorder %s20, 1
      %s296 = scalar_select %p295, %s20, 1
      %s297 = smul.addr %s296, 8
      %s298 = scalar_lea.vmem %s8, %s297
      %s299 = smul.u32 8, %s20
      %p300 = scmp.lt.s32.totalorder %s299, 15
      %s301 = scalar_select %p300, %s299, 15
      %s302 = smul.addr %s301, 32
      %s303 = smul.addr %s302, 4
      %s304 = scalar_lea.vmem %s0, %s303
      %s305 = smul.u32 8, %s20
      %p306 = scmp.lt.s32.totalorder %s20, 1
      %s307 = scalar_select %p306, %s20, 1
      %s308 = smul.addr %s307, 8
      %s309 = scalar_lea.vmem %s8, %s308
      %v311 = vld [vmem:[%s304] sm:$0xf]
      %v312 = vld [vmem:[%s304 + $0x4] sm:$0xf]
      %v313 = vld [vmem:[%s304 + $0x8] sm:$0xf]
      %v314 = vld [vmem:[%s304 + $0xc] sm:$0xf]
      %v315 = vld [vmem:[%s304 + $0x10] sm:$0xf]
      %v316 = vld [vmem:[%s304 + $0x14] sm:$0xf]
      %v317 = vld [vmem:[%s304 + $0x18] sm:$0xf]
      %v318 = vld [vmem:[%s304 + $0x1c] sm:$0xf]
      %v319 = vld [vmem:[%s304 + $0x20] sm:$0xf]
      %v320 = vld [vmem:[%s304 + $0x24] sm:$0xf]
      %v321 = vld [vmem:[%s304 + $0x28] sm:$0xf]
      %v322 = vld [vmem:[%s304 + $0x2c] sm:$0xf]
      %v323 = vld [vmem:[%s304 + $0x30] sm:$0xf]
      %v324 = vld [vmem:[%s304 + $0x34] sm:$0xf]
      %v325 = vld [vmem:[%s304 + $0x38] sm:$0xf]
      %v326 = vld [vmem:[%s304 + $0x3c] sm:$0xf]
      %v327 = vld [vmem:[%s304 + $0x40] sm:$0xf]
      %v328 = vld [vmem:[%s304 + $0x44] sm:$0xf]
      %v329 = vld [vmem:[%s304 + $0x48] sm:$0xf]
      %v330 = vld [vmem:[%s304 + $0x4c] sm:$0xf]
      %v331 = vld [vmem:[%s304 + $0x50] sm:$0xf]
      %v332 = vld [vmem:[%s304 + $0x54] sm:$0xf]
      %v333 = vld [vmem:[%s304 + $0x58] sm:$0xf]
      %v334 = vld [vmem:[%s304 + $0x5c] sm:$0xf]
      %v335 = vld [vmem:[%s304 + $0x60] sm:$0xf]
      %v336 = vld [vmem:[%s304 + $0x64] sm:$0xf]
      %v337 = vld [vmem:[%s304 + $0x68] sm:$0xf]
      %v338 = vld [vmem:[%s304 + $0x6c] sm:$0xf]
      %v339 = vld [vmem:[%s304 + $0x70] sm:$0xf]
      %v340 = vld [vmem:[%s304 + $0x74] sm:$0xf]
      %v341 = vld [vmem:[%s304 + $0x78] sm:$0xf]
      %v342 = vld [vmem:[%s304 + $0x7c] sm:$0xf]
      %v343 = vld [vmem:[%s304 + $0x80] sm:$0xf]
      %v344 = vld [vmem:[%s304 + $0x84] sm:$0xf]
      %v345 = vld [vmem:[%s304 + $0x88] sm:$0xf]
      %v346 = vld [vmem:[%s304 + $0x8c] sm:$0xf]
      %v347 = vld [vmem:[%s304 + $0x90] sm:$0xf]
      %v348 = vld [vmem:[%s304 + $0x94] sm:$0xf]
      %v349 = vld [vmem:[%s304 + $0x98] sm:$0xf]
      %v350 = vld [vmem:[%s304 + $0x9c] sm:$0xf]
      %v351 = vld [vmem:[%s304 + $0xa0] sm:$0xf]
      %v352 = vld [vmem:[%s304 + $0xa4] sm:$0xf]
      %v353 = vld [vmem:[%s304 + $0xa8] sm:$0xf]
      %v354 = vld [vmem:[%s304 + $0xac] sm:$0xf]
      %v355 = vld [vmem:[%s304 + $0xb0] sm:$0xf]
      %v356 = vld [vmem:[%s304 + $0xb4] sm:$0xf]
      %v357 = vld [vmem:[%s304 + $0xb8] sm:$0xf]
      %v358 = vld [vmem:[%s304 + $0xbc] sm:$0xf]
      %v359 = vld [vmem:[%s304 + $0xc0] sm:$0xf]
      %v360 = vld [vmem:[%s304 + $0xc4] sm:$0xf]
      %v361 = vld [vmem:[%s304 + $0xc8] sm:$0xf]
      %v362 = vld [vmem:[%s304 + $0xcc] sm:$0xf]
      %v363 = vld [vmem:[%s304 + $0xd0] sm:$0xf]
      %v364 = vld [vmem:[%s304 + $0xd4] sm:$0xf]
      %v365 = vld [vmem:[%s304 + $0xd8] sm:$0xf]
      %v366 = vld [vmem:[%s304 + $0xdc] sm:$0xf]
      %v367 = vld [vmem:[%s304 + $0xe0] sm:$0xf]
      %v368 = vld [vmem:[%s304 + $0xe4] sm:$0xf]
      %v369 = vld [vmem:[%s304 + $0xe8] sm:$0xf]
      %v370 = vld [vmem:[%s304 + $0xec] sm:$0xf]
      %v371 = vld [vmem:[%s304 + $0xf0] sm:$0xf]
      %v372 = vld [vmem:[%s304 + $0xf4] sm:$0xf]
      %v373 = vld [vmem:[%s304 + $0xf8] sm:$0xf]
      %v374 = vld [vmem:[%s304 + $0xfc] sm:$0xf]
      %v375 = vld [vmem:[%s304 + $0x100] sm:$0xf]
      %v376 = vld [vmem:[%s304 + $0x104] sm:$0xf]
      %v377 = vld [vmem:[%s304 + $0x108] sm:$0xf]
      %v378 = vld [vmem:[%s304 + $0x10c] sm:$0xf]
      %v379 = vld [vmem:[%s304 + $0x110] sm:$0xf]
      %v380 = vld [vmem:[%s304 + $0x114] sm:$0xf]
      %v381 = vld [vmem:[%s304 + $0x118] sm:$0xf]
      %v382 = vld [vmem:[%s304 + $0x11c] sm:$0xf]
      %v383 = vld [vmem:[%s304 + $0x120] sm:$0xf]
      %v384 = vld [vmem:[%s304 + $0x124] sm:$0xf]
      %v385 = vld [vmem:[%s304 + $0x128] sm:$0xf]
      %v386 = vld [vmem:[%s304 + $0x12c] sm:$0xf]
      %v387 = vld [vmem:[%s304 + $0x130] sm:$0xf]
      %v388 = vld [vmem:[%s304 + $0x134] sm:$0xf]
      %v389 = vld [vmem:[%s304 + $0x138] sm:$0xf]
      %v390 = vld [vmem:[%s304 + $0x13c] sm:$0xf]
      %v391 = vld [vmem:[%s304 + $0x140] sm:$0xf]
      %v392 = vld [vmem:[%s304 + $0x144] sm:$0xf]
      %v393 = vld [vmem:[%s304 + $0x148] sm:$0xf]
      %v394 = vld [vmem:[%s304 + $0x14c] sm:$0xf]
      %v395 = vld [vmem:[%s304 + $0x150] sm:$0xf]
      %v396 = vld [vmem:[%s304 + $0x154] sm:$0xf]
      %v397 = vld [vmem:[%s304 + $0x158] sm:$0xf]
      %v398 = vld [vmem:[%s304 + $0x15c] sm:$0xf]
      %v399 = vld [vmem:[%s304 + $0x160] sm:$0xf]
      %v400 = vld [vmem:[%s304 + $0x164] sm:$0xf]
      %v401 = vld [vmem:[%s304 + $0x168] sm:$0xf]
      %v402 = vld [vmem:[%s304 + $0x16c] sm:$0xf]
      %v403 = vld [vmem:[%s304 + $0x170] sm:$0xf]
      %v404 = vld [vmem:[%s304 + $0x174] sm:$0xf]
      %v405 = vld [vmem:[%s304 + $0x178] sm:$0xf]
      %v406 = vld [vmem:[%s304 + $0x17c] sm:$0xf]
      %v407 = vld [vmem:[%s304 + $0x180] sm:$0xf]
      %v408 = vld [vmem:[%s304 + $0x184] sm:$0xf]
      %v409 = vld [vmem:[%s304 + $0x188] sm:$0xf]
      %v410 = vld [vmem:[%s304 + $0x18c] sm:$0xf]
      %v411 = vld [vmem:[%s304 + $0x190] sm:$0xf]
      %v412 = vld [vmem:[%s304 + $0x194] sm:$0xf]
      %v413 = vld [vmem:[%s304 + $0x198] sm:$0xf]
      %v414 = vld [vmem:[%s304 + $0x19c] sm:$0xf]
      %v415 = vld [vmem:[%s304 + $0x1a0] sm:$0xf]
      %v416 = vld [vmem:[%s304 + $0x1a4] sm:$0xf]
      %v417 = vld [vmem:[%s304 + $0x1a8] sm:$0xf]
      %v418 = vld [vmem:[%s304 + $0x1ac] sm:$0xf]
      %v419 = vld [vmem:[%s304 + $0x1b0] sm:$0xf]
      %v420 = vld [vmem:[%s304 + $0x1b4] sm:$0xf]
      %v421 = vld [vmem:[%s304 + $0x1b8] sm:$0xf]
      %v422 = vld [vmem:[%s304 + $0x1bc] sm:$0xf]
      %v423 = vld [vmem:[%s304 + $0x1c0] sm:$0xf]
      %v424 = vld [vmem:[%s304 + $0x1c4] sm:$0xf]
      %v425 = vld [vmem:[%s304 + $0x1c8] sm:$0xf]
      %v426 = vld [vmem:[%s304 + $0x1cc] sm:$0xf]
      %v427 = vld [vmem:[%s304 + $0x1d0] sm:$0xf]
      %v428 = vld [vmem:[%s304 + $0x1d4] sm:$0xf]
      %v429 = vld [vmem:[%s304 + $0x1d8] sm:$0xf]
      %v430 = vld [vmem:[%s304 + $0x1dc] sm:$0xf]
      %v431 = vld [vmem:[%s304 + $0x1e0] sm:$0xf]
      %v432 = vld [vmem:[%s304 + $0x1e4] sm:$0xf]
      %v433 = vld [vmem:[%s304 + $0x1e8] sm:$0xf]
      %v434 = vld [vmem:[%s304 + $0x1ec] sm:$0xf]
      %v435 = vld [vmem:[%s304 + $0x1f0] sm:$0xf]
      %v436 = vld [vmem:[%s304 + $0x1f4] sm:$0xf]
      %v437 = vld [vmem:[%s304 + $0x1f8] sm:$0xf]
      %v438 = vld [vmem:[%s304 + $0x1fc] sm:$0xf]
      %v439 = vld [vmem:[%s304 + $0x200] sm:$0xf]
      %v440 = vld [vmem:[%s304 + $0x204] sm:$0xf]
      %v441 = vld [vmem:[%s304 + $0x208] sm:$0xf]
      %v442 = vld [vmem:[%s304 + $0x20c] sm:$0xf]
      %v443 = vld [vmem:[%s304 + $0x210] sm:$0xf]
      %v444 = vld [vmem:[%s304 + $0x214] sm:$0xf]
      %v445 = vld [vmem:[%s304 + $0x218] sm:$0xf]
      %v446 = vld [vmem:[%s304 + $0x21c] sm:$0xf]
      %v447 = vld [vmem:[%s304 + $0x220] sm:$0xf]
      %v448 = vld [vmem:[%s304 + $0x224] sm:$0xf]
      %v449 = vld [vmem:[%s304 + $0x228] sm:$0xf]
      %v450 = vld [vmem:[%s304 + $0x22c] sm:$0xf]
      %v451 = vld [vmem:[%s304 + $0x230] sm:$0xf]
      %v452 = vld [vmem:[%s304 + $0x234] sm:$0xf]
      %v453 = vld [vmem:[%s304 + $0x238] sm:$0xf]
      %v454 = vld [vmem:[%s304 + $0x23c] sm:$0xf]
      %v455 = vld [vmem:[%s304 + $0x240] sm:$0xf]
      %v456 = vld [vmem:[%s304 + $0x244] sm:$0xf]
      %v457 = vld [vmem:[%s304 + $0x248] sm:$0xf]
      %v458 = vld [vmem:[%s304 + $0x24c] sm:$0xf]
      %v459 = vld [vmem:[%s304 + $0x250] sm:$0xf]
      %v460 = vld [vmem:[%s304 + $0x254] sm:$0xf]
      %v461 = vld [vmem:[%s304 + $0x258] sm:$0xf]
      %v462 = vld [vmem:[%s304 + $0x25c] sm:$0xf]
      %v463 = vld [vmem:[%s304 + $0x260] sm:$0xf]
      %v464 = vld [vmem:[%s304 + $0x264] sm:$0xf]
      %v465 = vld [vmem:[%s304 + $0x268] sm:$0xf]
      %v466 = vld [vmem:[%s304 + $0x26c] sm:$0xf]
      %v467 = vld [vmem:[%s304 + $0x270] sm:$0xf]
      %v468 = vld [vmem:[%s304 + $0x274] sm:$0xf]
      %v469 = vld [vmem:[%s304 + $0x278] sm:$0xf]
      %v470 = vld [vmem:[%s304 + $0x27c] sm:$0xf]
      %v471 = vld [vmem:[%s304 + $0x280] sm:$0xf]
      %v472 = vld [vmem:[%s304 + $0x284] sm:$0xf]
      %v473 = vld [vmem:[%s304 + $0x288] sm:$0xf]
      %v474 = vld [vmem:[%s304 + $0x28c] sm:$0xf]
      %v475 = vld [vmem:[%s304 + $0x290] sm:$0xf]
      %v476 = vld [vmem:[%s304 + $0x294] sm:$0xf]
      %v477 = vld [vmem:[%s304 + $0x298] sm:$0xf]
      %v478 = vld [vmem:[%s304 + $0x29c] sm:$0xf]
      %v479 = vld [vmem:[%s304 + $0x2a0] sm:$0xf]
      %v480 = vld [vmem:[%s304 + $0x2a4] sm:$0xf]
      %v481 = vld [vmem:[%s304 + $0x2a8] sm:$0xf]
      %v482 = vld [vmem:[%s304 + $0x2ac] sm:$0xf]
      %v483 = vld [vmem:[%s304 + $0x2b0] sm:$0xf]
      %v484 = vld [vmem:[%s304 + $0x2b4] sm:$0xf]
      %v485 = vld [vmem:[%s304 + $0x2b8] sm:$0xf]
      %v486 = vld [vmem:[%s304 + $0x2bc] sm:$0xf]
      %v487 = vld [vmem:[%s304 + $0x2c0] sm:$0xf]
      %v488 = vld [vmem:[%s304 + $0x2c4] sm:$0xf]
      %v489 = vld [vmem:[%s304 + $0x2c8] sm:$0xf]
      %v490 = vld [vmem:[%s304 + $0x2cc] sm:$0xf]
      %v491 = vld [vmem:[%s304 + $0x2d0] sm:$0xf]
      %v492 = vld [vmem:[%s304 + $0x2d4] sm:$0xf]
      %v493 = vld [vmem:[%s304 + $0x2d8] sm:$0xf]
      %v494 = vld [vmem:[%s304 + $0x2dc] sm:$0xf]
      %v495 = vld [vmem:[%s304 + $0x2e0] sm:$0xf]
      %v496 = vld [vmem:[%s304 + $0x2e4] sm:$0xf]
      %v497 = vld [vmem:[%s304 + $0x2e8] sm:$0xf]
      %v498 = vld [vmem:[%s304 + $0x2ec] sm:$0xf]
      %v499 = vld [vmem:[%s304 + $0x2f0] sm:$0xf]
      %v500 = vld [vmem:[%s304 + $0x2f4] sm:$0xf]
      %v501 = vld [vmem:[%s304 + $0x2f8] sm:$0xf]
      %v502 = vld [vmem:[%s304 + $0x2fc] sm:$0xf]
      %v503 = vld [vmem:[%s304 + $0x300] sm:$0xf]
      %v504 = vld [vmem:[%s304 + $0x304] sm:$0xf]
      %v505 = vld [vmem:[%s304 + $0x308] sm:$0xf]
      %v506 = vld [vmem:[%s304 + $0x30c] sm:$0xf]
      %v507 = vld [vmem:[%s304 + $0x310] sm:$0xf]
      %v508 = vld [vmem:[%s304 + $0x314] sm:$0xf]
      %v509 = vld [vmem:[%s304 + $0x318] sm:$0xf]
      %v510 = vld [vmem:[%s304 + $0x31c] sm:$0xf]
      %v511 = vld [vmem:[%s304 + $0x320] sm:$0xf]
      %v512 = vld [vmem:[%s304 + $0x324] sm:$0xf]
      %v513 = vld [vmem:[%s304 + $0x328] sm:$0xf]
      %v514 = vld [vmem:[%s304 + $0x32c] sm:$0xf]
      %v515 = vld [vmem:[%s304 + $0x330] sm:$0xf]
      %v516 = vld [vmem:[%s304 + $0x334] sm:$0xf]
      %v517 = vld [vmem:[%s304 + $0x338] sm:$0xf]
      %v518 = vld [vmem:[%s304 + $0x33c] sm:$0xf]
      %v519 = vld [vmem:[%s304 + $0x340] sm:$0xf]
      %v520 = vld [vmem:[%s304 + $0x344] sm:$0xf]
      %v521 = vld [vmem:[%s304 + $0x348] sm:$0xf]
      %v522 = vld [vmem:[%s304 + $0x34c] sm:$0xf]
      %v523 = vld [vmem:[%s304 + $0x350] sm:$0xf]
      %v524 = vld [vmem:[%s304 + $0x354] sm:$0xf]
      %v525 = vld [vmem:[%s304 + $0x358] sm:$0xf]
      %v526 = vld [vmem:[%s304 + $0x35c] sm:$0xf]
      %v527 = vld [vmem:[%s304 + $0x360] sm:$0xf]
      %v528 = vld [vmem:[%s304 + $0x364] sm:$0xf]
      %v529 = vld [vmem:[%s304 + $0x368] sm:$0xf]
      %v530 = vld [vmem:[%s304 + $0x36c] sm:$0xf]
      %v531 = vld [vmem:[%s304 + $0x370] sm:$0xf]
      %v532 = vld [vmem:[%s304 + $0x374] sm:$0xf]
      %v533 = vld [vmem:[%s304 + $0x378] sm:$0xf]
      %v534 = vld [vmem:[%s304 + $0x37c] sm:$0xf]
      %v535 = vld [vmem:[%s304 + $0x380] sm:$0xf]
      %v536 = vld [vmem:[%s304 + $0x384] sm:$0xf]
      %v537 = vld [vmem:[%s304 + $0x388] sm:$0xf]
      %v538 = vld [vmem:[%s304 + $0x38c] sm:$0xf]
      %v539 = vld [vmem:[%s304 + $0x390] sm:$0xf]
      %v540 = vld [vmem:[%s304 + $0x394] sm:$0xf]
      %v541 = vld [vmem:[%s304 + $0x398] sm:$0xf]
      %v542 = vld [vmem:[%s304 + $0x39c] sm:$0xf]
      %v543 = vld [vmem:[%s304 + $0x3a0] sm:$0xf]
      %v544 = vld [vmem:[%s304 + $0x3a4] sm:$0xf]
      %v545 = vld [vmem:[%s304 + $0x3a8] sm:$0xf]
      %v546 = vld [vmem:[%s304 + $0x3ac] sm:$0xf]
      %v547 = vld [vmem:[%s304 + $0x3b0] sm:$0xf]
      %v548 = vld [vmem:[%s304 + $0x3b4] sm:$0xf]
      %v549 = vld [vmem:[%s304 + $0x3b8] sm:$0xf]
      %v550 = vld [vmem:[%s304 + $0x3bc] sm:$0xf]
      %v551 = vld [vmem:[%s304 + $0x3c0] sm:$0xf]
      %v552 = vld [vmem:[%s304 + $0x3c4] sm:$0xf]
      %v553 = vld [vmem:[%s304 + $0x3c8] sm:$0xf]
      %v554 = vld [vmem:[%s304 + $0x3cc] sm:$0xf]
      %v555 = vld [vmem:[%s304 + $0x3d0] sm:$0xf]
      %v556 = vld [vmem:[%s304 + $0x3d4] sm:$0xf]
      %v557 = vld [vmem:[%s304 + $0x3d8] sm:$0xf]
      %v558 = vld [vmem:[%s304 + $0x3dc] sm:$0xf]
      %v559 = vld [vmem:[%s304 + $0x3e0] sm:$0xf]
      %v560 = vld [vmem:[%s304 + $0x3e4] sm:$0xf]
      %v561 = vld [vmem:[%s304 + $0x3e8] sm:$0xf]
      %v562 = vld [vmem:[%s304 + $0x3ec] sm:$0xf]
      %v563 = vld [vmem:[%s304 + $0x3f0] sm:$0xf]
      %v564 = vld [vmem:[%s304 + $0x3f4] sm:$0xf]
      %v565 = vld [vmem:[%s304 + $0x3f8] sm:$0xf]
      %v566 = vld [vmem:[%s304 + $0x3fc] sm:$0xf]
      %v567 = vld [vmem:[%s2] sm:$0xf]
      %v568 = vld [vmem:[%s2 + $0x4] sm:$0x1]
      %v569 = vld [vmem:[%s3] sm:$0x1]
      %v571 = vlaneseq
      %v572 = vshrl.u32 %v571, 7
      %v573 = vsub.s32 0, %v572
      %v574 = vrot.slane %v569, %v573
      %v832 = vunpack.c.l.b16 %v311
      %v833 = vunpack.c.l.b16 %v312
      %v834 = vunpack.c.l.b16 %v313
      %v835 = vunpack.c.l.b16 %v314
      %v836 = vunpack.c.l.b16 %v315
      %v837 = vunpack.c.l.b16 %v316
      %v838 = vunpack.c.l.b16 %v317
      %v839 = vunpack.c.l.b16 %v318
      %v840 = vunpack.c.l.b16 %v319
      %v841 = vunpack.c.l.b16 %v320
      %v842 = vunpack.c.l.b16 %v321
      %v843 = vunpack.c.l.b16 %v322
      %v844 = vunpack.c.l.b16 %v323
      %v845 = vunpack.c.l.b16 %v324
      %v846 = vunpack.c.l.b16 %v325
      %v847 = vunpack.c.l.b16 %v326
      %v848 = vunpack.c.l.b16 %v327
      %v849 = vunpack.c.l.b16 %v328
      %v850 = vunpack.c.l.b16 %v329
      %v851 = vunpack.c.l.b16 %v330
      %v852 = vunpack.c.l.b16 %v331
      %v853 = vunpack.c.l.b16 %v332
      %v854 = vunpack.c.l.b16 %v333
      %v855 = vunpack.c.l.b16 %v334
      %v856 = vunpack.c.l.b16 %v335
      %v857 = vunpack.c.l.b16 %v336
      %v858 = vunpack.c.l.b16 %v337
      %v859 = vunpack.c.l.b16 %v338
      %v860 = vunpack.c.l.b16 %v339
      %v861 = vunpack.c.l.b16 %v340
      %v862 = vunpack.c.l.b16 %v341
      %v863 = vunpack.c.l.b16 %v342
      %v864 = vunpack.c.l.b16 %v343
      %v865 = vunpack.c.l.b16 %v344
      %v866 = vunpack.c.l.b16 %v345
      %v867 = vunpack.c.l.b16 %v346
      %v868 = vunpack.c.l.b16 %v347
      %v869 = vunpack.c.l.b16 %v348
      %v870 = vunpack.c.l.b16 %v349
      %v871 = vunpack.c.l.b16 %v350
      %v872 = vunpack.c.l.b16 %v351
      %v873 = vunpack.c.l.b16 %v352
      %v874 = vunpack.c.l.b16 %v353
      %v875 = vunpack.c.l.b16 %v354
      %v876 = vunpack.c.l.b16 %v355
      %v877 = vunpack.c.l.b16 %v356
      %v878 = vunpack.c.l.b16 %v357
      %v879 = vunpack.c.l.b16 %v358
      %v880 = vunpack.c.l.b16 %v359
      %v881 = vunpack.c.l.b16 %v360
      %v882 = vunpack.c.l.b16 %v361
      %v883 = vunpack.c.l.b16 %v362
      %v884 = vunpack.c.l.b16 %v363
      %v885 = vunpack.c.l.b16 %v364
      %v886 = vunpack.c.l.b16 %v365
      %v887 = vunpack.c.l.b16 %v366
      %v888 = vunpack.c.l.b16 %v367
      %v889 = vunpack.c.l.b16 %v368
      %v890 = vunpack.c.l.b16 %v369
      %v891 = vunpack.c.l.b16 %v370
      %v892 = vunpack.c.l.b16 %v371
      %v893 = vunpack.c.l.b16 %v372
      %v894 = vunpack.c.l.b16 %v373
      %v895 = vunpack.c.l.b16 %v374
      %v896 = vunpack.c.l.b16 %v375
      %v897 = vunpack.c.l.b16 %v376
      %v898 = vunpack.c.l.b16 %v377
      %v899 = vunpack.c.l.b16 %v378
      %v900 = vunpack.c.l.b16 %v379
      %v901 = vunpack.c.l.b16 %v380
      %v902 = vunpack.c.l.b16 %v381
      %v903 = vunpack.c.l.b16 %v382
      %v904 = vunpack.c.l.b16 %v383
      %v905 = vunpack.c.l.b16 %v384
      %v906 = vunpack.c.l.b16 %v385
      %v907 = vunpack.c.l.b16 %v386
      %v908 = vunpack.c.l.b16 %v387
      %v909 = vunpack.c.l.b16 %v388
      %v910 = vunpack.c.l.b16 %v389
      %v911 = vunpack.c.l.b16 %v390
      %v912 = vunpack.c.l.b16 %v391
      %v913 = vunpack.c.l.b16 %v392
      %v914 = vunpack.c.l.b16 %v393
      %v915 = vunpack.c.l.b16 %v394
      %v916 = vunpack.c.l.b16 %v395
      %v917 = vunpack.c.l.b16 %v396
      %v918 = vunpack.c.l.b16 %v397
      %v919 = vunpack.c.l.b16 %v398
      %v920 = vunpack.c.l.b16 %v399
      %v921 = vunpack.c.l.b16 %v400
      %v922 = vunpack.c.l.b16 %v401
      %v923 = vunpack.c.l.b16 %v402
      %v924 = vunpack.c.l.b16 %v403
      %v925 = vunpack.c.l.b16 %v404
      %v926 = vunpack.c.l.b16 %v405
      %v927 = vunpack.c.l.b16 %v406
      %v928 = vunpack.c.l.b16 %v407
      %v929 = vunpack.c.l.b16 %v408
      %v930 = vunpack.c.l.b16 %v409
      %v931 = vunpack.c.l.b16 %v410
      %v932 = vunpack.c.l.b16 %v411
      %v933 = vunpack.c.l.b16 %v412
      %v934 = vunpack.c.l.b16 %v413
      %v935 = vunpack.c.l.b16 %v414
      %v936 = vunpack.c.l.b16 %v415
      %v937 = vunpack.c.l.b16 %v416
      %v938 = vunpack.c.l.b16 %v417
      %v939 = vunpack.c.l.b16 %v418
      %v940 = vunpack.c.l.b16 %v419
      %v941 = vunpack.c.l.b16 %v420
      %v942 = vunpack.c.l.b16 %v421
      %v943 = vunpack.c.l.b16 %v422
      %v944 = vunpack.c.l.b16 %v423
      %v945 = vunpack.c.l.b16 %v424
      %v946 = vunpack.c.l.b16 %v425
      %v947 = vunpack.c.l.b16 %v426
      %v948 = vunpack.c.l.b16 %v427
      %v949 = vunpack.c.l.b16 %v428
      %v950 = vunpack.c.l.b16 %v429
      %v951 = vunpack.c.l.b16 %v430
      %v952 = vunpack.c.l.b16 %v431
      %v953 = vunpack.c.l.b16 %v432
      %v954 = vunpack.c.l.b16 %v433
      %v955 = vunpack.c.l.b16 %v434
      %v956 = vunpack.c.l.b16 %v435
      %v957 = vunpack.c.l.b16 %v436
      %v958 = vunpack.c.l.b16 %v437
      %v959 = vunpack.c.l.b16 %v438
      %v960 = vunpack.c.l.b16 %v439
      %v961 = vunpack.c.l.b16 %v440
      %v962 = vunpack.c.l.b16 %v441
      %v963 = vunpack.c.l.b16 %v442
      %v964 = vunpack.c.l.b16 %v443
      %v965 = vunpack.c.l.b16 %v444
      %v966 = vunpack.c.l.b16 %v445
      %v967 = vunpack.c.l.b16 %v446
      %v968 = vunpack.c.l.b16 %v447
      %v969 = vunpack.c.l.b16 %v448
      %v970 = vunpack.c.l.b16 %v449
      %v971 = vunpack.c.l.b16 %v450
      %v972 = vunpack.c.l.b16 %v451
      %v973 = vunpack.c.l.b16 %v452
      %v974 = vunpack.c.l.b16 %v453
      %v975 = vunpack.c.l.b16 %v454
      %v976 = vunpack.c.l.b16 %v455
      %v977 = vunpack.c.l.b16 %v456
      %v978 = vunpack.c.l.b16 %v457
      %v979 = vunpack.c.l.b16 %v458
      %v980 = vunpack.c.l.b16 %v459
      %v981 = vunpack.c.l.b16 %v460
      %v982 = vunpack.c.l.b16 %v461
      %v983 = vunpack.c.l.b16 %v462
      %v984 = vunpack.c.l.b16 %v463
      %v985 = vunpack.c.l.b16 %v464
      %v986 = vunpack.c.l.b16 %v465
      %v987 = vunpack.c.l.b16 %v466
      %v988 = vunpack.c.l.b16 %v467
      %v989 = vunpack.c.l.b16 %v468
      %v990 = vunpack.c.l.b16 %v469
      %v991 = vunpack.c.l.b16 %v470
      %v992 = vunpack.c.l.b16 %v471
      %v993 = vunpack.c.l.b16 %v472
      %v994 = vunpack.c.l.b16 %v473
      %v995 = vunpack.c.l.b16 %v474
      %v996 = vunpack.c.l.b16 %v475
      %v997 = vunpack.c.l.b16 %v476
      %v998 = vunpack.c.l.b16 %v477
      %v999 = vunpack.c.l.b16 %v478
      %v1000 = vunpack.c.l.b16 %v479
      %v1001 = vunpack.c.l.b16 %v480
      %v1002 = vunpack.c.l.b16 %v481
      %v1003 = vunpack.c.l.b16 %v482
      %v1004 = vunpack.c.l.b16 %v483
      %v1005 = vunpack.c.l.b16 %v484
      %v1006 = vunpack.c.l.b16 %v485
      %v1007 = vunpack.c.l.b16 %v486
      %v1008 = vunpack.c.l.b16 %v487
      %v1009 = vunpack.c.l.b16 %v488
      %v1010 = vunpack.c.l.b16 %v489
      %v1011 = vunpack.c.l.b16 %v490
      %v1012 = vunpack.c.l.b16 %v491
      %v1013 = vunpack.c.l.b16 %v492
      %v1014 = vunpack.c.l.b16 %v493
      %v1015 = vunpack.c.l.b16 %v494
      %v1016 = vunpack.c.l.b16 %v495
      %v1017 = vunpack.c.l.b16 %v496
      %v1018 = vunpack.c.l.b16 %v497
      %v1019 = vunpack.c.l.b16 %v498
      %v1020 = vunpack.c.l.b16 %v499
      %v1021 = vunpack.c.l.b16 %v500
      %v1022 = vunpack.c.l.b16 %v501
      %v1023 = vunpack.c.l.b16 %v502
      %v1024 = vunpack.c.l.b16 %v503
      %v1025 = vunpack.c.l.b16 %v504
      %v1026 = vunpack.c.l.b16 %v505
      %v1027 = vunpack.c.l.b16 %v506
      %v1028 = vunpack.c.l.b16 %v507
      %v1029 = vunpack.c.l.b16 %v508
      %v1030 = vunpack.c.l.b16 %v509
      %v1031 = vunpack.c.l.b16 %v510
      %v1032 = vunpack.c.l.b16 %v511
      %v1033 = vunpack.c.l.b16 %v512
      %v1034 = vunpack.c.l.b16 %v513
      %v1035 = vunpack.c.l.b16 %v514
      %v1036 = vunpack.c.l.b16 %v515
      %v1037 = vunpack.c.l.b16 %v516
      %v1038 = vunpack.c.l.b16 %v517
      %v1039 = vunpack.c.l.b16 %v518
      %v1040 = vunpack.c.l.b16 %v519
      %v1041 = vunpack.c.l.b16 %v520
      %v1042 = vunpack.c.l.b16 %v521
      %v1043 = vunpack.c.l.b16 %v522
      %v1044 = vunpack.c.l.b16 %v523
      %v1045 = vunpack.c.l.b16 %v524
      %v1046 = vunpack.c.l.b16 %v525
      %v1047 = vunpack.c.l.b16 %v526
      %v1048 = vunpack.c.l.b16 %v527
      %v1049 = vunpack.c.l.b16 %v528
      %v1050 = vunpack.c.l.b16 %v529
      %v1051 = vunpack.c.l.b16 %v530
      %v1052 = vunpack.c.l.b16 %v531
      %v1053 = vunpack.c.l.b16 %v532
      %v1054 = vunpack.c.l.b16 %v533
      %v1055 = vunpack.c.l.b16 %v534
      %v1056 = vunpack.c.l.b16 %v535
      %v1057 = vunpack.c.l.b16 %v536
      %v1058 = vunpack.c.l.b16 %v537
      %v1059 = vunpack.c.l.b16 %v538
      %v1060 = vunpack.c.l.b16 %v539
      %v1061 = vunpack.c.l.b16 %v540
      %v1062 = vunpack.c.l.b16 %v541
      %v1063 = vunpack.c.l.b16 %v542
      %v1064 = vunpack.c.l.b16 %v543
      %v1065 = vunpack.c.l.b16 %v544
      %v1066 = vunpack.c.l.b16 %v545
      %v1067 = vunpack.c.l.b16 %v546
      %v1068 = vunpack.c.l.b16 %v547
      %v1069 = vunpack.c.l.b16 %v548
      %v1070 = vunpack.c.l.b16 %v549
      %v1071 = vunpack.c.l.b16 %v550
      %v1072 = vunpack.c.l.b16 %v551
      %v1073 = vunpack.c.l.b16 %v552
      %v1074 = vunpack.c.l.b16 %v553
      %v1075 = vunpack.c.l.b16 %v554
      %v1076 = vunpack.c.l.b16 %v555
      %v1077 = vunpack.c.l.b16 %v556
      %v1078 = vunpack.c.l.b16 %v557
      %v1079 = vunpack.c.l.b16 %v558
      %v1080 = vunpack.c.l.b16 %v559
      %v1081 = vunpack.c.l.b16 %v560
      %v1082 = vunpack.c.l.b16 %v561
      %v1083 = vunpack.c.l.b16 %v562
      %v1084 = vunpack.c.l.b16 %v563
      %v1085 = vunpack.c.l.b16 %v564
      %v1086 = vunpack.c.l.b16 %v565
      %v1087 = vunpack.c.l.b16 %v566
      %v1088 = vpack.c.b16 %v833, %v832
      %v1089 = vpack.c.b16 %v835, %v834
      %v1090 = vpack.c.b16 %v837, %v836
      %v1091 = vpack.c.b16 %v839, %v838
      %v1092 = vpack.c.b16 %v841, %v840
      %v1093 = vpack.c.b16 %v843, %v842
      %v1094 = vpack.c.b16 %v845, %v844
      %v1095 = vpack.c.b16 %v847, %v846
      %v1096 = vpack.c.b16 %v849, %v848
      %v1097 = vpack.c.b16 %v851, %v850
      %v1098 = vpack.c.b16 %v853, %v852
      %v1099 = vpack.c.b16 %v855, %v854
      %v1100 = vpack.c.b16 %v857, %v856
      %v1101 = vpack.c.b16 %v859, %v858
      %v1102 = vpack.c.b16 %v861, %v860
      %v1103 = vpack.c.b16 %v863, %v862
      %v1104 = vpack.c.b16 %v865, %v864
      %v1105 = vpack.c.b16 %v867, %v866
      %v1106 = vpack.c.b16 %v869, %v868
      %v1107 = vpack.c.b16 %v871, %v870
      %v1108 = vpack.c.b16 %v873, %v872
      %v1109 = vpack.c.b16 %v875, %v874
      %v1110 = vpack.c.b16 %v877, %v876
      %v1111 = vpack.c.b16 %v879, %v878
      %v1112 = vpack.c.b16 %v881, %v880
      %v1113 = vpack.c.b16 %v883, %v882
      %v1114 = vpack.c.b16 %v885, %v884
      %v1115 = vpack.c.b16 %v887, %v886
      %v1116 = vpack.c.b16 %v889, %v888
      %v1117 = vpack.c.b16 %v891, %v890
      %v1118 = vpack.c.b16 %v893, %v892
      %v1119 = vpack.c.b16 %v895, %v894
      %v1120 = vpack.c.b16 %v897, %v896
      %v1121 = vpack.c.b16 %v899, %v898
      %v1122 = vpack.c.b16 %v901, %v900
      %v1123 = vpack.c.b16 %v903, %v902
      %v1124 = vpack.c.b16 %v905, %v904
      %v1125 = vpack.c.b16 %v907, %v906
      %v1126 = vpack.c.b16 %v909, %v908
      %v1127 = vpack.c.b16 %v911, %v910
      %v1128 = vpack.c.b16 %v913, %v912
      %v1129 = vpack.c.b16 %v915, %v914
      %v1130 = vpack.c.b16 %v917, %v916
      %v1131 = vpack.c.b16 %v919, %v918
      %v1132 = vpack.c.b16 %v921, %v920
      %v1133 = vpack.c.b16 %v923, %v922
      %v1134 = vpack.c.b16 %v925, %v924
      %v1135 = vpack.c.b16 %v927, %v926
      %v1136 = vpack.c.b16 %v929, %v928
      %v1137 = vpack.c.b16 %v931, %v930
      %v1138 = vpack.c.b16 %v933, %v932
      %v1139 = vpack.c.b16 %v935, %v934
      %v1140 = vpack.c.b16 %v937, %v936
      %v1141 = vpack.c.b16 %v939, %v938
      %v1142 = vpack.c.b16 %v941, %v940
      %v1143 = vpack.c.b16 %v943, %v942
      %v1144 = vpack.c.b16 %v945, %v944
      %v1145 = vpack.c.b16 %v947, %v946
      %v1146 = vpack.c.b16 %v949, %v948
      %v1147 = vpack.c.b16 %v951, %v950
      %v1148 = vpack.c.b16 %v953, %v952
      %v1149 = vpack.c.b16 %v955, %v954
      %v1150 = vpack.c.b16 %v957, %v956
      %v1151 = vpack.c.b16 %v959, %v958
      %v1152 = vpack.c.b16 %v961, %v960
      %v1153 = vpack.c.b16 %v963, %v962
      %v1154 = vpack.c.b16 %v965, %v964
      %v1155 = vpack.c.b16 %v967, %v966
      %v1156 = vpack.c.b16 %v969, %v968
      %v1157 = vpack.c.b16 %v971, %v970
      %v1158 = vpack.c.b16 %v973, %v972
      %v1159 = vpack.c.b16 %v975, %v974
      %v1160 = vpack.c.b16 %v977, %v976
      %v1161 = vpack.c.b16 %v979, %v978
      %v1162 = vpack.c.b16 %v981, %v980
      %v1163 = vpack.c.b16 %v983, %v982
      %v1164 = vpack.c.b16 %v985, %v984
      %v1165 = vpack.c.b16 %v987, %v986
      %v1166 = vpack.c.b16 %v989, %v988
      %v1167 = vpack.c.b16 %v991, %v990
      %v1168 = vpack.c.b16 %v993, %v992
      %v1169 = vpack.c.b16 %v995, %v994
      %v1170 = vpack.c.b16 %v997, %v996
      %v1171 = vpack.c.b16 %v999, %v998
      %v1172 = vpack.c.b16 %v1001, %v1000
      %v1173 = vpack.c.b16 %v1003, %v1002
      %v1174 = vpack.c.b16 %v1005, %v1004
      %v1175 = vpack.c.b16 %v1007, %v1006
      %v1176 = vpack.c.b16 %v1009, %v1008
      %v1177 = vpack.c.b16 %v1011, %v1010
      %v1178 = vpack.c.b16 %v1013, %v1012
      %v1179 = vpack.c.b16 %v1015, %v1014
      %v1180 = vpack.c.b16 %v1017, %v1016
      %v1181 = vpack.c.b16 %v1019, %v1018
      %v1182 = vpack.c.b16 %v1021, %v1020
      %v1183 = vpack.c.b16 %v1023, %v1022
      %v1184 = vpack.c.b16 %v1025, %v1024
      %v1185 = vpack.c.b16 %v1027, %v1026
      %v1186 = vpack.c.b16 %v1029, %v1028
      %v1187 = vpack.c.b16 %v1031, %v1030
      %v1188 = vpack.c.b16 %v1033, %v1032
      %v1189 = vpack.c.b16 %v1035, %v1034
      %v1190 = vpack.c.b16 %v1037, %v1036
      %v1191 = vpack.c.b16 %v1039, %v1038
      %v1192 = vpack.c.b16 %v1041, %v1040
      %v1193 = vpack.c.b16 %v1043, %v1042
      %v1194 = vpack.c.b16 %v1045, %v1044
      %v1195 = vpack.c.b16 %v1047, %v1046
      %v1196 = vpack.c.b16 %v1049, %v1048
      %v1197 = vpack.c.b16 %v1051, %v1050
      %v1198 = vpack.c.b16 %v1053, %v1052
      %v1199 = vpack.c.b16 %v1055, %v1054
      %v1200 = vpack.c.b16 %v1057, %v1056
      %v1201 = vpack.c.b16 %v1059, %v1058
      %v1202 = vpack.c.b16 %v1061, %v1060
      %v1203 = vpack.c.b16 %v1063, %v1062
      %v1204 = vpack.c.b16 %v1065, %v1064
      %v1205 = vpack.c.b16 %v1067, %v1066
      %v1206 = vpack.c.b16 %v1069, %v1068
      %v1207 = vpack.c.b16 %v1071, %v1070
      %v1208 = vpack.c.b16 %v1073, %v1072
      %v1209 = vpack.c.b16 %v1075, %v1074
      %v1210 = vpack.c.b16 %v1077, %v1076
      %v1211 = vpack.c.b16 %v1079, %v1078
      %v1212 = vpack.c.b16 %v1081, %v1080
      %v1213 = vpack.c.b16 %v1083, %v1082
      %v1214 = vpack.c.b16 %v1085, %v1084
      %v1215 = vpack.c.b16 %v1087, %v1086
      %v1218 = vunpack.c.l.b16 %v567
      %v1219 = vunpack.c.l.b16 %v568
      %v1220 = vpack.c.b16 %v1219, %v1218
      %vm1221 = vcmask 72704
      %v1223 = vsel %vm1221, %v1088, 0
      %v1226 = vsel %vm1221, %v1089, 0
      %v1229 = vsel %vm1221, %v1090, 0
      %v1232 = vsel %vm1221, %v1091, 0
      %v1235 = vsel %vm1221, %v1092, 0
      %v1238 = vsel %vm1221, %v1093, 0
      %v1241 = vsel %vm1221, %v1094, 0
      %v1244 = vsel %vm1221, %v1095, 0
      %v1247 = vsel %vm1221, %v1096, 0
      %v1250 = vsel %vm1221, %v1097, 0
      %v1253 = vsel %vm1221, %v1098, 0
      %v1256 = vsel %vm1221, %v1099, 0
      %v1259 = vsel %vm1221, %v1100, 0
      %v1262 = vsel %vm1221, %v1101, 0
      %v1265 = vsel %vm1221, %v1102, 0
      %v1268 = vsel %vm1221, %v1103, 0
      %v1271 = vsel %vm1221, %v1104, 0
      %v1274 = vsel %vm1221, %v1105, 0
      %v1277 = vsel %vm1221, %v1106, 0
      %v1280 = vsel %vm1221, %v1107, 0
      %v1283 = vsel %vm1221, %v1108, 0
      %v1286 = vsel %vm1221, %v1109, 0
      %v1289 = vsel %vm1221, %v1110, 0
      %v1292 = vsel %vm1221, %v1111, 0
      %v1295 = vsel %vm1221, %v1112, 0
      %v1298 = vsel %vm1221, %v1113, 0
      %v1301 = vsel %vm1221, %v1114, 0
      %v1304 = vsel %vm1221, %v1115, 0
      %v1307 = vsel %vm1221, %v1116, 0
      %v1310 = vsel %vm1221, %v1117, 0
      %v1313 = vsel %vm1221, %v1118, 0
      %v1316 = vsel %vm1221, %v1119, 0
      %v1319 = vsel %vm1221, %v1120, 0
      %v1322 = vsel %vm1221, %v1121, 0
      %v1325 = vsel %vm1221, %v1122, 0
      %v1328 = vsel %vm1221, %v1123, 0
      %v1331 = vsel %vm1221, %v1124, 0
      %v1334 = vsel %vm1221, %v1125, 0
      %v1337 = vsel %vm1221, %v1126, 0
      %v1340 = vsel %vm1221, %v1127, 0
      %v1343 = vsel %vm1221, %v1128, 0
      %v1346 = vsel %vm1221, %v1129, 0
      %v1349 = vsel %vm1221, %v1130, 0
      %v1352 = vsel %vm1221, %v1131, 0
      %v1355 = vsel %vm1221, %v1132, 0
      %v1358 = vsel %vm1221, %v1133, 0
      %v1361 = vsel %vm1221, %v1134, 0
      %v1364 = vsel %vm1221, %v1135, 0
      %v1367 = vsel %vm1221, %v1136, 0
      %v1370 = vsel %vm1221, %v1137, 0
      %v1373 = vsel %vm1221, %v1138, 0
      %v1376 = vsel %vm1221, %v1139, 0
      %v1379 = vsel %vm1221, %v1140, 0
      %v1382 = vsel %vm1221, %v1141, 0
      %v1385 = vsel %vm1221, %v1142, 0
      %v1388 = vsel %vm1221, %v1143, 0
      %v1391 = vsel %vm1221, %v1144, 0
      %v1394 = vsel %vm1221, %v1145, 0
      %v1397 = vsel %vm1221, %v1146, 0
      %v1400 = vsel %vm1221, %v1147, 0
      %v1403 = vsel %vm1221, %v1148, 0
      %v1406 = vsel %vm1221, %v1149, 0
      %v1409 = vsel %vm1221, %v1150, 0
      %v1412 = vsel %vm1221, %v1151, 0
      %v1415 = vsel %vm1221, %v1152, 0
      %v1418 = vsel %vm1221, %v1153, 0
      %v1421 = vsel %vm1221, %v1154, 0
      %v1424 = vsel %vm1221, %v1155, 0
      %v1427 = vsel %vm1221, %v1156, 0
      %v1430 = vsel %vm1221, %v1157, 0
      %v1433 = vsel %vm1221, %v1158, 0
      %v1436 = vsel %vm1221, %v1159, 0
      %v1439 = vsel %vm1221, %v1160, 0
      %v1442 = vsel %vm1221, %v1161, 0
      %v1445 = vsel %vm1221, %v1162, 0
      %v1448 = vsel %vm1221, %v1163, 0
      %v1451 = vsel %vm1221, %v1164, 0
      %v1454 = vsel %vm1221, %v1165, 0
      %v1457 = vsel %vm1221, %v1166, 0
      %v1460 = vsel %vm1221, %v1167, 0
      %v1463 = vsel %vm1221, %v1168, 0
      %v1466 = vsel %vm1221, %v1169, 0
      %v1469 = vsel %vm1221, %v1170, 0
      %v1472 = vsel %vm1221, %v1171, 0
      %v1475 = vsel %vm1221, %v1172, 0
      %v1478 = vsel %vm1221, %v1173, 0
      %v1481 = vsel %vm1221, %v1174, 0
      %v1484 = vsel %vm1221, %v1175, 0
      %v1487 = vsel %vm1221, %v1176, 0
      %v1490 = vsel %vm1221, %v1177, 0
      %v1493 = vsel %vm1221, %v1178, 0
      %v1496 = vsel %vm1221, %v1179, 0
      %v1499 = vsel %vm1221, %v1180, 0
      %v1502 = vsel %vm1221, %v1181, 0
      %v1505 = vsel %vm1221, %v1182, 0
      %v1508 = vsel %vm1221, %v1183, 0
      %v1511 = vsel %vm1221, %v1184, 0
      %v1514 = vsel %vm1221, %v1185, 0
      %v1517 = vsel %vm1221, %v1186, 0
      %v1520 = vsel %vm1221, %v1187, 0
      %v1523 = vsel %vm1221, %v1188, 0
      %v1526 = vsel %vm1221, %v1189, 0
      %v1529 = vsel %vm1221, %v1190, 0
      %v1532 = vsel %vm1221, %v1191, 0
      %v1535 = vsel %vm1221, %v1192, 0
      %v1538 = vsel %vm1221, %v1193, 0
      %v1541 = vsel %vm1221, %v1194, 0
      %v1544 = vsel %vm1221, %v1195, 0
      %v1547 = vsel %vm1221, %v1196, 0
      %v1550 = vsel %vm1221, %v1197, 0
      %v1553 = vsel %vm1221, %v1198, 0
      %v1556 = vsel %vm1221, %v1199, 0
      %v1559 = vsel %vm1221, %v1200, 0
      %v1562 = vsel %vm1221, %v1201, 0
      %v1565 = vsel %vm1221, %v1202, 0
      %v1568 = vsel %vm1221, %v1203, 0
      %v1571 = vsel %vm1221, %v1204, 0
      %v1574 = vsel %vm1221, %v1205, 0
      %v1577 = vsel %vm1221, %v1206, 0
      %v1580 = vsel %vm1221, %v1207, 0
      %v1583 = vsel %vm1221, %v1208, 0
      %v1586 = vsel %vm1221, %v1209, 0
      %v1589 = vsel %vm1221, %v1210, 0
      %v1592 = vsel %vm1221, %v1211, 0
      %v1595 = vsel %vm1221, %v1212, 0
      %v1598 = vsel %vm1221, %v1213, 0
      %v1601 = vsel %vm1221, %v1214, 0
      %v1604 = vsel %vm1221, %v1215, 0
      %vm1606 = vcmask 1043456
      %vm1607 = vcmask 1044480
      %v1608 = vsel %vm1606, 4294967295, 65535
      %v1609 = vsel %vm1607, %v1608, 0
      %v1611 = vand.u32 %v1220, %v1609
      %1613 = vmatprep.subr.bf16.mxu0 0
      %1614 = vmatpush1.bf16.msra.mxu0 %v1611
      %1615 = vmatprep.subr.bf16.mxu0 0
      %1616 = vmatpush1.bf16.msra.mxu0 0
      %1617 = vmatprep.subr.bf16.mxu0 0
      %1618 = vmatpush1.bf16.msra.mxu0 0
      %1619 = vmatprep.subr.bf16.mxu0 0
      %1620 = vmatpush1.bf16.msra.mxu0 0
      %1621 = vmatprep.subr.bf16.mxu0 0
      %1622 = vmatpush1.bf16.msra.mxu0 0
      %1623 = vmatprep.subr.bf16.mxu0 0
      %1624 = vmatpush1.bf16.msra.mxu0 0
      %1625 = vmatprep.subr.bf16.mxu0 0
      %1626 = vmatpush1.bf16.msra.mxu0 0
      %1627 = vmatprep.subr.bf16.mxu0 0
      %1628 = vmatpush1.bf16.msra.mxu0 0
      %1629 = vmatprep.subr.bf16.mxu0 0
      %1630 = vmatpush1.bf16.msra.mxu0 0
      %1631 = vmatprep.subr.bf16.mxu0 0
      %1632 = vmatpush1.bf16.msra.mxu0 0
      %1633 = vmatprep.subr.bf16.mxu0 0
      %1634 = vmatpush1.bf16.msra.mxu0 0
      %1635 = vmatprep.subr.bf16.mxu0 0
      %1636 = vmatpush1.bf16.msra.mxu0 0
      %1637 = vmatprep.subr.bf16.mxu0 0
      %1638 = vmatpush1.bf16.msra.mxu0 0
      %1639 = vmatprep.subr.bf16.mxu0 0
      %1640 = vmatpush1.bf16.msra.mxu0 0
      %1641 = vmatprep.subr.bf16.mxu0 0
      %1642 = vmatpush1.bf16.msra.mxu0 0
      %1643 = vmatprep.subr.bf16.mxu0 0
      %1644 = vmatpush1.bf16.msra.mxu0 0
      %1645 = vmatprep.mubr.bf16.mxu0 0
      %1646 = vmatmul.mubr.bf16.gmra.mrb[0].mxu0 %v1223
      %v1647 = vpop.f32.mrb[0].mxu0
      %v1648 = vadd.f32 %v574, %v1647
      %v1649 = vpop.f32.mrb[0].mxu0
      %v1650 = vpop.f32.mrb[0].mxu0
      %v1651 = vadd.f32 %v574, %v1650
      %v1652 = vpop.f32.mrb[0].mxu0
      %1653 = vmatprep.mubr.bf16.mxu0 0
      %1654 = vmatmul.mubr.bf16.gmra.mrb[0].mxu0 %v1226
      %v1655 = vpop.f32.mrb[0].mxu0
      %v1656 = vadd.f32 %v574, %v1655
      %v1657 = vpop.f32.mrb[0].mxu0
      %v1658 = vpop.f32.mrb[0].mxu0
      %v1659 = vadd.f32 %v574, %v1658
      %v1660 = vpop.f32.mrb[0].mxu0
      %1661 = vmatprep.mubr.bf16.mxu0 0
      %1662 = vmatmul.mubr.bf16.gmra.mrb[0].mxu0 %v1229
      %v1663 = vpop.f32.mrb[0].mxu0
      %v1664 = vadd.f32 %v574, %v1663
      %v1665 = vpop.f32.mrb[0].mxu0
      %v1666 = vpop.f32.mrb[0].mxu0
      %v1667 = vadd.f32 %v574, %v1666
      %v1668 = vpop.f32.mrb[0].mxu0
      %1669 = vmatprep.mubr.bf16.mxu0 0
      %1670 = vmatmul.mubr.bf16.gmra.mrb[0].mxu0 %v1232
      %v1671 = vpop.f32.mrb[0].mxu0
      %v1672 = vadd.f32 %v574, %v1671
      %v1673 = vpop.f32.mrb[0].mxu0
      %v1674 = vpop.f32.mrb[0].mxu0
      %v1675 = vadd.f32 %v574, %v1674
      %v1676 = vpop.f32.mrb[0].mxu0
      %1677 = vmatprep.mubr.bf16.mxu0 0
      %1678 = vmatmul.mubr.bf16.gmra.mrb[0].mxu0 %v1235
      %v1679 = vpop.f32.mrb[0].mxu0
      %v1680 = vadd.f32 %v574, %v1679
      %v1681 = vpop.f32.mrb[0].mxu0
      %v1682 = vpop.f32.mrb[0].mxu0
      %v1683 = vadd.f32 %v574, %v1682
      %v1684 = vpop.f32.mrb[0].mxu0
      %1685 = vmatprep.mubr.bf16.mxu0 0
      %1686 = vmatmul.mubr.bf16.gmra.mrb[0].mxu0 %v1238
      %v1687 = vpop.f32.mrb[0].mxu0
      %v1688 = vadd.f32 %v574, %v1687
      %v1689 = vpop.f32.mrb[0].mxu0
      %v1690 = vpop.f32.mrb[0].mxu0
      %v1691 = vadd.f32 %v574, %v1690
      %v1692 = vpop.f32.mrb[0].mxu0
      %1693 = vmatprep.mubr.bf16.mxu0 0
      %1694 = vmatmul.mubr.bf16.gmra.mrb[0].mxu0 %v1241
      %v1695 = vpop.f32.mrb[0].mxu0
      %v1696 = vadd.f32 %v574, %v1695
      %v1697 = vpop.f32.mrb[0].mxu0
      %v1698 = vpop.f32.mrb[0].mxu0
      %v1699 = vadd.f32 %v574, %v1698
      %v1700 = vpop.f32.mrb[0].mxu0
      %1701 = vmatprep.mubr.bf16.mxu0 0
      %1702 = vmatmul.mubr.bf16.gmra.mrb[0].mxu0 %v1244
      %v1703 = vpop.f32.mrb[0].mxu0
      %v1704 = vadd.f32 %v574, %v1703
      %v1705 = vpop.f32.mrb[0].mxu0
      %v1706 = vpop.f32.mrb[0].mxu0
      %v1707 = vadd.f32 %v574, %v1706
      %v1708 = vpop.f32.mrb[0].mxu0
      %1709 = vmatprep.mubr.bf16.mxu0 0
      %1710 = vmatmul.mubr.bf16.gmra.mrb[0].mxu0 %v1247
      %v1711 = vpop.f32.mrb[0].mxu0
      %v1712 = vadd.f32 %v574, %v1711
      %v1713 = vpop.f32.mrb[0].mxu0
      %v1714 = vpop.f32.mrb[0].mxu0
      %v1715 = vadd.f32 %v574, %v1714
      %v1716 = vpop.f32.mrb[0].mxu0
      %1717 = vmatprep.mubr.bf16.mxu0 0
      %1718 = vmatmul.mubr.bf16.gmra.mrb[0].mxu0 %v1250
      %v1719 = vpop.f32.mrb[0].mxu0
      %v1720 = vadd.f32 %v574, %v1719
      %v1721 = vpop.f32.mrb[0].mxu0
      %v1722 = vpop.f32.mrb[0].mxu0
      %v1723 = vadd.f32 %v574, %v1722
      %v1724 = vpop.f32.mrb[0].mxu0
      %1725 = vmatprep.mubr.bf16.mxu0 0
      %1726 = vmatmul.mubr.bf16.gmra.mrb[0].mxu0 %v1253
      %v1727 = vpop.f32.mrb[0].mxu0
      %v1728 = vadd.f32 %v574, %v1727
      %v1729 = vpop.f32.mrb[0].mxu0
      %v1730 = vpop.f32.mrb[0].mxu0
      %v1731 = vadd.f32 %v574, %v1730
      %v1732 = vpop.f32.mrb[0].mxu0
      %1733 = vmatprep.mubr.bf16.mxu0 0
      %1734 = vmatmul.mubr.bf16.gmra.mrb[0].mxu0 %v1256
      %v1735 = vpop.f32.mrb[0].mxu0
      %v1736 = vadd.f32 %v574, %v1735
      %v1737 = vpop.f32.mrb[0].mxu0
      %v1738 = vpop.f32.mrb[0].mxu0
      %v1739 = vadd.f32 %v574, %v1738
      %v1740 = vpop.f32.mrb[0].mxu0
      %1741 = vmatprep.mubr.bf16.mxu0 0
      %1742 = vmatmul.mubr.bf16.gmra.mrb[0].mxu0 %v1259
      %v1743 = vpop.f32.mrb[0].mxu0
      %v1744 = vadd.f32 %v574, %v1743
      %v1745 = vpop.f32.mrb[0].mxu0
      %v1746 = vpop.f32.mrb[0].mxu0
      %v1747 = vadd.f32 %v574, %v1746
      %v1748 = vpop.f32.mrb[0].mxu0
      %1749 = vmatprep.mubr.bf16.mxu0 0
      %1750 = vmatmul.mubr.bf16.gmra.mrb[0].mxu0 %v1262
      %v1751 = vpop.f32.mrb[0].mxu0
      %v1752 = vadd.f32 %v574, %v1751
      %v1753 = vpop.f32.mrb[0].mxu0
      %v1754 = vpop.f32.mrb[0].mxu0
      %v1755 = vadd.f32 %v574, %v1754
      %v1756 = vpop.f32.mrb[0].mxu0
      %1757 = vmatprep.mubr.bf16.mxu0 0
      %1758 = vmatmul.mubr.bf16.gmra.mrb[0].mxu0 %v1265
      %v1759 = vpop.f32.mrb[0].mxu0
      %v1760 = vadd.f32 %v574, %v1759
      %v1761 = vpop.f32.mrb[0].mxu0
      %v1762 = vpop.f32.mrb[0].mxu0
      %v1763 = vadd.f32 %v574, %v1762
      %v1764 = vpop.f32.mrb[0].mxu0
      %1765 = vmatprep.mubr.bf16.mxu0 0
      %1766 = vmatmul.mubr.bf16.gmra.mrb[0].mxu0 %v1268
      %v1767 = vpop.f32.mrb[0].mxu0
      %v1768 = vadd.f32 %v574, %v1767
      %v1769 = vpop.f32.mrb[0].mxu0
      %v1770 = vpop.f32.mrb[0].mxu0
      %v1771 = vadd.f32 %v574, %v1770
      %v1772 = vpop.f32.mrb[0].mxu0
      %1773 = vmatprep.mubr.bf16.mxu0 0
      %1774 = vmatmul.mubr.bf16.gmra.mrb[0].mxu0 %v1271
      %v1775 = vpop.f32.mrb[0].mxu0
      %v1776 = vadd.f32 %v574, %v1775
      %v1777 = vpop.f32.mrb[0].mxu0
      %v1778 = vpop.f32.mrb[0].mxu0
      %v1779 = vadd.f32 %v574, %v1778
      %v1780 = vpop.f32.mrb[0].mxu0
      %1781 = vmatprep.mubr.bf16.mxu0 0
      %1782 = vmatmul.mubr.bf16.gmra.mrb[0].mxu0 %v1274
      %v1783 = vpop.f32.mrb[0].mxu0
      %v1784 = vadd.f32 %v574, %v1783
      %v1785 = vpop.f32.mrb[0].mxu0
      %v1786 = vpop.f32.mrb[0].mxu0
      %v1787 = vadd.f32 %v574, %v1786
      %v1788 = vpop.f32.mrb[0].mxu0
      %1789 = vmatprep.mubr.bf16.mxu0 0
      %1790 = vmatmul.mubr.bf16.gmra.mrb[0].mxu0 %v1277
      %v1791 = vpop.f32.mrb[0].mxu0
      %v1792 = vadd.f32 %v574, %v1791
      %v1793 = vpop.f32.mrb[0].mxu0
      %v1794 = vpop.f32.mrb[0].mxu0
      %v1795 = vadd.f32 %v574, %v1794
      %v1796 = vpop.f32.mrb[0].mxu0
      %1797 = vmatprep.mubr.bf16.mxu0 0
      %1798 = vmatmul.mubr.bf16.gmra.mrb[0].mxu0 %v1280
      %v1799 = vpop.f32.mrb[0].mxu0
      %v1800 = vadd.f32 %v574, %v1799
      %v1801 = vpop.f32.mrb[0].mxu0
      %v1802 = vpop.f32.mrb[0].mxu0
      %v1803 = vadd.f32 %v574, %v1802
      %v1804 = vpop.f32.mrb[0].mxu0
      %1805 = vmatprep.mubr.bf16.mxu0 0
      %1806 = vmatmul.mubr.bf16.gmra.mrb[0].mxu0 %v1283
      %v1807 = vpop.f32.mrb[0].mxu0
      %v1808 = vadd.f32 %v574, %v1807
      %v1809 = vpop.f32.mrb[0].mxu0
      %v1810 = vpop.f32.mrb[0].mxu0
      %v1811 = vadd.f32 %v574, %v1810
      %v1812 = vpop.f32.mrb[0].mxu0
      %1813 = vmatprep.mubr.bf16.mxu0 0
      %1814 = vmatmul.mubr.bf16.gmra.mrb[0].mxu0 %v1286
      %v1815 = vpop.f32.mrb[0].mxu0
      %v1816 = vadd.f32 %v574, %v1815
      %v1817 = vpop.f32.mrb[0].mxu0
      %v1818 = vpop.f32.mrb[0].mxu0
      %v1819 = vadd.f32 %v574, %v1818
      %v1820 = vpop.f32.mrb[0].mxu0
      %1821 = vmatprep.mubr.bf16.mxu0 0
      %1822 = vmatmul.mubr.bf16.gmra.mrb[0].mxu0 %v1289
      %v1823 = vpop.f32.mrb[0].mxu0
      %v1824 = vadd.f32 %v574, %v1823
      %v1825 = vpop.f32.mrb[0].mxu0
      %v1826 = vpop.f32.mrb[0].mxu0
      %v1827 = vadd.f32 %v574, %v1826
      %v1828 = vpop.f32.mrb[0].mxu0
      %1829 = vmatprep.mubr.bf16.mxu0 0
      %1830 = vmatmul.mubr.bf16.gmra.mrb[0].mxu0 %v1292
      %v1831 = vpop.f32.mrb[0].mxu0
      %v1832 = vadd.f32 %v574, %v1831
      %v1833 = vpop.f32.mrb[0].mxu0
      %v1834 = vpop.f32.mrb[0].mxu0
      %v1835 = vadd.f32 %v574, %v1834
      %v1836 = vpop.f32.mrb[0].mxu0
      %1837 = vmatprep.mubr.bf16.mxu0 0
      %1838 = vmatmul.mubr.bf16.gmra.mrb[0].mxu0 %v1295
      %v1839 = vpop.f32.mrb[0].mxu0
      %v1840 = vadd.f32 %v574, %v1839
      %v1841 = vpop.f32.mrb[0].mxu0
      %v1842 = vpop.f32.mrb[0].mxu0
      %v1843 = vadd.f32 %v574, %v1842
      %v1844 = vpop.f32.mrb[0].mxu0
      %1845 = vmatprep.mubr.bf16.mxu0 0
      %1846 = vmatmul.mubr.bf16.gmra.mrb[0].mxu0 %v1298
      %v1847 = vpop.f32.mrb[0].mxu0
      %v1848 = vadd.f32 %v574, %v1847
      %v1849 = vpop.f32.mrb[0].mxu0
      %v1850 = vpop.f32.mrb[0].mxu0
      %v1851 = vadd.f32 %v574, %v1850
      %v1852 = vpop.f32.mrb[0].mxu0
      %1853 = vmatprep.mubr.bf16.mxu0 0
      %1854 = vmatmul.mubr.bf16.gmra.mrb[0].mxu0 %v1301
      %v1855 = vpop.f32.mrb[0].mxu0
      %v1856 = vadd.f32 %v574, %v1855
      %v1857 = vpop.f32.mrb[0].mxu0
      %v1858 = vpop.f32.mrb[0].mxu0
      %v1859 = vadd.f32 %v574, %v1858
      %v1860 = vpop.f32.mrb[0].mxu0
      %1861 = vmatprep.mubr.bf16.mxu0 0
      %1862 = vmatmul.mubr.bf16.gmra.mrb[0].mxu0 %v1304
      %v1863 = vpop.f32.mrb[0].mxu0
      %v1864 = vadd.f32 %v574, %v1863
      %v1865 = vpop.f32.mrb[0].mxu0
      %v1866 = vpop.f32.mrb[0].mxu0
      %v1867 = vadd.f32 %v574, %v1866
      %v1868 = vpop.f32.mrb[0].mxu0
      %1869 = vmatprep.mubr.bf16.mxu0 0
      %1870 = vmatmul.mubr.bf16.gmra.mrb[0].mxu0 %v1307
      %v1871 = vpop.f32.mrb[0].mxu0
      %v1872 = vadd.f32 %v574, %v1871
      %v1873 = vpop.f32.mrb[0].mxu0
      %v1874 = vpop.f32.mrb[0].mxu0
      %v1875 = vadd.f32 %v574, %v1874
      %v1876 = vpop.f32.mrb[0].mxu0
      %1877 = vmatprep.mubr.bf16.mxu0 0
      %1878 = vmatmul.mubr.bf16.gmra.mrb[0].mxu0 %v1310
      %v1879 = vpop.f32.mrb[0].mxu0
      %v1880 = vadd.f32 %v574, %v1879
      %v1881 = vpop.f32.mrb[0].mxu0
      %v1882 = vpop.f32.mrb[0].mxu0
      %v1883 = vadd.f32 %v574, %v1882
      %v1884 = vpop.f32.mrb[0].mxu0
      %1885 = vmatprep.mubr.bf16.mxu0 0
      %1886 = vmatmul.mubr.bf16.gmra.mrb[0].mxu0 %v1313
      %v1887 = vpop.f32.mrb[0].mxu0
      %v1888 = vadd.f32 %v574, %v1887
      %v1889 = vpop.f32.mrb[0].mxu0
      %v1890 = vpop.f32.mrb[0].mxu0
      %v1891 = vadd.f32 %v574, %v1890
      %v1892 = vpop.f32.mrb[0].mxu0
      %1893 = vmatprep.mubr.bf16.mxu0 0
      %1894 = vmatmul.mubr.bf16.gmra.mrb[0].mxu0 %v1316
      %v1895 = vpop.f32.mrb[0].mxu0
      %v1896 = vadd.f32 %v574, %v1895
      %v1897 = vpop.f32.mrb[0].mxu0
      %v1898 = vpop.f32.mrb[0].mxu0
      %v1899 = vadd.f32 %v574, %v1898
      %v1900 = vpop.f32.mrb[0].mxu0
      %1901 = vmatprep.mubr.bf16.mxu0 0
      %1902 = vmatmul.mubr.bf16.gmra.mrb[0].mxu0 %v1319
      %v1903 = vpop.f32.mrb[0].mxu0
      %v1904 = vadd.f32 %v574, %v1903
      %v1905 = vpop.f32.mrb[0].mxu0
      %v1906 = vpop.f32.mrb[0].mxu0
      %v1907 = vadd.f32 %v574, %v1906
      %v1908 = vpop.f32.mrb[0].mxu0
      %1909 = vmatprep.mubr.bf16.mxu0 0
      %1910 = vmatmul.mubr.bf16.gmra.mrb[0].mxu0 %v1322
      %v1911 = vpop.f32.mrb[0].mxu0
      %v1912 = vadd.f32 %v574, %v1911
      %v1913 = vpop.f32.mrb[0].mxu0
      %v1914 = vpop.f32.mrb[0].mxu0
      %v1915 = vadd.f32 %v574, %v1914
      %v1916 = vpop.f32.mrb[0].mxu0
      %1917 = vmatprep.mubr.bf16.mxu0 0
      %1918 = vmatmul.mubr.bf16.gmra.mrb[0].mxu0 %v1325
      %v1919 = vpop.f32.mrb[0].mxu0
      %v1920 = vadd.f32 %v574, %v1919
      %v1921 = vpop.f32.mrb[0].mxu0
      %v1922 = vpop.f32.mrb[0].mxu0
      %v1923 = vadd.f32 %v574, %v1922
      %v1924 = vpop.f32.mrb[0].mxu0
      %1925 = vmatprep.mubr.bf16.mxu0 0
      %1926 = vmatmul.mubr.bf16.gmra.mrb[0].mxu0 %v1328
      %v1927 = vpop.f32.mrb[0].mxu0
      %v1928 = vadd.f32 %v574, %v1927
      %v1929 = vpop.f32.mrb[0].mxu0
      %v1930 = vpop.f32.mrb[0].mxu0
      %v1931 = vadd.f32 %v574, %v1930
      %v1932 = vpop.f32.mrb[0].mxu0
      %1933 = vmatprep.mubr.bf16.mxu0 0
      %1934 = vmatmul.mubr.bf16.gmra.mrb[0].mxu0 %v1331
      %v1935 = vpop.f32.mrb[0].mxu0
      %v1936 = vadd.f32 %v574, %v1935
      %v1937 = vpop.f32.mrb[0].mxu0
      %v1938 = vpop.f32.mrb[0].mxu0
      %v1939 = vadd.f32 %v574, %v1938
      %v1940 = vpop.f32.mrb[0].mxu0
      %1941 = vmatprep.mubr.bf16.mxu0 0
      %1942 = vmatmul.mubr.bf16.gmra.mrb[0].mxu0 %v1334
      %v1943 = vpop.f32.mrb[0].mxu0
      %v1944 = vadd.f32 %v574, %v1943
      %v1945 = vpop.f32.mrb[0].mxu0
      %v1946 = vpop.f32.mrb[0].mxu0
      %v1947 = vadd.f32 %v574, %v1946
      %v1948 = vpop.f32.mrb[0].mxu0
      %1949 = vmatprep.mubr.bf16.mxu0 0
      %1950 = vmatmul.mubr.bf16.gmra.mrb[0].mxu0 %v1337
      %v1951 = vpop.f32.mrb[0].mxu0
      %v1952 = vadd.f32 %v574, %v1951
      %v1953 = vpop.f32.mrb[0].mxu0
      %v1954 = vpop.f32.mrb[0].mxu0
      %v1955 = vadd.f32 %v574, %v1954
      %v1956 = vpop.f32.mrb[0].mxu0
      %1957 = vmatprep.mubr.bf16.mxu0 0
      %1958 = vmatmul.mubr.bf16.gmra.mrb[0].mxu0 %v1340
      %v1959 = vpop.f32.mrb[0].mxu0
      %v1960 = vadd.f32 %v574, %v1959
      %v1961 = vpop.f32.mrb[0].mxu0
      %v1962 = vpop.f32.mrb[0].mxu0
      %v1963 = vadd.f32 %v574, %v1962
      %v1964 = vpop.f32.mrb[0].mxu0
      %1965 = vmatprep.mubr.bf16.mxu0 0
      %1966 = vmatmul.mubr.bf16.gmra.mrb[0].mxu0 %v1343
      %v1967 = vpop.f32.mrb[0].mxu0
      %v1968 = vadd.f32 %v574, %v1967
      %v1969 = vpop.f32.mrb[0].mxu0
      %v1970 = vpop.f32.mrb[0].mxu0
      %v1971 = vadd.f32 %v574, %v1970
      %v1972 = vpop.f32.mrb[0].mxu0
      %1973 = vmatprep.mubr.bf16.mxu0 0
      %1974 = vmatmul.mubr.bf16.gmra.mrb[0].mxu0 %v1346
      %v1975 = vpop.f32.mrb[0].mxu0
      %v1976 = vadd.f32 %v574, %v1975
      %v1977 = vpop.f32.mrb[0].mxu0
      %v1978 = vpop.f32.mrb[0].mxu0
      %v1979 = vadd.f32 %v574, %v1978
      %v1980 = vpop.f32.mrb[0].mxu0
      %1981 = vmatprep.mubr.bf16.mxu0 0
      %1982 = vmatmul.mubr.bf16.gmra.mrb[0].mxu0 %v1349
      %v1983 = vpop.f32.mrb[0].mxu0
      %v1984 = vadd.f32 %v574, %v1983
      %v1985 = vpop.f32.mrb[0].mxu0
      %v1986 = vpop.f32.mrb[0].mxu0
      %v1987 = vadd.f32 %v574, %v1986
      %v1988 = vpop.f32.mrb[0].mxu0
      %1989 = vmatprep.mubr.bf16.mxu0 0
      %1990 = vmatmul.mubr.bf16.gmra.mrb[0].mxu0 %v1352
      %v1991 = vpop.f32.mrb[0].mxu0
      %v1992 = vadd.f32 %v574, %v1991
      %v1993 = vpop.f32.mrb[0].mxu0
      %v1994 = vpop.f32.mrb[0].mxu0
      %v1995 = vadd.f32 %v574, %v1994
      %v1996 = vpop.f32.mrb[0].mxu0
      %1997 = vmatprep.mubr.bf16.mxu0 0
      %1998 = vmatmul.mubr.bf16.gmra.mrb[0].mxu0 %v1355
      %v1999 = vpop.f32.mrb[0].mxu0
      %v2000 = vadd.f32 %v574, %v1999
      %v2001 = vpop.f32.mrb[0].mxu0
      %v2002 = vpop.f32.mrb[0].mxu0
      %v2003 = vadd.f32 %v574, %v2002
      %v2004 = vpop.f32.mrb[0].mxu0
      %2005 = vmatprep.mubr.bf16.mxu0 0
      %2006 = vmatmul.mubr.bf16.gmra.mrb[0].mxu0 %v1358
      %v2007 = vpop.f32.mrb[0].mxu0
      %v2008 = vadd.f32 %v574, %v2007
      %v2009 = vpop.f32.mrb[0].mxu0
      %v2010 = vpop.f32.mrb[0].mxu0
      %v2011 = vadd.f32 %v574, %v2010
      %v2012 = vpop.f32.mrb[0].mxu0
      %2013 = vmatprep.mubr.bf16.mxu0 0
      %2014 = vmatmul.mubr.bf16.gmra.mrb[0].mxu0 %v1361
      %v2015 = vpop.f32.mrb[0].mxu0
      %v2016 = vadd.f32 %v574, %v2015
      %v2017 = vpop.f32.mrb[0].mxu0
      %v2018 = vpop.f32.mrb[0].mxu0
      %v2019 = vadd.f32 %v574, %v2018
      %v2020 = vpop.f32.mrb[0].mxu0
      %2021 = vmatprep.mubr.bf16.mxu0 0
      %2022 = vmatmul.mubr.bf16.gmra.mrb[0].mxu0 %v1364
      %v2023 = vpop.f32.mrb[0].mxu0
      %v2024 = vadd.f32 %v574, %v2023
      %v2025 = vpop.f32.mrb[0].mxu0
      %v2026 = vpop.f32.mrb[0].mxu0
      %v2027 = vadd.f32 %v574, %v2026
      %v2028 = vpop.f32.mrb[0].mxu0
      %2029 = vmatprep.mubr.bf16.mxu0 0
      %2030 = vmatmul.mubr.bf16.gmra.mrb[0].mxu0 %v1367
      %v2031 = vpop.f32.mrb[0].mxu0
      %v2032 = vadd.f32 %v574, %v2031
      %v2033 = vpop.f32.mrb[0].mxu0
      %v2034 = vpop.f32.mrb[0].mxu0
      %v2035 = vadd.f32 %v574, %v2034
      %v2036 = vpop.f32.mrb[0].mxu0
      %2037 = vmatprep.mubr.bf16.mxu0 0
      %2038 = vmatmul.mubr.bf16.gmra.mrb[0].mxu0 %v1370
      %v2039 = vpop.f32.mrb[0].mxu0
      %v2040 = vadd.f32 %v574, %v2039
      %v2041 = vpop.f32.mrb[0].mxu0
      %v2042 = vpop.f32.mrb[0].mxu0
      %v2043 = vadd.f32 %v574, %v2042
      %v2044 = vpop.f32.mrb[0].mxu0
      %2045 = vmatprep.mubr.bf16.mxu0 0
      %2046 = vmatmul.mubr.bf16.gmra.mrb[0].mxu0 %v1373
      %v2047 = vpop.f32.mrb[0].mxu0
      %v2048 = vadd.f32 %v574, %v2047
      %v2049 = vpop.f32.mrb[0].mxu0
      %v2050 = vpop.f32.mrb[0].mxu0
      %v2051 = vadd.f32 %v574, %v2050
      %v2052 = vpop.f32.mrb[0].mxu0
      %2053 = vmatprep.mubr.bf16.mxu0 0
      %2054 = vmatmul.mubr.bf16.gmra.mrb[0].mxu0 %v1376
      %v2055 = vpop.f32.mrb[0].mxu0
      %v2056 = vadd.f32 %v574, %v2055
      %v2057 = vpop.f32.mrb[0].mxu0
      %v2058 = vpop.f32.mrb[0].mxu0
      %v2059 = vadd.f32 %v574, %v2058
      %v2060 = vpop.f32.mrb[0].mxu0
      %2061 = vmatprep.mubr.bf16.mxu0 0
      %2062 = vmatmul.mubr.bf16.gmra.mrb[0].mxu0 %v1379
      %v2063 = vpop.f32.mrb[0].mxu0
      %v2064 = vadd.f32 %v574, %v2063
      %v2065 = vpop.f32.mrb[0].mxu0
      %v2066 = vpop.f32.mrb[0].mxu0
      %v2067 = vadd.f32 %v574, %v2066
      %v2068 = vpop.f32.mrb[0].mxu0
      %2069 = vmatprep.mubr.bf16.mxu0 0
      %2070 = vmatmul.mubr.bf16.gmra.mrb[0].mxu0 %v1382
      %v2071 = vpop.f32.mrb[0].mxu0
      %v2072 = vadd.f32 %v574, %v2071
      %v2073 = vpop.f32.mrb[0].mxu0
      %v2074 = vpop.f32.mrb[0].mxu0
      %v2075 = vadd.f32 %v574, %v2074
      %v2076 = vpop.f32.mrb[0].mxu0
      %2077 = vmatprep.mubr.bf16.mxu0 0
      %2078 = vmatmul.mubr.bf16.gmra.mrb[0].mxu0 %v1385
      %v2079 = vpop.f32.mrb[0].mxu0
      %v2080 = vadd.f32 %v574, %v2079
      %v2081 = vpop.f32.mrb[0].mxu0
      %v2082 = vpop.f32.mrb[0].mxu0
      %v2083 = vadd.f32 %v574, %v2082
      %v2084 = vpop.f32.mrb[0].mxu0
      %2085 = vmatprep.mubr.bf16.mxu0 0
      %2086 = vmatmul.mubr.bf16.gmra.mrb[0].mxu0 %v1388
      %v2087 = vpop.f32.mrb[0].mxu0
      %v2088 = vadd.f32 %v574, %v2087
      %v2089 = vpop.f32.mrb[0].mxu0
      %v2090 = vpop.f32.mrb[0].mxu0
      %v2091 = vadd.f32 %v574, %v2090
      %v2092 = vpop.f32.mrb[0].mxu0
      %2093 = vmatprep.mubr.bf16.mxu0 0
      %2094 = vmatmul.mubr.bf16.gmra.mrb[0].mxu0 %v1391
      %v2095 = vpop.f32.mrb[0].mxu0
      %v2096 = vadd.f32 %v574, %v2095
      %v2097 = vpop.f32.mrb[0].mxu0
      %v2098 = vpop.f32.mrb[0].mxu0
      %v2099 = vadd.f32 %v574, %v2098
      %v2100 = vpop.f32.mrb[0].mxu0
      %2101 = vmatprep.mubr.bf16.mxu0 0
      %2102 = vmatmul.mubr.bf16.gmra.mrb[0].mxu0 %v1394
      %v2103 = vpop.f32.mrb[0].mxu0
      %v2104 = vadd.f32 %v574, %v2103
      %v2105 = vpop.f32.mrb[0].mxu0
      %v2106 = vpop.f32.mrb[0].mxu0
      %v2107 = vadd.f32 %v574, %v2106
      %v2108 = vpop.f32.mrb[0].mxu0
      %2109 = vmatprep.mubr.bf16.mxu0 0
      %2110 = vmatmul.mubr.bf16.gmra.mrb[0].mxu0 %v1397
      %v2111 = vpop.f32.mrb[0].mxu0
      %v2112 = vadd.f32 %v574, %v2111
      %v2113 = vpop.f32.mrb[0].mxu0
      %v2114 = vpop.f32.mrb[0].mxu0
      %v2115 = vadd.f32 %v574, %v2114
      %v2116 = vpop.f32.mrb[0].mxu0
      %2117 = vmatprep.mubr.bf16.mxu0 0
      %2118 = vmatmul.mubr.bf16.gmra.mrb[0].mxu0 %v1400
      %v2119 = vpop.f32.mrb[0].mxu0
      %v2120 = vadd.f32 %v574, %v2119
      %v2121 = vpop.f32.mrb[0].mxu0
      %v2122 = vpop.f32.mrb[0].mxu0
      %v2123 = vadd.f32 %v574, %v2122
      %v2124 = vpop.f32.mrb[0].mxu0
      %2125 = vmatprep.mubr.bf16.mxu0 0
      %2126 = vmatmul.mubr.bf16.gmra.mrb[0].mxu0 %v1403
      %v2127 = vpop.f32.mrb[0].mxu0
      %v2128 = vadd.f32 %v574, %v2127
      %v2129 = vpop.f32.mrb[0].mxu0
      %v2130 = vpop.f32.mrb[0].mxu0
      %v2131 = vadd.f32 %v574, %v2130
      %v2132 = vpop.f32.mrb[0].mxu0
      %2133 = vmatprep.mubr.bf16.mxu0 0
      %2134 = vmatmul.mubr.bf16.gmra.mrb[0].mxu0 %v1406
      %v2135 = vpop.f32.mrb[0].mxu0
      %v2136 = vadd.f32 %v574, %v2135
      %v2137 = vpop.f32.mrb[0].mxu0
      %v2138 = vpop.f32.mrb[0].mxu0
      %v2139 = vadd.f32 %v574, %v2138
      %v2140 = vpop.f32.mrb[0].mxu0
      %2141 = vmatprep.mubr.bf16.mxu0 0
      %2142 = vmatmul.mubr.bf16.gmra.mrb[0].mxu0 %v1409
      %v2143 = vpop.f32.mrb[0].mxu0
      %v2144 = vadd.f32 %v574, %v2143
      %v2145 = vpop.f32.mrb[0].mxu0
      %v2146 = vpop.f32.mrb[0].mxu0
      %v2147 = vadd.f32 %v574, %v2146
      %v2148 = vpop.f32.mrb[0].mxu0
      %2149 = vmatprep.mubr.bf16.mxu0 0
      %2150 = vmatmul.mubr.bf16.gmra.mrb[0].mxu0 %v1412
      %v2151 = vpop.f32.mrb[0].mxu0
      %v2152 = vadd.f32 %v574, %v2151
      %v2153 = vpop.f32.mrb[0].mxu0
      %v2154 = vpop.f32.mrb[0].mxu0
      %v2155 = vadd.f32 %v574, %v2154
      %v2156 = vpop.f32.mrb[0].mxu0
      %2157 = vmatprep.mubr.bf16.mxu0 0
      %2158 = vmatmul.mubr.bf16.gmra.mrb[0].mxu0 %v1415
      %v2159 = vpop.f32.mrb[0].mxu0
      %v2160 = vadd.f32 %v574, %v2159
      %v2161 = vpop.f32.mrb[0].mxu0
      %v2162 = vpop.f32.mrb[0].mxu0
      %v2163 = vadd.f32 %v574, %v2162
      %v2164 = vpop.f32.mrb[0].mxu0
      %2165 = vmatprep.mubr.bf16.mxu0 0
      %2166 = vmatmul.mubr.bf16.gmra.mrb[0].mxu0 %v1418
      %v2167 = vpop.f32.mrb[0].mxu0
      %v2168 = vadd.f32 %v574, %v2167
      %v2169 = vpop.f32.mrb[0].mxu0
      %v2170 = vpop.f32.mrb[0].mxu0
      %v2171 = vadd.f32 %v574, %v2170
      %v2172 = vpop.f32.mrb[0].mxu0
      %2173 = vmatprep.mubr.bf16.mxu0 0
      %2174 = vmatmul.mubr.bf16.gmra.mrb[0].mxu0 %v1421
      %v2175 = vpop.f32.mrb[0].mxu0
      %v2176 = vadd.f32 %v574, %v2175
      %v2177 = vpop.f32.mrb[0].mxu0
      %v2178 = vpop.f32.mrb[0].mxu0
      %v2179 = vadd.f32 %v574, %v2178
      %v2180 = vpop.f32.mrb[0].mxu0
      %2181 = vmatprep.mubr.bf16.mxu0 0
      %2182 = vmatmul.mubr.bf16.gmra.mrb[0].mxu0 %v1424
      %v2183 = vpop.f32.mrb[0].mxu0
      %v2184 = vadd.f32 %v574, %v2183
      %v2185 = vpop.f32.mrb[0].mxu0
      %v2186 = vpop.f32.mrb[0].mxu0
      %v2187 = vadd.f32 %v574, %v2186
      %v2188 = vpop.f32.mrb[0].mxu0
      %2189 = vmatprep.mubr.bf16.mxu0 0
      %2190 = vmatmul.mubr.bf16.gmra.mrb[0].mxu0 %v1427
      %v2191 = vpop.f32.mrb[0].mxu0
      %v2192 = vadd.f32 %v574, %v2191
      %v2193 = vpop.f32.mrb[0].mxu0
      %v2194 = vpop.f32.mrb[0].mxu0
      %v2195 = vadd.f32 %v574, %v2194
      %v2196 = vpop.f32.mrb[0].mxu0
      %2197 = vmatprep.mubr.bf16.mxu0 0
      %2198 = vmatmul.mubr.bf16.gmra.mrb[0].mxu0 %v1430
      %v2199 = vpop.f32.mrb[0].mxu0
      %v2200 = vadd.f32 %v574, %v2199
      %v2201 = vpop.f32.mrb[0].mxu0
      %v2202 = vpop.f32.mrb[0].mxu0
      %v2203 = vadd.f32 %v574, %v2202
      %v2204 = vpop.f32.mrb[0].mxu0
      %2205 = vmatprep.mubr.bf16.mxu0 0
      %2206 = vmatmul.mubr.bf16.gmra.mrb[0].mxu0 %v1433
      %v2207 = vpop.f32.mrb[0].mxu0
      %v2208 = vadd.f32 %v574, %v2207
      %v2209 = vpop.f32.mrb[0].mxu0
      %v2210 = vpop.f32.mrb[0].mxu0
      %v2211 = vadd.f32 %v574, %v2210
      %v2212 = vpop.f32.mrb[0].mxu0
      %2213 = vmatprep.mubr.bf16.mxu0 0
      %2214 = vmatmul.mubr.bf16.gmra.mrb[0].mxu0 %v1436
      %v2215 = vpop.f32.mrb[0].mxu0
      %v2216 = vadd.f32 %v574, %v2215
      %v2217 = vpop.f32.mrb[0].mxu0
      %v2218 = vpop.f32.mrb[0].mxu0
      %v2219 = vadd.f32 %v574, %v2218
      %v2220 = vpop.f32.mrb[0].mxu0
      %2221 = vmatprep.mubr.bf16.mxu0 0
      %2222 = vmatmul.mubr.bf16.gmra.mrb[0].mxu0 %v1439
      %v2223 = vpop.f32.mrb[0].mxu0
      %v2224 = vadd.f32 %v574, %v2223
      %v2225 = vpop.f32.mrb[0].mxu0
      %v2226 = vpop.f32.mrb[0].mxu0
      %v2227 = vadd.f32 %v574, %v2226
      %v2228 = vpop.f32.mrb[0].mxu0
      %2229 = vmatprep.mubr.bf16.mxu0 0
      %2230 = vmatmul.mubr.bf16.gmra.mrb[0].mxu0 %v1442
      %v2231 = vpop.f32.mrb[0].mxu0
      %v2232 = vadd.f32 %v574, %v2231
      %v2233 = vpop.f32.mrb[0].mxu0
      %v2234 = vpop.f32.mrb[0].mxu0
      %v2235 = vadd.f32 %v574, %v2234
      %v2236 = vpop.f32.mrb[0].mxu0
      %2237 = vmatprep.mubr.bf16.mxu0 0
      %2238 = vmatmul.mubr.bf16.gmra.mrb[0].mxu0 %v1445
      %v2239 = vpop.f32.mrb[0].mxu0
      %v2240 = vadd.f32 %v574, %v2239
      %v2241 = vpop.f32.mrb[0].mxu0
      %v2242 = vpop.f32.mrb[0].mxu0
      %v2243 = vadd.f32 %v574, %v2242
      %v2244 = vpop.f32.mrb[0].mxu0
      %2245 = vmatprep.mubr.bf16.mxu0 0
      %2246 = vmatmul.mubr.bf16.gmra.mrb[0].mxu0 %v1448
      %v2247 = vpop.f32.mrb[0].mxu0
      %v2248 = vadd.f32 %v574, %v2247
      %v2249 = vpop.f32.mrb[0].mxu0
      %v2250 = vpop.f32.mrb[0].mxu0
      %v2251 = vadd.f32 %v574, %v2250
      %v2252 = vpop.f32.mrb[0].mxu0
      %2253 = vmatprep.mubr.bf16.mxu0 0
      %2254 = vmatmul.mubr.bf16.gmra.mrb[0].mxu0 %v1451
      %v2255 = vpop.f32.mrb[0].mxu0
      %v2256 = vadd.f32 %v574, %v2255
      %v2257 = vpop.f32.mrb[0].mxu0
      %v2258 = vpop.f32.mrb[0].mxu0
      %v2259 = vadd.f32 %v574, %v2258
      %v2260 = vpop.f32.mrb[0].mxu0
      %2261 = vmatprep.mubr.bf16.mxu0 0
      %2262 = vmatmul.mubr.bf16.gmra.mrb[0].mxu0 %v1454
      %v2263 = vpop.f32.mrb[0].mxu0
      %v2264 = vadd.f32 %v574, %v2263
      %v2265 = vpop.f32.mrb[0].mxu0
      %v2266 = vpop.f32.mrb[0].mxu0
      %v2267 = vadd.f32 %v574, %v2266
      %v2268 = vpop.f32.mrb[0].mxu0
      %2269 = vmatprep.mubr.bf16.mxu0 0
      %2270 = vmatmul.mubr.bf16.gmra.mrb[0].mxu0 %v1457
      %v2271 = vpop.f32.mrb[0].mxu0
      %v2272 = vadd.f32 %v574, %v2271
      %v2273 = vpop.f32.mrb[0].mxu0
      %v2274 = vpop.f32.mrb[0].mxu0
      %v2275 = vadd.f32 %v574, %v2274
      %v2276 = vpop.f32.mrb[0].mxu0
      %2277 = vmatprep.mubr.bf16.mxu0 0
      %2278 = vmatmul.mubr.bf16.gmra.mrb[0].mxu0 %v1460
      %v2279 = vpop.f32.mrb[0].mxu0
      %v2280 = vadd.f32 %v574, %v2279
      %v2281 = vpop.f32.mrb[0].mxu0
      %v2282 = vpop.f32.mrb[0].mxu0
      %v2283 = vadd.f32 %v574, %v2282
      %v2284 = vpop.f32.mrb[0].mxu0
      %2285 = vmatprep.mubr.bf16.mxu0 0
      %2286 = vmatmul.mubr.bf16.gmra.mrb[0].mxu0 %v1463
      %v2287 = vpop.f32.mrb[0].mxu0
      %v2288 = vadd.f32 %v574, %v2287
      %v2289 = vpop.f32.mrb[0].mxu0
      %v2290 = vpop.f32.mrb[0].mxu0
      %v2291 = vadd.f32 %v574, %v2290
      %v2292 = vpop.f32.mrb[0].mxu0
      %2293 = vmatprep.mubr.bf16.mxu0 0
      %2294 = vmatmul.mubr.bf16.gmra.mrb[0].mxu0 %v1466
      %v2295 = vpop.f32.mrb[0].mxu0
      %v2296 = vadd.f32 %v574, %v2295
      %v2297 = vpop.f32.mrb[0].mxu0
      %v2298 = vpop.f32.mrb[0].mxu0
      %v2299 = vadd.f32 %v574, %v2298
      %v2300 = vpop.f32.mrb[0].mxu0
      %2301 = vmatprep.mubr.bf16.mxu0 0
      %2302 = vmatmul.mubr.bf16.gmra.mrb[0].mxu0 %v1469
      %v2303 = vpop.f32.mrb[0].mxu0
      %v2304 = vadd.f32 %v574, %v2303
      %v2305 = vpop.f32.mrb[0].mxu0
      %v2306 = vpop.f32.mrb[0].mxu0
      %v2307 = vadd.f32 %v574, %v2306
      %v2308 = vpop.f32.mrb[0].mxu0
      %2309 = vmatprep.mubr.bf16.mxu0 0
      %2310 = vmatmul.mubr.bf16.gmra.mrb[0].mxu0 %v1472
      %v2311 = vpop.f32.mrb[0].mxu0
      %v2312 = vadd.f32 %v574, %v2311
      %v2313 = vpop.f32.mrb[0].mxu0
      %v2314 = vpop.f32.mrb[0].mxu0
      %v2315 = vadd.f32 %v574, %v2314
      %v2316 = vpop.f32.mrb[0].mxu0
      %2317 = vmatprep.mubr.bf16.mxu0 0
      %2318 = vmatmul.mubr.bf16.gmra.mrb[0].mxu0 %v1475
      %v2319 = vpop.f32.mrb[0].mxu0
      %v2320 = vadd.f32 %v574, %v2319
      %v2321 = vpop.f32.mrb[0].mxu0
      %v2322 = vpop.f32.mrb[0].mxu0
      %v2323 = vadd.f32 %v574, %v2322
      %v2324 = vpop.f32.mrb[0].mxu0
      %2325 = vmatprep.mubr.bf16.mxu0 0
      %2326 = vmatmul.mubr.bf16.gmra.mrb[0].mxu0 %v1478
      %v2327 = vpop.f32.mrb[0].mxu0
      %v2328 = vadd.f32 %v574, %v2327
      %v2329 = vpop.f32.mrb[0].mxu0
      %v2330 = vpop.f32.mrb[0].mxu0
      %v2331 = vadd.f32 %v574, %v2330
      %v2332 = vpop.f32.mrb[0].mxu0
      %2333 = vmatprep.mubr.bf16.mxu0 0
      %2334 = vmatmul.mubr.bf16.gmra.mrb[0].mxu0 %v1481
      %v2335 = vpop.f32.mrb[0].mxu0
      %v2336 = vadd.f32 %v574, %v2335
      %v2337 = vpop.f32.mrb[0].mxu0
      %v2338 = vpop.f32.mrb[0].mxu0
      %v2339 = vadd.f32 %v574, %v2338
      %v2340 = vpop.f32.mrb[0].mxu0
      %2341 = vmatprep.mubr.bf16.mxu0 0
      %2342 = vmatmul.mubr.bf16.gmra.mrb[0].mxu0 %v1484
      %v2343 = vpop.f32.mrb[0].mxu0
      %v2344 = vadd.f32 %v574, %v2343
      %v2345 = vpop.f32.mrb[0].mxu0
      %v2346 = vpop.f32.mrb[0].mxu0
      %v2347 = vadd.f32 %v574, %v2346
      %v2348 = vpop.f32.mrb[0].mxu0
      %2349 = vmatprep.mubr.bf16.mxu0 0
      %2350 = vmatmul.mubr.bf16.gmra.mrb[0].mxu0 %v1487
      %v2351 = vpop.f32.mrb[0].mxu0
      %v2352 = vadd.f32 %v574, %v2351
      %v2353 = vpop.f32.mrb[0].mxu0
      %v2354 = vpop.f32.mrb[0].mxu0
      %v2355 = vadd.f32 %v574, %v2354
      %v2356 = vpop.f32.mrb[0].mxu0
      %2357 = vmatprep.mubr.bf16.mxu0 0
      %2358 = vmatmul.mubr.bf16.gmra.mrb[0].mxu0 %v1490
      %v2359 = vpop.f32.mrb[0].mxu0
      %v2360 = vadd.f32 %v574, %v2359
      %v2361 = vpop.f32.mrb[0].mxu0
      %v2362 = vpop.f32.mrb[0].mxu0
      %v2363 = vadd.f32 %v574, %v2362
      %v2364 = vpop.f32.mrb[0].mxu0
      %2365 = vmatprep.mubr.bf16.mxu0 0
      %2366 = vmatmul.mubr.bf16.gmra.mrb[0].mxu0 %v1493
      %v2367 = vpop.f32.mrb[0].mxu0
      %v2368 = vadd.f32 %v574, %v2367
      %v2369 = vpop.f32.mrb[0].mxu0
      %v2370 = vpop.f32.mrb[0].mxu0
      %v2371 = vadd.f32 %v574, %v2370
      %v2372 = vpop.f32.mrb[0].mxu0
      %2373 = vmatprep.mubr.bf16.mxu0 0
      %2374 = vmatmul.mubr.bf16.gmra.mrb[0].mxu0 %v1496
      %v2375 = vpop.f32.mrb[0].mxu0
      %v2376 = vadd.f32 %v574, %v2375
      %v2377 = vpop.f32.mrb[0].mxu0
      %v2378 = vpop.f32.mrb[0].mxu0
      %v2379 = vadd.f32 %v574, %v2378
      %v2380 = vpop.f32.mrb[0].mxu0
      %2381 = vmatprep.mubr.bf16.mxu0 0
      %2382 = vmatmul.mubr.bf16.gmra.mrb[0].mxu0 %v1499
      %v2383 = vpop.f32.mrb[0].mxu0
      %v2384 = vadd.f32 %v574, %v2383
      %v2385 = vpop.f32.mrb[0].mxu0
      %v2386 = vpop.f32.mrb[0].mxu0
      %v2387 = vadd.f32 %v574, %v2386
      %v2388 = vpop.f32.mrb[0].mxu0
      %2389 = vmatprep.mubr.bf16.mxu0 0
      %2390 = vmatmul.mubr.bf16.gmra.mrb[0].mxu0 %v1502
      %v2391 = vpop.f32.mrb[0].mxu0
      %v2392 = vadd.f32 %v574, %v2391
      %v2393 = vpop.f32.mrb[0].mxu0
      %v2394 = vpop.f32.mrb[0].mxu0
      %v2395 = vadd.f32 %v574, %v2394
      %v2396 = vpop.f32.mrb[0].mxu0
      %2397 = vmatprep.mubr.bf16.mxu0 0
      %2398 = vmatmul.mubr.bf16.gmra.mrb[0].mxu0 %v1505
      %v2399 = vpop.f32.mrb[0].mxu0
      %v2400 = vadd.f32 %v574, %v2399
      %v2401 = vpop.f32.mrb[0].mxu0
      %v2402 = vpop.f32.mrb[0].mxu0
      %v2403 = vadd.f32 %v574, %v2402
      %v2404 = vpop.f32.mrb[0].mxu0
      %2405 = vmatprep.mubr.bf16.mxu0 0
      %2406 = vmatmul.mubr.bf16.gmra.mrb[0].mxu0 %v1508
      %v2407 = vpop.f32.mrb[0].mxu0
      %v2408 = vadd.f32 %v574, %v2407
      %v2409 = vpop.f32.mrb[0].mxu0
      %v2410 = vpop.f32.mrb[0].mxu0
      %v2411 = vadd.f32 %v574, %v2410
      %v2412 = vpop.f32.mrb[0].mxu0
      %2413 = vmatprep.mubr.bf16.mxu0 0
      %2414 = vmatmul.mubr.bf16.gmra.mrb[0].mxu0 %v1511
      %v2415 = vpop.f32.mrb[0].mxu0
      %v2416 = vadd.f32 %v574, %v2415
      %v2417 = vpop.f32.mrb[0].mxu0
      %v2418 = vpop.f32.mrb[0].mxu0
      %v2419 = vadd.f32 %v574, %v2418
      %v2420 = vpop.f32.mrb[0].mxu0
      %2421 = vmatprep.mubr.bf16.mxu0 0
      %2422 = vmatmul.mubr.bf16.gmra.mrb[0].mxu0 %v1514
      %v2423 = vpop.f32.mrb[0].mxu0
      %v2424 = vadd.f32 %v574, %v2423
      %v2425 = vpop.f32.mrb[0].mxu0
      %v2426 = vpop.f32.mrb[0].mxu0
      %v2427 = vadd.f32 %v574, %v2426
      %v2428 = vpop.f32.mrb[0].mxu0
      %2429 = vmatprep.mubr.bf16.mxu0 0
      %2430 = vmatmul.mubr.bf16.gmra.mrb[0].mxu0 %v1517
      %v2431 = vpop.f32.mrb[0].mxu0
      %v2432 = vadd.f32 %v574, %v2431
      %v2433 = vpop.f32.mrb[0].mxu0
      %v2434 = vpop.f32.mrb[0].mxu0
      %v2435 = vadd.f32 %v574, %v2434
      %v2436 = vpop.f32.mrb[0].mxu0
      %2437 = vmatprep.mubr.bf16.mxu0 0
      %2438 = vmatmul.mubr.bf16.gmra.mrb[0].mxu0 %v1520
      %v2439 = vpop.f32.mrb[0].mxu0
      %v2440 = vadd.f32 %v574, %v2439
      %v2441 = vpop.f32.mrb[0].mxu0
      %v2442 = vpop.f32.mrb[0].mxu0
      %v2443 = vadd.f32 %v574, %v2442
      %v2444 = vpop.f32.mrb[0].mxu0
      %2445 = vmatprep.mubr.bf16.mxu0 0
      %2446 = vmatmul.mubr.bf16.gmra.mrb[0].mxu0 %v1523
      %v2447 = vpop.f32.mrb[0].mxu0
      %v2448 = vadd.f32 %v574, %v2447
      %v2449 = vpop.f32.mrb[0].mxu0
      %v2450 = vpop.f32.mrb[0].mxu0
      %v2451 = vadd.f32 %v574, %v2450
      %v2452 = vpop.f32.mrb[0].mxu0
      %2453 = vmatprep.mubr.bf16.mxu0 0
      %2454 = vmatmul.mubr.bf16.gmra.mrb[0].mxu0 %v1526
      %v2455 = vpop.f32.mrb[0].mxu0
      %v2456 = vadd.f32 %v574, %v2455
      %v2457 = vpop.f32.mrb[0].mxu0
      %v2458 = vpop.f32.mrb[0].mxu0
      %v2459 = vadd.f32 %v574, %v2458
      %v2460 = vpop.f32.mrb[0].mxu0
      %2461 = vmatprep.mubr.bf16.mxu0 0
      %2462 = vmatmul.mubr.bf16.gmra.mrb[0].mxu0 %v1529
      %v2463 = vpop.f32.mrb[0].mxu0
      %v2464 = vadd.f32 %v574, %v2463
      %v2465 = vpop.f32.mrb[0].mxu0
      %v2466 = vpop.f32.mrb[0].mxu0
      %v2467 = vadd.f32 %v574, %v2466
      %v2468 = vpop.f32.mrb[0].mxu0
      %2469 = vmatprep.mubr.bf16.mxu0 0
      %2470 = vmatmul.mubr.bf16.gmra.mrb[0].mxu0 %v1532
      %v2471 = vpop.f32.mrb[0].mxu0
      %v2472 = vadd.f32 %v574, %v2471
      %v2473 = vpop.f32.mrb[0].mxu0
      %v2474 = vpop.f32.mrb[0].mxu0
      %v2475 = vadd.f32 %v574, %v2474
      %v2476 = vpop.f32.mrb[0].mxu0
      %2477 = vmatprep.mubr.bf16.mxu0 0
      %2478 = vmatmul.mubr.bf16.gmra.mrb[0].mxu0 %v1535
      %v2479 = vpop.f32.mrb[0].mxu0
      %v2480 = vadd.f32 %v574, %v2479
      %v2481 = vpop.f32.mrb[0].mxu0
      %v2482 = vpop.f32.mrb[0].mxu0
      %v2483 = vadd.f32 %v574, %v2482
      %v2484 = vpop.f32.mrb[0].mxu0
      %2485 = vmatprep.mubr.bf16.mxu0 0
      %2486 = vmatmul.mubr.bf16.gmra.mrb[0].mxu0 %v1538
      %v2487 = vpop.f32.mrb[0].mxu0
      %v2488 = vadd.f32 %v574, %v2487
      %v2489 = vpop.f32.mrb[0].mxu0
      %v2490 = vpop.f32.mrb[0].mxu0
      %v2491 = vadd.f32 %v574, %v2490
      %v2492 = vpop.f32.mrb[0].mxu0
      %2493 = vmatprep.mubr.bf16.mxu0 0
      %2494 = vmatmul.mubr.bf16.gmra.mrb[0].mxu0 %v1541
      %v2495 = vpop.f32.mrb[0].mxu0
      %v2496 = vadd.f32 %v574, %v2495
      %v2497 = vpop.f32.mrb[0].mxu0
      %v2498 = vpop.f32.mrb[0].mxu0
      %v2499 = vadd.f32 %v574, %v2498
      %v2500 = vpop.f32.mrb[0].mxu0
      %2501 = vmatprep.mubr.bf16.mxu0 0
      %2502 = vmatmul.mubr.bf16.gmra.mrb[0].mxu0 %v1544
      %v2503 = vpop.f32.mrb[0].mxu0
      %v2504 = vadd.f32 %v574, %v2503
      %v2505 = vpop.f32.mrb[0].mxu0
      %v2506 = vpop.f32.mrb[0].mxu0
      %v2507 = vadd.f32 %v574, %v2506
      %v2508 = vpop.f32.mrb[0].mxu0
      %2509 = vmatprep.mubr.bf16.mxu0 0
      %2510 = vmatmul.mubr.bf16.gmra.mrb[0].mxu0 %v1547
      %v2511 = vpop.f32.mrb[0].mxu0
      %v2512 = vadd.f32 %v574, %v2511
      %v2513 = vpop.f32.mrb[0].mxu0
      %v2514 = vpop.f32.mrb[0].mxu0
      %v2515 = vadd.f32 %v574, %v2514
      %v2516 = vpop.f32.mrb[0].mxu0
      %2517 = vmatprep.mubr.bf16.mxu0 0
      %2518 = vmatmul.mubr.bf16.gmra.mrb[0].mxu0 %v1550
      %v2519 = vpop.f32.mrb[0].mxu0
      %v2520 = vadd.f32 %v574, %v2519
      %v2521 = vpop.f32.mrb[0].mxu0
      %v2522 = vpop.f32.mrb[0].mxu0
      %v2523 = vadd.f32 %v574, %v2522
      %v2524 = vpop.f32.mrb[0].mxu0
      %2525 = vmatprep.mubr.bf16.mxu0 0
      %2526 = vmatmul.mubr.bf16.gmra.mrb[0].mxu0 %v1553
      %v2527 = vpop.f32.mrb[0].mxu0
      %v2528 = vadd.f32 %v574, %v2527
      %v2529 = vpop.f32.mrb[0].mxu0
      %v2530 = vpop.f32.mrb[0].mxu0
      %v2531 = vadd.f32 %v574, %v2530
      %v2532 = vpop.f32.mrb[0].mxu0
      %2533 = vmatprep.mubr.bf16.mxu0 0
      %2534 = vmatmul.mubr.bf16.gmra.mrb[0].mxu0 %v1556
      %v2535 = vpop.f32.mrb[0].mxu0
      %v2536 = vadd.f32 %v574, %v2535
      %v2537 = vpop.f32.mrb[0].mxu0
      %v2538 = vpop.f32.mrb[0].mxu0
      %v2539 = vadd.f32 %v574, %v2538
      %v2540 = vpop.f32.mrb[0].mxu0
      %2541 = vmatprep.mubr.bf16.mxu0 0
      %2542 = vmatmul.mubr.bf16.gmra.mrb[0].mxu0 %v1559
      %v2543 = vpop.f32.mrb[0].mxu0
      %v2544 = vadd.f32 %v574, %v2543
      %v2545 = vpop.f32.mrb[0].mxu0
      %v2546 = vpop.f32.mrb[0].mxu0
      %v2547 = vadd.f32 %v574, %v2546
      %v2548 = vpop.f32.mrb[0].mxu0
      %2549 = vmatprep.mubr.bf16.mxu0 0
      %2550 = vmatmul.mubr.bf16.gmra.mrb[0].mxu0 %v1562
      %v2551 = vpop.f32.mrb[0].mxu0
      %v2552 = vadd.f32 %v574, %v2551
      %v2553 = vpop.f32.mrb[0].mxu0
      %v2554 = vpop.f32.mrb[0].mxu0
      %v2555 = vadd.f32 %v574, %v2554
      %v2556 = vpop.f32.mrb[0].mxu0
      %2557 = vmatprep.mubr.bf16.mxu0 0
      %2558 = vmatmul.mubr.bf16.gmra.mrb[0].mxu0 %v1565
      %v2559 = vpop.f32.mrb[0].mxu0
      %v2560 = vadd.f32 %v574, %v2559
      %v2561 = vpop.f32.mrb[0].mxu0
      %v2562 = vpop.f32.mrb[0].mxu0
      %v2563 = vadd.f32 %v574, %v2562
      %v2564 = vpop.f32.mrb[0].mxu0
      %2565 = vmatprep.mubr.bf16.mxu0 0
      %2566 = vmatmul.mubr.bf16.gmra.mrb[0].mxu0 %v1568
      %v2567 = vpop.f32.mrb[0].mxu0
      %v2568 = vadd.f32 %v574, %v2567
      %v2569 = vpop.f32.mrb[0].mxu0
      %v2570 = vpop.f32.mrb[0].mxu0
      %v2571 = vadd.f32 %v574, %v2570
      %v2572 = vpop.f32.mrb[0].mxu0
      %2573 = vmatprep.mubr.bf16.mxu0 0
      %2574 = vmatmul.mubr.bf16.gmra.mrb[0].mxu0 %v1571
      %v2575 = vpop.f32.mrb[0].mxu0
      %v2576 = vadd.f32 %v574, %v2575
      %v2577 = vpop.f32.mrb[0].mxu0
      %v2578 = vpop.f32.mrb[0].mxu0
      %v2579 = vadd.f32 %v574, %v2578
      %v2580 = vpop.f32.mrb[0].mxu0
      %2581 = vmatprep.mubr.bf16.mxu0 0
      %2582 = vmatmul.mubr.bf16.gmra.mrb[0].mxu0 %v1574
      %v2583 = vpop.f32.mrb[0].mxu0
      %v2584 = vadd.f32 %v574, %v2583
      %v2585 = vpop.f32.mrb[0].mxu0
      %v2586 = vpop.f32.mrb[0].mxu0
      %v2587 = vadd.f32 %v574, %v2586
      %v2588 = vpop.f32.mrb[0].mxu0
      %2589 = vmatprep.mubr.bf16.mxu0 0
      %2590 = vmatmul.mubr.bf16.gmra.mrb[0].mxu0 %v1577
      %v2591 = vpop.f32.mrb[0].mxu0
      %v2592 = vadd.f32 %v574, %v2591
      %v2593 = vpop.f32.mrb[0].mxu0
      %v2594 = vpop.f32.mrb[0].mxu0
      %v2595 = vadd.f32 %v574, %v2594
      %v2596 = vpop.f32.mrb[0].mxu0
      %2597 = vmatprep.mubr.bf16.mxu0 0
      %2598 = vmatmul.mubr.bf16.gmra.mrb[0].mxu0 %v1580
      %v2599 = vpop.f32.mrb[0].mxu0
      %v2600 = vadd.f32 %v574, %v2599
      %v2601 = vpop.f32.mrb[0].mxu0
      %v2602 = vpop.f32.mrb[0].mxu0
      %v2603 = vadd.f32 %v574, %v2602
      %v2604 = vpop.f32.mrb[0].mxu0
      %2605 = vmatprep.mubr.bf16.mxu0 0
      %2606 = vmatmul.mubr.bf16.gmra.mrb[0].mxu0 %v1583
      %v2607 = vpop.f32.mrb[0].mxu0
      %v2608 = vadd.f32 %v574, %v2607
      %v2609 = vpop.f32.mrb[0].mxu0
      %v2610 = vpop.f32.mrb[0].mxu0
      %v2611 = vadd.f32 %v574, %v2610
      %v2612 = vpop.f32.mrb[0].mxu0
      %2613 = vmatprep.mubr.bf16.mxu0 0
      %2614 = vmatmul.mubr.bf16.gmra.mrb[0].mxu0 %v1586
      %v2615 = vpop.f32.mrb[0].mxu0
      %v2616 = vadd.f32 %v574, %v2615
      %v2617 = vpop.f32.mrb[0].mxu0
      %v2618 = vpop.f32.mrb[0].mxu0
      %v2619 = vadd.f32 %v574, %v2618
      %v2620 = vpop.f32.mrb[0].mxu0
      %2621 = vmatprep.mubr.bf16.mxu0 0
      %2622 = vmatmul.mubr.bf16.gmra.mrb[0].mxu0 %v1589
      %v2623 = vpop.f32.mrb[0].mxu0
      %v2624 = vadd.f32 %v574, %v2623
      %v2625 = vpop.f32.mrb[0].mxu0
      %v2626 = vpop.f32.mrb[0].mxu0
      %v2627 = vadd.f32 %v574, %v2626
      %v2628 = vpop.f32.mrb[0].mxu0
      %2629 = vmatprep.mubr.bf16.mxu0 0
      %2630 = vmatmul.mubr.bf16.gmra.mrb[0].mxu0 %v1592
      %v2631 = vpop.f32.mrb[0].mxu0
      %v2632 = vadd.f32 %v574, %v2631
      %v2633 = vpop.f32.mrb[0].mxu0
      %v2634 = vpop.f32.mrb[0].mxu0
      %v2635 = vadd.f32 %v574, %v2634
      %v2636 = vpop.f32.mrb[0].mxu0
      %2637 = vmatprep.mubr.bf16.mxu0 0
      %2638 = vmatmul.mubr.bf16.gmra.mrb[0].mxu0 %v1595
      %v2639 = vpop.f32.mrb[0].mxu0
      %v2640 = vadd.f32 %v574, %v2639
      %v2641 = vpop.f32.mrb[0].mxu0
      %v2642 = vpop.f32.mrb[0].mxu0
      %v2643 = vadd.f32 %v574, %v2642
      %v2644 = vpop.f32.mrb[0].mxu0
      %2645 = vmatprep.mubr.bf16.mxu0 0
      %2646 = vmatmul.mubr.bf16.gmra.mrb[0].mxu0 %v1598
      %v2647 = vpop.f32.mrb[0].mxu0
      %v2648 = vadd.f32 %v574, %v2647
      %v2649 = vpop.f32.mrb[0].mxu0
      %v2650 = vpop.f32.mrb[0].mxu0
      %v2651 = vadd.f32 %v574, %v2650
      %v2652 = vpop.f32.mrb[0].mxu0
      %2653 = vmatprep.mubr.bf16.mxu0 0
      %2654 = vmatmul.mubr.bf16.gmra.mrb[0].mxu0 %v1601
      %v2655 = vpop.f32.mrb[0].mxu0
      %v2656 = vadd.f32 %v574, %v2655
      %v2657 = vpop.f32.mrb[0].mxu0
      %v2658 = vpop.f32.mrb[0].mxu0
      %v2659 = vadd.f32 %v574, %v2658
      %v2660 = vpop.f32.mrb[0].mxu0
      %2661 = vmatprep.mubr.bf16.mxu0 0
      %2662 = vmatmul.mubr.bf16.gmra.mrb[0].mxu0 %v1604
      %v2663 = vpop.f32.mrb[0].mxu0
      %v2664 = vadd.f32 %v574, %v2663
      %v2665 = vpop.f32.mrb[0].mxu0
      %v2666 = vpop.f32.mrb[0].mxu0
      %v2667 = vadd.f32 %v574, %v2666
      %v2668 = vpop.f32.mrb[0].mxu0
      %2669 = vdwg.mxu0
      %v2670 = vmul.f32 %v1648, 0.2
      %v2671 = vmul.f32 %v1651, 0.2
      %v2672 = vmul.f32 %v1656, 0.2
      %v2673 = vmul.f32 %v1659, 0.2
      %v2674 = vmul.f32 %v1664, 0.2
      %v2675 = vmul.f32 %v1667, 0.2
      %v2676 = vmul.f32 %v1672, 0.2
      %v2677 = vmul.f32 %v1675, 0.2
      %v2678 = vmul.f32 %v1680, 0.2
      %v2679 = vmul.f32 %v1683, 0.2
      %v2680 = vmul.f32 %v1688, 0.2
      %v2681 = vmul.f32 %v1691, 0.2
      %v2682 = vmul.f32 %v1696, 0.2
      %v2683 = vmul.f32 %v1699, 0.2
      %v2684 = vmul.f32 %v1704, 0.2
      %v2685 = vmul.f32 %v1707, 0.2
      %v2686 = vmul.f32 %v1712, 0.2
      %v2687 = vmul.f32 %v1715, 0.2
      %v2688 = vmul.f32 %v1720, 0.2
      %v2689 = vmul.f32 %v1723, 0.2
      %v2690 = vmul.f32 %v1728, 0.2
      %v2691 = vmul.f32 %v1731, 0.2
      %v2692 = vmul.f32 %v1736, 0.2
      %v2693 = vmul.f32 %v1739, 0.2
      %v2694 = vmul.f32 %v1744, 0.2
      %v2695 = vmul.f32 %v1747, 0.2
      %v2696 = vmul.f32 %v1752, 0.2
      %v2697 = vmul.f32 %v1755, 0.2
      %v2698 = vmul.f32 %v1760, 0.2
      %v2699 = vmul.f32 %v1763, 0.2
      %v2700 = vmul.f32 %v1768, 0.2
      %v2701 = vmul.f32 %v1771, 0.2
      %v2702 = vmul.f32 %v1776, 0.2
      %v2703 = vmul.f32 %v1779, 0.2
      %v2704 = vmul.f32 %v1784, 0.2
      %v2705 = vmul.f32 %v1787, 0.2
      %v2706 = vmul.f32 %v1792, 0.2
      %v2707 = vmul.f32 %v1795, 0.2
      %v2708 = vmul.f32 %v1800, 0.2
      %v2709 = vmul.f32 %v1803, 0.2
      %v2710 = vmul.f32 %v1808, 0.2
      %v2711 = vmul.f32 %v1811, 0.2
      %v2712 = vmul.f32 %v1816, 0.2
      %v2713 = vmul.f32 %v1819, 0.2
      %v2714 = vmul.f32 %v1824, 0.2
      %v2715 = vmul.f32 %v1827, 0.2
      %v2716 = vmul.f32 %v1832, 0.2
      %v2717 = vmul.f32 %v1835, 0.2
      %v2718 = vmul.f32 %v1840, 0.2
      %v2719 = vmul.f32 %v1843, 0.2
      %v2720 = vmul.f32 %v1848, 0.2
      %v2721 = vmul.f32 %v1851, 0.2
      %v2722 = vmul.f32 %v1856, 0.2
      %v2723 = vmul.f32 %v1859, 0.2
      %v2724 = vmul.f32 %v1864, 0.2
      %v2725 = vmul.f32 %v1867, 0.2
      %v2726 = vmul.f32 %v1872, 0.2
      %v2727 = vmul.f32 %v1875, 0.2
      %v2728 = vmul.f32 %v1880, 0.2
      %v2729 = vmul.f32 %v1883, 0.2
      %v2730 = vmul.f32 %v1888, 0.2
      %v2731 = vmul.f32 %v1891, 0.2
      %v2732 = vmul.f32 %v1896, 0.2
      %v2733 = vmul.f32 %v1899, 0.2
      %v2734 = vmul.f32 %v1904, 0.2
      %v2735 = vmul.f32 %v1907, 0.2
      %v2736 = vmul.f32 %v1912, 0.2
      %v2737 = vmul.f32 %v1915, 0.2
      %v2738 = vmul.f32 %v1920, 0.2
      %v2739 = vmul.f32 %v1923, 0.2
      %v2740 = vmul.f32 %v1928, 0.2
      %v2741 = vmul.f32 %v1931, 0.2
      %v2742 = vmul.f32 %v1936, 0.2
      %v2743 = vmul.f32 %v1939, 0.2
      %v2744 = vmul.f32 %v1944, 0.2
      %v2745 = vmul.f32 %v1947, 0.2
      %v2746 = vmul.f32 %v1952, 0.2
      %v2747 = vmul.f32 %v1955, 0.2
      %v2748 = vmul.f32 %v1960, 0.2
      %v2749 = vmul.f32 %v1963, 0.2
      %v2750 = vmul.f32 %v1968, 0.2
      %v2751 = vmul.f32 %v1971, 0.2
      %v2752 = vmul.f32 %v1976, 0.2
      %v2753 = vmul.f32 %v1979, 0.2
      %v2754 = vmul.f32 %v1984, 0.2
      %v2755 = vmul.f32 %v1987, 0.2
      %v2756 = vmul.f32 %v1992, 0.2
      %v2757 = vmul.f32 %v1995, 0.2
      %v2758 = vmul.f32 %v2000, 0.2
      %v2759 = vmul.f32 %v2003, 0.2
      %v2760 = vmul.f32 %v2008, 0.2
      %v2761 = vmul.f32 %v2011, 0.2
      %v2762 = vmul.f32 %v2016, 0.2
      %v2763 = vmul.f32 %v2019, 0.2
      %v2764 = vmul.f32 %v2024, 0.2
      %v2765 = vmul.f32 %v2027, 0.2
      %v2766 = vmul.f32 %v2032, 0.2
      %v2767 = vmul.f32 %v2035, 0.2
      %v2768 = vmul.f32 %v2040, 0.2
      %v2769 = vmul.f32 %v2043, 0.2
      %v2770 = vmul.f32 %v2048, 0.2
      %v2771 = vmul.f32 %v2051, 0.2
      %v2772 = vmul.f32 %v2056, 0.2
      %v2773 = vmul.f32 %v2059, 0.2
      %v2774 = vmul.f32 %v2064, 0.2
      %v2775 = vmul.f32 %v2067, 0.2
      %v2776 = vmul.f32 %v2072, 0.2
      %v2777 = vmul.f32 %v2075, 0.2
      %v2778 = vmul.f32 %v2080, 0.2
      %v2779 = vmul.f32 %v2083, 0.2
      %v2780 = vmul.f32 %v2088, 0.2
      %v2781 = vmul.f32 %v2091, 0.2
      %v2782 = vmul.f32 %v2096, 0.2
      %v2783 = vmul.f32 %v2099, 0.2
      %v2784 = vmul.f32 %v2104, 0.2
      %v2785 = vmul.f32 %v2107, 0.2
      %v2786 = vmul.f32 %v2112, 0.2
      %v2787 = vmul.f32 %v2115, 0.2
      %v2788 = vmul.f32 %v2120, 0.2
      %v2789 = vmul.f32 %v2123, 0.2
      %v2790 = vmul.f32 %v2128, 0.2
      %v2791 = vmul.f32 %v2131, 0.2
      %v2792 = vmul.f32 %v2136, 0.2
      %v2793 = vmul.f32 %v2139, 0.2
      %v2794 = vmul.f32 %v2144, 0.2
      %v2795 = vmul.f32 %v2147, 0.2
      %v2796 = vmul.f32 %v2152, 0.2
      %v2797 = vmul.f32 %v2155, 0.2
      %v2798 = vmul.f32 %v2160, 0.2
      %v2799 = vmul.f32 %v2163, 0.2
      %v2800 = vmul.f32 %v2168, 0.2
      %v2801 = vmul.f32 %v2171, 0.2
      %v2802 = vmul.f32 %v2176, 0.2
      %v2803 = vmul.f32 %v2179, 0.2
      %v2804 = vmul.f32 %v2184, 0.2
      %v2805 = vmul.f32 %v2187, 0.2
      %v2806 = vmul.f32 %v2192, 0.2
      %v2807 = vmul.f32 %v2195, 0.2
      %v2808 = vmul.f32 %v2200, 0.2
      %v2809 = vmul.f32 %v2203, 0.2
      %v2810 = vmul.f32 %v2208, 0.2
      %v2811 = vmul.f32 %v2211, 0.2
      %v2812 = vmul.f32 %v2216, 0.2
      %v2813 = vmul.f32 %v2219, 0.2
      %v2814 = vmul.f32 %v2224, 0.2
      %v2815 = vmul.f32 %v2227, 0.2
      %v2816 = vmul.f32 %v2232, 0.2
      %v2817 = vmul.f32 %v2235, 0.2
      %v2818 = vmul.f32 %v2240, 0.2
      %v2819 = vmul.f32 %v2243, 0.2
      %v2820 = vmul.f32 %v2248, 0.2
      %v2821 = vmul.f32 %v2251, 0.2
      %v2822 = vmul.f32 %v2256, 0.2
      %v2823 = vmul.f32 %v2259, 0.2
      %v2824 = vmul.f32 %v2264, 0.2
      %v2825 = vmul.f32 %v2267, 0.2
      %v2826 = vmul.f32 %v2272, 0.2
      %v2827 = vmul.f32 %v2275, 0.2
      %v2828 = vmul.f32 %v2280, 0.2
      %v2829 = vmul.f32 %v2283, 0.2
      %v2830 = vmul.f32 %v2288, 0.2
      %v2831 = vmul.f32 %v2291, 0.2
      %v2832 = vmul.f32 %v2296, 0.2
      %v2833 = vmul.f32 %v2299, 0.2
      %v2834 = vmul.f32 %v2304, 0.2
      %v2835 = vmul.f32 %v2307, 0.2
      %v2836 = vmul.f32 %v2312, 0.2
      %v2837 = vmul.f32 %v2315, 0.2
      %v2838 = vmul.f32 %v2320, 0.2
      %v2839 = vmul.f32 %v2323, 0.2
      %v2840 = vmul.f32 %v2328, 0.2
      %v2841 = vmul.f32 %v2331, 0.2
      %v2842 = vmul.f32 %v2336, 0.2
      %v2843 = vmul.f32 %v2339, 0.2
      %v2844 = vmul.f32 %v2344, 0.2
      %v2845 = vmul.f32 %v2347, 0.2
      %v2846 = vmul.f32 %v2352, 0.2
      %v2847 = vmul.f32 %v2355, 0.2
      %v2848 = vmul.f32 %v2360, 0.2
      %v2849 = vmul.f32 %v2363, 0.2
      %v2850 = vmul.f32 %v2368, 0.2
      %v2851 = vmul.f32 %v2371, 0.2
      %v2852 = vmul.f32 %v2376, 0.2
      %v2853 = vmul.f32 %v2379, 0.2
      %v2854 = vmul.f32 %v2384, 0.2
      %v2855 = vmul.f32 %v2387, 0.2
      %v2856 = vmul.f32 %v2392, 0.2
      %v2857 = vmul.f32 %v2395, 0.2
      %v2858 = vmul.f32 %v2400, 0.2
      %v2859 = vmul.f32 %v2403, 0.2
      %v2860 = vmul.f32 %v2408, 0.2
      %v2861 = vmul.f32 %v2411, 0.2
      %v2862 = vmul.f32 %v2416, 0.2
      %v2863 = vmul.f32 %v2419, 0.2
      %v2864 = vmul.f32 %v2424, 0.2
      %v2865 = vmul.f32 %v2427, 0.2
      %v2866 = vmul.f32 %v2432, 0.2
      %v2867 = vmul.f32 %v2435, 0.2
      %v2868 = vmul.f32 %v2440, 0.2
      %v2869 = vmul.f32 %v2443, 0.2
      %v2870 = vmul.f32 %v2448, 0.2
      %v2871 = vmul.f32 %v2451, 0.2
      %v2872 = vmul.f32 %v2456, 0.2
      %v2873 = vmul.f32 %v2459, 0.2
      %v2874 = vmul.f32 %v2464, 0.2
      %v2875 = vmul.f32 %v2467, 0.2
      %v2876 = vmul.f32 %v2472, 0.2
      %v2877 = vmul.f32 %v2475, 0.2
      %v2878 = vmul.f32 %v2480, 0.2
      %v2879 = vmul.f32 %v2483, 0.2
      %v2880 = vmul.f32 %v2488, 0.2
      %v2881 = vmul.f32 %v2491, 0.2
      %v2882 = vmul.f32 %v2496, 0.2
      %v2883 = vmul.f32 %v2499, 0.2
      %v2884 = vmul.f32 %v2504, 0.2
      %v2885 = vmul.f32 %v2507, 0.2
      %v2886 = vmul.f32 %v2512, 0.2
      %v2887 = vmul.f32 %v2515, 0.2
      %v2888 = vmul.f32 %v2520, 0.2
      %v2889 = vmul.f32 %v2523, 0.2
      %v2890 = vmul.f32 %v2528, 0.2
      %v2891 = vmul.f32 %v2531, 0.2
      %v2892 = vmul.f32 %v2536, 0.2
      %v2893 = vmul.f32 %v2539, 0.2
      %v2894 = vmul.f32 %v2544, 0.2
      %v2895 = vmul.f32 %v2547, 0.2
      %v2896 = vmul.f32 %v2552, 0.2
      %v2897 = vmul.f32 %v2555, 0.2
      %v2898 = vmul.f32 %v2560, 0.2
      %v2899 = vmul.f32 %v2563, 0.2
      %v2900 = vmul.f32 %v2568, 0.2
      %v2901 = vmul.f32 %v2571, 0.2
      %v2902 = vmul.f32 %v2576, 0.2
      %v2903 = vmul.f32 %v2579, 0.2
      %v2904 = vmul.f32 %v2584, 0.2
      %v2905 = vmul.f32 %v2587, 0.2
      %v2906 = vmul.f32 %v2592, 0.2
      %v2907 = vmul.f32 %v2595, 0.2
      %v2908 = vmul.f32 %v2600, 0.2
      %v2909 = vmul.f32 %v2603, 0.2
      %v2910 = vmul.f32 %v2608, 0.2
      %v2911 = vmul.f32 %v2611, 0.2
      %v2912 = vmul.f32 %v2616, 0.2
      %v2913 = vmul.f32 %v2619, 0.2
      %v2914 = vmul.f32 %v2624, 0.2
      %v2915 = vmul.f32 %v2627, 0.2
      %v2916 = vmul.f32 %v2632, 0.2
      %v2917 = vmul.f32 %v2635, 0.2
      %v2918 = vmul.f32 %v2640, 0.2
      %v2919 = vmul.f32 %v2643, 0.2
      %v2920 = vmul.f32 %v2648, 0.2
      %v2921 = vmul.f32 %v2651, 0.2
      %v2922 = vmul.f32 %v2656, 0.2
      %v2923 = vmul.f32 %v2659, 0.2
      %v2924 = vmul.f32 %v2664, 0.2
      %v2925 = vmul.f32 %v2667, 0.2
      %v2926 = vmax.f32 %v1648, %v2670
      %v2927 = vmax.f32 %v1651, %v2671
      %v2928 = vmax.f32 %v1656, %v2672
      %v2929 = vmax.f32 %v1659, %v2673
      %v2930 = vmax.f32 %v1664, %v2674
      %v2931 = vmax.f32 %v1667, %v2675
      %v2932 = vmax.f32 %v1672, %v2676
      %v2933 = vmax.f32 %v1675, %v2677
      %v2934 = vmax.f32 %v1680, %v2678
      %v2935 = vmax.f32 %v1683, %v2679
      %v2936 = vmax.f32 %v1688, %v2680
      %v2937 = vmax.f32 %v1691, %v2681
      %v2938 = vmax.f32 %v1696, %v2682
      %v2939 = vmax.f32 %v1699, %v2683
      %v2940 = vmax.f32 %v1704, %v2684
      %v2941 = vmax.f32 %v1707, %v2685
      %v2942 = vmax.f32 %v1712, %v2686
      %v2943 = vmax.f32 %v1715, %v2687
      %v2944 = vmax.f32 %v1720, %v2688
      %v2945 = vmax.f32 %v1723, %v2689
      %v2946 = vmax.f32 %v1728, %v2690
      %v2947 = vmax.f32 %v1731, %v2691
      %v2948 = vmax.f32 %v1736, %v2692
      %v2949 = vmax.f32 %v1739, %v2693
      %v2950 = vmax.f32 %v1744, %v2694
      %v2951 = vmax.f32 %v1747, %v2695
      %v2952 = vmax.f32 %v1752, %v2696
      %v2953 = vmax.f32 %v1755, %v2697
      %v2954 = vmax.f32 %v1760, %v2698
      %v2955 = vmax.f32 %v1763, %v2699
      %v2956 = vmax.f32 %v1768, %v2700
      %v2957 = vmax.f32 %v1771, %v2701
      %v2958 = vmax.f32 %v1776, %v2702
      %v2959 = vmax.f32 %v1779, %v2703
      %v2960 = vmax.f32 %v1784, %v2704
      %v2961 = vmax.f32 %v1787, %v2705
      %v2962 = vmax.f32 %v1792, %v2706
      %v2963 = vmax.f32 %v1795, %v2707
      %v2964 = vmax.f32 %v1800, %v2708
      %v2965 = vmax.f32 %v1803, %v2709
      %v2966 = vmax.f32 %v1808, %v2710
      %v2967 = vmax.f32 %v1811, %v2711
      %v2968 = vmax.f32 %v1816, %v2712
      %v2969 = vmax.f32 %v1819, %v2713
      %v2970 = vmax.f32 %v1824, %v2714
      %v2971 = vmax.f32 %v1827, %v2715
      %v2972 = vmax.f32 %v1832, %v2716
      %v2973 = vmax.f32 %v1835, %v2717
      %v2974 = vmax.f32 %v1840, %v2718
      %v2975 = vmax.f32 %v1843, %v2719
      %v2976 = vmax.f32 %v1848, %v2720
      %v2977 = vmax.f32 %v1851, %v2721
      %v2978 = vmax.f32 %v1856, %v2722
      %v2979 = vmax.f32 %v1859, %v2723
      %v2980 = vmax.f32 %v1864, %v2724
      %v2981 = vmax.f32 %v1867, %v2725
      %v2982 = vmax.f32 %v1872, %v2726
      %v2983 = vmax.f32 %v1875, %v2727
      %v2984 = vmax.f32 %v1880, %v2728
      %v2985 = vmax.f32 %v1883, %v2729
      %v2986 = vmax.f32 %v1888, %v2730
      %v2987 = vmax.f32 %v1891, %v2731
      %v2988 = vmax.f32 %v1896, %v2732
      %v2989 = vmax.f32 %v1899, %v2733
      %v2990 = vmax.f32 %v1904, %v2734
      %v2991 = vmax.f32 %v1907, %v2735
      %v2992 = vmax.f32 %v1912, %v2736
      %v2993 = vmax.f32 %v1915, %v2737
      %v2994 = vmax.f32 %v1920, %v2738
      %v2995 = vmax.f32 %v1923, %v2739
      %v2996 = vmax.f32 %v1928, %v2740
      %v2997 = vmax.f32 %v1931, %v2741
      %v2998 = vmax.f32 %v1936, %v2742
      %v2999 = vmax.f32 %v1939, %v2743
      %v3000 = vmax.f32 %v1944, %v2744
      %v3001 = vmax.f32 %v1947, %v2745
      %v3002 = vmax.f32 %v1952, %v2746
      %v3003 = vmax.f32 %v1955, %v2747
      %v3004 = vmax.f32 %v1960, %v2748
      %v3005 = vmax.f32 %v1963, %v2749
      %v3006 = vmax.f32 %v1968, %v2750
      %v3007 = vmax.f32 %v1971, %v2751
      %v3008 = vmax.f32 %v1976, %v2752
      %v3009 = vmax.f32 %v1979, %v2753
      %v3010 = vmax.f32 %v1984, %v2754
      %v3011 = vmax.f32 %v1987, %v2755
      %v3012 = vmax.f32 %v1992, %v2756
      %v3013 = vmax.f32 %v1995, %v2757
      %v3014 = vmax.f32 %v2000, %v2758
      %v3015 = vmax.f32 %v2003, %v2759
      %v3016 = vmax.f32 %v2008, %v2760
      %v3017 = vmax.f32 %v2011, %v2761
      %v3018 = vmax.f32 %v2016, %v2762
      %v3019 = vmax.f32 %v2019, %v2763
      %v3020 = vmax.f32 %v2024, %v2764
      %v3021 = vmax.f32 %v2027, %v2765
      %v3022 = vmax.f32 %v2032, %v2766
      %v3023 = vmax.f32 %v2035, %v2767
      %v3024 = vmax.f32 %v2040, %v2768
      %v3025 = vmax.f32 %v2043, %v2769
      %v3026 = vmax.f32 %v2048, %v2770
      %v3027 = vmax.f32 %v2051, %v2771
      %v3028 = vmax.f32 %v2056, %v2772
      %v3029 = vmax.f32 %v2059, %v2773
      %v3030 = vmax.f32 %v2064, %v2774
      %v3031 = vmax.f32 %v2067, %v2775
      %v3032 = vmax.f32 %v2072, %v2776
      %v3033 = vmax.f32 %v2075, %v2777
      %v3034 = vmax.f32 %v2080, %v2778
      %v3035 = vmax.f32 %v2083, %v2779
      %v3036 = vmax.f32 %v2088, %v2780
      %v3037 = vmax.f32 %v2091, %v2781
      %v3038 = vmax.f32 %v2096, %v2782
      %v3039 = vmax.f32 %v2099, %v2783
      %v3040 = vmax.f32 %v2104, %v2784
      %v3041 = vmax.f32 %v2107, %v2785
      %v3042 = vmax.f32 %v2112, %v2786
      %v3043 = vmax.f32 %v2115, %v2787
      %v3044 = vmax.f32 %v2120, %v2788
      %v3045 = vmax.f32 %v2123, %v2789
      %v3046 = vmax.f32 %v2128, %v2790
      %v3047 = vmax.f32 %v2131, %v2791
      %v3048 = vmax.f32 %v2136, %v2792
      %v3049 = vmax.f32 %v2139, %v2793
      %v3050 = vmax.f32 %v2144, %v2794
      %v3051 = vmax.f32 %v2147, %v2795
      %v3052 = vmax.f32 %v2152, %v2796
      %v3053 = vmax.f32 %v2155, %v2797
      %v3054 = vmax.f32 %v2160, %v2798
      %v3055 = vmax.f32 %v2163, %v2799
      %v3056 = vmax.f32 %v2168, %v2800
      %v3057 = vmax.f32 %v2171, %v2801
      %v3058 = vmax.f32 %v2176, %v2802
      %v3059 = vmax.f32 %v2179, %v2803
      %v3060 = vmax.f32 %v2184, %v2804
      %v3061 = vmax.f32 %v2187, %v2805
      %v3062 = vmax.f32 %v2192, %v2806
      %v3063 = vmax.f32 %v2195, %v2807
      %v3064 = vmax.f32 %v2200, %v2808
      %v3065 = vmax.f32 %v2203, %v2809
      %v3066 = vmax.f32 %v2208, %v2810
      %v3067 = vmax.f32 %v2211, %v2811
      %v3068 = vmax.f32 %v2216, %v2812
      %v3069 = vmax.f32 %v2219, %v2813
      %v3070 = vmax.f32 %v2224, %v2814
      %v3071 = vmax.f32 %v2227, %v2815
      %v3072 = vmax.f32 %v2232, %v2816
      %v3073 = vmax.f32 %v2235, %v2817
      %v3074 = vmax.f32 %v2240, %v2818
      %v3075 = vmax.f32 %v2243, %v2819
      %v3076 = vmax.f32 %v2248, %v2820
      %v3077 = vmax.f32 %v2251, %v2821
      %v3078 = vmax.f32 %v2256, %v2822
      %v3079 = vmax.f32 %v2259, %v2823
      %v3080 = vmax.f32 %v2264, %v2824
      %v3081 = vmax.f32 %v2267, %v2825
      %v3082 = vmax.f32 %v2272, %v2826
      %v3083 = vmax.f32 %v2275, %v2827
      %v3084 = vmax.f32 %v2280, %v2828
      %v3085 = vmax.f32 %v2283, %v2829
      %v3086 = vmax.f32 %v2288, %v2830
      %v3087 = vmax.f32 %v2291, %v2831
      %v3088 = vmax.f32 %v2296, %v2832
      %v3089 = vmax.f32 %v2299, %v2833
      %v3090 = vmax.f32 %v2304, %v2834
      %v3091 = vmax.f32 %v2307, %v2835
      %v3092 = vmax.f32 %v2312, %v2836
      %v3093 = vmax.f32 %v2315, %v2837
      %v3094 = vmax.f32 %v2320, %v2838
      %v3095 = vmax.f32 %v2323, %v2839
      %v3096 = vmax.f32 %v2328, %v2840
      %v3097 = vmax.f32 %v2331, %v2841
      %v3098 = vmax.f32 %v2336, %v2842
      %v3099 = vmax.f32 %v2339, %v2843
      %v3100 = vmax.f32 %v2344, %v2844
      %v3101 = vmax.f32 %v2347, %v2845
      %v3102 = vmax.f32 %v2352, %v2846
      %v3103 = vmax.f32 %v2355, %v2847
      %v3104 = vmax.f32 %v2360, %v2848
      %v3105 = vmax.f32 %v2363, %v2849
      %v3106 = vmax.f32 %v2368, %v2850
      %v3107 = vmax.f32 %v2371, %v2851
      %v3108 = vmax.f32 %v2376, %v2852
      %v3109 = vmax.f32 %v2379, %v2853
      %v3110 = vmax.f32 %v2384, %v2854
      %v3111 = vmax.f32 %v2387, %v2855
      %v3112 = vmax.f32 %v2392, %v2856
      %v3113 = vmax.f32 %v2395, %v2857
      %v3114 = vmax.f32 %v2400, %v2858
      %v3115 = vmax.f32 %v2403, %v2859
      %v3116 = vmax.f32 %v2408, %v2860
      %v3117 = vmax.f32 %v2411, %v2861
      %v3118 = vmax.f32 %v2416, %v2862
      %v3119 = vmax.f32 %v2419, %v2863
      %v3120 = vmax.f32 %v2424, %v2864
      %v3121 = vmax.f32 %v2427, %v2865
      %v3122 = vmax.f32 %v2432, %v2866
      %v3123 = vmax.f32 %v2435, %v2867
      %v3124 = vmax.f32 %v2440, %v2868
      %v3125 = vmax.f32 %v2443, %v2869
      %v3126 = vmax.f32 %v2448, %v2870
      %v3127 = vmax.f32 %v2451, %v2871
      %v3128 = vmax.f32 %v2456, %v2872
      %v3129 = vmax.f32 %v2459, %v2873
      %v3130 = vmax.f32 %v2464, %v2874
      %v3131 = vmax.f32 %v2467, %v2875
      %v3132 = vmax.f32 %v2472, %v2876
      %v3133 = vmax.f32 %v2475, %v2877
      %v3134 = vmax.f32 %v2480, %v2878
      %v3135 = vmax.f32 %v2483, %v2879
      %v3136 = vmax.f32 %v2488, %v2880
      %v3137 = vmax.f32 %v2491, %v2881
      %v3138 = vmax.f32 %v2496, %v2882
      %v3139 = vmax.f32 %v2499, %v2883
      %v3140 = vmax.f32 %v2504, %v2884
      %v3141 = vmax.f32 %v2507, %v2885
      %v3142 = vmax.f32 %v2512, %v2886
      %v3143 = vmax.f32 %v2515, %v2887
      %v3144 = vmax.f32 %v2520, %v2888
      %v3145 = vmax.f32 %v2523, %v2889
      %v3146 = vmax.f32 %v2528, %v2890
      %v3147 = vmax.f32 %v2531, %v2891
      %v3148 = vmax.f32 %v2536, %v2892
      %v3149 = vmax.f32 %v2539, %v2893
      %v3150 = vmax.f32 %v2544, %v2894
      %v3151 = vmax.f32 %v2547, %v2895
      %v3152 = vmax.f32 %v2552, %v2896
      %v3153 = vmax.f32 %v2555, %v2897
      %v3154 = vmax.f32 %v2560, %v2898
      %v3155 = vmax.f32 %v2563, %v2899
      %v3156 = vmax.f32 %v2568, %v2900
      %v3157 = vmax.f32 %v2571, %v2901
      %v3158 = vmax.f32 %v2576, %v2902
      %v3159 = vmax.f32 %v2579, %v2903
      %v3160 = vmax.f32 %v2584, %v2904
      %v3161 = vmax.f32 %v2587, %v2905
      %v3162 = vmax.f32 %v2592, %v2906
      %v3163 = vmax.f32 %v2595, %v2907
      %v3164 = vmax.f32 %v2600, %v2908
      %v3165 = vmax.f32 %v2603, %v2909
      %v3166 = vmax.f32 %v2608, %v2910
      %v3167 = vmax.f32 %v2611, %v2911
      %v3168 = vmax.f32 %v2616, %v2912
      %v3169 = vmax.f32 %v2619, %v2913
      %v3170 = vmax.f32 %v2624, %v2914
      %v3171 = vmax.f32 %v2627, %v2915
      %v3172 = vmax.f32 %v2632, %v2916
      %v3173 = vmax.f32 %v2635, %v2917
      %v3174 = vmax.f32 %v2640, %v2918
      %v3175 = vmax.f32 %v2643, %v2919
      %v3176 = vmax.f32 %v2648, %v2920
      %v3177 = vmax.f32 %v2651, %v2921
      %v3178 = vmax.f32 %v2656, %v2922
      %v3179 = vmax.f32 %v2659, %v2923
      %v3180 = vmax.f32 %v2664, %v2924
      %v3181 = vmax.f32 %v2667, %v2925
      %v3182 = vld [vmem:[%s1] sm:$0xff]
      %v3183 = vld [vmem:[%s1 + $0x8] sm:$0xff]
      %v3184 = vld [vmem:[%s1 + $0x10] sm:$0xff]
      %v3185 = vld [vmem:[%s1 + $0x18] sm:$0xff]
      %v3186 = vld [vmem:[%s1 + $0x20] sm:$0xff]
      %v3187 = vld [vmem:[%s1 + $0x28] sm:$0xff]
      %v3188 = vld [vmem:[%s1 + $0x30] sm:$0xff]
      %v3189 = vld [vmem:[%s1 + $0x38] sm:$0xff]
      %v3190 = vld [vmem:[%s1 + $0x40] sm:$0xff]
      %v3191 = vld [vmem:[%s1 + $0x48] sm:$0xff]
      %v3192 = vld [vmem:[%s1 + $0x50] sm:$0xff]
      %v3193 = vld [vmem:[%s1 + $0x58] sm:$0xff]
      %v3194 = vld [vmem:[%s1 + $0x60] sm:$0xff]
      %v3195 = vld [vmem:[%s1 + $0x68] sm:$0xff]
      %v3196 = vld [vmem:[%s1 + $0x70] sm:$0xff]
      %v3197 = vld [vmem:[%s1 + $0x78] sm:$0xff]
      %v3198 = vld [vmem:[%s1 + $0x80] sm:$0xff]
      %v3199 = vld [vmem:[%s1 + $0x88] sm:$0xff]
      %v3200 = vld [vmem:[%s1 + $0x90] sm:$0xff]
      %v3201 = vld [vmem:[%s1 + $0x98] sm:$0xff]
      %v3202 = vld [vmem:[%s1 + $0xa0] sm:$0xff]
      %v3203 = vld [vmem:[%s1 + $0xa8] sm:$0xff]
      %v3204 = vld [vmem:[%s1 + $0xb0] sm:$0xff]
      %v3205 = vld [vmem:[%s1 + $0xb8] sm:$0xff]
      %v3206 = vld [vmem:[%s1 + $0xc0] sm:$0xff]
      %v3207 = vld [vmem:[%s1 + $0xc8] sm:$0xff]
      %v3208 = vld [vmem:[%s1 + $0xd0] sm:$0xff]
      %v3209 = vld [vmem:[%s1 + $0xd8] sm:$0xff]
      %v3210 = vld [vmem:[%s1 + $0xe0] sm:$0xff]
      %v3211 = vld [vmem:[%s1 + $0xe8] sm:$0xff]
      %v3212 = vld [vmem:[%s1 + $0xf0] sm:$0xff]
      %v3213 = vld [vmem:[%s1 + $0xf8] sm:$0xff]
      %3215 = vset.pattern.permute.xlu0 0
      %3216 = vperm.xlu0 %3215, %v3182
      %v3217 = vpop.permute.xlu0 %3216
      %3220 = vset.pattern.permute.xlu0 0
      %3221 = vperm.xlu0 %3220, %v3183
      %v3222 = vpop.permute.xlu0 %3221
      %3225 = vset.pattern.permute.xlu0 0
      %3226 = vperm.xlu0 %3225, %v3184
      %v3227 = vpop.permute.xlu0 %3226
      %3230 = vset.pattern.permute.xlu0 0
      %3231 = vperm.xlu0 %3230, %v3185
      %v3232 = vpop.permute.xlu0 %3231
      %3235 = vset.pattern.permute.xlu0 0
      %3236 = vperm.xlu0 %3235, %v3186
      %v3237 = vpop.permute.xlu0 %3236
      %3240 = vset.pattern.permute.xlu0 0
      %3241 = vperm.xlu0 %3240, %v3187
      %v3242 = vpop.permute.xlu0 %3241
      %3245 = vset.pattern.permute.xlu0 0
      %3246 = vperm.xlu0 %3245, %v3188
      %v3247 = vpop.permute.xlu0 %3246
      %3250 = vset.pattern.permute.xlu0 0
      %3251 = vperm.xlu0 %3250, %v3189
      %v3252 = vpop.permute.xlu0 %3251
      %3255 = vset.pattern.permute.xlu0 0
      %3256 = vperm.xlu0 %3255, %v3190
      %v3257 = vpop.permute.xlu0 %3256
      %3260 = vset.pattern.permute.xlu0 0
      %3261 = vperm.xlu0 %3260, %v3191
      %v3262 = vpop.permute.xlu0 %3261
      %3265 = vset.pattern.permute.xlu0 0
      %3266 = vperm.xlu0 %3265, %v3192
      %v3267 = vpop.permute.xlu0 %3266
      %3270 = vset.pattern.permute.xlu0 0
      %3271 = vperm.xlu0 %3270, %v3193
      %v3272 = vpop.permute.xlu0 %3271
      %3275 = vset.pattern.permute.xlu0 0
      %3276 = vperm.xlu0 %3275, %v3194
      %v3277 = vpop.permute.xlu0 %3276
      %3280 = vset.pattern.permute.xlu0 0
      %3281 = vperm.xlu0 %3280, %v3195
      %v3282 = vpop.permute.xlu0 %3281
      %3285 = vset.pattern.permute.xlu0 0
      %3286 = vperm.xlu0 %3285, %v3196
      %v3287 = vpop.permute.xlu0 %3286
      %3290 = vset.pattern.permute.xlu0 0
      %3291 = vperm.xlu0 %3290, %v3197
      %v3292 = vpop.permute.xlu0 %3291
      %3295 = vset.pattern.permute.xlu0 0
      %3296 = vperm.xlu0 %3295, %v3198
      %v3297 = vpop.permute.xlu0 %3296
      %3300 = vset.pattern.permute.xlu0 0
      %3301 = vperm.xlu0 %3300, %v3199
      %v3302 = vpop.permute.xlu0 %3301
      %3305 = vset.pattern.permute.xlu0 0
      %3306 = vperm.xlu0 %3305, %v3200
      %v3307 = vpop.permute.xlu0 %3306
      %3310 = vset.pattern.permute.xlu0 0
      %3311 = vperm.xlu0 %3310, %v3201
      %v3312 = vpop.permute.xlu0 %3311
      %3315 = vset.pattern.permute.xlu0 0
      %3316 = vperm.xlu0 %3315, %v3202
      %v3317 = vpop.permute.xlu0 %3316
      %3320 = vset.pattern.permute.xlu0 0
      %3321 = vperm.xlu0 %3320, %v3203
      %v3322 = vpop.permute.xlu0 %3321
      %3325 = vset.pattern.permute.xlu0 0
      %3326 = vperm.xlu0 %3325, %v3204
      %v3327 = vpop.permute.xlu0 %3326
      %3330 = vset.pattern.permute.xlu0 0
      %3331 = vperm.xlu0 %3330, %v3205
      %v3332 = vpop.permute.xlu0 %3331
      %3335 = vset.pattern.permute.xlu0 0
      %3336 = vperm.xlu0 %3335, %v3206
      %v3337 = vpop.permute.xlu0 %3336
      %3340 = vset.pattern.permute.xlu0 0
      %3341 = vperm.xlu0 %3340, %v3207
      %v3342 = vpop.permute.xlu0 %3341
      %3345 = vset.pattern.permute.xlu0 0
      %3346 = vperm.xlu0 %3345, %v3208
      %v3347 = vpop.permute.xlu0 %3346
      %3350 = vset.pattern.permute.xlu0 0
      %3351 = vperm.xlu0 %3350, %v3209
      %v3352 = vpop.permute.xlu0 %3351
      %3355 = vset.pattern.permute.xlu0 0
      %3356 = vperm.xlu0 %3355, %v3210
      %v3357 = vpop.permute.xlu0 %3356
      %3360 = vset.pattern.permute.xlu0 0
      %3361 = vperm.xlu0 %3360, %v3211
      %v3362 = vpop.permute.xlu0 %3361
      %3365 = vset.pattern.permute.xlu0 0
      %3366 = vperm.xlu0 %3365, %v3212
      %v3367 = vpop.permute.xlu0 %3366
      %3370 = vset.pattern.permute.xlu0 0
      %3371 = vperm.xlu0 %3370, %v3213
      %v3372 = vpop.permute.xlu0 %3371
      %v3374 = vmul.f32 %v2926, %v3217
      %v3375 = vmul.f32 %v2927, %v3222
      %v3376 = vmul.f32 %v2928, %v3227
      %v3377 = vmul.f32 %v2929, %v3232
      %v3378 = vmul.f32 %v2930, %v3237
      %v3379 = vmul.f32 %v2931, %v3242
      %v3380 = vmul.f32 %v2932, %v3247
      %v3381 = vmul.f32 %v2933, %v3252
      %v3382 = vmul.f32 %v2934, %v3257
      %v3383 = vmul.f32 %v2935, %v3262
      %v3384 = vmul.f32 %v2936, %v3267
      %v3385 = vmul.f32 %v2937, %v3272
      %v3386 = vmul.f32 %v2938, %v3277
      %v3387 = vmul.f32 %v2939, %v3282
      %v3388 = vmul.f32 %v2940, %v3287
      %v3389 = vmul.f32 %v2941, %v3292
      %v3390 = vmul.f32 %v2942, %v3297
      %v3391 = vmul.f32 %v2943, %v3302
      %v3392 = vmul.f32 %v2944, %v3307
      %v3393 = vmul.f32 %v2945, %v3312
      %v3394 = vmul.f32 %v2946, %v3317
      %v3395 = vmul.f32 %v2947, %v3322
      %v3396 = vmul.f32 %v2948, %v3327
      %v3397 = vmul.f32 %v2949, %v3332
      %v3398 = vmul.f32 %v2950, %v3337
      %v3399 = vmul.f32 %v2951, %v3342
      %v3400 = vmul.f32 %v2952, %v3347
      %v3401 = vmul.f32 %v2953, %v3352
      %v3402 = vmul.f32 %v2954, %v3357
      %v3403 = vmul.f32 %v2955, %v3362
      %v3404 = vmul.f32 %v2956, %v3367
      %v3405 = vmul.f32 %v2957, %v3372
      %v3406 = vmul.f32 %v2958, %v3217
      %v3407 = vmul.f32 %v2959, %v3222
      %v3408 = vmul.f32 %v2960, %v3227
      %v3409 = vmul.f32 %v2961, %v3232
      %v3410 = vmul.f32 %v2962, %v3237
      %v3411 = vmul.f32 %v2963, %v3242
      %v3412 = vmul.f32 %v2964, %v3247
      %v3413 = vmul.f32 %v2965, %v3252
      %v3414 = vmul.f32 %v2966, %v3257
      %v3415 = vmul.f32 %v2967, %v3262
      %v3416 = vmul.f32 %v2968, %v3267
      %v3417 = vmul.f32 %v2969, %v3272
      %v3418 = vmul.f32 %v2970, %v3277
      %v3419 = vmul.f32 %v2971, %v3282
      %v3420 = vmul.f32 %v2972, %v3287
      %v3421 = vmul.f32 %v2973, %v3292
      %v3422 = vmul.f32 %v2974, %v3297
      %v3423 = vmul.f32 %v2975, %v3302
      %v3424 = vmul.f32 %v2976, %v3307
      %v3425 = vmul.f32 %v2977, %v3312
      %v3426 = vmul.f32 %v2978, %v3317
      %v3427 = vmul.f32 %v2979, %v3322
      %v3428 = vmul.f32 %v2980, %v3327
      %v3429 = vmul.f32 %v2981, %v3332
      %v3430 = vmul.f32 %v2982, %v3337
      %v3431 = vmul.f32 %v2983, %v3342
      %v3432 = vmul.f32 %v2984, %v3347
      %v3433 = vmul.f32 %v2985, %v3352
      %v3434 = vmul.f32 %v2986, %v3357
      %v3435 = vmul.f32 %v2987, %v3362
      %v3436 = vmul.f32 %v2988, %v3367
      %v3437 = vmul.f32 %v2989, %v3372
      %v3438 = vmul.f32 %v2990, %v3217
      %v3439 = vmul.f32 %v2991, %v3222
      %v3440 = vmul.f32 %v2992, %v3227
      %v3441 = vmul.f32 %v2993, %v3232
      %v3442 = vmul.f32 %v2994, %v3237
      %v3443 = vmul.f32 %v2995, %v3242
      %v3444 = vmul.f32 %v2996, %v3247
      %v3445 = vmul.f32 %v2997, %v3252
      %v3446 = vmul.f32 %v2998, %v3257
      %v3447 = vmul.f32 %v2999, %v3262
      %v3448 = vmul.f32 %v3000, %v3267
      %v3449 = vmul.f32 %v3001, %v3272
      %v3450 = vmul.f32 %v3002, %v3277
      %v3451 = vmul.f32 %v3003, %v3282
      %v3452 = vmul.f32 %v3004, %v3287
      %v3453 = vmul.f32 %v3005, %v3292
      %v3454 = vmul.f32 %v3006, %v3297
      %v3455 = vmul.f32 %v3007, %v3302
      %v3456 = vmul.f32 %v3008, %v3307
      %v3457 = vmul.f32 %v3009, %v3312
      %v3458 = vmul.f32 %v3010, %v3317
      %v3459 = vmul.f32 %v3011, %v3322
      %v3460 = vmul.f32 %v3012, %v3327
      %v3461 = vmul.f32 %v3013, %v3332
      %v3462 = vmul.f32 %v3014, %v3337
      %v3463 = vmul.f32 %v3015, %v3342
      %v3464 = vmul.f32 %v3016, %v3347
      %v3465 = vmul.f32 %v3017, %v3352
      %v3466 = vmul.f32 %v3018, %v3357
      %v3467 = vmul.f32 %v3019, %v3362
      %v3468 = vmul.f32 %v3020, %v3367
      %v3469 = vmul.f32 %v3021, %v3372
      %v3470 = vmul.f32 %v3022, %v3217
      %v3471 = vmul.f32 %v3023, %v3222
      %v3472 = vmul.f32 %v3024, %v3227
      %v3473 = vmul.f32 %v3025, %v3232
      %v3474 = vmul.f32 %v3026, %v3237
      %v3475 = vmul.f32 %v3027, %v3242
      %v3476 = vmul.f32 %v3028, %v3247
      %v3477 = vmul.f32 %v3029, %v3252
      %v3478 = vmul.f32 %v3030, %v3257
      %v3479 = vmul.f32 %v3031, %v3262
      %v3480 = vmul.f32 %v3032, %v3267
      %v3481 = vmul.f32 %v3033, %v3272
      %v3482 = vmul.f32 %v3034, %v3277
      %v3483 = vmul.f32 %v3035, %v3282
      %v3484 = vmul.f32 %v3036, %v3287
      %v3485 = vmul.f32 %v3037, %v3292
      %v3486 = vmul.f32 %v3038, %v3297
      %v3487 = vmul.f32 %v3039, %v3302
      %v3488 = vmul.f32 %v3040, %v3307
      %v3489 = vmul.f32 %v3041, %v3312
      %v3490 = vmul.f32 %v3042, %v3317
      %v3491 = vmul.f32 %v3043, %v3322
      %v3492 = vmul.f32 %v3044, %v3327
      %v3493 = vmul.f32 %v3045, %v3332
      %v3494 = vmul.f32 %v3046, %v3337
      %v3495 = vmul.f32 %v3047, %v3342
      %v3496 = vmul.f32 %v3048, %v3347
      %v3497 = vmul.f32 %v3049, %v3352
      %v3498 = vmul.f32 %v3050, %v3357
      %v3499 = vmul.f32 %v3051, %v3362
      %v3500 = vmul.f32 %v3052, %v3367
      %v3501 = vmul.f32 %v3053, %v3372
      %v3502 = vmul.f32 %v3054, %v3217
      %v3503 = vmul.f32 %v3055, %v3222
      %v3504 = vmul.f32 %v3056, %v3227
      %v3505 = vmul.f32 %v3057, %v3232
      %v3506 = vmul.f32 %v3058, %v3237
      %v3507 = vmul.f32 %v3059, %v3242
      %v3508 = vmul.f32 %v3060, %v3247
      %v3509 = vmul.f32 %v3061, %v3252
      %v3510 = vmul.f32 %v3062, %v3257
      %v3511 = vmul.f32 %v3063, %v3262
      %v3512 = vmul.f32 %v3064, %v3267
      %v3513 = vmul.f32 %v3065, %v3272
      %v3514 = vmul.f32 %v3066, %v3277
      %v3515 = vmul.f32 %v3067, %v3282
      %v3516 = vmul.f32 %v3068, %v3287
      %v3517 = vmul.f32 %v3069, %v3292
      %v3518 = vmul.f32 %v3070, %v3297
      %v3519 = vmul.f32 %v3071, %v3302
      %v3520 = vmul.f32 %v3072, %v3307
      %v3521 = vmul.f32 %v3073, %v3312
      %v3522 = vmul.f32 %v3074, %v3317
      %v3523 = vmul.f32 %v3075, %v3322
      %v3524 = vmul.f32 %v3076, %v3327
      %v3525 = vmul.f32 %v3077, %v3332
      %v3526 = vmul.f32 %v3078, %v3337
      %v3527 = vmul.f32 %v3079, %v3342
      %v3528 = vmul.f32 %v3080, %v3347
      %v3529 = vmul.f32 %v3081, %v3352
      %v3530 = vmul.f32 %v3082, %v3357
      %v3531 = vmul.f32 %v3083, %v3362
      %v3532 = vmul.f32 %v3084, %v3367
      %v3533 = vmul.f32 %v3085, %v3372
      %v3534 = vmul.f32 %v3086, %v3217
      %v3535 = vmul.f32 %v3087, %v3222
      %v3536 = vmul.f32 %v3088, %v3227
      %v3537 = vmul.f32 %v3089, %v3232
      %v3538 = vmul.f32 %v3090, %v3237
      %v3539 = vmul.f32 %v3091, %v3242
      %v3540 = vmul.f32 %v3092, %v3247
      %v3541 = vmul.f32 %v3093, %v3252
      %v3542 = vmul.f32 %v3094, %v3257
      %v3543 = vmul.f32 %v3095, %v3262
      %v3544 = vmul.f32 %v3096, %v3267
      %v3545 = vmul.f32 %v3097, %v3272
      %v3546 = vmul.f32 %v3098, %v3277
      %v3547 = vmul.f32 %v3099, %v3282
      %v3548 = vmul.f32 %v3100, %v3287
      %v3549 = vmul.f32 %v3101, %v3292
      %v3550 = vmul.f32 %v3102, %v3297
      %v3551 = vmul.f32 %v3103, %v3302
      %v3552 = vmul.f32 %v3104, %v3307
      %v3553 = vmul.f32 %v3105, %v3312
      %v3554 = vmul.f32 %v3106, %v3317
      %v3555 = vmul.f32 %v3107, %v3322
      %v3556 = vmul.f32 %v3108, %v3327
      %v3557 = vmul.f32 %v3109, %v3332
      %v3558 = vmul.f32 %v3110, %v3337
      %v3559 = vmul.f32 %v3111, %v3342
      %v3560 = vmul.f32 %v3112, %v3347
      %v3561 = vmul.f32 %v3113, %v3352
      %v3562 = vmul.f32 %v3114, %v3357
      %v3563 = vmul.f32 %v3115, %v3362
      %v3564 = vmul.f32 %v3116, %v3367
      %v3565 = vmul.f32 %v3117, %v3372
      %v3566 = vmul.f32 %v3118, %v3217
      %v3567 = vmul.f32 %v3119, %v3222
      %v3568 = vmul.f32 %v3120, %v3227
      %v3569 = vmul.f32 %v3121, %v3232
      %v3570 = vmul.f32 %v3122, %v3237
      %v3571 = vmul.f32 %v3123, %v3242
      %v3572 = vmul.f32 %v3124, %v3247
      %v3573 = vmul.f32 %v3125, %v3252
      %v3574 = vmul.f32 %v3126, %v3257
      %v3575 = vmul.f32 %v3127, %v3262
      %v3576 = vmul.f32 %v3128, %v3267
      %v3577 = vmul.f32 %v3129, %v3272
      %v3578 = vmul.f32 %v3130, %v3277
      %v3579 = vmul.f32 %v3131, %v3282
      %v3580 = vmul.f32 %v3132, %v3287
      %v3581 = vmul.f32 %v3133, %v3292
      %v3582 = vmul.f32 %v3134, %v3297
      %v3583 = vmul.f32 %v3135, %v3302
      %v3584 = vmul.f32 %v3136, %v3307
      %v3585 = vmul.f32 %v3137, %v3312
      %v3586 = vmul.f32 %v3138, %v3317
      %v3587 = vmul.f32 %v3139, %v3322
      %v3588 = vmul.f32 %v3140, %v3327
      %v3589 = vmul.f32 %v3141, %v3332
      %v3590 = vmul.f32 %v3142, %v3337
      %v3591 = vmul.f32 %v3143, %v3342
      %v3592 = vmul.f32 %v3144, %v3347
      %v3593 = vmul.f32 %v3145, %v3352
      %v3594 = vmul.f32 %v3146, %v3357
      %v3595 = vmul.f32 %v3147, %v3362
      %v3596 = vmul.f32 %v3148, %v3367
      %v3597 = vmul.f32 %v3149, %v3372
      %v3598 = vmul.f32 %v3150, %v3217
      %v3599 = vmul.f32 %v3151, %v3222
      %v3600 = vmul.f32 %v3152, %v3227
      %v3601 = vmul.f32 %v3153, %v3232
      %v3602 = vmul.f32 %v3154, %v3237
      %v3603 = vmul.f32 %v3155, %v3242
      %v3604 = vmul.f32 %v3156, %v3247
      %v3605 = vmul.f32 %v3157, %v3252
      %v3606 = vmul.f32 %v3158, %v3257
      %v3607 = vmul.f32 %v3159, %v3262
      %v3608 = vmul.f32 %v3160, %v3267
      %v3609 = vmul.f32 %v3161, %v3272
      %v3610 = vmul.f32 %v3162, %v3277
      %v3611 = vmul.f32 %v3163, %v3282
      %v3612 = vmul.f32 %v3164, %v3287
      %v3613 = vmul.f32 %v3165, %v3292
      %v3614 = vmul.f32 %v3166, %v3297
      %v3615 = vmul.f32 %v3167, %v3302
      %v3616 = vmul.f32 %v3168, %v3307
      %v3617 = vmul.f32 %v3169, %v3312
      %v3618 = vmul.f32 %v3170, %v3317
      %v3619 = vmul.f32 %v3171, %v3322
      %v3620 = vmul.f32 %v3172, %v3327
      %v3621 = vmul.f32 %v3173, %v3332
      %v3622 = vmul.f32 %v3174, %v3337
      %v3623 = vmul.f32 %v3175, %v3342
      %v3624 = vmul.f32 %v3176, %v3347
      %v3625 = vmul.f32 %v3177, %v3352
      %v3626 = vmul.f32 %v3178, %v3357
      %v3627 = vmul.f32 %v3179, %v3362
      %v3628 = vmul.f32 %v3180, %v3367
      %v3629 = vmul.f32 %v3181, %v3372
      %vm3630 = vcmask 523264
      %3631 = vst.msk [vmem:[#allocation2] sm:$0xff] %vm3630, %v3374
      %3632 = vst.msk [vmem:[#allocation2 + $0x8] sm:$0xff] %vm3630, %v3375
      %3633 = vst.msk [vmem:[#allocation2 + $0x10] sm:$0xff] %vm3630, %v3376
      %3634 = vst.msk [vmem:[#allocation2 + $0x18] sm:$0xff] %vm3630, %v3377
      %3635 = vst.msk [vmem:[#allocation2 + $0x20] sm:$0xff] %vm3630, %v3378
      %3636 = vst.msk [vmem:[#allocation2 + $0x28] sm:$0xff] %vm3630, %v3379
      %3637 = vst.msk [vmem:[#allocation2 + $0x30] sm:$0xff] %vm3630, %v3380
      %3638 = vst.msk [vmem:[#allocation2 + $0x38] sm:$0xff] %vm3630, %v3381
      %3639 = vst.msk [vmem:[#allocation2 + $0x120] sm:$0xff] %vm3630, %v3406
      %3640 = vst.msk [vmem:[#allocation2 + $0x128] sm:$0xff] %vm3630, %v3407
      %3641 = vst.msk [vmem:[#allocation2 + $0x130] sm:$0xff] %vm3630, %v3408
      %3642 = vst.msk [vmem:[#allocation2 + $0x138] sm:$0xff] %vm3630, %v3409
      %3643 = vst.msk [vmem:[#allocation2 + $0x140] sm:$0xff] %vm3630, %v3410
      %3644 = vst.msk [vmem:[#allocation2 + $0x148] sm:$0xff] %vm3630, %v3411
      %3645 = vst.msk [vmem:[#allocation2 + $0x150] sm:$0xff] %vm3630, %v3412
      %3646 = vst.msk [vmem:[#allocation2 + $0x158] sm:$0xff] %vm3630, %v3413
      %3647 = vst.msk [vmem:[#allocation2 + $0x240] sm:$0xff] %vm3630, %v3438
      %3648 = vst.msk [vmem:[#allocation2 + $0x248] sm:$0xff] %vm3630, %v3439
      %3649 = vst.msk [vmem:[#allocation2 + $0x250] sm:$0xff] %vm3630, %v3440
      %3650 = vst.msk [vmem:[#allocation2 + $0x258] sm:$0xff] %vm3630, %v3441
      %3651 = vst.msk [vmem:[#allocation2 + $0x260] sm:$0xff] %vm3630, %v3442
      %3652 = vst.msk [vmem:[#allocation2 + $0x268] sm:$0xff] %vm3630, %v3443
      %3653 = vst.msk [vmem:[#allocation2 + $0x270] sm:$0xff] %vm3630, %v3444
      %3654 = vst.msk [vmem:[#allocation2 + $0x278] sm:$0xff] %vm3630, %v3445
      %3655 = vst.msk [vmem:[#allocation2 + $0x360] sm:$0xff] %vm3630, %v3470
      %3656 = vst.msk [vmem:[#allocation2 + $0x368] sm:$0xff] %vm3630, %v3471
      %3657 = vst.msk [vmem:[#allocation2 + $0x370] sm:$0xff] %vm3630, %v3472
      %3658 = vst.msk [vmem:[#allocation2 + $0x378] sm:$0xff] %vm3630, %v3473
      %3659 = vst.msk [vmem:[#allocation2 + $0x380] sm:$0xff] %vm3630, %v3474
      %3660 = vst.msk [vmem:[#allocation2 + $0x388] sm:$0xff] %vm3630, %v3475
      %3661 = vst.msk [vmem:[#allocation2 + $0x390] sm:$0xff] %vm3630, %v3476
      %3662 = vst.msk [vmem:[#allocation2 + $0x398] sm:$0xff] %vm3630, %v3477
      %3663 = vst.msk [vmem:[#allocation2 + $0x480] sm:$0xff] %vm3630, %v3502
      %3664 = vst.msk [vmem:[#allocation2 + $0x488] sm:$0xff] %vm3630, %v3503
      %3665 = vst.msk [vmem:[#allocation2 + $0x490] sm:$0xff] %vm3630, %v3504
      %3666 = vst.msk [vmem:[#allocation2 + $0x498] sm:$0xff] %vm3630, %v3505
      %3667 = vst.msk [vmem:[#allocation2 + $0x4a0] sm:$0xff] %vm3630, %v3506
      %3668 = vst.msk [vmem:[#allocation2 + $0x4a8] sm:$0xff] %vm3630, %v3507
      %3669 = vst.msk [vmem:[#allocation2 + $0x4b0] sm:$0xff] %vm3630, %v3508
      %3670 = vst.msk [vmem:[#allocation2 + $0x4b8] sm:$0xff] %vm3630, %v3509
      %3671 = vst.msk [vmem:[#allocation2 + $0x5a0] sm:$0xff] %vm3630, %v3534
      %3672 = vst.msk [vmem:[#allocation2 + $0x5a8] sm:$0xff] %vm3630, %v3535
      %3673 = vst.msk [vmem:[#allocation2 + $0x5b0] sm:$0xff] %vm3630, %v3536
      %3674 = vst.msk [vmem:[#allocation2 + $0x5b8] sm:$0xff] %vm3630, %v3537
      %3675 = vst.msk [vmem:[#allocation2 + $0x5c0] sm:$0xff] %vm3630, %v3538
      %3676 = vst.msk [vmem:[#allocation2 + $0x5c8] sm:$0xff] %vm3630, %v3539
      %3677 = vst.msk [vmem:[#allocation2 + $0x5d0] sm:$0xff] %vm3630, %v3540
      %3678 = vst.msk [vmem:[#allocation2 + $0x5d8] sm:$0xff] %vm3630, %v3541
      %3679 = vst.msk [vmem:[#allocation2 + $0x6c0] sm:$0xff] %vm3630, %v3566
      %3680 = vst.msk [vmem:[#allocation2 + $0x6c8] sm:$0xff] %vm3630, %v3567
      %3681 = vst.msk [vmem:[#allocation2 + $0x6d0] sm:$0xff] %vm3630, %v3568
      %3682 = vst.msk [vmem:[#allocation2 + $0x6d8] sm:$0xff] %vm3630, %v3569
      %3683 = vst.msk [vmem:[#allocation2 + $0x6e0] sm:$0xff] %vm3630, %v3570
      %3684 = vst.msk [vmem:[#allocation2 + $0x6e8] sm:$0xff] %vm3630, %v3571
      %3685 = vst.msk [vmem:[#allocation2 + $0x6f0] sm:$0xff] %vm3630, %v3572
      %3686 = vst.msk [vmem:[#allocation2 + $0x6f8] sm:$0xff] %vm3630, %v3573
      %3687 = vst.msk [vmem:[#allocation2 + $0x7e0] sm:$0xff] %vm3630, %v3598
      %3688 = vst.msk [vmem:[#allocation2 + $0x7e8] sm:$0xff] %vm3630, %v3599
      %3689 = vst.msk [vmem:[#allocation2 + $0x7f0] sm:$0xff] %vm3630, %v3600
      %3690 = vst.msk [vmem:[#allocation2 + $0x7f8] sm:$0xff] %vm3630, %v3601
      %3691 = vst.msk [vmem:[#allocation2 + $0x800] sm:$0xff] %vm3630, %v3602
      %3692 = vst.msk [vmem:[#allocation2 + $0x808] sm:$0xff] %vm3630, %v3603
      %3693 = vst.msk [vmem:[#allocation2 + $0x810] sm:$0xff] %vm3630, %v3604
      %3694 = vst.msk [vmem:[#allocation2 + $0x818] sm:$0xff] %vm3630, %v3605
      %vm3695 = vcmask 516096
      %3696 = vst.msk [vmem:[#allocation2 + $0x40] sm:$0x1] %vm3695, 0.0
      %3697 = vst.msk [vmem:[#allocation2 + $0x160] sm:$0x1] %vm3695, 0.0
      %3698 = vst.msk [vmem:[#allocation2 + $0x280] sm:$0x1] %vm3695, 0.0
      %3699 = vst.msk [vmem:[#allocation2 + $0x3a0] sm:$0x1] %vm3695, 0.0
      %3700 = vst.msk [vmem:[#allocation2 + $0x4c0] sm:$0x1] %vm3695, 0.0
      %3701 = vst.msk [vmem:[#allocation2 + $0x5e0] sm:$0x1] %vm3695, 0.0
      %3702 = vst.msk [vmem:[#allocation2 + $0x700] sm:$0x1] %vm3695, 0.0
      %3703 = vst.msk [vmem:[#allocation2 + $0x820] sm:$0x1] %vm3695, 0.0
      %3704 = vst.msk [vmem:[#allocation2 + $0x48] sm:$0xff] %vm3630, %v3382
      %3705 = vst.msk [vmem:[#allocation2 + $0x50] sm:$0xff] %vm3630, %v3383
      %3706 = vst.msk [vmem:[#allocation2 + $0x58] sm:$0xff] %vm3630, %v3384
      %3707 = vst.msk [vmem:[#allocation2 + $0x60] sm:$0xff] %vm3630, %v3385
      %3708 = vst.msk [vmem:[#allocation2 + $0x68] sm:$0xff] %vm3630, %v3386
      %3709 = vst.msk [vmem:[#allocation2 + $0x70] sm:$0xff] %vm3630, %v3387
      %3710 = vst.msk [vmem:[#allocation2 + $0x78] sm:$0xff] %vm3630, %v3388
      %3711 = vst.msk [vmem:[#allocation2 + $0x80] sm:$0xff] %vm3630, %v3389
      %3712 = vst.msk [vmem:[#allocation2 + $0x168] sm:$0xff] %vm3630, %v3414
      %3713 = vst.msk [vmem:[#allocation2 + $0x170] sm:$0xff] %vm3630, %v3415
      %3714 = vst.msk [vmem:[#allocation2 + $0x178] sm:$0xff] %vm3630, %v3416
      %3715 = vst.msk [vmem:[#allocation2 + $0x180] sm:$0xff] %vm3630, %v3417
      %3716 = vst.msk [vmem:[#allocation2 + $0x188] sm:$0xff] %vm3630, %v3418
      %3717 = vst.msk [vmem:[#allocation2 + $0x190] sm:$0xff] %vm3630, %v3419
      %3718 = vst.msk [vmem:[#allocation2 + $0x198] sm:$0xff] %vm3630, %v3420
      %3719 = vst.msk [vmem:[#allocation2 + $0x1a0] sm:$0xff] %vm3630, %v3421
      %3720 = vst.msk [vmem:[#allocation2 + $0x288] sm:$0xff] %vm3630, %v3446
      %3721 = vst.msk [vmem:[#allocation2 + $0x290] sm:$0xff] %vm3630, %v3447
      %3722 = vst.msk [vmem:[#allocation2 + $0x298] sm:$0xff] %vm3630, %v3448
      %3723 = vst.msk [vmem:[#allocation2 + $0x2a0] sm:$0xff] %vm3630, %v3449
      %3724 = vst.msk [vmem:[#allocation2 + $0x2a8] sm:$0xff] %vm3630, %v3450
      %3725 = vst.msk [vmem:[#allocation2 + $0x2b0] sm:$0xff] %vm3630, %v3451
      %3726 = vst.msk [vmem:[#allocation2 + $0x2b8] sm:$0xff] %vm3630, %v3452
      %3727 = vst.msk [vmem:[#allocation2 + $0x2c0] sm:$0xff] %vm3630, %v3453
      %3728 = vst.msk [vmem:[#allocation2 + $0x3a8] sm:$0xff] %vm3630, %v3478
      %3729 = vst.msk [vmem:[#allocation2 + $0x3b0] sm:$0xff] %vm3630, %v3479
      %3730 = vst.msk [vmem:[#allocation2 + $0x3b8] sm:$0xff] %vm3630, %v3480
      %3731 = vst.msk [vmem:[#allocation2 + $0x3c0] sm:$0xff] %vm3630, %v3481
      %3732 = vst.msk [vmem:[#allocation2 + $0x3c8] sm:$0xff] %vm3630, %v3482
      %3733 = vst.msk [vmem:[#allocation2 + $0x3d0] sm:$0xff] %vm3630, %v3483
      %3734 = vst.msk [vmem:[#allocation2 + $0x3d8] sm:$0xff] %vm3630, %v3484
      %3735 = vst.msk [vmem:[#allocation2 + $0x3e0] sm:$0xff] %vm3630, %v3485
      %3736 = vst.msk [vmem:[#allocation2 + $0x4c8] sm:$0xff] %vm3630, %v3510
      %3737 = vst.msk [vmem:[#allocation2 + $0x4d0] sm:$0xff] %vm3630, %v3511
      %3738 = vst.msk [vmem:[#allocation2 + $0x4d8] sm:$0xff] %vm3630, %v3512
      %3739 = vst.msk [vmem:[#allocation2 + $0x4e0] sm:$0xff] %vm3630, %v3513
      %3740 = vst.msk [vmem:[#allocation2 + $0x4e8] sm:$0xff] %vm3630, %v3514
      %3741 = vst.msk [vmem:[#allocation2 + $0x4f0] sm:$0xff] %vm3630, %v3515
      %3742 = vst.msk [vmem:[#allocation2 + $0x4f8] sm:$0xff] %vm3630, %v3516
      %3743 = vst.msk [vmem:[#allocation2 + $0x500] sm:$0xff] %vm3630, %v3517
      %3744 = vst.msk [vmem:[#allocation2 + $0x5e8] sm:$0xff] %vm3630, %v3542
      %3745 = vst.msk [vmem:[#allocation2 + $0x5f0] sm:$0xff] %vm3630, %v3543
      %3746 = vst.msk [vmem:[#allocation2 + $0x5f8] sm:$0xff] %vm3630, %v3544
      %3747 = vst.msk [vmem:[#allocation2 + $0x600] sm:$0xff] %vm3630, %v3545
      %3748 = vst.msk [vmem:[#allocation2 + $0x608] sm:$0xff] %vm3630, %v3546
      %3749 = vst.msk [vmem:[#allocation2 + $0x610] sm:$0xff] %vm3630, %v3547
      %3750 = vst.msk [vmem:[#allocation2 + $0x618] sm:$0xff] %vm3630, %v3548
      %3751 = vst.msk [vmem:[#allocation2 + $0x620] sm:$0xff] %vm3630, %v3549
      %3752 = vst.msk [vmem:[#allocation2 + $0x708] sm:$0xff] %vm3630, %v3574
      %3753 = vst.msk [vmem:[#allocation2 + $0x710] sm:$0xff] %vm3630, %v3575
      %3754 = vst.msk [vmem:[#allocation2 + $0x718] sm:$0xff] %vm3630, %v3576
      %3755 = vst.msk [vmem:[#allocation2 + $0x720] sm:$0xff] %vm3630, %v3577
      %3756 = vst.msk [vmem:[#allocation2 + $0x728] sm:$0xff] %vm3630, %v3578
      %3757 = vst.msk [vmem:[#allocation2 + $0x730] sm:$0xff] %vm3630, %v3579
      %3758 = vst.msk [vmem:[#allocation2 + $0x738] sm:$0xff] %vm3630, %v3580
      %3759 = vst.msk [vmem:[#allocation2 + $0x740] sm:$0xff] %vm3630, %v3581
      %3760 = vst.msk [vmem:[#allocation2 + $0x828] sm:$0xff] %vm3630, %v3606
      %3761 = vst.msk [vmem:[#allocation2 + $0x830] sm:$0xff] %vm3630, %v3607
      %3762 = vst.msk [vmem:[#allocation2 + $0x838] sm:$0xff] %vm3630, %v3608
      %3763 = vst.msk [vmem:[#allocation2 + $0x840] sm:$0xff] %vm3630, %v3609
      %3764 = vst.msk [vmem:[#allocation2 + $0x848] sm:$0xff] %vm3630, %v3610
      %3765 = vst.msk [vmem:[#allocation2 + $0x850] sm:$0xff] %vm3630, %v3611
      %3766 = vst.msk [vmem:[#allocation2 + $0x858] sm:$0xff] %vm3630, %v3612
      %3767 = vst.msk [vmem:[#allocation2 + $0x860] sm:$0xff] %vm3630, %v3613
      %3768 = vst.msk [vmem:[#allocation2 + $0x88] sm:$0x1] %vm3695, 0.0
      %3769 = vst.msk [vmem:[#allocation2 + $0x1a8] sm:$0x1] %vm3695, 0.0
      %3770 = vst.msk [vmem:[#allocation2 + $0x2c8] sm:$0x1] %vm3695, 0.0
      %3771 = vst.msk [vmem:[#allocation2 + $0x3e8] sm:$0x1] %vm3695, 0.0
      %3772 = vst.msk [vmem:[#allocation2 + $0x508] sm:$0x1] %vm3695, 0.0
      %3773 = vst.msk [vmem:[#allocation2 + $0x628] sm:$0x1] %vm3695, 0.0
      %3774 = vst.msk [vmem:[#allocation2 + $0x748] sm:$0x1] %vm3695, 0.0
      %3775 = vst.msk [vmem:[#allocation2 + $0x868] sm:$0x1] %vm3695, 0.0
      %3776 = vst.msk [vmem:[#allocation2 + $0x90] sm:$0xff] %vm3630, %v3390
      %3777 = vst.msk [vmem:[#allocation2 + $0x98] sm:$0xff] %vm3630, %v3391
      %3778 = vst.msk [vmem:[#allocation2 + $0xa0] sm:$0xff] %vm3630, %v3392
      %3779 = vst.msk [vmem:[#allocation2 + $0xa8] sm:$0xff] %vm3630, %v3393
      %3780 = vst.msk [vmem:[#allocation2 + $0xb0] sm:$0xff] %vm3630, %v3394
      %3781 = vst.msk [vmem:[#allocation2 + $0xb8] sm:$0xff] %vm3630, %v3395
      %3782 = vst.msk [vmem:[#allocation2 + $0xc0] sm:$0xff] %vm3630, %v3396
      %3783 = vst.msk [vmem:[#allocation2 + $0xc8] sm:$0xff] %vm3630, %v3397
      %3784 = vst.msk [vmem:[#allocation2 + $0x1b0] sm:$0xff] %vm3630, %v3422
      %3785 = vst.msk [vmem:[#allocation2 + $0x1b8] sm:$0xff] %vm3630, %v3423
      %3786 = vst.msk [vmem:[#allocation2 + $0x1c0] sm:$0xff] %vm3630, %v3424
      %3787 = vst.msk [vmem:[#allocation2 + $0x1c8] sm:$0xff] %vm3630, %v3425
      %3788 = vst.msk [vmem:[#allocation2 + $0x1d0] sm:$0xff] %vm3630, %v3426
      %3789 = vst.msk [vmem:[#allocation2 + $0x1d8] sm:$0xff] %vm3630, %v3427
      %3790 = vst.msk [vmem:[#allocation2 + $0x1e0] sm:$0xff] %vm3630, %v3428
      %3791 = vst.msk [vmem:[#allocation2 + $0x1e8] sm:$0xff] %vm3630, %v3429
      %3792 = vst.msk [vmem:[#allocation2 + $0x2d0] sm:$0xff] %vm3630, %v3454
      %3793 = vst.msk [vmem:[#allocation2 + $0x2d8] sm:$0xff] %vm3630, %v3455
      %3794 = vst.msk [vmem:[#allocation2 + $0x2e0] sm:$0xff] %vm3630, %v3456
      %3795 = vst.msk [vmem:[#allocation2 + $0x2e8] sm:$0xff] %vm3630, %v3457
      %3796 = vst.msk [vmem:[#allocation2 + $0x2f0] sm:$0xff] %vm3630, %v3458
      %3797 = vst.msk [vmem:[#allocation2 + $0x2f8] sm:$0xff] %vm3630, %v3459
      %3798 = vst.msk [vmem:[#allocation2 + $0x300] sm:$0xff] %vm3630, %v3460
      %3799 = vst.msk [vmem:[#allocation2 + $0x308] sm:$0xff] %vm3630, %v3461
      %3800 = vst.msk [vmem:[#allocation2 + $0x3f0] sm:$0xff] %vm3630, %v3486
      %3801 = vst.msk [vmem:[#allocation2 + $0x3f8] sm:$0xff] %vm3630, %v3487
      %3802 = vst.msk [vmem:[#allocation2 + $0x400] sm:$0xff] %vm3630, %v3488
      %3803 = vst.msk [vmem:[#allocation2 + $0x408] sm:$0xff] %vm3630, %v3489
      %3804 = vst.msk [vmem:[#allocation2 + $0x410] sm:$0xff] %vm3630, %v3490
      %3805 = vst.msk [vmem:[#allocation2 + $0x418] sm:$0xff] %vm3630, %v3491
      %3806 = vst.msk [vmem:[#allocation2 + $0x420] sm:$0xff] %vm3630, %v3492
      %3807 = vst.msk [vmem:[#allocation2 + $0x428] sm:$0xff] %vm3630, %v3493
      %3808 = vst.msk [vmem:[#allocation2 + $0x510] sm:$0xff] %vm3630, %v3518
      %3809 = vst.msk [vmem:[#allocation2 + $0x518] sm:$0xff] %vm3630, %v3519
      %3810 = vst.msk [vmem:[#allocation2 + $0x520] sm:$0xff] %vm3630, %v3520
      %3811 = vst.msk [vmem:[#allocation2 + $0x528] sm:$0xff] %vm3630, %v3521
      %3812 = vst.msk [vmem:[#allocation2 + $0x530] sm:$0xff] %vm3630, %v3522
      %3813 = vst.msk [vmem:[#allocation2 + $0x538] sm:$0xff] %vm3630, %v3523
      %3814 = vst.msk [vmem:[#allocation2 + $0x540] sm:$0xff] %vm3630, %v3524
      %3815 = vst.msk [vmem:[#allocation2 + $0x548] sm:$0xff] %vm3630, %v3525
      %3816 = vst.msk [vmem:[#allocation2 + $0x630] sm:$0xff] %vm3630, %v3550
      %3817 = vst.msk [vmem:[#allocation2 + $0x638] sm:$0xff] %vm3630, %v3551
      %3818 = vst.msk [vmem:[#allocation2 + $0x640] sm:$0xff] %vm3630, %v3552
      %3819 = vst.msk [vmem:[#allocation2 + $0x648] sm:$0xff] %vm3630, %v3553
      %3820 = vst.msk [vmem:[#allocation2 + $0x650] sm:$0xff] %vm3630, %v3554
      %3821 = vst.msk [vmem:[#allocation2 + $0x658] sm:$0xff] %vm3630, %v3555
      %3822 = vst.msk [vmem:[#allocation2 + $0x660] sm:$0xff] %vm3630, %v3556
      %3823 = vst.msk [vmem:[#allocation2 + $0x668] sm:$0xff] %vm3630, %v3557
      %3824 = vst.msk [vmem:[#allocation2 + $0x750] sm:$0xff] %vm3630, %v3582
      %3825 = vst.msk [vmem:[#allocation2 + $0x758] sm:$0xff] %vm3630, %v3583
      %3826 = vst.msk [vmem:[#allocation2 + $0x760] sm:$0xff] %vm3630, %v3584
      %3827 = vst.msk [vmem:[#allocation2 + $0x768] sm:$0xff] %vm3630, %v3585
      %3828 = vst.msk [vmem:[#allocation2 + $0x770] sm:$0xff] %vm3630, %v3586
      %3829 = vst.msk [vmem:[#allocation2 + $0x778] sm:$0xff] %vm3630, %v3587
      %3830 = vst.msk [vmem:[#allocation2 + $0x780] sm:$0xff] %vm3630, %v3588
      %3831 = vst.msk [vmem:[#allocation2 + $0x788] sm:$0xff] %vm3630, %v3589
      %3832 = vst.msk [vmem:[#allocation2 + $0x870] sm:$0xff] %vm3630, %v3614
      %3833 = vst.msk [vmem:[#allocation2 + $0x878] sm:$0xff] %vm3630, %v3615
      %3834 = vst.msk [vmem:[#allocation2 + $0x880] sm:$0xff] %vm3630, %v3616
      %3835 = vst.msk [vmem:[#allocation2 + $0x888] sm:$0xff] %vm3630, %v3617
      %3836 = vst.msk [vmem:[#allocation2 + $0x890] sm:$0xff] %vm3630, %v3618
      %3837 = vst.msk [vmem:[#allocation2 + $0x898] sm:$0xff] %vm3630, %v3619
      %3838 = vst.msk [vmem:[#allocation2 + $0x8a0] sm:$0xff] %vm3630, %v3620
      %3839 = vst.msk [vmem:[#allocation2 + $0x8a8] sm:$0xff] %vm3630, %v3621
      %3840 = vst.msk [vmem:[#allocation2 + $0xd0] sm:$0x1] %vm3695, 0.0
      %3841 = vst.msk [vmem:[#allocation2 + $0x1f0] sm:$0x1] %vm3695, 0.0
      %3842 = vst.msk [vmem:[#allocation2 + $0x310] sm:$0x1] %vm3695, 0.0
      %3843 = vst.msk [vmem:[#allocation2 + $0x430] sm:$0x1] %vm3695, 0.0
      %3844 = vst.msk [vmem:[#allocation2 + $0x550] sm:$0x1] %vm3695, 0.0
      %3845 = vst.msk [vmem:[#allocation2 + $0x670] sm:$0x1] %vm3695, 0.0
      %3846 = vst.msk [vmem:[#allocation2 + $0x790] sm:$0x1] %vm3695, 0.0
      %3847 = vst.msk [vmem:[#allocation2 + $0x8b0] sm:$0x1] %vm3695, 0.0
      %3848 = vst.msk [vmem:[#allocation2 + $0xd8] sm:$0xff] %vm3630, %v3398
      %3849 = vst.msk [vmem:[#allocation2 + $0xe0] sm:$0xff] %vm3630, %v3399
      %3850 = vst.msk [vmem:[#allocation2 + $0xe8] sm:$0xff] %vm3630, %v3400
      %3851 = vst.msk [vmem:[#allocation2 + $0xf0] sm:$0xff] %vm3630, %v3401
      %3852 = vst.msk [vmem:[#allocation2 + $0xf8] sm:$0xff] %vm3630, %v3402
      %3853 = vst.msk [vmem:[#allocation2 + $0x100] sm:$0xff] %vm3630, %v3403
      %3854 = vst.msk [vmem:[#allocation2 + $0x108] sm:$0xff] %vm3630, %v3404
      %3855 = vst.msk [vmem:[#allocation2 + $0x110] sm:$0xff] %vm3630, %v3405
      %3856 = vst.msk [vmem:[#allocation2 + $0x1f8] sm:$0xff] %vm3630, %v3430
      %3857 = vst.msk [vmem:[#allocation2 + $0x200] sm:$0xff] %vm3630, %v3431
      %3858 = vst.msk [vmem:[#allocation2 + $0x208] sm:$0xff] %vm3630, %v3432
      %3859 = vst.msk [vmem:[#allocation2 + $0x210] sm:$0xff] %vm3630, %v3433
      %3860 = vst.msk [vmem:[#allocation2 + $0x218] sm:$0xff] %vm3630, %v3434
      %3861 = vst.msk [vmem:[#allocation2 + $0x220] sm:$0xff] %vm3630, %v3435
      %3862 = vst.msk [vmem:[#allocation2 + $0x228] sm:$0xff] %vm3630, %v3436
      %3863 = vst.msk [vmem:[#allocation2 + $0x230] sm:$0xff] %vm3630, %v3437
      %3864 = vst.msk [vmem:[#allocation2 + $0x318] sm:$0xff] %vm3630, %v3462
      %3865 = vst.msk [vmem:[#allocation2 + $0x320] sm:$0xff] %vm3630, %v3463
      %3866 = vst.msk [vmem:[#allocation2 + $0x328] sm:$0xff] %vm3630, %v3464
      %3867 = vst.msk [vmem:[#allocation2 + $0x330] sm:$0xff] %vm3630, %v3465
      %3868 = vst.msk [vmem:[#allocation2 + $0x338] sm:$0xff] %vm3630, %v3466
      %3869 = vst.msk [vmem:[#allocation2 + $0x340] sm:$0xff] %vm3630, %v3467
      %3870 = vst.msk [vmem:[#allocation2 + $0x348] sm:$0xff] %vm3630, %v3468
      %3871 = vst.msk [vmem:[#allocation2 + $0x350] sm:$0xff] %vm3630, %v3469
      %3872 = vst.msk [vmem:[#allocation2 + $0x438] sm:$0xff] %vm3630, %v3494
      %3873 = vst.msk [vmem:[#allocation2 + $0x440] sm:$0xff] %vm3630, %v3495
      %3874 = vst.msk [vmem:[#allocation2 + $0x448] sm:$0xff] %vm3630, %v3496
      %3875 = vst.msk [vmem:[#allocation2 + $0x450] sm:$0xff] %vm3630, %v3497
      %3876 = vst.msk [vmem:[#allocation2 + $0x458] sm:$0xff] %vm3630, %v3498
      %3877 = vst.msk [vmem:[#allocation2 + $0x460] sm:$0xff] %vm3630, %v3499
      %3878 = vst.msk [vmem:[#allocation2 + $0x468] sm:$0xff] %vm3630, %v3500
      %3879 = vst.msk [vmem:[#allocation2 + $0x470] sm:$0xff] %vm3630, %v3501
      %3880 = vst.msk [vmem:[#allocation2 + $0x558] sm:$0xff] %vm3630, %v3526
      %3881 = vst.msk [vmem:[#allocation2 + $0x560] sm:$0xff] %vm3630, %v3527
      %3882 = vst.msk [vmem:[#allocation2 + $0x568] sm:$0xff] %vm3630, %v3528
      %3883 = vst.msk [vmem:[#allocation2 + $0x570] sm:$0xff] %vm3630, %v3529
      %3884 = vst.msk [vmem:[#allocation2 + $0x578] sm:$0xff] %vm3630, %v3530
      %3885 = vst.msk [vmem:[#allocation2 + $0x580] sm:$0xff] %vm3630, %v3531
      %3886 = vst.msk [vmem:[#allocation2 + $0x588] sm:$0xff] %vm3630, %v3532
      %3887 = vst.msk [vmem:[#allocation2 + $0x590] sm:$0xff] %vm3630, %v3533
      %3888 = vst.msk [vmem:[#allocation2 + $0x678] sm:$0xff] %vm3630, %v3558
      %3889 = vst.msk [vmem:[#allocation2 + $0x680] sm:$0xff] %vm3630, %v3559
      %3890 = vst.msk [vmem:[#allocation2 + $0x688] sm:$0xff] %vm3630, %v3560
      %3891 = vst.msk [vmem:[#allocation2 + $0x690] sm:$0xff] %vm3630, %v3561
      %3892 = vst.msk [vmem:[#allocation2 + $0x698] sm:$0xff] %vm3630, %v3562
      %3893 = vst.msk [vmem:[#allocation2 + $0x6a0] sm:$0xff] %vm3630, %v3563
      %3894 = vst.msk [vmem:[#allocation2 + $0x6a8] sm:$0xff] %vm3630, %v3564
      %3895 = vst.msk [vmem:[#allocation2 + $0x6b0] sm:$0xff] %vm3630, %v3565
      %3896 = vst.msk [vmem:[#allocation2 + $0x798] sm:$0xff] %vm3630, %v3590
      %3897 = vst.msk [vmem:[#allocation2 + $0x7a0] sm:$0xff] %vm3630, %v3591
      %3898 = vst.msk [vmem:[#allocation2 + $0x7a8] sm:$0xff] %vm3630, %v3592
      %3899 = vst.msk [vmem:[#allocation2 + $0x7b0] sm:$0xff] %vm3630, %v3593
      %3900 = vst.msk [vmem:[#allocation2 + $0x7b8] sm:$0xff] %vm3630, %v3594
      %3901 = vst.msk [vmem:[#allocation2 + $0x7c0] sm:$0xff] %vm3630, %v3595
      %3902 = vst.msk [vmem:[#allocation2 + $0x7c8] sm:$0xff] %vm3630, %v3596
      %3903 = vst.msk [vmem:[#allocation2 + $0x7d0] sm:$0xff] %vm3630, %v3597
      %3904 = vst.msk [vmem:[#allocation2 + $0x8b8] sm:$0xff] %vm3630, %v3622
      %3905 = vst.msk [vmem:[#allocation2 + $0x8c0] sm:$0xff] %vm3630, %v3623
      %3906 = vst.msk [vmem:[#allocation2 + $0x8c8] sm:$0xff] %vm3630, %v3624
      %3907 = vst.msk [vmem:[#allocation2 + $0x8d0] sm:$0xff] %vm3630, %v3625
      %3908 = vst.msk [vmem:[#allocation2 + $0x8d8] sm:$0xff] %vm3630, %v3626
      %3909 = vst.msk [vmem:[#allocation2 + $0x8e0] sm:$0xff] %vm3630, %v3627
      %3910 = vst.msk [vmem:[#allocation2 + $0x8e8] sm:$0xff] %vm3630, %v3628
      %3911 = vst.msk [vmem:[#allocation2 + $0x8f0] sm:$0xff] %vm3630, %v3629
      %3912 = vst.msk [vmem:[#allocation2 + $0x118] sm:$0x1] %vm3695, 0.0
      %3913 = vst.msk [vmem:[#allocation2 + $0x238] sm:$0x1] %vm3695, 0.0
      %3914 = vst.msk [vmem:[#allocation2 + $0x358] sm:$0x1] %vm3695, 0.0
      %3915 = vst.msk [vmem:[#allocation2 + $0x478] sm:$0x1] %vm3695, 0.0
      %3916 = vst.msk [vmem:[#allocation2 + $0x598] sm:$0x1] %vm3695, 0.0
      %3917 = vst.msk [vmem:[#allocation2 + $0x6b8] sm:$0x1] %vm3695, 0.0
      %3918 = vst.msk [vmem:[#allocation2 + $0x7d8] sm:$0x1] %vm3695, 0.0
      %3919 = vst.msk [vmem:[#allocation2 + $0x8f8] sm:$0x1] %vm3695, 0.0
      %v3920 = vld [vmem:[#allocation2 + $0xd8] sm:$0xff]
      %v3921 = vld [vmem:[#allocation2 + $0xe0] sm:$0xff]
      %v3922 = vld [vmem:[#allocation2 + $0xe8] sm:$0xff]
      %v3923 = vld [vmem:[#allocation2 + $0xf0] sm:$0xff]
      %v3924 = vld [vmem:[#allocation2 + $0xf8] sm:$0xff]
      %v3925 = vld [vmem:[#allocation2 + $0x100] sm:$0xff]
      %v3926 = vld [vmem:[#allocation2 + $0x108] sm:$0xff]
      %v3927 = vld [vmem:[#allocation2 + $0x1f8] sm:$0xff]
      %v3928 = vld [vmem:[#allocation2 + $0x200] sm:$0xff]
      %v3929 = vld [vmem:[#allocation2 + $0x208] sm:$0xff]
      %v3930 = vld [vmem:[#allocation2 + $0x210] sm:$0xff]
      %v3931 = vld [vmem:[#allocation2 + $0x218] sm:$0xff]
      %v3932 = vld [vmem:[#allocation2 + $0x220] sm:$0xff]
      %v3933 = vld [vmem:[#allocation2 + $0x228] sm:$0xff]
      %v3934 = vld [vmem:[#allocation2 + $0x318] sm:$0xff]
      %v3935 = vld [vmem:[#allocation2 + $0x320] sm:$0xff]
      %v3936 = vld [vmem:[#allocation2 + $0x328] sm:$0xff]
      %v3937 = vld [vmem:[#allocation2 + $0x330] sm:$0xff]
      %v3938 = vld [vmem:[#allocation2 + $0x338] sm:$0xff]
      %v3939 = vld [vmem:[#allocation2 + $0x340] sm:$0xff]
      %v3940 = vld [vmem:[#allocation2 + $0x348] sm:$0xff]
      %v3941 = vld [vmem:[#allocation2 + $0x438] sm:$0xff]
      %v3942 = vld [vmem:[#allocation2 + $0x440] sm:$0xff]
      %v3943 = vld [vmem:[#allocation2 + $0x448] sm:$0xff]
      %v3944 = vld [vmem:[#allocation2 + $0x450] sm:$0xff]
      %v3945 = vld [vmem:[#allocation2 + $0x458] sm:$0xff]
      %v3946 = vld [vmem:[#allocation2 + $0x460] sm:$0xff]
      %v3947 = vld [vmem:[#allocation2 + $0x468] sm:$0xff]
      %v3948 = vld [vmem:[#allocation2 + $0x558] sm:$0xff]
      %v3949 = vld [vmem:[#allocation2 + $0x560] sm:$0xff]
      %v3950 = vld [vmem:[#allocation2 + $0x568] sm:$0xff]
      %v3951 = vld [vmem:[#allocation2 + $0x570] sm:$0xff]
      %v3952 = vld [vmem:[#allocation2 + $0x578] sm:$0xff]
      %v3953 = vld [vmem:[#allocation2 + $0x580] sm:$0xff]
      %v3954 = vld [vmem:[#allocation2 + $0x588] sm:$0xff]
      %v3955 = vld [vmem:[#allocation2 + $0x678] sm:$0xff]
      %v3956 = vld [vmem:[#allocation2 + $0x680] sm:$0xff]
      %v3957 = vld [vmem:[#allocation2 + $0x688] sm:$0xff]
      %v3958 = vld [vmem:[#allocation2 + $0x690] sm:$0xff]
      %v3959 = vld [vmem:[#allocation2 + $0x698] sm:$0xff]
      %v3960 = vld [vmem:[#allocation2 + $0x6a0] sm:$0xff]
      %v3961 = vld [vmem:[#allocation2 + $0x6a8] sm:$0xff]
      %v3962 = vld [vmem:[#allocation2 + $0x798] sm:$0xff]
      %v3963 = vld [vmem:[#allocation2 + $0x7a0] sm:$0xff]
      %v3964 = vld [vmem:[#allocation2 + $0x7a8] sm:$0xff]
      %v3965 = vld [vmem:[#allocation2 + $0x7b0] sm:$0xff]
      %v3966 = vld [vmem:[#allocation2 + $0x7b8] sm:$0xff]
      %v3967 = vld [vmem:[#allocation2 + $0x7c0] sm:$0xff]
      %v3968 = vld [vmem:[#allocation2 + $0x7c8] sm:$0xff]
      %v3969 = vld [vmem:[#allocation2 + $0x8b8] sm:$0xff]
      %v3970 = vld [vmem:[#allocation2 + $0x8c0] sm:$0xff]
      %v3971 = vld [vmem:[#allocation2 + $0x8c8] sm:$0xff]
      %v3972 = vld [vmem:[#allocation2 + $0x8d0] sm:$0xff]
      %v3973 = vld [vmem:[#allocation2 + $0x8d8] sm:$0xff]
      %v3974 = vld [vmem:[#allocation2 + $0x8e0] sm:$0xff]
      %v3975 = vld [vmem:[#allocation2 + $0x8e8] sm:$0xff]
      %v3976 = vpack.c.bf16 %v3921, %v3920
      %v3977 = vpack.c.bf16 %v3923, %v3922
      %v3978 = vpack.c.bf16 %v3925, %v3924
      %v3979 = vpack.c.bf16 %v3927, %v3926
      %v3980 = vpack.c.bf16 %v3929, %v3928
      %v3981 = vpack.c.bf16 %v3931, %v3930
      %v3982 = vpack.c.bf16 %v3933, %v3932
      %v3983 = vpack.c.bf16 %v3935, %v3934
      %v3984 = vpack.c.bf16 %v3937, %v3936
      %v3985 = vpack.c.bf16 %v3939, %v3938
      %v3986 = vpack.c.bf16 %v3941, %v3940
      %v3987 = vpack.c.bf16 %v3943, %v3942
      %v3988 = vpack.c.bf16 %v3945, %v3944
      %v3989 = vpack.c.bf16 %v3947, %v3946
      %v3990 = vpack.c.bf16 %v3949, %v3948
      %v3991 = vpack.c.bf16 %v3951, %v3950
      %v3992 = vpack.c.bf16 %v3953, %v3952
      %v3993 = vpack.c.bf16 %v3955, %v3954
      %v3994 = vpack.c.bf16 %v3957, %v3956
      %v3995 = vpack.c.bf16 %v3959, %v3958
      %v3996 = vpack.c.bf16 %v3961, %v3960
      %v3997 = vpack.c.bf16 %v3963, %v3962
      %v3998 = vpack.c.bf16 %v3965, %v3964
      %v3999 = vpack.c.bf16 %v3967, %v3966
      %v4000 = vpack.c.bf16 %v3969, %v3968
      %v4001 = vpack.c.bf16 %v3971, %v3970
      %v4002 = vpack.c.bf16 %v3973, %v3972
      %v4003 = vpack.c.bf16 %v3975, %v3974
      %4004 = vst.msk [vmem:[#allocation3] sm:$0xff] %vm3630, %v3976
      %4005 = vst.msk [vmem:[#allocation3 + $0x28] sm:$0xff] %vm3630, %v3977
      %4006 = vst.msk [vmem:[#allocation3 + $0x50] sm:$0xff] %vm3630, %v3978
      %4007 = vst.msk [vmem:[#allocation3 + $0x78] sm:$0xff] %vm3630, %v3979
      %4008 = vst.msk [vmem:[#allocation3 + $0xa0] sm:$0xff] %vm3630, %v3980
      %4009 = vst.msk [vmem:[#allocation3 + $0xc8] sm:$0xff] %vm3630, %v3981
      %4010 = vst.msk [vmem:[#allocation3 + $0xf0] sm:$0xff] %vm3630, %v3982
      %4011 = vst.msk [vmem:[#allocation3 + $0x118] sm:$0xff] %vm3630, %v3983
      %4012 = vst.msk [vmem:[#allocation3 + $0x140] sm:$0xff] %vm3630, %v3984
      %4013 = vst.msk [vmem:[#allocation3 + $0x168] sm:$0xff] %vm3630, %v3985
      %4014 = vst.msk [vmem:[#allocation3 + $0x190] sm:$0xff] %vm3630, %v3986
      %4015 = vst.msk [vmem:[#allocation3 + $0x1b8] sm:$0xff] %vm3630, %v3987
      %4016 = vst.msk [vmem:[#allocation3 + $0x1e0] sm:$0xff] %vm3630, %v3988
      %4017 = vst.msk [vmem:[#allocation3 + $0x208] sm:$0xff] %vm3630, %v3989
      %4018 = vst.msk [vmem:[#allocation3 + $0x230] sm:$0xff] %vm3630, %v3990
      %4019 = vst.msk [vmem:[#allocation3 + $0x258] sm:$0xff] %vm3630, %v3991
      %4020 = vst.msk [vmem:[#allocation3 + $0x280] sm:$0xff] %vm3630, %v3992
      %4021 = vst.msk [vmem:[#allocation3 + $0x2a8] sm:$0xff] %vm3630, %v3993
      %4022 = vst.msk [vmem:[#allocation3 + $0x2d0] sm:$0xff] %vm3630, %v3994
      %4023 = vst.msk [vmem:[#allocation3 + $0x2f8] sm:$0xff] %vm3630, %v3995
      %4024 = vst.msk [vmem:[#allocation3 + $0x320] sm:$0xff] %vm3630, %v3996
      %4025 = vst.msk [vmem:[#allocation3 + $0x348] sm:$0xff] %vm3630, %v3997
      %4026 = vst.msk [vmem:[#allocation3 + $0x370] sm:$0xff] %vm3630, %v3998
      %4027 = vst.msk [vmem:[#allocation3 + $0x398] sm:$0xff] %vm3630, %v3999
      %4028 = vst.msk [vmem:[#allocation3 + $0x3c0] sm:$0xff] %vm3630, %v4000
      %4029 = vst.msk [vmem:[#allocation3 + $0x3e8] sm:$0xff] %vm3630, %v4001
      %4030 = vst.msk [vmem:[#allocation3 + $0x410] sm:$0xff] %vm3630, %v4002
      %4031 = vst.msk [vmem:[#allocation3 + $0x438] sm:$0xff] %vm3630, %v4003
      %v4032 = vld [vmem:[#allocation2 + $0x90] sm:$0xff]
      %v4033 = vld [vmem:[#allocation2 + $0x98] sm:$0xff]
      %v4034 = vld [vmem:[#allocation2 + $0xa0] sm:$0xff]
      %v4035 = vld [vmem:[#allocation2 + $0xa8] sm:$0xff]
      %v4036 = vld [vmem:[#allocation2 + $0xb0] sm:$0xff]
      %v4037 = vld [vmem:[#allocation2 + $0xb8] sm:$0xff]
      %v4038 = vld [vmem:[#allocation2 + $0xc0] sm:$0xff]
      %v4039 = vld [vmem:[#allocation2 + $0x1b0] sm:$0xff]
      %v4040 = vld [vmem:[#allocation2 + $0x1b8] sm:$0xff]
      %v4041 = vld [vmem:[#allocation2 + $0x1c0] sm:$0xff]
      %v4042 = vld [vmem:[#allocation2 + $0x1c8] sm:$0xff]
      %v4043 = vld [vmem:[#allocation2 + $0x1d0] sm:$0xff]
      %v4044 = vld [vmem:[#allocation2 + $0x1d8] sm:$0xff]
      %v4045 = vld [vmem:[#allocation2 + $0x1e0] sm:$0xff]
      %v4046 = vld [vmem:[#allocation2 + $0x2d0] sm:$0xff]
      %v4047 = vld [vmem:[#allocation2 + $0x2d8] sm:$0xff]
      %v4048 = vld [vmem:[#allocation2 + $0x2e0] sm:$0xff]
      %v4049 = vld [vmem:[#allocation2 + $0x2e8] sm:$0xff]
      %v4050 = vld [vmem:[#allocation2 + $0x2f0] sm:$0xff]
      %v4051 = vld [vmem:[#allocation2 + $0x2f8] sm:$0xff]
      %v4052 = vld [vmem:[#allocation2 + $0x300] sm:$0xff]
      %v4053 = vld [vmem:[#allocation2 + $0x3f0] sm:$0xff]
      %v4054 = vld [vmem:[#allocation2 + $0x3f8] sm:$0xff]
      %v4055 = vld [vmem:[#allocation2 + $0x400] sm:$0xff]
      %v4056 = vld [vmem:[#allocation2 + $0x408] sm:$0xff]
      %v4057 = vld [vmem:[#allocation2 + $0x410] sm:$0xff]
      %v4058 = vld [vmem:[#allocation2 + $0x418] sm:$0xff]
      %v4059 = vld [vmem:[#allocation2 + $0x420] sm:$0xff]
      %v4060 = vld [vmem:[#allocation2 + $0x510] sm:$0xff]
      %v4061 = vld [vmem:[#allocation2 + $0x518] sm:$0xff]
      %v4062 = vld [vmem:[#allocation2 + $0x520] sm:$0xff]
      %v4063 = vld [vmem:[#allocation2 + $0x528] sm:$0xff]
      %v4064 = vld [vmem:[#allocation2 + $0x530] sm:$0xff]
      %v4065 = vld [vmem:[#allocation2 + $0x538] sm:$0xff]
      %v4066 = vld [vmem:[#allocation2 + $0x540] sm:$0xff]
      %v4067 = vld [vmem:[#allocation2 + $0x630] sm:$0xff]
      %v4068 = vld [vmem:[#allocation2 + $0x638] sm:$0xff]
      %v4069 = vld [vmem:[#allocation2 + $0x640] sm:$0xff]
      %v4070 = vld [vmem:[#allocation2 + $0x648] sm:$0xff]
      %v4071 = vld [vmem:[#allocation2 + $0x650] sm:$0xff]
      %v4072 = vld [vmem:[#allocation2 + $0x658] sm:$0xff]
      %v4073 = vld [vmem:[#allocation2 + $0x660] sm:$0xff]
      %v4074 = vld [vmem:[#allocation2 + $0x750] sm:$0xff]
      %v4075 = vld [vmem:[#allocation2 + $0x758] sm:$0xff]
      %v4076 = vld [vmem:[#allocation2 + $0x760] sm:$0xff]
      %v4077 = vld [vmem:[#allocation2 + $0x768] sm:$0xff]
      %v4078 = vld [vmem:[#allocation2 + $0x770] sm:$0xff]
      %v4079 = vld [vmem:[#allocation2 + $0x778] sm:$0xff]
      %v4080 = vld [vmem:[#allocation2 + $0x780] sm:$0xff]
      %v4081 = vld [vmem:[#allocation2 + $0x870] sm:$0xff]
      %v4082 = vld [vmem:[#allocation2 + $0x878] sm:$0xff]
      %v4083 = vld [vmem:[#allocation2 + $0x880] sm:$0xff]
      %v4084 = vld [vmem:[#allocation2 + $0x888] sm:$0xff]
      %v4085 = vld [vmem:[#allocation2 + $0x890] sm:$0xff]
      %v4086 = vld [vmem:[#allocation2 + $0x898] sm:$0xff]
      %v4087 = vld [vmem:[#allocation2 + $0x8a0] sm:$0xff]
      %v4088 = vpack.c.bf16 %v4033, %v4032
      %v4089 = vpack.c.bf16 %v4035, %v4034
      %v4090 = vpack.c.bf16 %v4037, %v4036
      %v4091 = vpack.c.bf16 %v4039, %v4038
      %v4092 = vpack.c.bf16 %v4041, %v4040
      %v4093 = vpack.c.bf16 %v4043, %v4042
      %v4094 = vpack.c.bf16 %v4045, %v4044
      %v4095 = vpack.c.bf16 %v4047, %v4046
      %v4096 = vpack.c.bf16 %v4049, %v4048
      %v4097 = vpack.c.bf16 %v4051, %v4050
      %v4098 = vpack.c.bf16 %v4053, %v4052
      %v4099 = vpack.c.bf16 %v4055, %v4054
      %v4100 = vpack.c.bf16 %v4057, %v4056
      %v4101 = vpack.c.bf16 %v4059, %v4058
      %v4102 = vpack.c.bf16 %v4061, %v4060
      %v4103 = vpack.c.bf16 %v4063, %v4062
      %v4104 = vpack.c.bf16 %v4065, %v4064
      %v4105 = vpack.c.bf16 %v4067, %v4066
      %v4106 = vpack.c.bf16 %v4069, %v4068
      %v4107 = vpack.c.bf16 %v4071, %v4070
      %v4108 = vpack.c.bf16 %v4073, %v4072
      %v4109 = vpack.c.bf16 %v4075, %v4074
      %v4110 = vpack.c.bf16 %v4077, %v4076
      %v4111 = vpack.c.bf16 %v4079, %v4078
      %v4112 = vpack.c.bf16 %v4081, %v4080
      %v4113 = vpack.c.bf16 %v4083, %v4082
      %v4114 = vpack.c.bf16 %v4085, %v4084
      %v4115 = vpack.c.bf16 %v4087, %v4086
      %4144 = vrot.lane.b32.xlu0 %v4088, 64
      %v4145 = vpop.permute.xlu0 %4144
      %4146 = vrot.lane.b32.xlu0 %v4089, 64
      %v4147 = vpop.permute.xlu0 %4146
      %4148 = vrot.lane.b32.xlu0 %v4090, 64
      %v4149 = vpop.permute.xlu0 %4148
      %4150 = vrot.lane.b32.xlu0 %v4091, 64
      %v4151 = vpop.permute.xlu0 %4150
      %4152 = vrot.lane.b32.xlu0 %v4092, 64
      %v4153 = vpop.permute.xlu0 %4152
      %4154 = vrot.lane.b32.xlu0 %v4093, 64
      %v4155 = vpop.permute.xlu0 %4154
      %4156 = vrot.lane.b32.xlu0 %v4094, 64
      %v4157 = vpop.permute.xlu0 %4156
      %4158 = vrot.lane.b32.xlu0 %v4095, 64
      %v4159 = vpop.permute.xlu0 %4158
      %4160 = vrot.lane.b32.xlu0 %v4096, 64
      %v4161 = vpop.permute.xlu0 %4160
      %4162 = vrot.lane.b32.xlu0 %v4097, 64
      %v4163 = vpop.permute.xlu0 %4162
      %4164 = vrot.lane.b32.xlu0 %v4098, 64
      %v4165 = vpop.permute.xlu0 %4164
      %4166 = vrot.lane.b32.xlu0 %v4099, 64
      %v4167 = vpop.permute.xlu0 %4166
      %4168 = vrot.lane.b32.xlu0 %v4100, 64
      %v4169 = vpop.permute.xlu0 %4168
      %4170 = vrot.lane.b32.xlu0 %v4101, 64
      %v4171 = vpop.permute.xlu0 %4170
      %4172 = vrot.lane.b32.xlu0 %v4102, 64
      %v4173 = vpop.permute.xlu0 %4172
      %4174 = vrot.lane.b32.xlu0 %v4103, 64
      %v4175 = vpop.permute.xlu0 %4174
      %4176 = vrot.lane.b32.xlu0 %v4104, 64
      %v4177 = vpop.permute.xlu0 %4176
      %4178 = vrot.lane.b32.xlu0 %v4105, 64
      %v4179 = vpop.permute.xlu0 %4178
      %4180 = vrot.lane.b32.xlu0 %v4106, 64
      %v4181 = vpop.permute.xlu0 %4180
      %4182 = vrot.lane.b32.xlu0 %v4107, 64
      %v4183 = vpop.permute.xlu0 %4182
      %4184 = vrot.lane.b32.xlu0 %v4108, 64
      %v4185 = vpop.permute.xlu0 %4184
      %4186 = vrot.lane.b32.xlu0 %v4109, 64
      %v4187 = vpop.permute.xlu0 %4186
      %4188 = vrot.lane.b32.xlu0 %v4110, 64
      %v4189 = vpop.permute.xlu0 %4188
      %4190 = vrot.lane.b32.xlu0 %v4111, 64
      %v4191 = vpop.permute.xlu0 %4190
      %4192 = vrot.lane.b32.xlu0 %v4112, 64
      %v4193 = vpop.permute.xlu0 %4192
      %4194 = vrot.lane.b32.xlu0 %v4113, 64
      %v4195 = vpop.permute.xlu0 %4194
      %4196 = vrot.lane.b32.xlu0 %v4114, 64
      %v4197 = vpop.permute.xlu0 %4196
      %4198 = vrot.lane.b32.xlu0 %v4115, 64
      %v4199 = vpop.permute.xlu0 %4198
      %vm4228 = vcmask 1048064
      %4229 = vst.msk [vmem:[#allocation3] sm:$0xff] %vm4228, %v4145
      %4230 = vst.msk [vmem:[#allocation3 + $0x28] sm:$0xff] %vm4228, %v4147
      %4231 = vst.msk [vmem:[#allocation3 + $0x50] sm:$0xff] %vm4228, %v4149
      %4232 = vst.msk [vmem:[#allocation3 + $0x78] sm:$0xff] %vm4228, %v4151
      %4233 = vst.msk [vmem:[#allocation3 + $0xa0] sm:$0xff] %vm4228, %v4153
      %4234 = vst.msk [vmem:[#allocation3 + $0xc8] sm:$0xff] %vm4228, %v4155
      %4235 = vst.msk [vmem:[#allocation3 + $0xf0] sm:$0xff] %vm4228, %v4157
      %4236 = vst.msk [vmem:[#allocation3 + $0x118] sm:$0xff] %vm4228, %v4159
      %4237 = vst.msk [vmem:[#allocation3 + $0x140] sm:$0xff] %vm4228, %v4161
      %4238 = vst.msk [vmem:[#allocation3 + $0x168] sm:$0xff] %vm4228, %v4163
      %4239 = vst.msk [vmem:[#allocation3 + $0x190] sm:$0xff] %vm4228, %v4165
      %4240 = vst.msk [vmem:[#allocation3 + $0x1b8] sm:$0xff] %vm4228, %v4167
      %4241 = vst.msk [vmem:[#allocation3 + $0x1e0] sm:$0xff] %vm4228, %v4169
      %4242 = vst.msk [vmem:[#allocation3 + $0x208] sm:$0xff] %vm4228, %v4171
      %4243 = vst.msk [vmem:[#allocation3 + $0x230] sm:$0xff] %vm4228, %v4173
      %4244 = vst.msk [vmem:[#allocation3 + $0x258] sm:$0xff] %vm4228, %v4175
      %4245 = vst.msk [vmem:[#allocation3 + $0x280] sm:$0xff] %vm4228, %v4177
      %4246 = vst.msk [vmem:[#allocation3 + $0x2a8] sm:$0xff] %vm4228, %v4179
      %4247 = vst.msk [vmem:[#allocation3 + $0x2d0] sm:$0xff] %vm4228, %v4181
      %4248 = vst.msk [vmem:[#allocation3 + $0x2f8] sm:$0xff] %vm4228, %v4183
      %4249 = vst.msk [vmem:[#allocation3 + $0x320] sm:$0xff] %vm4228, %v4185
      %4250 = vst.msk [vmem:[#allocation3 + $0x348] sm:$0xff] %vm4228, %v4187
      %4251 = vst.msk [vmem:[#allocation3 + $0x370] sm:$0xff] %vm4228, %v4189
      %4252 = vst.msk [vmem:[#allocation3 + $0x398] sm:$0xff] %vm4228, %v4191
      %4253 = vst.msk [vmem:[#allocation3 + $0x3c0] sm:$0xff] %vm4228, %v4193
      %4254 = vst.msk [vmem:[#allocation3 + $0x3e8] sm:$0xff] %vm4228, %v4195
      %4255 = vst.msk [vmem:[#allocation3 + $0x410] sm:$0xff] %vm4228, %v4197
      %4256 = vst.msk [vmem:[#allocation3 + $0x438] sm:$0xff] %vm4228, %v4199
      %v4257 = vld [vmem:[#allocation2 + $0xd9] sm:$0xff]
      %v4258 = vld [vmem:[#allocation2 + $0xe1] sm:$0xff]
      %v4259 = vld [vmem:[#allocation2 + $0xe9] sm:$0xff]
      %v4260 = vld [vmem:[#allocation2 + $0xf1] sm:$0xff]
      %v4261 = vld [vmem:[#allocation2 + $0xf9] sm:$0xff]
      %v4262 = vld [vmem:[#allocation2 + $0x101] sm:$0xff]
      %v4263 = vld [vmem:[#allocation2 + $0x109] sm:$0xff]
      %v4264 = vld [vmem:[#allocation2 + $0x1f9] sm:$0xff]
      %v4265 = vld [vmem:[#allocation2 + $0x201] sm:$0xff]
      %v4266 = vld [vmem:[#allocation2 + $0x209] sm:$0xff]
      %v4267 = vld [vmem:[#allocation2 + $0x211] sm:$0xff]
      %v4268 = vld [vmem:[#allocation2 + $0x219] sm:$0xff]
      %v4269 = vld [vmem:[#allocation2 + $0x221] sm:$0xff]
      %v4270 = vld [vmem:[#allocation2 + $0x229] sm:$0xff]
      %v4271 = vld [vmem:[#allocation2 + $0x319] sm:$0xff]
      %v4272 = vld [vmem:[#allocation2 + $0x321] sm:$0xff]
      %v4273 = vld [vmem:[#allocation2 + $0x329] sm:$0xff]
      %v4274 = vld [vmem:[#allocation2 + $0x331] sm:$0xff]
      %v4275 = vld [vmem:[#allocation2 + $0x339] sm:$0xff]
      %v4276 = vld [vmem:[#allocation2 + $0x341] sm:$0xff]
      %v4277 = vld [vmem:[#allocation2 + $0x349] sm:$0xff]
      %v4278 = vld [vmem:[#allocation2 + $0x439] sm:$0xff]
      %v4279 = vld [vmem:[#allocation2 + $0x441] sm:$0xff]
      %v4280 = vld [vmem:[#allocation2 + $0x449] sm:$0xff]
      %v4281 = vld [vmem:[#allocation2 + $0x451] sm:$0xff]
      %v4282 = vld [vmem:[#allocation2 + $0x459] sm:$0xff]
      %v4283 = vld [vmem:[#allocation2 + $0x461] sm:$0xff]
      %v4284 = vld [vmem:[#allocation2 + $0x469] sm:$0xff]
      %v4285 = vld [vmem:[#allocation2 + $0x559] sm:$0xff]
      %v4286 = vld [vmem:[#allocation2 + $0x561] sm:$0xff]
      %v4287 = vld [vmem:[#allocation2 + $0x569] sm:$0xff]
      %v4288 = vld [vmem:[#allocation2 + $0x571] sm:$0xff]
      %v4289 = vld [vmem:[#allocation2 + $0x579] sm:$0xff]
      %v4290 = vld [vmem:[#allocation2 + $0x581] sm:$0xff]
      %v4291 = vld [vmem:[#allocation2 + $0x589] sm:$0xff]
      %v4292 = vld [vmem:[#allocation2 + $0x679] sm:$0xff]
      %v4293 = vld [vmem:[#allocation2 + $0x681] sm:$0xff]
      %v4294 = vld [vmem:[#allocation2 + $0x689] sm:$0xff]
      %v4295 = vld [vmem:[#allocation2 + $0x691] sm:$0xff]
      %v4296 = vld [vmem:[#allocation2 + $0x699] sm:$0xff]
      %v4297 = vld [vmem:[#allocation2 + $0x6a1] sm:$0xff]
      %v4298 = vld [vmem:[#allocation2 + $0x6a9] sm:$0xff]
      %v4299 = vld [vmem:[#allocation2 + $0x799] sm:$0xff]
      %v4300 = vld [vmem:[#allocation2 + $0x7a1] sm:$0xff]
      %v4301 = vld [vmem:[#allocation2 + $0x7a9] sm:$0xff]
      %v4302 = vld [vmem:[#allocation2 + $0x7b1] sm:$0xff]
      %v4303 = vld [vmem:[#allocation2 + $0x7b9] sm:$0xff]
      %v4304 = vld [vmem:[#allocation2 + $0x7c1] sm:$0xff]
      %v4305 = vld [vmem:[#allocation2 + $0x7c9] sm:$0xff]
      %v4306 = vld [vmem:[#allocation2 + $0x8b9] sm:$0xff]
      %v4307 = vld [vmem:[#allocation2 + $0x8c1] sm:$0xff]
      %v4308 = vld [vmem:[#allocation2 + $0x8c9] sm:$0xff]
      %v4309 = vld [vmem:[#allocation2 + $0x8d1] sm:$0xff]
      %v4310 = vld [vmem:[#allocation2 + $0x8d9] sm:$0xff]
      %v4311 = vld [vmem:[#allocation2 + $0x8e1] sm:$0xff]
      %v4312 = vld [vmem:[#allocation2 + $0x8e9] sm:$0xff]
      %v4313 = vpack.c.bf16 %v4258, %v4257
      %v4314 = vpack.c.bf16 %v4260, %v4259
      %v4315 = vpack.c.bf16 %v4262, %v4261
      %v4316 = vpack.c.bf16 %v4264, %v4263
      %v4317 = vpack.c.bf16 %v4266, %v4265
      %v4318 = vpack.c.bf16 %v4268, %v4267
      %v4319 = vpack.c.bf16 %v4270, %v4269
      %v4320 = vpack.c.bf16 %v4272, %v4271
      %v4321 = vpack.c.bf16 %v4274, %v4273
      %v4322 = vpack.c.bf16 %v4276, %v4275
      %v4323 = vpack.c.bf16 %v4278, %v4277
      %v4324 = vpack.c.bf16 %v4280, %v4279
      %v4325 = vpack.c.bf16 %v4282, %v4281
      %v4326 = vpack.c.bf16 %v4284, %v4283
      %v4327 = vpack.c.bf16 %v4286, %v4285
      %v4328 = vpack.c.bf16 %v4288, %v4287
      %v4329 = vpack.c.bf16 %v4290, %v4289
      %v4330 = vpack.c.bf16 %v4292, %v4291
      %v4331 = vpack.c.bf16 %v4294, %v4293
      %v4332 = vpack.c.bf16 %v4296, %v4295
      %v4333 = vpack.c.bf16 %v4298, %v4297
      %v4334 = vpack.c.bf16 %v4300, %v4299
      %v4335 = vpack.c.bf16 %v4302, %v4301
      %v4336 = vpack.c.bf16 %v4304, %v4303
      %v4337 = vpack.c.bf16 %v4306, %v4305
      %v4338 = vpack.c.bf16 %v4308, %v4307
      %v4339 = vpack.c.bf16 %v4310, %v4309
      %v4340 = vpack.c.bf16 %v4312, %v4311
      %4341 = vst.msk [vmem:[#allocation3 + $0x8] sm:$0xff] %vm3630, %v4313
      %4342 = vst.msk [vmem:[#allocation3 + $0x30] sm:$0xff] %vm3630, %v4314
      %4343 = vst.msk [vmem:[#allocation3 + $0x58] sm:$0xff] %vm3630, %v4315
      %4344 = vst.msk [vmem:[#allocation3 + $0x80] sm:$0xff] %vm3630, %v4316
      %4345 = vst.msk [vmem:[#allocation3 + $0xa8] sm:$0xff] %vm3630, %v4317
      %4346 = vst.msk [vmem:[#allocation3 + $0xd0] sm:$0xff] %vm3630, %v4318
      %4347 = vst.msk [vmem:[#allocation3 + $0xf8] sm:$0xff] %vm3630, %v4319
      %4348 = vst.msk [vmem:[#allocation3 + $0x120] sm:$0xff] %vm3630, %v4320
      %4349 = vst.msk [vmem:[#allocation3 + $0x148] sm:$0xff] %vm3630, %v4321
      %4350 = vst.msk [vmem:[#allocation3 + $0x170] sm:$0xff] %vm3630, %v4322
      %4351 = vst.msk [vmem:[#allocation3 + $0x198] sm:$0xff] %vm3630, %v4323
      %4352 = vst.msk [vmem:[#allocation3 + $0x1c0] sm:$0xff] %vm3630, %v4324
      %4353 = vst.msk [vmem:[#allocation3 + $0x1e8] sm:$0xff] %vm3630, %v4325
      %4354 = vst.msk [vmem:[#allocation3 + $0x210] sm:$0xff] %vm3630, %v4326
      %4355 = vst.msk [vmem:[#allocation3 + $0x238] sm:$0xff] %vm3630, %v4327
      %4356 = vst.msk [vmem:[#allocation3 + $0x260] sm:$0xff] %vm3630, %v4328
      %4357 = vst.msk [vmem:[#allocation3 + $0x288] sm:$0xff] %vm3630, %v4329
      %4358 = vst.msk [vmem:[#allocation3 + $0x2b0] sm:$0xff] %vm3630, %v4330
      %4359 = vst.msk [vmem:[#allocation3 + $0x2d8] sm:$0xff] %vm3630, %v4331
      %4360 = vst.msk [vmem:[#allocation3 + $0x300] sm:$0xff] %vm3630, %v4332
      %4361 = vst.msk [vmem:[#allocation3 + $0x328] sm:$0xff] %vm3630, %v4333
      %4362 = vst.msk [vmem:[#allocation3 + $0x350] sm:$0xff] %vm3630, %v4334
      %4363 = vst.msk [vmem:[#allocation3 + $0x378] sm:$0xff] %vm3630, %v4335
      %4364 = vst.msk [vmem:[#allocation3 + $0x3a0] sm:$0xff] %vm3630, %v4336
      %4365 = vst.msk [vmem:[#allocation3 + $0x3c8] sm:$0xff] %vm3630, %v4337
      %4366 = vst.msk [vmem:[#allocation3 + $0x3f0] sm:$0xff] %vm3630, %v4338
      %4367 = vst.msk [vmem:[#allocation3 + $0x418] sm:$0xff] %vm3630, %v4339
      %4368 = vst.msk [vmem:[#allocation3 + $0x440] sm:$0xff] %vm3630, %v4340
      %v4369 = vld [vmem:[#allocation2 + $0x48] sm:$0xff]
      %v4370 = vld [vmem:[#allocation2 + $0x50] sm:$0xff]
      %v4371 = vld [vmem:[#allocation2 + $0x58] sm:$0xff]
      %v4372 = vld [vmem:[#allocation2 + $0x60] sm:$0xff]
      %v4373 = vld [vmem:[#allocation2 + $0x68] sm:$0xff]
      %v4374 = vld [vmem:[#allocation2 + $0x70] sm:$0xff]
      %v4375 = vld [vmem:[#allocation2 + $0x78] sm:$0xff]
      %v4376 = vld [vmem:[#allocation2 + $0x168] sm:$0xff]
      %v4377 = vld [vmem:[#allocation2 + $0x170] sm:$0xff]
      %v4378 = vld [vmem:[#allocation2 + $0x178] sm:$0xff]
      %v4379 = vld [vmem:[#allocation2 + $0x180] sm:$0xff]
      %v4380 = vld [vmem:[#allocation2 + $0x188] sm:$0xff]
      %v4381 = vld [vmem:[#allocation2 + $0x190] sm:$0xff]
      %v4382 = vld [vmem:[#allocation2 + $0x198] sm:$0xff]
      %v4383 = vld [vmem:[#allocation2 + $0x288] sm:$0xff]
      %v4384 = vld [vmem:[#allocation2 + $0x290] sm:$0xff]
      %v4385 = vld [vmem:[#allocation2 + $0x298] sm:$0xff]
      %v4386 = vld [vmem:[#allocation2 + $0x2a0] sm:$0xff]
      %v4387 = vld [vmem:[#allocation2 + $0x2a8] sm:$0xff]
      %v4388 = vld [vmem:[#allocation2 + $0x2b0] sm:$0xff]
      %v4389 = vld [vmem:[#allocation2 + $0x2b8] sm:$0xff]
      %v4390 = vld [vmem:[#allocation2 + $0x3a8] sm:$0xff]
      %v4391 = vld [vmem:[#allocation2 + $0x3b0] sm:$0xff]
      %v4392 = vld [vmem:[#allocation2 + $0x3b8] sm:$0xff]
      %v4393 = vld [vmem:[#allocation2 + $0x3c0] sm:$0xff]
      %v4394 = vld [vmem:[#allocation2 + $0x3c8] sm:$0xff]
      %v4395 = vld [vmem:[#allocation2 + $0x3d0] sm:$0xff]
      %v4396 = vld [vmem:[#allocation2 + $0x3d8] sm:$0xff]
      %v4397 = vld [vmem:[#allocation2 + $0x4c8] sm:$0xff]
      %v4398 = vld [vmem:[#allocation2 + $0x4d0] sm:$0xff]
      %v4399 = vld [vmem:[#allocation2 + $0x4d8] sm:$0xff]
      %v4400 = vld [vmem:[#allocation2 + $0x4e0] sm:$0xff]
      %v4401 = vld [vmem:[#allocation2 + $0x4e8] sm:$0xff]
      %v4402 = vld [vmem:[#allocation2 + $0x4f0] sm:$0xff]
      %v4403 = vld [vmem:[#allocation2 + $0x4f8] sm:$0xff]
      %v4404 = vld [vmem:[#allocation2 + $0x5e8] sm:$0xff]
      %v4405 = vld [vmem:[#allocation2 + $0x5f0] sm:$0xff]
      %v4406 = vld [vmem:[#allocation2 + $0x5f8] sm:$0xff]
      %v4407 = vld [vmem:[#allocation2 + $0x600] sm:$0xff]
      %v4408 = vld [vmem:[#allocation2 + $0x608] sm:$0xff]
      %v4409 = vld [vmem:[#allocation2 + $0x610] sm:$0xff]
      %v4410 = vld [vmem:[#allocation2 + $0x618] sm:$0xff]
      %v4411 = vld [vmem:[#allocation2 + $0x708] sm:$0xff]
      %v4412 = vld [vmem:[#allocation2 + $0x710] sm:$0xff]
      %v4413 = vld [vmem:[#allocation2 + $0x718] sm:$0xff]
      %v4414 = vld [vmem:[#allocation2 + $0x720] sm:$0xff]
      %v4415 = vld [vmem:[#allocation2 + $0x728] sm:$0xff]
      %v4416 = vld [vmem:[#allocation2 + $0x730] sm:$0xff]
      %v4417 = vld [vmem:[#allocation2 + $0x738] sm:$0xff]
      %v4418 = vld [vmem:[#allocation2 + $0x828] sm:$0xff]
      %v4419 = vld [vmem:[#allocation2 + $0x830] sm:$0xff]
      %v4420 = vld [vmem:[#allocation2 + $0x838] sm:$0xff]
      %v4421 = vld [vmem:[#allocation2 + $0x840] sm:$0xff]
      %v4422 = vld [vmem:[#allocation2 + $0x848] sm:$0xff]
      %v4423 = vld [vmem:[#allocation2 + $0x850] sm:$0xff]
      %v4424 = vld [vmem:[#allocation2 + $0x858] sm:$0xff]
      %v4425 = vpack.c.bf16 %v4370, %v4369
      %v4426 = vpack.c.bf16 %v4372, %v4371
      %v4427 = vpack.c.bf16 %v4374, %v4373
      %v4428 = vpack.c.bf16 %v4376, %v4375
      %v4429 = vpack.c.bf16 %v4378, %v4377
      %v4430 = vpack.c.bf16 %v4380, %v4379
      %v4431 = vpack.c.bf16 %v4382, %v4381
      %v4432 = vpack.c.bf16 %v4384, %v4383
      %v4433 = vpack.c.bf16 %v4386, %v4385
      %v4434 = vpack.c.bf16 %v4388, %v4387
      %v4435 = vpack.c.bf16 %v4390, %v4389
      %v4436 = vpack.c.bf16 %v4392, %v4391
      %v4437 = vpack.c.bf16 %v4394, %v4393
      %v4438 = vpack.c.bf16 %v4396, %v4395
      %v4439 = vpack.c.bf16 %v4398, %v4397
      %v4440 = vpack.c.bf16 %v4400, %v4399
      %v4441 = vpack.c.bf16 %v4402, %v4401
      %v4442 = vpack.c.bf16 %v4404, %v4403
      %v4443 = vpack.c.bf16 %v4406, %v4405
      %v4444 = vpack.c.bf16 %v4408, %v4407
      %v4445 = vpack.c.bf16 %v4410, %v4409
      %v4446 = vpack.c.bf16 %v4412, %v4411
      %v4447 = vpack.c.bf16 %v4414, %v4413
      %v4448 = vpack.c.bf16 %v4416, %v4415
      %v4449 = vpack.c.bf16 %v4418, %v4417
      %v4450 = vpack.c.bf16 %v4420, %v4419
      %v4451 = vpack.c.bf16 %v4422, %v4421
      %v4452 = vpack.c.bf16 %v4424, %v4423
      %4481 = vrot.lane.b32.xlu0 %v4425, 64
      %v4482 = vpop.permute.xlu0 %4481
      %4483 = vrot.lane.b32.xlu0 %v4426, 64
      %v4484 = vpop.permute.xlu0 %4483
      %4485 = vrot.lane.b32.xlu0 %v4427, 64
      %v4486 = vpop.permute.xlu0 %4485
      %4487 = vrot.lane.b32.xlu0 %v4428, 64
      %v4488 = vpop.permute.xlu0 %4487
      %4489 = vrot.lane.b32.xlu0 %v4429, 64
      %v4490 = vpop.permute.xlu0 %4489
      %4491 = vrot.lane.b32.xlu0 %v4430, 64
      %v4492 = vpop.permute.xlu0 %4491
      %4493 = vrot.lane.b32.xlu0 %v4431, 64
      %v4494 = vpop.permute.xlu0 %4493
      %4495 = vrot.lane.b32.xlu0 %v4432, 64
      %v4496 = vpop.permute.xlu0 %4495
      %4497 = vrot.lane.b32.xlu0 %v4433, 64
      %v4498 = vpop.permute.xlu0 %4497
      %4499 = vrot.lane.b32.xlu0 %v4434, 64
      %v4500 = vpop.permute.xlu0 %4499
      %4501 = vrot.lane.b32.xlu0 %v4435, 64
      %v4502 = vpop.permute.xlu0 %4501
      %4503 = vrot.lane.b32.xlu0 %v4436, 64
      %v4504 = vpop.permute.xlu0 %4503
      %4505 = vrot.lane.b32.xlu0 %v4437, 64
      %v4506 = vpop.permute.xlu0 %4505
      %4507 = vrot.lane.b32.xlu0 %v4438, 64
      %v4508 = vpop.permute.xlu0 %4507
      %4509 = vrot.lane.b32.xlu0 %v4439, 64
      %v4510 = vpop.permute.xlu0 %4509
      %4511 = vrot.lane.b32.xlu0 %v4440, 64
      %v4512 = vpop.permute.xlu0 %4511
      %4513 = vrot.lane.b32.xlu0 %v4441, 64
      %v4514 = vpop.permute.xlu0 %4513
      %4515 = vrot.lane.b32.xlu0 %v4442, 64
      %v4516 = vpop.permute.xlu0 %4515
      %4517 = vrot.lane.b32.xlu0 %v4443, 64
      %v4518 = vpop.permute.xlu0 %4517
      %4519 = vrot.lane.b32.xlu0 %v4444, 64
      %v4520 = vpop.permute.xlu0 %4519
      %4521 = vrot.lane.b32.xlu0 %v4445, 64
      %v4522 = vpop.permute.xlu0 %4521
      %4523 = vrot.lane.b32.xlu0 %v4446, 64
      %v4524 = vpop.permute.xlu0 %4523
      %4525 = vrot.lane.b32.xlu0 %v4447, 64
      %v4526 = vpop.permute.xlu0 %4525
      %4527 = vrot.lane.b32.xlu0 %v4448, 64
      %v4528 = vpop.permute.xlu0 %4527
      %4529 = vrot.lane.b32.xlu0 %v4449, 64
      %v4530 = vpop.permute.xlu0 %4529
      %4531 = vrot.lane.b32.xlu0 %v4450, 64
      %v4532 = vpop.permute.xlu0 %4531
      %4533 = vrot.lane.b32.xlu0 %v4451, 64
      %v4534 = vpop.permute.xlu0 %4533
      %4535 = vrot.lane.b32.xlu0 %v4452, 64
      %v4536 = vpop.permute.xlu0 %4535
      %4565 = vst.msk [vmem:[#allocation3 + $0x8] sm:$0xff] %vm4228, %v4482
      %4566 = vst.msk [vmem:[#allocation3 + $0x30] sm:$0xff] %vm4228, %v4484
      %4567 = vst.msk [vmem:[#allocation3 + $0x58] sm:$0xff] %vm4228, %v4486
      %4568 = vst.msk [vmem:[#allocation3 + $0x80] sm:$0xff] %vm4228, %v4488
      %4569 = vst.msk [vmem:[#allocation3 + $0xa8] sm:$0xff] %vm4228, %v4490
      %4570 = vst.msk [vmem:[#allocation3 + $0xd0] sm:$0xff] %vm4228, %v4492
      %4571 = vst.msk [vmem:[#allocation3 + $0xf8] sm:$0xff] %vm4228, %v4494
      %4572 = vst.msk [vmem:[#allocation3 + $0x120] sm:$0xff] %vm4228, %v4496
      %4573 = vst.msk [vmem:[#allocation3 + $0x148] sm:$0xff] %vm4228, %v4498
      %4574 = vst.msk [vmem:[#allocation3 + $0x170] sm:$0xff] %vm4228, %v4500
      %4575 = vst.msk [vmem:[#allocation3 + $0x198] sm:$0xff] %vm4228, %v4502
      %4576 = vst.msk [vmem:[#allocation3 + $0x1c0] sm:$0xff] %vm4228, %v4504
      %4577 = vst.msk [vmem:[#allocation3 + $0x1e8] sm:$0xff] %vm4228, %v4506
      %4578 = vst.msk [vmem:[#allocation3 + $0x210] sm:$0xff] %vm4228, %v4508
      %4579 = vst.msk [vmem:[#allocation3 + $0x238] sm:$0xff] %vm4228, %v4510
      %4580 = vst.msk [vmem:[#allocation3 + $0x260] sm:$0xff] %vm4228, %v4512
      %4581 = vst.msk [vmem:[#allocation3 + $0x288] sm:$0xff] %vm4228, %v4514
      %4582 = vst.msk [vmem:[#allocation3 + $0x2b0] sm:$0xff] %vm4228, %v4516
      %4583 = vst.msk [vmem:[#allocation3 + $0x2d8] sm:$0xff] %vm4228, %v4518
      %4584 = vst.msk [vmem:[#allocation3 + $0x300] sm:$0xff] %vm4228, %v4520
      %4585 = vst.msk [vmem:[#allocation3 + $0x328] sm:$0xff] %vm4228, %v4522
      %4586 = vst.msk [vmem:[#allocation3 + $0x350] sm:$0xff] %vm4228, %v4524
      %4587 = vst.msk [vmem:[#allocation3 + $0x378] sm:$0xff] %vm4228, %v4526
      %4588 = vst.msk [vmem:[#allocation3 + $0x3a0] sm:$0xff] %vm4228, %v4528
      %4589 = vst.msk [vmem:[#allocation3 + $0x3c8] sm:$0xff] %vm4228, %v4530
      %4590 = vst.msk [vmem:[#allocation3 + $0x3f0] sm:$0xff] %vm4228, %v4532
      %4591 = vst.msk [vmem:[#allocation3 + $0x418] sm:$0xff] %vm4228, %v4534
      %4592 = vst.msk [vmem:[#allocation3 + $0x440] sm:$0xff] %vm4228, %v4536
      %v4593 = vld [vmem:[#allocation2] sm:$0xff]
      %v4594 = vld [vmem:[#allocation2 + $0x8] sm:$0xff]
      %v4595 = vld [vmem:[#allocation2 + $0x10] sm:$0xff]
      %v4596 = vld [vmem:[#allocation2 + $0x18] sm:$0xff]
      %v4597 = vld [vmem:[#allocation2 + $0x20] sm:$0xff]
      %v4598 = vld [vmem:[#allocation2 + $0x28] sm:$0xff]
      %v4599 = vld [vmem:[#allocation2 + $0x30] sm:$0xff]
      %v4600 = vld [vmem:[#allocation2 + $0x120] sm:$0xff]
      %v4601 = vld [vmem:[#allocation2 + $0x128] sm:$0xff]
      %v4602 = vld [vmem:[#allocation2 + $0x130] sm:$0xff]
      %v4603 = vld [vmem:[#allocation2 + $0x138] sm:$0xff]
      %v4604 = vld [vmem:[#allocation2 + $0x140] sm:$0xff]
      %v4605 = vld [vmem:[#allocation2 + $0x148] sm:$0xff]
      %v4606 = vld [vmem:[#allocation2 + $0x150] sm:$0xff]
      %v4607 = vld [vmem:[#allocation2 + $0x240] sm:$0xff]
      %v4608 = vld [vmem:[#allocation2 + $0x248] sm:$0xff]
      %v4609 = vld [vmem:[#allocation2 + $0x250] sm:$0xff]
      %v4610 = vld [vmem:[#allocation2 + $0x258] sm:$0xff]
      %v4611 = vld [vmem:[#allocation2 + $0x260] sm:$0xff]
      %v4612 = vld [vmem:[#allocation2 + $0x268] sm:$0xff]
      %v4613 = vld [vmem:[#allocation2 + $0x270] sm:$0xff]
      %v4614 = vld [vmem:[#allocation2 + $0x360] sm:$0xff]
      %v4615 = vld [vmem:[#allocation2 + $0x368] sm:$0xff]
      %v4616 = vld [vmem:[#allocation2 + $0x370] sm:$0xff]
      %v4617 = vld [vmem:[#allocation2 + $0x378] sm:$0xff]
      %v4618 = vld [vmem:[#allocation2 + $0x380] sm:$0xff]
      %v4619 = vld [vmem:[#allocation2 + $0x388] sm:$0xff]
      %v4620 = vld [vmem:[#allocation2 + $0x390] sm:$0xff]
      %v4621 = vld [vmem:[#allocation2 + $0x480] sm:$0xff]
      %v4622 = vld [vmem:[#allocation2 + $0x488] sm:$0xff]
      %v4623 = vld [vmem:[#allocation2 + $0x490] sm:$0xff]
      %v4624 = vld [vmem:[#allocation2 + $0x498] sm:$0xff]
      %v4625 = vld [vmem:[#allocation2 + $0x4a0] sm:$0xff]
      %v4626 = vld [vmem:[#allocation2 + $0x4a8] sm:$0xff]
      %v4627 = vld [vmem:[#allocation2 + $0x4b0] sm:$0xff]
      %v4628 = vld [vmem:[#allocation2 + $0x5a0] sm:$0xff]
      %v4629 = vld [vmem:[#allocation2 + $0x5a8] sm:$0xff]
      %v4630 = vld [vmem:[#allocation2 + $0x5b0] sm:$0xff]
      %v4631 = vld [vmem:[#allocation2 + $0x5b8] sm:$0xff]
      %v4632 = vld [vmem:[#allocation2 + $0x5c0] sm:$0xff]
      %v4633 = vld [vmem:[#allocation2 + $0x5c8] sm:$0xff]
      %v4634 = vld [vmem:[#allocation2 + $0x5d0] sm:$0xff]
      %v4635 = vld [vmem:[#allocation2 + $0x6c0] sm:$0xff]
      %v4636 = vld [vmem:[#allocation2 + $0x6c8] sm:$0xff]
      %v4637 = vld [vmem:[#allocation2 + $0x6d0] sm:$0xff]
      %v4638 = vld [vmem:[#allocation2 + $0x6d8] sm:$0xff]
      %v4639 = vld [vmem:[#allocation2 + $0x6e0] sm:$0xff]
      %v4640 = vld [vmem:[#allocation2 + $0x6e8] sm:$0xff]
      %v4641 = vld [vmem:[#allocation2 + $0x6f0] sm:$0xff]
      %v4642 = vld [vmem:[#allocation2 + $0x7e0] sm:$0xff]
      %v4643 = vld [vmem:[#allocation2 + $0x7e8] sm:$0xff]
      %v4644 = vld [vmem:[#allocation2 + $0x7f0] sm:$0xff]
      %v4645 = vld [vmem:[#allocation2 + $0x7f8] sm:$0xff]
      %v4646 = vld [vmem:[#allocation2 + $0x800] sm:$0xff]
      %v4647 = vld [vmem:[#allocation2 + $0x808] sm:$0xff]
      %v4648 = vld [vmem:[#allocation2 + $0x810] sm:$0xff]
      %v4649 = vpack.c.bf16 %v4594, %v4593
      %v4650 = vpack.c.bf16 %v4596, %v4595
      %v4651 = vpack.c.bf16 %v4598, %v4597
      %v4652 = vpack.c.bf16 %v4600, %v4599
      %v4653 = vpack.c.bf16 %v4602, %v4601
      %v4654 = vpack.c.bf16 %v4604, %v4603
      %v4655 = vpack.c.bf16 %v4606, %v4605
      %v4656 = vpack.c.bf16 %v4608, %v4607
      %v4657 = vpack.c.bf16 %v4610, %v4609
      %v4658 = vpack.c.bf16 %v4612, %v4611
      %v4659 = vpack.c.bf16 %v4614, %v4613
      %v4660 = vpack.c.bf16 %v4616, %v4615
      %v4661 = vpack.c.bf16 %v4618, %v4617
      %v4662 = vpack.c.bf16 %v4620, %v4619
      %v4663 = vpack.c.bf16 %v4622, %v4621
      %v4664 = vpack.c.bf16 %v4624, %v4623
      %v4665 = vpack.c.bf16 %v4626, %v4625
      %v4666 = vpack.c.bf16 %v4628, %v4627
      %v4667 = vpack.c.bf16 %v4630, %v4629
      %v4668 = vpack.c.bf16 %v4632, %v4631
      %v4669 = vpack.c.bf16 %v4634, %v4633
      %v4670 = vpack.c.bf16 %v4636, %v4635
      %v4671 = vpack.c.bf16 %v4638, %v4637
      %v4672 = vpack.c.bf16 %v4640, %v4639
      %v4673 = vpack.c.bf16 %v4642, %v4641
      %v4674 = vpack.c.bf16 %v4644, %v4643
      %v4675 = vpack.c.bf16 %v4646, %v4645
      %v4676 = vpack.c.bf16 %v4648, %v4647
      %4677 = vst.msk [vmem:[#allocation3 + $0x10] sm:$0xff] %vm3630, %v4649
      %4678 = vst.msk [vmem:[#allocation3 + $0x38] sm:$0xff] %vm3630, %v4650
      %4679 = vst.msk [vmem:[#allocation3 + $0x60] sm:$0xff] %vm3630, %v4651
      %4680 = vst.msk [vmem:[#allocation3 + $0x88] sm:$0xff] %vm3630, %v4652
      %4681 = vst.msk [vmem:[#allocation3 + $0xb0] sm:$0xff] %vm3630, %v4653
      %4682 = vst.msk [vmem:[#allocation3 + $0xd8] sm:$0xff] %vm3630, %v4654
      %4683 = vst.msk [vmem:[#allocation3 + $0x100] sm:$0xff] %vm3630, %v4655
      %4684 = vst.msk [vmem:[#allocation3 + $0x128] sm:$0xff] %vm3630, %v4656
      %4685 = vst.msk [vmem:[#allocation3 + $0x150] sm:$0xff] %vm3630, %v4657
      %4686 = vst.msk [vmem:[#allocation3 + $0x178] sm:$0xff] %vm3630, %v4658
      %4687 = vst.msk [vmem:[#allocation3 + $0x1a0] sm:$0xff] %vm3630, %v4659
      %4688 = vst.msk [vmem:[#allocation3 + $0x1c8] sm:$0xff] %vm3630, %v4660
      %4689 = vst.msk [vmem:[#allocation3 + $0x1f0] sm:$0xff] %vm3630, %v4661
      %4690 = vst.msk [vmem:[#allocation3 + $0x218] sm:$0xff] %vm3630, %v4662
      %4691 = vst.msk [vmem:[#allocation3 + $0x240] sm:$0xff] %vm3630, %v4663
      %4692 = vst.msk [vmem:[#allocation3 + $0x268] sm:$0xff] %vm3630, %v4664
      %4693 = vst.msk [vmem:[#allocation3 + $0x290] sm:$0xff] %vm3630, %v4665
      %4694 = vst.msk [vmem:[#allocation3 + $0x2b8] sm:$0xff] %vm3630, %v4666
      %4695 = vst.msk [vmem:[#allocation3 + $0x2e0] sm:$0xff] %vm3630, %v4667
      %4696 = vst.msk [vmem:[#allocation3 + $0x308] sm:$0xff] %vm3630, %v4668
      %4697 = vst.msk [vmem:[#allocation3 + $0x330] sm:$0xff] %vm3630, %v4669
      %4698 = vst.msk [vmem:[#allocation3 + $0x358] sm:$0xff] %vm3630, %v4670
      %4699 = vst.msk [vmem:[#allocation3 + $0x380] sm:$0xff] %vm3630, %v4671
      %4700 = vst.msk [vmem:[#allocation3 + $0x3a8] sm:$0xff] %vm3630, %v4672
      %4701 = vst.msk [vmem:[#allocation3 + $0x3d0] sm:$0xff] %vm3630, %v4673
      %4702 = vst.msk [vmem:[#allocation3 + $0x3f8] sm:$0xff] %vm3630, %v4674
      %4703 = vst.msk [vmem:[#allocation3 + $0x420] sm:$0xff] %vm3630, %v4675
      %4704 = vst.msk [vmem:[#allocation3 + $0x448] sm:$0xff] %vm3630, %v4676
      %v4705 = vld [vmem:[#allocation2 + $0x49] sm:$0xff]
      %v4706 = vld [vmem:[#allocation2 + $0x51] sm:$0xff]
      %v4707 = vld [vmem:[#allocation2 + $0x59] sm:$0xff]
      %v4708 = vld [vmem:[#allocation2 + $0x61] sm:$0xff]
      %v4709 = vld [vmem:[#allocation2 + $0x69] sm:$0xff]
      %v4710 = vld [vmem:[#allocation2 + $0x71] sm:$0xff]
      %v4711 = vld [vmem:[#allocation2 + $0x79] sm:$0xff]
      %v4712 = vld [vmem:[#allocation2 + $0x169] sm:$0xff]
      %v4713 = vld [vmem:[#allocation2 + $0x171] sm:$0xff]
      %v4714 = vld [vmem:[#allocation2 + $0x179] sm:$0xff]
      %v4715 = vld [vmem:[#allocation2 + $0x181] sm:$0xff]
      %v4716 = vld [vmem:[#allocation2 + $0x189] sm:$0xff]
      %v4717 = vld [vmem:[#allocation2 + $0x191] sm:$0xff]
      %v4718 = vld [vmem:[#allocation2 + $0x199] sm:$0xff]
      %v4719 = vld [vmem:[#allocation2 + $0x289] sm:$0xff]
      %v4720 = vld [vmem:[#allocation2 + $0x291] sm:$0xff]
      %v4721 = vld [vmem:[#allocation2 + $0x299] sm:$0xff]
      %v4722 = vld [vmem:[#allocation2 + $0x2a1] sm:$0xff]
      %v4723 = vld [vmem:[#allocation2 + $0x2a9] sm:$0xff]
      %v4724 = vld [vmem:[#allocation2 + $0x2b1] sm:$0xff]
      %v4725 = vld [vmem:[#allocation2 + $0x2b9] sm:$0xff]
      %v4726 = vld [vmem:[#allocation2 + $0x3a9] sm:$0xff]
      %v4727 = vld [vmem:[#allocation2 + $0x3b1] sm:$0xff]
      %v4728 = vld [vmem:[#allocation2 + $0x3b9] sm:$0xff]
      %v4729 = vld [vmem:[#allocation2 + $0x3c1] sm:$0xff]
      %v4730 = vld [vmem:[#allocation2 + $0x3c9] sm:$0xff]
      %v4731 = vld [vmem:[#allocation2 + $0x3d1] sm:$0xff]
      %v4732 = vld [vmem:[#allocation2 + $0x3d9] sm:$0xff]
      %v4733 = vld [vmem:[#allocation2 + $0x4c9] sm:$0xff]
      %v4734 = vld [vmem:[#allocation2 + $0x4d1] sm:$0xff]
      %v4735 = vld [vmem:[#allocation2 + $0x4d9] sm:$0xff]
      %v4736 = vld [vmem:[#allocation2 + $0x4e1] sm:$0xff]
      %v4737 = vld [vmem:[#allocation2 + $0x4e9] sm:$0xff]
      %v4738 = vld [vmem:[#allocation2 + $0x4f1] sm:$0xff]
      %v4739 = vld [vmem:[#allocation2 + $0x4f9] sm:$0xff]
      %v4740 = vld [vmem:[#allocation2 + $0x5e9] sm:$0xff]
      %v4741 = vld [vmem:[#allocation2 + $0x5f1] sm:$0xff]
      %v4742 = vld [vmem:[#allocation2 + $0x5f9] sm:$0xff]
      %v4743 = vld [vmem:[#allocation2 + $0x601] sm:$0xff]
      %v4744 = vld [vmem:[#allocation2 + $0x609] sm:$0xff]
      %v4745 = vld [vmem:[#allocation2 + $0x611] sm:$0xff]
      %v4746 = vld [vmem:[#allocation2 + $0x619] sm:$0xff]
      %v4747 = vld [vmem:[#allocation2 + $0x709] sm:$0xff]
      %v4748 = vld [vmem:[#allocation2 + $0x711] sm:$0xff]
      %v4749 = vld [vmem:[#allocation2 + $0x719] sm:$0xff]
      %v4750 = vld [vmem:[#allocation2 + $0x721] sm:$0xff]
      %v4751 = vld [vmem:[#allocation2 + $0x729] sm:$0xff]
      %v4752 = vld [vmem:[#allocation2 + $0x731] sm:$0xff]
      %v4753 = vld [vmem:[#allocation2 + $0x739] sm:$0xff]
      %v4754 = vld [vmem:[#allocation2 + $0x829] sm:$0xff]
      %v4755 = vld [vmem:[#allocation2 + $0x831] sm:$0xff]
      %v4756 = vld [vmem:[#allocation2 + $0x839] sm:$0xff]
      %v4757 = vld [vmem:[#allocation2 + $0x841] sm:$0xff]
      %v4758 = vld [vmem:[#allocation2 + $0x849] sm:$0xff]
      %v4759 = vld [vmem:[#allocation2 + $0x851] sm:$0xff]
      %v4760 = vld [vmem:[#allocation2 + $0x859] sm:$0xff]
      %v4761 = vpack.c.bf16 %v4706, %v4705
      %v4762 = vpack.c.bf16 %v4708, %v4707
      %v4763 = vpack.c.bf16 %v4710, %v4709
      %v4764 = vpack.c.bf16 %v4712, %v4711
      %v4765 = vpack.c.bf16 %v4714, %v4713
      %v4766 = vpack.c.bf16 %v4716, %v4715
      %v4767 = vpack.c.bf16 %v4718, %v4717
      %v4768 = vpack.c.bf16 %v4720, %v4719
      %v4769 = vpack.c.bf16 %v4722, %v4721
      %v4770 = vpack.c.bf16 %v4724, %v4723
      %v4771 = vpack.c.bf16 %v4726, %v4725
      %v4772 = vpack.c.bf16 %v4728, %v4727
      %v4773 = vpack.c.bf16 %v4730, %v4729
      %v4774 = vpack.c.bf16 %v4732, %v4731
      %v4775 = vpack.c.bf16 %v4734, %v4733
      %v4776 = vpack.c.bf16 %v4736, %v4735
      %v4777 = vpack.c.bf16 %v4738, %v4737
      %v4778 = vpack.c.bf16 %v4740, %v4739
      %v4779 = vpack.c.bf16 %v4742, %v4741
      %v4780 = vpack.c.bf16 %v4744, %v4743
      %v4781 = vpack.c.bf16 %v4746, %v4745
      %v4782 = vpack.c.bf16 %v4748, %v4747
      %v4783 = vpack.c.bf16 %v4750, %v4749
      %v4784 = vpack.c.bf16 %v4752, %v4751
      %v4785 = vpack.c.bf16 %v4754, %v4753
      %v4786 = vpack.c.bf16 %v4756, %v4755
      %v4787 = vpack.c.bf16 %v4758, %v4757
      %v4788 = vpack.c.bf16 %v4760, %v4759
      %4817 = vrot.lane.b32.xlu0 %v4761, 64
      %v4818 = vpop.permute.xlu0 %4817
      %4819 = vrot.lane.b32.xlu0 %v4762, 64
      %v4820 = vpop.permute.xlu0 %4819
      %4821 = vrot.lane.b32.xlu0 %v4763, 64
      %v4822 = vpop.permute.xlu0 %4821
      %4823 = vrot.lane.b32.xlu0 %v4764, 64
      %v4824 = vpop.permute.xlu0 %4823
      %4825 = vrot.lane.b32.xlu0 %v4765, 64
      %v4826 = vpop.permute.xlu0 %4825
      %4827 = vrot.lane.b32.xlu0 %v4766, 64
      %v4828 = vpop.permute.xlu0 %4827
      %4829 = vrot.lane.b32.xlu0 %v4767, 64
      %v4830 = vpop.permute.xlu0 %4829
      %4831 = vrot.lane.b32.xlu0 %v4768, 64
      %v4832 = vpop.permute.xlu0 %4831
      %4833 = vrot.lane.b32.xlu0 %v4769, 64
      %v4834 = vpop.permute.xlu0 %4833
      %4835 = vrot.lane.b32.xlu0 %v4770, 64
      %v4836 = vpop.permute.xlu0 %4835
      %4837 = vrot.lane.b32.xlu0 %v4771, 64
      %v4838 = vpop.permute.xlu0 %4837
      %4839 = vrot.lane.b32.xlu0 %v4772, 64
      %v4840 = vpop.permute.xlu0 %4839
      %4841 = vrot.lane.b32.xlu0 %v4773, 64
      %v4842 = vpop.permute.xlu0 %4841
      %4843 = vrot.lane.b32.xlu0 %v4774, 64
      %v4844 = vpop.permute.xlu0 %4843
      %4845 = vrot.lane.b32.xlu0 %v4775, 64
      %v4846 = vpop.permute.xlu0 %4845
      %4847 = vrot.lane.b32.xlu0 %v4776, 64
      %v4848 = vpop.permute.xlu0 %4847
      %4849 = vrot.lane.b32.xlu0 %v4777, 64
      %v4850 = vpop.permute.xlu0 %4849
      %4851 = vrot.lane.b32.xlu0 %v4778, 64
      %v4852 = vpop.permute.xlu0 %4851
      %4853 = vrot.lane.b32.xlu0 %v4779, 64
      %v4854 = vpop.permute.xlu0 %4853
      %4855 = vrot.lane.b32.xlu0 %v4780, 64
      %v4856 = vpop.permute.xlu0 %4855
      %4857 = vrot.lane.b32.xlu0 %v4781, 64
      %v4858 = vpop.permute.xlu0 %4857
      %4859 = vrot.lane.b32.xlu0 %v4782, 64
      %v4860 = vpop.permute.xlu0 %4859
      %4861 = vrot.lane.b32.xlu0 %v4783, 64
      %v4862 = vpop.permute.xlu0 %4861
      %4863 = vrot.lane.b32.xlu0 %v4784, 64
      %v4864 = vpop.permute.xlu0 %4863
      %4865 = vrot.lane.b32.xlu0 %v4785, 64
      %v4866 = vpop.permute.xlu0 %4865
      %4867 = vrot.lane.b32.xlu0 %v4786, 64
      %v4868 = vpop.permute.xlu0 %4867
      %4869 = vrot.lane.b32.xlu0 %v4787, 64
      %v4870 = vpop.permute.xlu0 %4869
      %4871 = vrot.lane.b32.xlu0 %v4788, 64
      %v4872 = vpop.permute.xlu0 %4871
      %4901 = vst.msk [vmem:[#allocation3 + $0x10] sm:$0xff] %vm4228, %v4818
      %4902 = vst.msk [vmem:[#allocation3 + $0x38] sm:$0xff] %vm4228, %v4820
      %4903 = vst.msk [vmem:[#allocation3 + $0x60] sm:$0xff] %vm4228, %v4822
      %4904 = vst.msk [vmem:[#allocation3 + $0x88] sm:$0xff] %vm4228, %v4824
      %4905 = vst.msk [vmem:[#allocation3 + $0xb0] sm:$0xff] %vm4228, %v4826
      %4906 = vst.msk [vmem:[#allocation3 + $0xd8] sm:$0xff] %vm4228, %v4828
      %4907 = vst.msk [vmem:[#allocation3 + $0x100] sm:$0xff] %vm4228, %v4830
      %4908 = vst.msk [vmem:[#allocation3 + $0x128] sm:$0xff] %vm4228, %v4832
      %4909 = vst.msk [vmem:[#allocation3 + $0x150] sm:$0xff] %vm4228, %v4834
      %4910 = vst.msk [vmem:[#allocation3 + $0x178] sm:$0xff] %vm4228, %v4836
      %4911 = vst.msk [vmem:[#allocation3 + $0x1a0] sm:$0xff] %vm4228, %v4838
      %4912 = vst.msk [vmem:[#allocation3 + $0x1c8] sm:$0xff] %vm4228, %v4840
      %4913 = vst.msk [vmem:[#allocation3 + $0x1f0] sm:$0xff] %vm4228, %v4842
      %4914 = vst.msk [vmem:[#allocation3 + $0x218] sm:$0xff] %vm4228, %v4844
      %4915 = vst.msk [vmem:[#allocation3 + $0x240] sm:$0xff] %vm4228, %v4846
      %4916 = vst.msk [vmem:[#allocation3 + $0x268] sm:$0xff] %vm4228, %v4848
      %4917 = vst.msk [vmem:[#allocation3 + $0x290] sm:$0xff] %vm4228, %v4850
      %4918 = vst.msk [vmem:[#allocation3 + $0x2b8] sm:$0xff] %vm4228, %v4852
      %4919 = vst.msk [vmem:[#allocation3 + $0x2e0] sm:$0xff] %vm4228, %v4854
      %4920 = vst.msk [vmem:[#allocation3 + $0x308] sm:$0xff] %vm4228, %v4856
      %4921 = vst.msk [vmem:[#allocation3 + $0x330] sm:$0xff] %vm4228, %v4858
      %4922 = vst.msk [vmem:[#allocation3 + $0x358] sm:$0xff] %vm4228, %v4860
      %4923 = vst.msk [vmem:[#allocation3 + $0x380] sm:$0xff] %vm4228, %v4862
      %4924 = vst.msk [vmem:[#allocation3 + $0x3a8] sm:$0xff] %vm4228, %v4864
      %4925 = vst.msk [vmem:[#allocation3 + $0x3d0] sm:$0xff] %vm4228, %v4866
      %4926 = vst.msk [vmem:[#allocation3 + $0x3f8] sm:$0xff] %vm4228, %v4868
      %4927 = vst.msk [vmem:[#allocation3 + $0x420] sm:$0xff] %vm4228, %v4870
      %4928 = vst.msk [vmem:[#allocation3 + $0x448] sm:$0xff] %vm4228, %v4872
      %v4929 = vld [vmem:[#allocation2 + $0xe0] sm:$0xff]
      %v4930 = vld [vmem:[#allocation2 + $0xe8] sm:$0xff]
      %v4931 = vld [vmem:[#allocation2 + $0xf0] sm:$0xff]
      %v4932 = vld [vmem:[#allocation2 + $0xf8] sm:$0xff]
      %v4933 = vld [vmem:[#allocation2 + $0x100] sm:$0xff]
      %v4934 = vld [vmem:[#allocation2 + $0x108] sm:$0xff]
      %v4935 = vld [vmem:[#allocation2 + $0x110] sm:$0xff]
      %v4936 = vld [vmem:[#allocation2 + $0x200] sm:$0xff]
      %v4937 = vld [vmem:[#allocation2 + $0x208] sm:$0xff]
      %v4938 = vld [vmem:[#allocation2 + $0x210] sm:$0xff]
      %v4939 = vld [vmem:[#allocation2 + $0x218] sm:$0xff]
      %v4940 = vld [vmem:[#allocation2 + $0x220] sm:$0xff]
      %v4941 = vld [vmem:[#allocation2 + $0x228] sm:$0xff]
      %v4942 = vld [vmem:[#allocation2 + $0x230] sm:$0xff]
      %v4943 = vld [vmem:[#allocation2 + $0x320] sm:$0xff]
      %v4944 = vld [vmem:[#allocation2 + $0x328] sm:$0xff]
      %v4945 = vld [vmem:[#allocation2 + $0x330] sm:$0xff]
      %v4946 = vld [vmem:[#allocation2 + $0x338] sm:$0xff]
      %v4947 = vld [vmem:[#allocation2 + $0x340] sm:$0xff]
      %v4948 = vld [vmem:[#allocation2 + $0x348] sm:$0xff]
      %v4949 = vld [vmem:[#allocation2 + $0x350] sm:$0xff]
      %v4950 = vld [vmem:[#allocation2 + $0x440] sm:$0xff]
      %v4951 = vld [vmem:[#allocation2 + $0x448] sm:$0xff]
      %v4952 = vld [vmem:[#allocation2 + $0x450] sm:$0xff]
      %v4953 = vld [vmem:[#allocation2 + $0x458] sm:$0xff]
      %v4954 = vld [vmem:[#allocation2 + $0x460] sm:$0xff]
      %v4955 = vld [vmem:[#allocation2 + $0x468] sm:$0xff]
      %v4956 = vld [vmem:[#allocation2 + $0x470] sm:$0xff]
      %v4957 = vld [vmem:[#allocation2 + $0x560] sm:$0xff]
      %v4958 = vld [vmem:[#allocation2 + $0x568] sm:$0xff]
      %v4959 = vld [vmem:[#allocation2 + $0x570] sm:$0xff]
      %v4960 = vld [vmem:[#allocation2 + $0x578] sm:$0xff]
      %v4961 = vld [vmem:[#allocation2 + $0x580] sm:$0xff]
      %v4962 = vld [vmem:[#allocation2 + $0x588] sm:$0xff]
      %v4963 = vld [vmem:[#allocation2 + $0x590] sm:$0xff]
      %v4964 = vld [vmem:[#allocation2 + $0x680] sm:$0xff]
      %v4965 = vld [vmem:[#allocation2 + $0x688] sm:$0xff]
      %v4966 = vld [vmem:[#allocation2 + $0x690] sm:$0xff]
      %v4967 = vld [vmem:[#allocation2 + $0x698] sm:$0xff]
      %v4968 = vld [vmem:[#allocation2 + $0x6a0] sm:$0xff]
      %v4969 = vld [vmem:[#allocation2 + $0x6a8] sm:$0xff]
      %v4970 = vld [vmem:[#allocation2 + $0x6b0] sm:$0xff]
      %v4971 = vld [vmem:[#allocation2 + $0x7a0] sm:$0xff]
      %v4972 = vld [vmem:[#allocation2 + $0x7a8] sm:$0xff]
      %v4973 = vld [vmem:[#allocation2 + $0x7b0] sm:$0xff]
      %v4974 = vld [vmem:[#allocation2 + $0x7b8] sm:$0xff]
      %v4975 = vld [vmem:[#allocation2 + $0x7c0] sm:$0xff]
      %v4976 = vld [vmem:[#allocation2 + $0x7c8] sm:$0xff]
      %v4977 = vld [vmem:[#allocation2 + $0x7d0] sm:$0xff]
      %v4978 = vld [vmem:[#allocation2 + $0x8c0] sm:$0xff]
      %v4979 = vld [vmem:[#allocation2 + $0x8c8] sm:$0xff]
      %v4980 = vld [vmem:[#allocation2 + $0x8d0] sm:$0xff]
      %v4981 = vld [vmem:[#allocation2 + $0x8d8] sm:$0xff]
      %v4982 = vld [vmem:[#allocation2 + $0x8e0] sm:$0xff]
      %v4983 = vld [vmem:[#allocation2 + $0x8e8] sm:$0xff]
      %v4984 = vld [vmem:[#allocation2 + $0x8f0] sm:$0xff]
      %v4985 = vpack.c.bf16 %v4930, %v4929
      %v4986 = vpack.c.bf16 %v4932, %v4931
      %v4987 = vpack.c.bf16 %v4934, %v4933
      %v4988 = vpack.c.bf16 %v4936, %v4935
      %v4989 = vpack.c.bf16 %v4938, %v4937
      %v4990 = vpack.c.bf16 %v4940, %v4939
      %v4991 = vpack.c.bf16 %v4942, %v4941
      %v4992 = vpack.c.bf16 %v4944, %v4943
      %v4993 = vpack.c.bf16 %v4946, %v4945
      %v4994 = vpack.c.bf16 %v4948, %v4947
      %v4995 = vpack.c.bf16 %v4950, %v4949
      %v4996 = vpack.c.bf16 %v4952, %v4951
      %v4997 = vpack.c.bf16 %v4954, %v4953
      %v4998 = vpack.c.bf16 %v4956, %v4955
      %v4999 = vpack.c.bf16 %v4958, %v4957
      %v5000 = vpack.c.bf16 %v4960, %v4959
      %v5001 = vpack.c.bf16 %v4962, %v4961
      %v5002 = vpack.c.bf16 %v4964, %v4963
      %v5003 = vpack.c.bf16 %v4966, %v4965
      %v5004 = vpack.c.bf16 %v4968, %v4967
      %v5005 = vpack.c.bf16 %v4970, %v4969
      %v5006 = vpack.c.bf16 %v4972, %v4971
      %v5007 = vpack.c.bf16 %v4974, %v4973
      %v5008 = vpack.c.bf16 %v4976, %v4975
      %v5009 = vpack.c.bf16 %v4978, %v4977
      %v5010 = vpack.c.bf16 %v4980, %v4979
      %v5011 = vpack.c.bf16 %v4982, %v4981
      %v5012 = vpack.c.bf16 %v4984, %v4983
      %5013 = vst.msk [vmem:[#allocation3 + $0x18] sm:$0xff] %vm3630, %v4985
      %5014 = vst.msk [vmem:[#allocation3 + $0x40] sm:$0xff] %vm3630, %v4986
      %5015 = vst.msk [vmem:[#allocation3 + $0x68] sm:$0xff] %vm3630, %v4987
      %5016 = vst.msk [vmem:[#allocation3 + $0x90] sm:$0xff] %vm3630, %v4988
      %5017 = vst.msk [vmem:[#allocation3 + $0xb8] sm:$0xff] %vm3630, %v4989
      %5018 = vst.msk [vmem:[#allocation3 + $0xe0] sm:$0xff] %vm3630, %v4990
      %5019 = vst.msk [vmem:[#allocation3 + $0x108] sm:$0xff] %vm3630, %v4991
      %5020 = vst.msk [vmem:[#allocation3 + $0x130] sm:$0xff] %vm3630, %v4992
      %5021 = vst.msk [vmem:[#allocation3 + $0x158] sm:$0xff] %vm3630, %v4993
      %5022 = vst.msk [vmem:[#allocation3 + $0x180] sm:$0xff] %vm3630, %v4994
      %5023 = vst.msk [vmem:[#allocation3 + $0x1a8] sm:$0xff] %vm3630, %v4995
      %5024 = vst.msk [vmem:[#allocation3 + $0x1d0] sm:$0xff] %vm3630, %v4996
      %5025 = vst.msk [vmem:[#allocation3 + $0x1f8] sm:$0xff] %vm3630, %v4997
      %5026 = vst.msk [vmem:[#allocation3 + $0x220] sm:$0xff] %vm3630, %v4998
      %5027 = vst.msk [vmem:[#allocation3 + $0x248] sm:$0xff] %vm3630, %v4999
      %5028 = vst.msk [vmem:[#allocation3 + $0x270] sm:$0xff] %vm3630, %v5000
      %5029 = vst.msk [vmem:[#allocation3 + $0x298] sm:$0xff] %vm3630, %v5001
      %5030 = vst.msk [vmem:[#allocation3 + $0x2c0] sm:$0xff] %vm3630, %v5002
      %5031 = vst.msk [vmem:[#allocation3 + $0x2e8] sm:$0xff] %vm3630, %v5003
      %5032 = vst.msk [vmem:[#allocation3 + $0x310] sm:$0xff] %vm3630, %v5004
      %5033 = vst.msk [vmem:[#allocation3 + $0x338] sm:$0xff] %vm3630, %v5005
      %5034 = vst.msk [vmem:[#allocation3 + $0x360] sm:$0xff] %vm3630, %v5006
      %5035 = vst.msk [vmem:[#allocation3 + $0x388] sm:$0xff] %vm3630, %v5007
      %5036 = vst.msk [vmem:[#allocation3 + $0x3b0] sm:$0xff] %vm3630, %v5008
      %5037 = vst.msk [vmem:[#allocation3 + $0x3d8] sm:$0xff] %vm3630, %v5009
      %5038 = vst.msk [vmem:[#allocation3 + $0x400] sm:$0xff] %vm3630, %v5010
      %5039 = vst.msk [vmem:[#allocation3 + $0x428] sm:$0xff] %vm3630, %v5011
      %5040 = vst.msk [vmem:[#allocation3 + $0x450] sm:$0xff] %vm3630, %v5012
      %v5041 = vld [vmem:[#allocation2 + $0x98] sm:$0xff]
      %v5042 = vld [vmem:[#allocation2 + $0xa0] sm:$0xff]
      %v5043 = vld [vmem:[#allocation2 + $0xa8] sm:$0xff]
      %v5044 = vld [vmem:[#allocation2 + $0xb0] sm:$0xff]
      %v5045 = vld [vmem:[#allocation2 + $0xb8] sm:$0xff]
      %v5046 = vld [vmem:[#allocation2 + $0xc0] sm:$0xff]
      %v5047 = vld [vmem:[#allocation2 + $0xc8] sm:$0xff]
      %v5048 = vld [vmem:[#allocation2 + $0x1b8] sm:$0xff]
      %v5049 = vld [vmem:[#allocation2 + $0x1c0] sm:$0xff]
      %v5050 = vld [vmem:[#allocation2 + $0x1c8] sm:$0xff]
      %v5051 = vld [vmem:[#allocation2 + $0x1d0] sm:$0xff]
      %v5052 = vld [vmem:[#allocation2 + $0x1d8] sm:$0xff]
      %v5053 = vld [vmem:[#allocation2 + $0x1e0] sm:$0xff]
      %v5054 = vld [vmem:[#allocation2 + $0x1e8] sm:$0xff]
      %v5055 = vld [vmem:[#allocation2 + $0x2d8] sm:$0xff]
      %v5056 = vld [vmem:[#allocation2 + $0x2e0] sm:$0xff]
      %v5057 = vld [vmem:[#allocation2 + $0x2e8] sm:$0xff]
      %v5058 = vld [vmem:[#allocation2 + $0x2f0] sm:$0xff]
      %v5059 = vld [vmem:[#allocation2 + $0x2f8] sm:$0xff]
      %v5060 = vld [vmem:[#allocation2 + $0x300] sm:$0xff]
      %v5061 = vld [vmem:[#allocation2 + $0x308] sm:$0xff]
      %v5062 = vld [vmem:[#allocation2 + $0x3f8] sm:$0xff]
      %v5063 = vld [vmem:[#allocation2 + $0x400] sm:$0xff]
      %v5064 = vld [vmem:[#allocation2 + $0x408] sm:$0xff]
      %v5065 = vld [vmem:[#allocation2 + $0x410] sm:$0xff]
      %v5066 = vld [vmem:[#allocation2 + $0x418] sm:$0xff]
      %v5067 = vld [vmem:[#allocation2 + $0x420] sm:$0xff]
      %v5068 = vld [vmem:[#allocation2 + $0x428] sm:$0xff]
      %v5069 = vld [vmem:[#allocation2 + $0x518] sm:$0xff]
      %v5070 = vld [vmem:[#allocation2 + $0x520] sm:$0xff]
      %v5071 = vld [vmem:[#allocation2 + $0x528] sm:$0xff]
      %v5072 = vld [vmem:[#allocation2 + $0x530] sm:$0xff]
      %v5073 = vld [vmem:[#allocation2 + $0x538] sm:$0xff]
      %v5074 = vld [vmem:[#allocation2 + $0x540] sm:$0xff]
      %v5075 = vld [vmem:[#allocation2 + $0x548] sm:$0xff]
      %v5076 = vld [vmem:[#allocation2 + $0x638] sm:$0xff]
      %v5077 = vld [vmem:[#allocation2 + $0x640] sm:$0xff]
      %v5078 = vld [vmem:[#allocation2 + $0x648] sm:$0xff]
      %v5079 = vld [vmem:[#allocation2 + $0x650] sm:$0xff]
      %v5080 = vld [vmem:[#allocation2 + $0x658] sm:$0xff]
      %v5081 = vld [vmem:[#allocation2 + $0x660] sm:$0xff]
      %v5082 = vld [vmem:[#allocation2 + $0x668] sm:$0xff]
      %v5083 = vld [vmem:[#allocation2 + $0x758] sm:$0xff]
      %v5084 = vld [vmem:[#allocation2 + $0x760] sm:$0xff]
      %v5085 = vld [vmem:[#allocation2 + $0x768] sm:$0xff]
      %v5086 = vld [vmem:[#allocation2 + $0x770] sm:$0xff]
      %v5087 = vld [vmem:[#allocation2 + $0x778] sm:$0xff]
      %v5088 = vld [vmem:[#allocation2 + $0x780] sm:$0xff]
      %v5089 = vld [vmem:[#allocation2 + $0x788] sm:$0xff]
      %v5090 = vld [vmem:[#allocation2 + $0x878] sm:$0xff]
      %v5091 = vld [vmem:[#allocation2 + $0x880] sm:$0xff]
      %v5092 = vld [vmem:[#allocation2 + $0x888] sm:$0xff]
      %v5093 = vld [vmem:[#allocation2 + $0x890] sm:$0xff]
      %v5094 = vld [vmem:[#allocation2 + $0x898] sm:$0xff]
      %v5095 = vld [vmem:[#allocation2 + $0x8a0] sm:$0xff]
      %v5096 = vld [vmem:[#allocation2 + $0x8a8] sm:$0xff]
      %v5097 = vpack.c.bf16 %v5042, %v5041
      %v5098 = vpack.c.bf16 %v5044, %v5043
      %v5099 = vpack.c.bf16 %v5046, %v5045
      %v5100 = vpack.c.bf16 %v5048, %v5047
      %v5101 = vpack.c.bf16 %v5050, %v5049
      %v5102 = vpack.c.bf16 %v5052, %v5051
      %v5103 = vpack.c.bf16 %v5054, %v5053
      %v5104 = vpack.c.bf16 %v5056, %v5055
      %v5105 = vpack.c.bf16 %v5058, %v5057
      %v5106 = vpack.c.bf16 %v5060, %v5059
      %v5107 = vpack.c.bf16 %v5062, %v5061
      %v5108 = vpack.c.bf16 %v5064, %v5063
      %v5109 = vpack.c.bf16 %v5066, %v5065
      %v5110 = vpack.c.bf16 %v5068, %v5067
      %v5111 = vpack.c.bf16 %v5070, %v5069
      %v5112 = vpack.c.bf16 %v5072, %v5071
      %v5113 = vpack.c.bf16 %v5074, %v5073
      %v5114 = vpack.c.bf16 %v5076, %v5075
      %v5115 = vpack.c.bf16 %v5078, %v5077
      %v5116 = vpack.c.bf16 %v5080, %v5079
      %v5117 = vpack.c.bf16 %v5082, %v5081
      %v5118 = vpack.c.bf16 %v5084, %v5083
      %v5119 = vpack.c.bf16 %v5086, %v5085
      %v5120 = vpack.c.bf16 %v5088, %v5087
      %v5121 = vpack.c.bf16 %v5090, %v5089
      %v5122 = vpack.c.bf16 %v5092, %v5091
      %v5123 = vpack.c.bf16 %v5094, %v5093
      %v5124 = vpack.c.bf16 %v5096, %v5095
      %5153 = vrot.lane.b32.xlu0 %v5097, 64
      %v5154 = vpop.permute.xlu0 %5153
      %5155 = vrot.lane.b32.xlu0 %v5098, 64
      %v5156 = vpop.permute.xlu0 %5155
      %5157 = vrot.lane.b32.xlu0 %v5099, 64
      %v5158 = vpop.permute.xlu0 %5157
      %5159 = vrot.lane.b32.xlu0 %v5100, 64
      %v5160 = vpop.permute.xlu0 %5159
      %5161 = vrot.lane.b32.xlu0 %v5101, 64
      %v5162 = vpop.permute.xlu0 %5161
      %5163 = vrot.lane.b32.xlu0 %v5102, 64
      %v5164 = vpop.permute.xlu0 %5163
      %5165 = vrot.lane.b32.xlu0 %v5103, 64
      %v5166 = vpop.permute.xlu0 %5165
      %5167 = vrot.lane.b32.xlu0 %v5104, 64
      %v5168 = vpop.permute.xlu0 %5167
      %5169 = vrot.lane.b32.xlu0 %v5105, 64
      %v5170 = vpop.permute.xlu0 %5169
      %5171 = vrot.lane.b32.xlu0 %v5106, 64
      %v5172 = vpop.permute.xlu0 %5171
      %5173 = vrot.lane.b32.xlu0 %v5107, 64
      %v5174 = vpop.permute.xlu0 %5173
      %5175 = vrot.lane.b32.xlu0 %v5108, 64
      %v5176 = vpop.permute.xlu0 %5175
      %5177 = vrot.lane.b32.xlu0 %v5109, 64
      %v5178 = vpop.permute.xlu0 %5177
      %5179 = vrot.lane.b32.xlu0 %v5110, 64
      %v5180 = vpop.permute.xlu0 %5179
      %5181 = vrot.lane.b32.xlu0 %v5111, 64
      %v5182 = vpop.permute.xlu0 %5181
      %5183 = vrot.lane.b32.xlu0 %v5112, 64
      %v5184 = vpop.permute.xlu0 %5183
      %5185 = vrot.lane.b32.xlu0 %v5113, 64
      %v5186 = vpop.permute.xlu0 %5185
      %5187 = vrot.lane.b32.xlu0 %v5114, 64
      %v5188 = vpop.permute.xlu0 %5187
      %5189 = vrot.lane.b32.xlu0 %v5115, 64
      %v5190 = vpop.permute.xlu0 %5189
      %5191 = vrot.lane.b32.xlu0 %v5116, 64
      %v5192 = vpop.permute.xlu0 %5191
      %5193 = vrot.lane.b32.xlu0 %v5117, 64
      %v5194 = vpop.permute.xlu0 %5193
      %5195 = vrot.lane.b32.xlu0 %v5118, 64
      %v5196 = vpop.permute.xlu0 %5195
      %5197 = vrot.lane.b32.xlu0 %v5119, 64
      %v5198 = vpop.permute.xlu0 %5197
      %5199 = vrot.lane.b32.xlu0 %v5120, 64
      %v5200 = vpop.permute.xlu0 %5199
      %5201 = vrot.lane.b32.xlu0 %v5121, 64
      %v5202 = vpop.permute.xlu0 %5201
      %5203 = vrot.lane.b32.xlu0 %v5122, 64
      %v5204 = vpop.permute.xlu0 %5203
      %5205 = vrot.lane.b32.xlu0 %v5123, 64
      %v5206 = vpop.permute.xlu0 %5205
      %5207 = vrot.lane.b32.xlu0 %v5124, 64
      %v5208 = vpop.permute.xlu0 %5207
      %5237 = vst.msk [vmem:[#allocation3 + $0x18] sm:$0xff] %vm4228, %v5154
      %5238 = vst.msk [vmem:[#allocation3 + $0x40] sm:$0xff] %vm4228, %v5156
      %5239 = vst.msk [vmem:[#allocation3 + $0x68] sm:$0xff] %vm4228, %v5158
      %5240 = vst.msk [vmem:[#allocation3 + $0x90] sm:$0xff] %vm4228, %v5160
      %5241 = vst.msk [vmem:[#allocation3 + $0xb8] sm:$0xff] %vm4228, %v5162
      %5242 = vst.msk [vmem:[#allocation3 + $0xe0] sm:$0xff] %vm4228, %v5164
      %5243 = vst.msk [vmem:[#allocation3 + $0x108] sm:$0xff] %vm4228, %v5166
      %5244 = vst.msk [vmem:[#allocation3 + $0x130] sm:$0xff] %vm4228, %v5168
      %5245 = vst.msk [vmem:[#allocation3 + $0x158] sm:$0xff] %vm4228, %v5170
      %5246 = vst.msk [vmem:[#allocation3 + $0x180] sm:$0xff] %vm4228, %v5172
      %5247 = vst.msk [vmem:[#allocation3 + $0x1a8] sm:$0xff] %vm4228, %v5174
      %5248 = vst.msk [vmem:[#allocation3 + $0x1d0] sm:$0xff] %vm4228, %v5176
      %5249 = vst.msk [vmem:[#allocation3 + $0x1f8] sm:$0xff] %vm4228, %v5178
      %5250 = vst.msk [vmem:[#allocation3 + $0x220] sm:$0xff] %vm4228, %v5180
      %5251 = vst.msk [vmem:[#allocation3 + $0x248] sm:$0xff] %vm4228, %v5182
      %5252 = vst.msk [vmem:[#allocation3 + $0x270] sm:$0xff] %vm4228, %v5184
      %5253 = vst.msk [vmem:[#allocation3 + $0x298] sm:$0xff] %vm4228, %v5186
      %5254 = vst.msk [vmem:[#allocation3 + $0x2c0] sm:$0xff] %vm4228, %v5188
      %5255 = vst.msk [vmem:[#allocation3 + $0x2e8] sm:$0xff] %vm4228, %v5190
      %5256 = vst.msk [vmem:[#allocation3 + $0x310] sm:$0xff] %vm4228, %v5192
      %5257 = vst.msk [vmem:[#allocation3 + $0x338] sm:$0xff] %vm4228, %v5194
      %5258 = vst.msk [vmem:[#allocation3 + $0x360] sm:$0xff] %vm4228, %v5196
      %5259 = vst.msk [vmem:[#allocation3 + $0x388] sm:$0xff] %vm4228, %v5198
      %5260 = vst.msk [vmem:[#allocation3 + $0x3b0] sm:$0xff] %vm4228, %v5200
      %5261 = vst.msk [vmem:[#allocation3 + $0x3d8] sm:$0xff] %vm4228, %v5202
      %5262 = vst.msk [vmem:[#allocation3 + $0x400] sm:$0xff] %vm4228, %v5204
      %5263 = vst.msk [vmem:[#allocation3 + $0x428] sm:$0xff] %vm4228, %v5206
      %5264 = vst.msk [vmem:[#allocation3 + $0x450] sm:$0xff] %vm4228, %v5208
      %v5265 = vld [vmem:[#allocation2 + $0xe1] sm:$0xff]
      %v5266 = vld [vmem:[#allocation2 + $0xe9] sm:$0xff]
      %v5267 = vld [vmem:[#allocation2 + $0xf1] sm:$0xff]
      %v5268 = vld [vmem:[#allocation2 + $0xf9] sm:$0xff]
      %v5269 = vld [vmem:[#allocation2 + $0x101] sm:$0xff]
      %v5270 = vld [vmem:[#allocation2 + $0x109] sm:$0xff]
      %v5271 = vld [vmem:[#allocation2 + $0x111] sm:$0xff]
      %v5272 = vld [vmem:[#allocation2 + $0x201] sm:$0xff]
      %v5273 = vld [vmem:[#allocation2 + $0x209] sm:$0xff]
      %v5274 = vld [vmem:[#allocation2 + $0x211] sm:$0xff]
      %v5275 = vld [vmem:[#allocation2 + $0x219] sm:$0xff]
      %v5276 = vld [vmem:[#allocation2 + $0x221] sm:$0xff]
      %v5277 = vld [vmem:[#allocation2 + $0x229] sm:$0xff]
      %v5278 = vld [vmem:[#allocation2 + $0x231] sm:$0xff]
      %v5279 = vld [vmem:[#allocation2 + $0x321] sm:$0xff]
      %v5280 = vld [vmem:[#allocation2 + $0x329] sm:$0xff]
      %v5281 = vld [vmem:[#allocation2 + $0x331] sm:$0xff]
      %v5282 = vld [vmem:[#allocation2 + $0x339] sm:$0xff]
      %v5283 = vld [vmem:[#allocation2 + $0x341] sm:$0xff]
      %v5284 = vld [vmem:[#allocation2 + $0x349] sm:$0xff]
      %v5285 = vld [vmem:[#allocation2 + $0x351] sm:$0xff]
      %v5286 = vld [vmem:[#allocation2 + $0x441] sm:$0xff]
      %v5287 = vld [vmem:[#allocation2 + $0x449] sm:$0xff]
      %v5288 = vld [vmem:[#allocation2 + $0x451] sm:$0xff]
      %v5289 = vld [vmem:[#allocation2 + $0x459] sm:$0xff]
      %v5290 = vld [vmem:[#allocation2 + $0x461] sm:$0xff]
      %v5291 = vld [vmem:[#allocation2 + $0x469] sm:$0xff]
      %v5292 = vld [vmem:[#allocation2 + $0x471] sm:$0xff]
      %v5293 = vld [vmem:[#allocation2 + $0x561] sm:$0xff]
      %v5294 = vld [vmem:[#allocation2 + $0x569] sm:$0xff]
      %v5295 = vld [vmem:[#allocation2 + $0x571] sm:$0xff]
      %v5296 = vld [vmem:[#allocation2 + $0x579] sm:$0xff]
      %v5297 = vld [vmem:[#allocation2 + $0x581] sm:$0xff]
      %v5298 = vld [vmem:[#allocation2 + $0x589] sm:$0xff]
      %v5299 = vld [vmem:[#allocation2 + $0x591] sm:$0xff]
      %v5300 = vld [vmem:[#allocation2 + $0x681] sm:$0xff]
      %v5301 = vld [vmem:[#allocation2 + $0x689] sm:$0xff]
      %v5302 = vld [vmem:[#allocation2 + $0x691] sm:$0xff]
      %v5303 = vld [vmem:[#allocation2 + $0x699] sm:$0xff]
      %v5304 = vld [vmem:[#allocation2 + $0x6a1] sm:$0xff]
      %v5305 = vld [vmem:[#allocation2 + $0x6a9] sm:$0xff]
      %v5306 = vld [vmem:[#allocation2 + $0x6b1] sm:$0xff]
      %v5307 = vld [vmem:[#allocation2 + $0x7a1] sm:$0xff]
      %v5308 = vld [vmem:[#allocation2 + $0x7a9] sm:$0xff]
      %v5309 = vld [vmem:[#allocation2 + $0x7b1] sm:$0xff]
      %v5310 = vld [vmem:[#allocation2 + $0x7b9] sm:$0xff]
      %v5311 = vld [vmem:[#allocation2 + $0x7c1] sm:$0xff]
      %v5312 = vld [vmem:[#allocation2 + $0x7c9] sm:$0xff]
      %v5313 = vld [vmem:[#allocation2 + $0x7d1] sm:$0xff]
      %v5314 = vld [vmem:[#allocation2 + $0x8c1] sm:$0xff]
      %v5315 = vld [vmem:[#allocation2 + $0x8c9] sm:$0xff]
      %v5316 = vld [vmem:[#allocation2 + $0x8d1] sm:$0xff]
      %v5317 = vld [vmem:[#allocation2 + $0x8d9] sm:$0xff]
      %v5318 = vld [vmem:[#allocation2 + $0x8e1] sm:$0xff]
      %v5319 = vld [vmem:[#allocation2 + $0x8e9] sm:$0xff]
      %v5320 = vld [vmem:[#allocation2 + $0x8f1] sm:$0xff]
      %v5321 = vpack.c.bf16 %v5266, %v5265
      %v5322 = vpack.c.bf16 %v5268, %v5267
      %v5323 = vpack.c.bf16 %v5270, %v5269
      %v5324 = vpack.c.bf16 %v5272, %v5271
      %v5325 = vpack.c.bf16 %v5274, %v5273
      %v5326 = vpack.c.bf16 %v5276, %v5275
      %v5327 = vpack.c.bf16 %v5278, %v5277
      %v5328 = vpack.c.bf16 %v5280, %v5279
      %v5329 = vpack.c.bf16 %v5282, %v5281
      %v5330 = vpack.c.bf16 %v5284, %v5283
      %v5331 = vpack.c.bf16 %v5286, %v5285
      %v5332 = vpack.c.bf16 %v5288, %v5287
      %v5333 = vpack.c.bf16 %v5290, %v5289
      %v5334 = vpack.c.bf16 %v5292, %v5291
      %v5335 = vpack.c.bf16 %v5294, %v5293
      %v5336 = vpack.c.bf16 %v5296, %v5295
      %v5337 = vpack.c.bf16 %v5298, %v5297
      %v5338 = vpack.c.bf16 %v5300, %v5299
      %v5339 = vpack.c.bf16 %v5302, %v5301
      %v5340 = vpack.c.bf16 %v5304, %v5303
      %v5341 = vpack.c.bf16 %v5306, %v5305
      %v5342 = vpack.c.bf16 %v5308, %v5307
      %v5343 = vpack.c.bf16 %v5310, %v5309
      %v5344 = vpack.c.bf16 %v5312, %v5311
      %v5345 = vpack.c.bf16 %v5314, %v5313
      %v5346 = vpack.c.bf16 %v5316, %v5315
      %v5347 = vpack.c.bf16 %v5318, %v5317
      %v5348 = vpack.c.bf16 %v5320, %v5319
      %5349 = vst.msk [vmem:[#allocation3 + $0x20] sm:$0xff] %vm3630, %v5321
      %5350 = vst.msk [vmem:[#allocation3 + $0x48] sm:$0xff] %vm3630, %v5322
      %5351 = vst.msk [vmem:[#allocation3 + $0x70] sm:$0xff] %vm3630, %v5323
      %5352 = vst.msk [vmem:[#allocation3 + $0x98] sm:$0xff] %vm3630, %v5324
      %5353 = vst.msk [vmem:[#allocation3 + $0xc0] sm:$0xff] %vm3630, %v5325
      %5354 = vst.msk [vmem:[#allocation3 + $0xe8] sm:$0xff] %vm3630, %v5326
      %5355 = vst.msk [vmem:[#allocation3 + $0x110] sm:$0xff] %vm3630, %v5327
      %5356 = vst.msk [vmem:[#allocation3 + $0x138] sm:$0xff] %vm3630, %v5328
      %5357 = vst.msk [vmem:[#allocation3 + $0x160] sm:$0xff] %vm3630, %v5329
      %5358 = vst.msk [vmem:[#allocation3 + $0x188] sm:$0xff] %vm3630, %v5330
      %5359 = vst.msk [vmem:[#allocation3 + $0x1b0] sm:$0xff] %vm3630, %v5331
      %5360 = vst.msk [vmem:[#allocation3 + $0x1d8] sm:$0xff] %vm3630, %v5332
      %5361 = vst.msk [vmem:[#allocation3 + $0x200] sm:$0xff] %vm3630, %v5333
      %5362 = vst.msk [vmem:[#allocation3 + $0x228] sm:$0xff] %vm3630, %v5334
      %5363 = vst.msk [vmem:[#allocation3 + $0x250] sm:$0xff] %vm3630, %v5335
      %5364 = vst.msk [vmem:[#allocation3 + $0x278] sm:$0xff] %vm3630, %v5336
      %5365 = vst.msk [vmem:[#allocation3 + $0x2a0] sm:$0xff] %vm3630, %v5337
      %5366 = vst.msk [vmem:[#allocation3 + $0x2c8] sm:$0xff] %vm3630, %v5338
      %5367 = vst.msk [vmem:[#allocation3 + $0x2f0] sm:$0xff] %vm3630, %v5339
      %5368 = vst.msk [vmem:[#allocation3 + $0x318] sm:$0xff] %vm3630, %v5340
      %5369 = vst.msk [vmem:[#allocation3 + $0x340] sm:$0xff] %vm3630, %v5341
      %5370 = vst.msk [vmem:[#allocation3 + $0x368] sm:$0xff] %vm3630, %v5342
      %5371 = vst.msk [vmem:[#allocation3 + $0x390] sm:$0xff] %vm3630, %v5343
      %5372 = vst.msk [vmem:[#allocation3 + $0x3b8] sm:$0xff] %vm3630, %v5344
      %5373 = vst.msk [vmem:[#allocation3 + $0x3e0] sm:$0xff] %vm3630, %v5345
      %5374 = vst.msk [vmem:[#allocation3 + $0x408] sm:$0xff] %vm3630, %v5346
      %5375 = vst.msk [vmem:[#allocation3 + $0x430] sm:$0xff] %vm3630, %v5347
      %5376 = vst.msk [vmem:[#allocation3 + $0x458] sm:$0xff] %vm3630, %v5348
      %v5377 = vld [vmem:[#allocation3] sm:$0xff]
      %v5378 = vld [vmem:[#allocation3 + $0x8] sm:$0xff]
      %v5379 = vld [vmem:[#allocation3 + $0x10] sm:$0xff]
      %v5380 = vld [vmem:[#allocation3 + $0x18] sm:$0xff]
      %v5381 = vld [vmem:[#allocation3 + $0x20] sm:$0xff]
      %v5382 = vld [vmem:[#allocation3 + $0x28] sm:$0xff]
      %v5383 = vld [vmem:[#allocation3 + $0x30] sm:$0xff]
      %v5384 = vld [vmem:[#allocation3 + $0x38] sm:$0xff]
      %v5385 = vld [vmem:[#allocation3 + $0x40] sm:$0xff]
      %v5386 = vld [vmem:[#allocation3 + $0x48] sm:$0xff]
      %v5387 = vld [vmem:[#allocation3 + $0x50] sm:$0xff]
      %v5388 = vld [vmem:[#allocation3 + $0x58] sm:$0xff]
      %v5389 = vld [vmem:[#allocation3 + $0x60] sm:$0xff]
      %v5390 = vld [vmem:[#allocation3 + $0x68] sm:$0xff]
      %v5391 = vld [vmem:[#allocation3 + $0x70] sm:$0xff]
      %v5392 = vld [vmem:[#allocation3 + $0x78] sm:$0xff]
      %v5393 = vld [vmem:[#allocation3 + $0x80] sm:$0xff]
      %v5394 = vld [vmem:[#allocation3 + $0x88] sm:$0xff]
      %v5395 = vld [vmem:[#allocation3 + $0x90] sm:$0xff]
      %v5396 = vld [vmem:[#allocation3 + $0x98] sm:$0xff]
      %v5397 = vld [vmem:[#allocation3 + $0xa0] sm:$0xff]
      %v5398 = vld [vmem:[#allocation3 + $0xa8] sm:$0xff]
      %v5399 = vld [vmem:[#allocation3 + $0xb0] sm:$0xff]
      %v5400 = vld [vmem:[#allocation3 + $0xb8] sm:$0xff]
      %v5401 = vld [vmem:[#allocation3 + $0xc0] sm:$0xff]
      %v5402 = vld [vmem:[#allocation3 + $0xc8] sm:$0xff]
      %v5403 = vld [vmem:[#allocation3 + $0xd0] sm:$0xff]
      %v5404 = vld [vmem:[#allocation3 + $0xd8] sm:$0xff]
      %v5405 = vld [vmem:[#allocation3 + $0xe0] sm:$0xff]
      %v5406 = vld [vmem:[#allocation3 + $0xe8] sm:$0xff]
      %v5407 = vld [vmem:[#allocation3 + $0xf0] sm:$0xff]
      %v5408 = vld [vmem:[#allocation3 + $0xf8] sm:$0xff]
      %v5409 = vld [vmem:[#allocation3 + $0x100] sm:$0xff]
      %v5410 = vld [vmem:[#allocation3 + $0x108] sm:$0xff]
      %v5411 = vld [vmem:[#allocation3 + $0x110] sm:$0xff]
      %v5412 = vld [vmem:[#allocation3 + $0x118] sm:$0xff]
      %v5413 = vld [vmem:[#allocation3 + $0x120] sm:$0xff]
      %v5414 = vld [vmem:[#allocation3 + $0x128] sm:$0xff]
      %v5415 = vld [vmem:[#allocation3 + $0x130] sm:$0xff]
      %v5416 = vld [vmem:[#allocation3 + $0x138] sm:$0xff]
      %v5417 = vld [vmem:[#allocation3 + $0x140] sm:$0xff]
      %v5418 = vld [vmem:[#allocation3 + $0x148] sm:$0xff]
      %v5419 = vld [vmem:[#allocation3 + $0x150] sm:$0xff]
      %v5420 = vld [vmem:[#allocation3 + $0x158] sm:$0xff]
      %v5421 = vld [vmem:[#allocation3 + $0x160] sm:$0xff]
      %v5422 = vld [vmem:[#allocation3 + $0x168] sm:$0xff]
      %v5423 = vld [vmem:[#allocation3 + $0x170] sm:$0xff]
      %v5424 = vld [vmem:[#allocation3 + $0x178] sm:$0xff]
      %v5425 = vld [vmem:[#allocation3 + $0x180] sm:$0xff]
      %v5426 = vld [vmem:[#allocation3 + $0x188] sm:$0xff]
      %v5427 = vld [vmem:[#allocation3 + $0x190] sm:$0xff]
      %v5428 = vld [vmem:[#allocation3 + $0x198] sm:$0xff]
      %v5429 = vld [vmem:[#allocation3 + $0x1a0] sm:$0xff]
      %v5430 = vld [vmem:[#allocation3 + $0x1a8] sm:$0xff]
      %v5431 = vld [vmem:[#allocation3 + $0x1b0] sm:$0xff]
      %v5432 = vld [vmem:[#allocation3 + $0x1b8] sm:$0xff]
      %v5433 = vld [vmem:[#allocation3 + $0x1c0] sm:$0xff]
      %v5434 = vld [vmem:[#allocation3 + $0x1c8] sm:$0xff]
      %v5435 = vld [vmem:[#allocation3 + $0x1d0] sm:$0xff]
      %v5436 = vld [vmem:[#allocation3 + $0x1d8] sm:$0xff]
      %v5437 = vld [vmem:[#allocation3 + $0x1e0] sm:$0xff]
      %v5438 = vld [vmem:[#allocation3 + $0x1e8] sm:$0xff]
      %v5439 = vld [vmem:[#allocation3 + $0x1f0] sm:$0xff]
      %v5440 = vld [vmem:[#allocation3 + $0x1f8] sm:$0xff]
      %v5441 = vld [vmem:[#allocation3 + $0x200] sm:$0xff]
      %v5442 = vld [vmem:[#allocation3 + $0x208] sm:$0xff]
      %v5443 = vld [vmem:[#allocation3 + $0x210] sm:$0xff]
      %v5444 = vld [vmem:[#allocation3 + $0x218] sm:$0xff]
      %v5445 = vld [vmem:[#allocation3 + $0x220] sm:$0xff]
      %v5446 = vld [vmem:[#allocation3 + $0x228] sm:$0xff]
      %v5447 = vld [vmem:[#allocation3 + $0x230] sm:$0xff]
      %v5448 = vld [vmem:[#allocation3 + $0x238] sm:$0xff]
      %v5449 = vld [vmem:[#allocation3 + $0x240] sm:$0xff]
      %v5450 = vld [vmem:[#allocation3 + $0x248] sm:$0xff]
      %v5451 = vld [vmem:[#allocation3 + $0x250] sm:$0xff]
      %v5452 = vld [vmem:[#allocation3 + $0x258] sm:$0xff]
      %v5453 = vld [vmem:[#allocation3 + $0x260] sm:$0xff]
      %v5454 = vld [vmem:[#allocation3 + $0x268] sm:$0xff]
      %v5455 = vld [vmem:[#allocation3 + $0x270] sm:$0xff]
      %v5456 = vld [vmem:[#allocation3 + $0x278] sm:$0xff]
      %v5457 = vld [vmem:[#allocation3 + $0x280] sm:$0xff]
      %v5458 = vld [vmem:[#allocation3 + $0x288] sm:$0xff]
      %v5459 = vld [vmem:[#allocation3 + $0x290] sm:$0xff]
      %v5460 = vld [vmem:[#allocation3 + $0x298] sm:$0xff]
      %v5461 = vld [vmem:[#allocation3 + $0x2a0] sm:$0xff]
      %v5462 = vld [vmem:[#allocation3 + $0x2a8] sm:$0xff]
      %v5463 = vld [vmem:[#allocation3 + $0x2b0] sm:$0xff]
      %v5464 = vld [vmem:[#allocation3 + $0x2b8] sm:$0xff]
      %v5465 = vld [vmem:[#allocation3 + $0x2c0] sm:$0xff]
      %v5466 = vld [vmem:[#allocation3 + $0x2c8] sm:$0xff]
      %v5467 = vld [vmem:[#allocation3 + $0x2d0] sm:$0xff]
      %v5468 = vld [vmem:[#allocation3 + $0x2d8] sm:$0xff]
      %v5469 = vld [vmem:[#allocation3 + $0x2e0] sm:$0xff]
      %v5470 = vld [vmem:[#allocation3 + $0x2e8] sm:$0xff]
      %v5471 = vld [vmem:[#allocation3 + $0x2f0] sm:$0xff]
      %v5472 = vld [vmem:[#allocation3 + $0x2f8] sm:$0xff]
      %v5473 = vld [vmem:[#allocation3 + $0x300] sm:$0xff]
      %v5474 = vld [vmem:[#allocation3 + $0x308] sm:$0xff]
      %v5475 = vld [vmem:[#allocation3 + $0x310] sm:$0xff]
      %v5476 = vld [vmem:[#allocation3 + $0x318] sm:$0xff]
      %v5477 = vld [vmem:[#allocation3 + $0x320] sm:$0xff]
      %v5478 = vld [vmem:[#allocation3 + $0x328] sm:$0xff]
      %v5479 = vld [vmem:[#allocation3 + $0x330] sm:$0xff]
      %v5480 = vld [vmem:[#allocation3 + $0x338] sm:$0xff]
      %v5481 = vld [vmem:[#allocation3 + $0x340] sm:$0xff]
      %v5482 = vld [vmem:[#allocation3 + $0x348] sm:$0xff]
      %v5483 = vld [vmem:[#allocation3 + $0x350] sm:$0xff]
      %v5484 = vld [vmem:[#allocation3 + $0x358] sm:$0xff]
      %v5485 = vld [vmem:[#allocation3 + $0x360] sm:$0xff]
      %v5486 = vld [vmem:[#allocation3 + $0x368] sm:$0xff]
      %v5487 = vld [vmem:[#allocation3 + $0x370] sm:$0xff]
      %v5488 = vld [vmem:[#allocation3 + $0x378] sm:$0xff]
      %v5489 = vld [vmem:[#allocation3 + $0x380] sm:$0xff]
      %v5490 = vld [vmem:[#allocation3 + $0x388] sm:$0xff]
      %v5491 = vld [vmem:[#allocation3 + $0x390] sm:$0xff]
      %v5492 = vld [vmem:[#allocation3 + $0x398] sm:$0xff]
      %v5493 = vld [vmem:[#allocation3 + $0x3a0] sm:$0xff]
      %v5494 = vld [vmem:[#allocation3 + $0x3a8] sm:$0xff]
      %v5495 = vld [vmem:[#allocation3 + $0x3b0] sm:$0xff]
      %v5496 = vld [vmem:[#allocation3 + $0x3b8] sm:$0xff]
      %v5497 = vld [vmem:[#allocation3 + $0x3c0] sm:$0xff]
      %v5498 = vld [vmem:[#allocation3 + $0x3c8] sm:$0xff]
      %v5499 = vld [vmem:[#allocation3 + $0x3d0] sm:$0xff]
      %v5500 = vld [vmem:[#allocation3 + $0x3d8] sm:$0xff]
      %v5501 = vld [vmem:[#allocation3 + $0x3e0] sm:$0xff]
      %v5502 = vld [vmem:[#allocation3 + $0x3e8] sm:$0xff]
      %v5503 = vld [vmem:[#allocation3 + $0x3f0] sm:$0xff]
      %v5504 = vld [vmem:[#allocation3 + $0x3f8] sm:$0xff]
      %v5505 = vld [vmem:[#allocation3 + $0x400] sm:$0xff]
      %v5506 = vld [vmem:[#allocation3 + $0x408] sm:$0xff]
      %v5507 = vld [vmem:[#allocation3 + $0x410] sm:$0xff]
      %v5508 = vld [vmem:[#allocation3 + $0x418] sm:$0xff]
      %v5509 = vld [vmem:[#allocation3 + $0x420] sm:$0xff]
      %v5510 = vld [vmem:[#allocation3 + $0x428] sm:$0xff]
      %v5511 = vld [vmem:[#allocation3 + $0x430] sm:$0xff]
      %v5512 = vld [vmem:[#allocation3 + $0x438] sm:$0xff]
      %v5513 = vld [vmem:[#allocation3 + $0x440] sm:$0xff]
      %v5514 = vld [vmem:[#allocation3 + $0x448] sm:$0xff]
      %v5515 = vld [vmem:[#allocation3 + $0x450] sm:$0xff]
      %v5516 = vld [vmem:[#allocation3 + $0x458] sm:$0xff]
      %v5517 = vld [vmem:[%s4] sm:$0xf]
      %v5518 = vld [vmem:[%s4 + $0x4] sm:$0xf]
      %v5519 = vld [vmem:[%s4 + $0x8] sm:$0xf]
      %v5520 = vld [vmem:[%s4 + $0xc] sm:$0xf]
      %v5521 = vld [vmem:[%s4 + $0x10] sm:$0xf]
      %v5522 = vld [vmem:[%s4 + $0x14] sm:$0xf]
      %v5523 = vld [vmem:[%s4 + $0x18] sm:$0xf]
      %v5524 = vld [vmem:[%s4 + $0x1c] sm:$0xf]
      %v5525 = vld [vmem:[%s4 + $0x20] sm:$0xf]
      %v5526 = vld [vmem:[%s4 + $0x24] sm:$0xf]
      %v5527 = vld [vmem:[%s4 + $0x28] sm:$0xf]
      %v5528 = vld [vmem:[%s4 + $0x2c] sm:$0xf]
      %v5529 = vld [vmem:[%s4 + $0x30] sm:$0xf]
      %v5530 = vld [vmem:[%s4 + $0x34] sm:$0xf]
      %v5531 = vld [vmem:[%s4 + $0x38] sm:$0xf]
      %v5532 = vld [vmem:[%s4 + $0x3c] sm:$0xf]
      %v5533 = vld [vmem:[%s4 + $0x40] sm:$0xf]
      %v5534 = vld [vmem:[%s4 + $0x44] sm:$0xf]
      %v5535 = vld [vmem:[%s4 + $0x48] sm:$0xf]
      %v5536 = vld [vmem:[%s4 + $0x4c] sm:$0xf]
      %v5537 = vld [vmem:[%s4 + $0x50] sm:$0xf]
      %v5538 = vld [vmem:[%s4 + $0x54] sm:$0xf]
      %v5539 = vld [vmem:[%s4 + $0x58] sm:$0xf]
      %v5540 = vld [vmem:[%s4 + $0x5c] sm:$0xf]
      %v5541 = vld [vmem:[%s4 + $0x60] sm:$0xf]
      %v5542 = vld [vmem:[%s4 + $0x64] sm:$0xf]
      %v5543 = vld [vmem:[%s4 + $0x68] sm:$0xf]
      %v5544 = vld [vmem:[%s4 + $0x6c] sm:$0xf]
      %v5545 = vld [vmem:[%s4 + $0x70] sm:$0xf]
      %v5546 = vld [vmem:[%s4 + $0x74] sm:$0xf]
      %v5547 = vld [vmem:[%s4 + $0x78] sm:$0xf]
      %v5548 = vld [vmem:[%s4 + $0x7c] sm:$0xf]
      %v5549 = vld [vmem:[%s4 + $0x80] sm:$0xf]
      %v5550 = vld [vmem:[%s4 + $0x84] sm:$0xf]
      %v5551 = vld [vmem:[%s4 + $0x88] sm:$0xf]
      %v5552 = vld [vmem:[%s4 + $0x8c] sm:$0xf]
      %v5553 = vld [vmem:[%s4 + $0x90] sm:$0xf]
      %v5554 = vld [vmem:[%s4 + $0x94] sm:$0xf]
      %v5555 = vld [vmem:[%s4 + $0x98] sm:$0xf]
      %v5556 = vld [vmem:[%s4 + $0x9c] sm:$0xf]
      %v5557 = vld [vmem:[%s4 + $0xa0] sm:$0xf]
      %v5558 = vld [vmem:[%s4 + $0xa4] sm:$0xf]
      %v5559 = vld [vmem:[%s4 + $0xa8] sm:$0xf]
      %v5560 = vld [vmem:[%s4 + $0xac] sm:$0xf]
      %v5561 = vld [vmem:[%s4 + $0xb0] sm:$0xf]
      %v5562 = vld [vmem:[%s4 + $0xb4] sm:$0xf]
      %v5563 = vld [vmem:[%s4 + $0xb8] sm:$0xf]
      %v5564 = vld [vmem:[%s4 + $0xbc] sm:$0xf]
      %v5565 = vld [vmem:[%s4 + $0xc0] sm:$0xf]
      %v5566 = vld [vmem:[%s4 + $0xc4] sm:$0xf]
      %v5567 = vld [vmem:[%s4 + $0xc8] sm:$0xf]
      %v5568 = vld [vmem:[%s4 + $0xcc] sm:$0xf]
      %v5569 = vld [vmem:[%s4 + $0xd0] sm:$0xf]
      %v5570 = vld [vmem:[%s4 + $0xd4] sm:$0xf]
      %v5571 = vld [vmem:[%s4 + $0xd8] sm:$0xf]
      %v5572 = vld [vmem:[%s4 + $0xdc] sm:$0xf]
      %v5573 = vld [vmem:[%s4 + $0xe0] sm:$0xf]
      %v5574 = vld [vmem:[%s4 + $0xe4] sm:$0xf]
      %v5575 = vld [vmem:[%s4 + $0xe8] sm:$0xf]
      %v5576 = vld [vmem:[%s4 + $0xec] sm:$0xf]
      %v5577 = vld [vmem:[%s4 + $0xf0] sm:$0xf]
      %v5578 = vld [vmem:[%s4 + $0xf4] sm:$0xf]
      %v5579 = vld [vmem:[%s4 + $0xf8] sm:$0xf]
      %v5580 = vld [vmem:[%s4 + $0xfc] sm:$0xf]
      %v5581 = vld [vmem:[%s4 + $0x100] sm:$0xf]
      %v5582 = vld [vmem:[%s4 + $0x104] sm:$0xf]
      %v5583 = vld [vmem:[%s4 + $0x108] sm:$0xf]
      %v5584 = vld [vmem:[%s4 + $0x10c] sm:$0xf]
      %v5585 = vld [vmem:[%s4 + $0x110] sm:$0xf]
      %v5586 = vld [vmem:[%s4 + $0x114] sm:$0xf]
      %v5587 = vld [vmem:[%s4 + $0x118] sm:$0xf]
      %v5588 = vld [vmem:[%s4 + $0x11c] sm:$0xf]
      %v5589 = vld [vmem:[%s5] sm:$0x1]
      %v5591 = vlaneseq
      %v5592 = vshrl.u32 %v5591, 7
      %v5593 = vsub.s32 0, %v5592
      %v5594 = vrot.slane %v5589, %v5593
      %v5668 = vunpack.c.l.b16 %v5517
      %v5669 = vunpack.c.l.b16 %v5518
      %v5670 = vunpack.c.l.b16 %v5519
      %v5671 = vunpack.c.l.b16 %v5520
      %v5672 = vunpack.c.l.b16 %v5521
      %v5673 = vunpack.c.l.b16 %v5522
      %v5674 = vunpack.c.l.b16 %v5523
      %v5675 = vunpack.c.l.b16 %v5524
      %v5676 = vunpack.c.l.b16 %v5525
      %v5677 = vunpack.c.l.b16 %v5526
      %v5678 = vunpack.c.l.b16 %v5527
      %v5679 = vunpack.c.l.b16 %v5528
      %v5680 = vunpack.c.l.b16 %v5529
      %v5681 = vunpack.c.l.b16 %v5530
      %v5682 = vunpack.c.l.b16 %v5531
      %v5683 = vunpack.c.l.b16 %v5532
      %v5684 = vunpack.c.l.b16 %v5533
      %v5685 = vunpack.c.l.b16 %v5534
      %v5686 = vunpack.c.l.b16 %v5535
      %v5687 = vunpack.c.l.b16 %v5536
      %v5688 = vunpack.c.l.b16 %v5537
      %v5689 = vunpack.c.l.b16 %v5538
      %v5690 = vunpack.c.l.b16 %v5539
      %v5691 = vunpack.c.l.b16 %v5540
      %v5692 = vunpack.c.l.b16 %v5541
      %v5693 = vunpack.c.l.b16 %v5542
      %v5694 = vunpack.c.l.b16 %v5543
      %v5695 = vunpack.c.l.b16 %v5544
      %v5696 = vunpack.c.l.b16 %v5545
      %v5697 = vunpack.c.l.b16 %v5546
      %v5698 = vunpack.c.l.b16 %v5547
      %v5699 = vunpack.c.l.b16 %v5548
      %v5700 = vunpack.c.l.b16 %v5549
      %v5701 = vunpack.c.l.b16 %v5550
      %v5702 = vunpack.c.l.b16 %v5551
      %v5703 = vunpack.c.l.b16 %v5552
      %v5704 = vunpack.c.l.b16 %v5553
      %v5705 = vunpack.c.l.b16 %v5554
      %v5706 = vunpack.c.l.b16 %v5555
      %v5707 = vunpack.c.l.b16 %v5556
      %v5708 = vunpack.c.l.b16 %v5557
      %v5709 = vunpack.c.l.b16 %v5558
      %v5710 = vunpack.c.l.b16 %v5559
      %v5711 = vunpack.c.l.b16 %v5560
      %v5712 = vunpack.c.l.b16 %v5561
      %v5713 = vunpack.c.l.b16 %v5562
      %v5714 = vunpack.c.l.b16 %v5563
      %v5715 = vunpack.c.l.b16 %v5564
      %v5716 = vunpack.c.l.b16 %v5565
      %v5717 = vunpack.c.l.b16 %v5566
      %v5718 = vunpack.c.l.b16 %v5567
      %v5719 = vunpack.c.l.b16 %v5568
      %v5720 = vunpack.c.l.b16 %v5569
      %v5721 = vunpack.c.l.b16 %v5570
      %v5722 = vunpack.c.l.b16 %v5571
      %v5723 = vunpack.c.l.b16 %v5572
      %v5724 = vunpack.c.l.b16 %v5573
      %v5725 = vunpack.c.l.b16 %v5574
      %v5726 = vunpack.c.l.b16 %v5575
      %v5727 = vunpack.c.l.b16 %v5576
      %v5728 = vunpack.c.l.b16 %v5577
      %v5729 = vunpack.c.l.b16 %v5578
      %v5730 = vunpack.c.l.b16 %v5579
      %v5731 = vunpack.c.l.b16 %v5580
      %v5732 = vunpack.c.l.b16 %v5581
      %v5733 = vunpack.c.l.b16 %v5582
      %v5734 = vunpack.c.l.b16 %v5583
      %v5735 = vunpack.c.l.b16 %v5584
      %v5736 = vunpack.c.l.b16 %v5585
      %v5737 = vunpack.c.l.b16 %v5586
      %v5738 = vunpack.c.l.b16 %v5587
      %v5739 = vunpack.c.l.b16 %v5588
      %v5740 = vpack.c.b16 %v5669, %v5668
      %v5741 = vpack.c.b16 %v5671, %v5670
      %v5742 = vpack.c.b16 %v5673, %v5672
      %v5743 = vpack.c.b16 %v5675, %v5674
      %v5744 = vpack.c.b16 %v5677, %v5676
      %v5745 = vpack.c.b16 %v5679, %v5678
      %v5746 = vpack.c.b16 %v5681, %v5680
      %v5747 = vpack.c.b16 %v5683, %v5682
      %v5748 = vpack.c.b16 %v5685, %v5684
      %v5749 = vpack.c.b16 %v5687, %v5686
      %v5750 = vpack.c.b16 %v5689, %v5688
      %v5751 = vpack.c.b16 %v5691, %v5690
      %v5752 = vpack.c.b16 %v5693, %v5692
      %v5753 = vpack.c.b16 %v5695, %v5694
      %v5754 = vpack.c.b16 %v5697, %v5696
      %v5755 = vpack.c.b16 %v5699, %v5698
      %v5756 = vpack.c.b16 %v5701, %v5700
      %v5757 = vpack.c.b16 %v5703, %v5702
      %v5758 = vpack.c.b16 %v5705, %v5704
      %v5759 = vpack.c.b16 %v5707, %v5706
      %v5760 = vpack.c.b16 %v5709, %v5708
      %v5761 = vpack.c.b16 %v5711, %v5710
      %v5762 = vpack.c.b16 %v5713, %v5712
      %v5763 = vpack.c.b16 %v5715, %v5714
      %v5764 = vpack.c.b16 %v5717, %v5716
      %v5765 = vpack.c.b16 %v5719, %v5718
      %v5766 = vpack.c.b16 %v5721, %v5720
      %v5767 = vpack.c.b16 %v5723, %v5722
      %v5768 = vpack.c.b16 %v5725, %v5724
      %v5769 = vpack.c.b16 %v5727, %v5726
      %v5770 = vpack.c.b16 %v5729, %v5728
      %v5771 = vpack.c.b16 %v5731, %v5730
      %v5772 = vpack.c.b16 %v5733, %v5732
      %v5773 = vpack.c.b16 %v5735, %v5734
      %v5774 = vpack.c.b16 %v5737, %v5736
      %v5775 = vpack.c.b16 %v5739, %v5738
      %v5813 = vsel %vm3630, %v5381, 0
      %v5816 = vsel %vm3630, %v5386, 0
      %v5819 = vsel %vm3630, %v5391, 0
      %v5822 = vsel %vm3630, %v5396, 0
      %v5825 = vsel %vm3630, %v5401, 0
      %v5828 = vsel %vm3630, %v5406, 0
      %v5831 = vsel %vm3630, %v5411, 0
      %v5834 = vsel %vm3630, %v5416, 0
      %v5837 = vsel %vm3630, %v5421, 0
      %v5840 = vsel %vm3630, %v5426, 0
      %v5843 = vsel %vm3630, %v5431, 0
      %v5846 = vsel %vm3630, %v5436, 0
      %v5849 = vsel %vm3630, %v5441, 0
      %v5852 = vsel %vm3630, %v5446, 0
      %v5855 = vsel %vm3630, %v5451, 0
      %v5858 = vsel %vm3630, %v5456, 0
      %v5861 = vsel %vm3630, %v5461, 0
      %v5864 = vsel %vm3630, %v5466, 0
      %v5867 = vsel %vm3630, %v5471, 0
      %v5870 = vsel %vm3630, %v5476, 0
      %v5873 = vsel %vm3630, %v5481, 0
      %v5876 = vsel %vm3630, %v5486, 0
      %v5879 = vsel %vm3630, %v5491, 0
      %v5882 = vsel %vm3630, %v5496, 0
      %v5885 = vsel %vm3630, %v5501, 0
      %v5888 = vsel %vm3630, %v5506, 0
      %v5891 = vsel %vm3630, %v5511, 0
      %v5894 = vsel %vm3630, %v5516, 0
      %5896 = vmatprep.subr.bf16.mxu0 0
      %5897 = vmatpush1.bf16.msra.mxu0 %v5740
      %5898 = vmatprep.subr.bf16.mxu0 0
      %5899 = vmatpush1.bf16.msra.mxu0 %v5741
      %5900 = vmatprep.subr.bf16.mxu0 0
      %5901 = vmatpush1.bf16.msra.mxu0 %v5742
      %5902 = vmatprep.subr.bf16.mxu0 0
      %5903 = vmatpush1.bf16.msra.mxu0 %v5743
      %5904 = vmatprep.subr.bf16.mxu0 0
      %5905 = vmatpush1.bf16.msra.mxu0 %v5744
      %5906 = vmatprep.subr.bf16.mxu0 0
      %5907 = vmatpush1.bf16.msra.mxu0 %v5745
      %5908 = vmatprep.subr.bf16.mxu0 0
      %5909 = vmatpush1.bf16.msra.mxu0 %v5746
      %5910 = vmatprep.subr.bf16.mxu0 0
      %5911 = vmatpush1.bf16.msra.mxu0 %v5747
      %5912 = vmatprep.subr.bf16.mxu0 0
      %5913 = vmatpush1.bf16.msra.mxu0 %v5748
      %5914 = vmatprep.subr.bf16.mxu0 0
      %5915 = vmatpush1.bf16.msra.mxu0 %v5749
      %5916 = vmatprep.subr.bf16.mxu0 0
      %5917 = vmatpush1.bf16.msra.mxu0 %v5750
      %5918 = vmatprep.subr.bf16.mxu0 0
      %5919 = vmatpush1.bf16.msra.mxu0 %v5751
      %5920 = vmatprep.subr.bf16.mxu0 0
      %5921 = vmatpush1.bf16.msra.mxu0 %v5752
      %5922 = vmatprep.subr.bf16.mxu0 0
      %5923 = vmatpush1.bf16.msra.mxu0 %v5753
      %5924 = vmatprep.subr.bf16.mxu0 0
      %5925 = vmatpush1.bf16.msra.mxu0 %v5754
      %5926 = vmatprep.subr.bf16.mxu0 0
      %5927 = vmatpush1.bf16.msra.mxu0 %v5755
      %5928 = vmatprep.mubr.bf16.mxu0 %v5378
      %5929 = vmatmul.mubr.bf16.gmra.mrb[0].mxu0 %v5377
      %v5930 = vpop.f32.mrb[0].mxu0
      %v5931 = vadd.f32 %v5594, %v5930
      %v5932 = vpop.f32.mrb[0].mxu0
      %v5933 = vpop.f32.mrb[0].mxu0
      %v5934 = vadd.f32 %v5594, %v5933
      %v5935 = vpop.f32.mrb[0].mxu0
      %5936 = vmatprep.mubr.bf16.mxu0 %v5383
      %5937 = vmatmul.mubr.bf16.gmra.mrb[0].mxu0 %v5382
      %v5938 = vpop.f32.mrb[0].mxu0
      %v5939 = vadd.f32 %v5594, %v5938
      %v5940 = vpop.f32.mrb[0].mxu0
      %v5941 = vpop.f32.mrb[0].mxu0
      %v5942 = vadd.f32 %v5594, %v5941
      %v5943 = vpop.f32.mrb[0].mxu0
      %5944 = vmatprep.mubr.bf16.mxu0 %v5388
      %5945 = vmatmul.mubr.bf16.gmra.mrb[0].mxu0 %v5387
      %v5946 = vpop.f32.mrb[0].mxu0
      %v5947 = vadd.f32 %v5594, %v5946
      %v5948 = vpop.f32.mrb[0].mxu0
      %v5949 = vpop.f32.mrb[0].mxu0
      %v5950 = vadd.f32 %v5594, %v5949
      %v5951 = vpop.f32.mrb[0].mxu0
      %5952 = vmatprep.mubr.bf16.mxu0 %v5393
      %5953 = vmatmul.mubr.bf16.gmra.mrb[0].mxu0 %v5392
      %v5954 = vpop.f32.mrb[0].mxu0
      %v5955 = vadd.f32 %v5594, %v5954
      %v5956 = vpop.f32.mrb[0].mxu0
      %v5957 = vpop.f32.mrb[0].mxu0
      %v5958 = vadd.f32 %v5594, %v5957
      %v5959 = vpop.f32.mrb[0].mxu0
      %5960 = vmatprep.mubr.bf16.mxu0 %v5398
      %5961 = vmatmul.mubr.bf16.gmra.mrb[0].mxu0 %v5397
      %v5962 = vpop.f32.mrb[0].mxu0
      %v5963 = vadd.f32 %v5594, %v5962
      %v5964 = vpop.f32.mrb[0].mxu0
      %v5965 = vpop.f32.mrb[0].mxu0
      %v5966 = vadd.f32 %v5594, %v5965
      %v5967 = vpop.f32.mrb[0].mxu0
      %5968 = vmatprep.mubr.bf16.mxu0 %v5403
      %5969 = vmatmul.mubr.bf16.gmra.mrb[0].mxu0 %v5402
      %v5970 = vpop.f32.mrb[0].mxu0
      %v5971 = vadd.f32 %v5594, %v5970
      %v5972 = vpop.f32.mrb[0].mxu0
      %v5973 = vpop.f32.mrb[0].mxu0
      %v5974 = vadd.f32 %v5594, %v5973
      %v5975 = vpop.f32.mrb[0].mxu0
      %5976 = vmatprep.mubr.bf16.mxu0 %v5408
      %5977 = vmatmul.mubr.bf16.gmra.mrb[0].mxu0 %v5407
      %v5978 = vpop.f32.mrb[0].mxu0
      %v5979 = vadd.f32 %v5594, %v5978
      %v5980 = vpop.f32.mrb[0].mxu0
      %v5981 = vpop.f32.mrb[0].mxu0
      %v5982 = vadd.f32 %v5594, %v5981
      %v5983 = vpop.f32.mrb[0].mxu0
      %5984 = vmatprep.mubr.bf16.mxu0 %v5413
      %5985 = vmatmul.mubr.bf16.gmra.mrb[0].mxu0 %v5412
      %v5986 = vpop.f32.mrb[0].mxu0
      %v5987 = vadd.f32 %v5594, %v5986
      %v5988 = vpop.f32.mrb[0].mxu0
      %v5989 = vpop.f32.mrb[0].mxu0
      %v5990 = vadd.f32 %v5594, %v5989
      %v5991 = vpop.f32.mrb[0].mxu0
      %5992 = vmatprep.mubr.bf16.mxu0 %v5418
      %5993 = vmatmul.mubr.bf16.gmra.mrb[0].mxu0 %v5417
      %v5994 = vpop.f32.mrb[0].mxu0
      %v5995 = vadd.f32 %v5594, %v5994
      %v5996 = vpop.f32.mrb[0].mxu0
      %v5997 = vpop.f32.mrb[0].mxu0
      %v5998 = vadd.f32 %v5594, %v5997
      %v5999 = vpop.f32.mrb[0].mxu0
      %6000 = vmatprep.mubr.bf16.mxu0 %v5423
      %6001 = vmatmul.mubr.bf16.gmra.mrb[0].mxu0 %v5422
      %v6002 = vpop.f32.mrb[0].mxu0
      %v6003 = vadd.f32 %v5594, %v6002
      %v6004 = vpop.f32.mrb[0].mxu0
      %v6005 = vpop.f32.mrb[0].mxu0
      %v6006 = vadd.f32 %v5594, %v6005
      %v6007 = vpop.f32.mrb[0].mxu0
      %6008 = vmatprep.mubr.bf16.mxu0 %v5428
      %6009 = vmatmul.mubr.bf16.gmra.mrb[0].mxu0 %v5427
      %v6010 = vpop.f32.mrb[0].mxu0
      %v6011 = vadd.f32 %v5594, %v6010
      %v6012 = vpop.f32.mrb[0].mxu0
      %v6013 = vpop.f32.mrb[0].mxu0
      %v6014 = vadd.f32 %v5594, %v6013
      %v6015 = vpop.f32.mrb[0].mxu0
      %6016 = vmatprep.mubr.bf16.mxu0 %v5433
      %6017 = vmatmul.mubr.bf16.gmra.mrb[0].mxu0 %v5432
      %v6018 = vpop.f32.mrb[0].mxu0
      %v6019 = vadd.f32 %v5594, %v6018
      %v6020 = vpop.f32.mrb[0].mxu0
      %v6021 = vpop.f32.mrb[0].mxu0
      %v6022 = vadd.f32 %v5594, %v6021
      %v6023 = vpop.f32.mrb[0].mxu0
      %6024 = vmatprep.mubr.bf16.mxu0 %v5438
      %6025 = vmatmul.mubr.bf16.gmra.mrb[0].mxu0 %v5437
      %v6026 = vpop.f32.mrb[0].mxu0
      %v6027 = vadd.f32 %v5594, %v6026
      %v6028 = vpop.f32.mrb[0].mxu0
      %v6029 = vpop.f32.mrb[0].mxu0
      %v6030 = vadd.f32 %v5594, %v6029
      %v6031 = vpop.f32.mrb[0].mxu0
      %6032 = vmatprep.mubr.bf16.mxu0 %v5443
      %6033 = vmatmul.mubr.bf16.gmra.mrb[0].mxu0 %v5442
      %v6034 = vpop.f32.mrb[0].mxu0
      %v6035 = vadd.f32 %v5594, %v6034
      %v6036 = vpop.f32.mrb[0].mxu0
      %v6037 = vpop.f32.mrb[0].mxu0
      %v6038 = vadd.f32 %v5594, %v6037
      %v6039 = vpop.f32.mrb[0].mxu0
      %6040 = vmatprep.mubr.bf16.mxu0 %v5448
      %6041 = vmatmul.mubr.bf16.gmra.mrb[0].mxu0 %v5447
      %v6042 = vpop.f32.mrb[0].mxu0
      %v6043 = vadd.f32 %v5594, %v6042
      %v6044 = vpop.f32.mrb[0].mxu0
      %v6045 = vpop.f32.mrb[0].mxu0
      %v6046 = vadd.f32 %v5594, %v6045
      %v6047 = vpop.f32.mrb[0].mxu0
      %6048 = vmatprep.mubr.bf16.mxu0 %v5453
      %6049 = vmatmul.mubr.bf16.gmra.mrb[0].mxu0 %v5452
      %v6050 = vpop.f32.mrb[0].mxu0
      %v6051 = vadd.f32 %v5594, %v6050
      %v6052 = vpop.f32.mrb[0].mxu0
      %v6053 = vpop.f32.mrb[0].mxu0
      %v6054 = vadd.f32 %v5594, %v6053
      %v6055 = vpop.f32.mrb[0].mxu0
      %6056 = vmatprep.mubr.bf16.mxu0 %v5458
      %6057 = vmatmul.mubr.bf16.gmra.mrb[0].mxu0 %v5457
      %v6058 = vpop.f32.mrb[0].mxu0
      %v6059 = vadd.f32 %v5594, %v6058
      %v6060 = vpop.f32.mrb[0].mxu0
      %v6061 = vpop.f32.mrb[0].mxu0
      %v6062 = vadd.f32 %v5594, %v6061
      %v6063 = vpop.f32.mrb[0].mxu0
      %6064 = vmatprep.mubr.bf16.mxu0 %v5463
      %6065 = vmatmul.mubr.bf16.gmra.mrb[0].mxu0 %v5462
      %v6066 = vpop.f32.mrb[0].mxu0
      %v6067 = vadd.f32 %v5594, %v6066
      %v6068 = vpop.f32.mrb[0].mxu0
      %v6069 = vpop.f32.mrb[0].mxu0
      %v6070 = vadd.f32 %v5594, %v6069
      %v6071 = vpop.f32.mrb[0].mxu0
      %6072 = vmatprep.mubr.bf16.mxu0 %v5468
      %6073 = vmatmul.mubr.bf16.gmra.mrb[0].mxu0 %v5467
      %v6074 = vpop.f32.mrb[0].mxu0
      %v6075 = vadd.f32 %v5594, %v6074
      %v6076 = vpop.f32.mrb[0].mxu0
      %v6077 = vpop.f32.mrb[0].mxu0
      %v6078 = vadd.f32 %v5594, %v6077
      %v6079 = vpop.f32.mrb[0].mxu0
      %6080 = vmatprep.mubr.bf16.mxu0 %v5473
      %6081 = vmatmul.mubr.bf16.gmra.mrb[0].mxu0 %v5472
      %v6082 = vpop.f32.mrb[0].mxu0
      %v6083 = vadd.f32 %v5594, %v6082
      %v6084 = vpop.f32.mrb[0].mxu0
      %v6085 = vpop.f32.mrb[0].mxu0
      %v6086 = vadd.f32 %v5594, %v6085
      %v6087 = vpop.f32.mrb[0].mxu0
      %6088 = vmatprep.mubr.bf16.mxu0 %v5478
      %6089 = vmatmul.mubr.bf16.gmra.mrb[0].mxu0 %v5477
      %v6090 = vpop.f32.mrb[0].mxu0
      %v6091 = vadd.f32 %v5594, %v6090
      %v6092 = vpop.f32.mrb[0].mxu0
      %v6093 = vpop.f32.mrb[0].mxu0
      %v6094 = vadd.f32 %v5594, %v6093
      %v6095 = vpop.f32.mrb[0].mxu0
      %6096 = vmatprep.mubr.bf16.mxu0 %v5483
      %6097 = vmatmul.mubr.bf16.gmra.mrb[0].mxu0 %v5482
      %v6098 = vpop.f32.mrb[0].mxu0
      %v6099 = vadd.f32 %v5594, %v6098
      %v6100 = vpop.f32.mrb[0].mxu0
      %v6101 = vpop.f32.mrb[0].mxu0
      %v6102 = vadd.f32 %v5594, %v6101
      %v6103 = vpop.f32.mrb[0].mxu0
      %6104 = vmatprep.mubr.bf16.mxu0 %v5488
      %6105 = vmatmul.mubr.bf16.gmra.mrb[0].mxu0 %v5487
      %v6106 = vpop.f32.mrb[0].mxu0
      %v6107 = vadd.f32 %v5594, %v6106
      %v6108 = vpop.f32.mrb[0].mxu0
      %v6109 = vpop.f32.mrb[0].mxu0
      %v6110 = vadd.f32 %v5594, %v6109
      %v6111 = vpop.f32.mrb[0].mxu0
      %6112 = vmatprep.mubr.bf16.mxu0 %v5493
      %6113 = vmatmul.mubr.bf16.gmra.mrb[0].mxu0 %v5492
      %v6114 = vpop.f32.mrb[0].mxu0
      %v6115 = vadd.f32 %v5594, %v6114
      %v6116 = vpop.f32.mrb[0].mxu0
      %v6117 = vpop.f32.mrb[0].mxu0
      %v6118 = vadd.f32 %v5594, %v6117
      %v6119 = vpop.f32.mrb[0].mxu0
      %6120 = vmatprep.mubr.bf16.mxu0 %v5498
      %6121 = vmatmul.mubr.bf16.gmra.mrb[0].mxu0 %v5497
      %v6122 = vpop.f32.mrb[0].mxu0
      %v6123 = vadd.f32 %v5594, %v6122
      %v6124 = vpop.f32.mrb[0].mxu0
      %v6125 = vpop.f32.mrb[0].mxu0
      %v6126 = vadd.f32 %v5594, %v6125
      %v6127 = vpop.f32.mrb[0].mxu0
      %6128 = vmatprep.mubr.bf16.mxu0 %v5503
      %6129 = vmatmul.mubr.bf16.gmra.mrb[0].mxu0 %v5502
      %v6130 = vpop.f32.mrb[0].mxu0
      %v6131 = vadd.f32 %v5594, %v6130
      %v6132 = vpop.f32.mrb[0].mxu0
      %v6133 = vpop.f32.mrb[0].mxu0
      %v6134 = vadd.f32 %v5594, %v6133
      %v6135 = vpop.f32.mrb[0].mxu0
      %6136 = vmatprep.mubr.bf16.mxu0 %v5508
      %6137 = vmatmul.mubr.bf16.gmra.mrb[0].mxu0 %v5507
      %v6138 = vpop.f32.mrb[0].mxu0
      %v6139 = vadd.f32 %v5594, %v6138
      %v6140 = vpop.f32.mrb[0].mxu0
      %v6141 = vpop.f32.mrb[0].mxu0
      %v6142 = vadd.f32 %v5594, %v6141
      %v6143 = vpop.f32.mrb[0].mxu0
      %6144 = vmatprep.mubr.bf16.mxu0 %v5513
      %6145 = vmatmul.mubr.bf16.gmra.mrb[0].mxu0 %v5512
      %v6146 = vpop.f32.mrb[0].mxu0
      %v6147 = vadd.f32 %v5594, %v6146
      %v6148 = vpop.f32.mrb[0].mxu0
      %v6149 = vpop.f32.mrb[0].mxu0
      %v6150 = vadd.f32 %v5594, %v6149
      %v6151 = vpop.f32.mrb[0].mxu0
      %6152 = vdwg.mxu0
      %6153 = vmatprep.subr.bf16.mxu0 0
      %6154 = vmatpush1.bf16.msra.mxu0 %v5756
      %6155 = vmatprep.subr.bf16.mxu0 0
      %6156 = vmatpush1.bf16.msra.mxu0 %v5757
      %6157 = vmatprep.subr.bf16.mxu0 0
      %6158 = vmatpush1.bf16.msra.mxu0 %v5758
      %6159 = vmatprep.subr.bf16.mxu0 0
      %6160 = vmatpush1.bf16.msra.mxu0 %v5759
      %6161 = vmatprep.subr.bf16.mxu0 0
      %6162 = vmatpush1.bf16.msra.mxu0 %v5760
      %6163 = vmatprep.subr.bf16.mxu0 0
      %6164 = vmatpush1.bf16.msra.mxu0 %v5761
      %6165 = vmatprep.subr.bf16.mxu0 0
      %6166 = vmatpush1.bf16.msra.mxu0 %v5762
      %6167 = vmatprep.subr.bf16.mxu0 0
      %6168 = vmatpush1.bf16.msra.mxu0 %v5763
      %6169 = vmatprep.subr.bf16.mxu0 0
      %6170 = vmatpush1.bf16.msra.mxu0 %v5764
      %6171 = vmatprep.subr.bf16.mxu0 0
      %6172 = vmatpush1.bf16.msra.mxu0 %v5765
      %6173 = vmatprep.subr.bf16.mxu0 0
      %6174 = vmatpush1.bf16.msra.mxu0 %v5766
      %6175 = vmatprep.subr.bf16.mxu0 0
      %6176 = vmatpush1.bf16.msra.mxu0 %v5767
      %6177 = vmatprep.subr.bf16.mxu0 0
      %6178 = vmatpush1.bf16.msra.mxu0 %v5768
      %6179 = vmatprep.subr.bf16.mxu0 0
      %6180 = vmatpush1.bf16.msra.mxu0 %v5769
      %6181 = vmatprep.subr.bf16.mxu0 0
      %6182 = vmatpush1.bf16.msra.mxu0 %v5770
      %6183 = vmatprep.subr.bf16.mxu0 0
      %6184 = vmatpush1.bf16.msra.mxu0 %v5771
      %6185 = vmatprep.mubr.bf16.mxu0 %v5380
      %6186 = vmatmul.mubr.bf16.gmra.mrb[0].mxu0 %v5379
      %v6187 = vpop.f32.mrb[0].mxu0
      %v6188 = vadd.f32 %v5931, %v6187
      %v6189 = vpop.f32.mrb[0].mxu0
      %v6190 = vpop.f32.mrb[0].mxu0
      %v6191 = vadd.f32 %v5934, %v6190
      %v6192 = vpop.f32.mrb[0].mxu0
      %6193 = vmatprep.mubr.bf16.mxu0 %v5385
      %6194 = vmatmul.mubr.bf16.gmra.mrb[0].mxu0 %v5384
      %v6195 = vpop.f32.mrb[0].mxu0
      %v6196 = vadd.f32 %v5939, %v6195
      %v6197 = vpop.f32.mrb[0].mxu0
      %v6198 = vpop.f32.mrb[0].mxu0
      %v6199 = vadd.f32 %v5942, %v6198
      %v6200 = vpop.f32.mrb[0].mxu0
      %6201 = vmatprep.mubr.bf16.mxu0 %v5390
      %6202 = vmatmul.mubr.bf16.gmra.mrb[0].mxu0 %v5389
      %v6203 = vpop.f32.mrb[0].mxu0
      %v6204 = vadd.f32 %v5947, %v6203
      %v6205 = vpop.f32.mrb[0].mxu0
      %v6206 = vpop.f32.mrb[0].mxu0
      %v6207 = vadd.f32 %v5950, %v6206
      %v6208 = vpop.f32.mrb[0].mxu0
      %6209 = vmatprep.mubr.bf16.mxu0 %v5395
      %6210 = vmatmul.mubr.bf16.gmra.mrb[0].mxu0 %v5394
      %v6211 = vpop.f32.mrb[0].mxu0
      %v6212 = vadd.f32 %v5955, %v6211
      %v6213 = vpop.f32.mrb[0].mxu0
      %v6214 = vpop.f32.mrb[0].mxu0
      %v6215 = vadd.f32 %v5958, %v6214
      %v6216 = vpop.f32.mrb[0].mxu0
      %6217 = vmatprep.mubr.bf16.mxu0 %v5400
      %6218 = vmatmul.mubr.bf16.gmra.mrb[0].mxu0 %v5399
      %v6219 = vpop.f32.mrb[0].mxu0
      %v6220 = vadd.f32 %v5963, %v6219
      %v6221 = vpop.f32.mrb[0].mxu0
      %v6222 = vpop.f32.mrb[0].mxu0
      %v6223 = vadd.f32 %v5966, %v6222
      %v6224 = vpop.f32.mrb[0].mxu0
      %6225 = vmatprep.mubr.bf16.mxu0 %v5405
      %6226 = vmatmul.mubr.bf16.gmra.mrb[0].mxu0 %v5404
      %v6227 = vpop.f32.mrb[0].mxu0
      %v6228 = vadd.f32 %v5971, %v6227
      %v6229 = vpop.f32.mrb[0].mxu0
      %v6230 = vpop.f32.mrb[0].mxu0
      %v6231 = vadd.f32 %v5974, %v6230
      %v6232 = vpop.f32.mrb[0].mxu0
      %6233 = vmatprep.mubr.bf16.mxu0 %v5410
      %6234 = vmatmul.mubr.bf16.gmra.mrb[0].mxu0 %v5409
      %v6235 = vpop.f32.mrb[0].mxu0
      %v6236 = vadd.f32 %v5979, %v6235
      %v6237 = vpop.f32.mrb[0].mxu0
      %v6238 = vpop.f32.mrb[0].mxu0
      %v6239 = vadd.f32 %v5982, %v6238
      %v6240 = vpop.f32.mrb[0].mxu0
      %6241 = vmatprep.mubr.bf16.mxu0 %v5415
      %6242 = vmatmul.mubr.bf16.gmra.mrb[0].mxu0 %v5414
      %v6243 = vpop.f32.mrb[0].mxu0
      %v6244 = vadd.f32 %v5987, %v6243
      %v6245 = vpop.f32.mrb[0].mxu0
      %v6246 = vpop.f32.mrb[0].mxu0
      %v6247 = vadd.f32 %v5990, %v6246
      %v6248 = vpop.f32.mrb[0].mxu0
      %6249 = vmatprep.mubr.bf16.mxu0 %v5420
      %6250 = vmatmul.mubr.bf16.gmra.mrb[0].mxu0 %v5419
      %v6251 = vpop.f32.mrb[0].mxu0
      %v6252 = vadd.f32 %v5995, %v6251
      %v6253 = vpop.f32.mrb[0].mxu0
      %v6254 = vpop.f32.mrb[0].mxu0
      %v6255 = vadd.f32 %v5998, %v6254
      %v6256 = vpop.f32.mrb[0].mxu0
      %6257 = vmatprep.mubr.bf16.mxu0 %v5425
      %6258 = vmatmul.mubr.bf16.gmra.mrb[0].mxu0 %v5424
      %v6259 = vpop.f32.mrb[0].mxu0
      %v6260 = vadd.f32 %v6003, %v6259
      %v6261 = vpop.f32.mrb[0].mxu0
      %v6262 = vpop.f32.mrb[0].mxu0
      %v6263 = vadd.f32 %v6006, %v6262
      %v6264 = vpop.f32.mrb[0].mxu0
      %6265 = vmatprep.mubr.bf16.mxu0 %v5430
      %6266 = vmatmul.mubr.bf16.gmra.mrb[0].mxu0 %v5429
      %v6267 = vpop.f32.mrb[0].mxu0
      %v6268 = vadd.f32 %v6011, %v6267
      %v6269 = vpop.f32.mrb[0].mxu0
      %v6270 = vpop.f32.mrb[0].mxu0
      %v6271 = vadd.f32 %v6014, %v6270
      %v6272 = vpop.f32.mrb[0].mxu0
      %6273 = vmatprep.mubr.bf16.mxu0 %v5435
      %6274 = vmatmul.mubr.bf16.gmra.mrb[0].mxu0 %v5434
      %v6275 = vpop.f32.mrb[0].mxu0
      %v6276 = vadd.f32 %v6019, %v6275
      %v6277 = vpop.f32.mrb[0].mxu0
      %v6278 = vpop.f32.mrb[0].mxu0
      %v6279 = vadd.f32 %v6022, %v6278
      %v6280 = vpop.f32.mrb[0].mxu0
      %6281 = vmatprep.mubr.bf16.mxu0 %v5440
      %6282 = vmatmul.mubr.bf16.gmra.mrb[0].mxu0 %v5439
      %v6283 = vpop.f32.mrb[0].mxu0
      %v6284 = vadd.f32 %v6027, %v6283
      %v6285 = vpop.f32.mrb[0].mxu0
      %v6286 = vpop.f32.mrb[0].mxu0
      %v6287 = vadd.f32 %v6030, %v6286
      %v6288 = vpop.f32.mrb[0].mxu0
      %6289 = vmatprep.mubr.bf16.mxu0 %v5445
      %6290 = vmatmul.mubr.bf16.gmra.mrb[0].mxu0 %v5444
      %v6291 = vpop.f32.mrb[0].mxu0
      %v6292 = vadd.f32 %v6035, %v6291
      %v6293 = vpop.f32.mrb[0].mxu0
      %v6294 = vpop.f32.mrb[0].mxu0
      %v6295 = vadd.f32 %v6038, %v6294
      %v6296 = vpop.f32.mrb[0].mxu0
      %6297 = vmatprep.mubr.bf16.mxu0 %v5450
      %6298 = vmatmul.mubr.bf16.gmra.mrb[0].mxu0 %v5449
      %v6299 = vpop.f32.mrb[0].mxu0
      %v6300 = vadd.f32 %v6043, %v6299
      %v6301 = vpop.f32.mrb[0].mxu0
      %v6302 = vpop.f32.mrb[0].mxu0
      %v6303 = vadd.f32 %v6046, %v6302
      %v6304 = vpop.f32.mrb[0].mxu0
      %6305 = vmatprep.mubr.bf16.mxu0 %v5455
      %6306 = vmatmul.mubr.bf16.gmra.mrb[0].mxu0 %v5454
      %v6307 = vpop.f32.mrb[0].mxu0
      %v6308 = vadd.f32 %v6051, %v6307
      %v6309 = vpop.f32.mrb[0].mxu0
      %v6310 = vpop.f32.mrb[0].mxu0
      %v6311 = vadd.f32 %v6054, %v6310
      %v6312 = vpop.f32.mrb[0].mxu0
      %6313 = vmatprep.mubr.bf16.mxu0 %v5460
      %6314 = vmatmul.mubr.bf16.gmra.mrb[0].mxu0 %v5459
      %v6315 = vpop.f32.mrb[0].mxu0
      %v6316 = vadd.f32 %v6059, %v6315
      %v6317 = vpop.f32.mrb[0].mxu0
      %v6318 = vpop.f32.mrb[0].mxu0
      %v6319 = vadd.f32 %v6062, %v6318
      %v6320 = vpop.f32.mrb[0].mxu0
      %6321 = vmatprep.mubr.bf16.mxu0 %v5465
      %6322 = vmatmul.mubr.bf16.gmra.mrb[0].mxu0 %v5464
      %v6323 = vpop.f32.mrb[0].mxu0
      %v6324 = vadd.f32 %v6067, %v6323
      %v6325 = vpop.f32.mrb[0].mxu0
      %v6326 = vpop.f32.mrb[0].mxu0
      %v6327 = vadd.f32 %v6070, %v6326
      %v6328 = vpop.f32.mrb[0].mxu0
      %6329 = vmatprep.mubr.bf16.mxu0 %v5470
      %6330 = vmatmul.mubr.bf16.gmra.mrb[0].mxu0 %v5469
      %v6331 = vpop.f32.mrb[0].mxu0
      %v6332 = vadd.f32 %v6075, %v6331
      %v6333 = vpop.f32.mrb[0].mxu0
      %v6334 = vpop.f32.mrb[0].mxu0
      %v6335 = vadd.f32 %v6078, %v6334
      %v6336 = vpop.f32.mrb[0].mxu0
      %6337 = vmatprep.mubr.bf16.mxu0 %v5475
      %6338 = vmatmul.mubr.bf16.gmra.mrb[0].mxu0 %v5474
      %v6339 = vpop.f32.mrb[0].mxu0
      %v6340 = vadd.f32 %v6083, %v6339
      %v6341 = vpop.f32.mrb[0].mxu0
      %v6342 = vpop.f32.mrb[0].mxu0
      %v6343 = vadd.f32 %v6086, %v6342
      %v6344 = vpop.f32.mrb[0].mxu0
      %6345 = vmatprep.mubr.bf16.mxu0 %v5480
      %6346 = vmatmul.mubr.bf16.gmra.mrb[0].mxu0 %v5479
      %v6347 = vpop.f32.mrb[0].mxu0
      %v6348 = vadd.f32 %v6091, %v6347
      %v6349 = vpop.f32.mrb[0].mxu0
      %v6350 = vpop.f32.mrb[0].mxu0
      %v6351 = vadd.f32 %v6094, %v6350
      %v6352 = vpop.f32.mrb[0].mxu0
      %6353 = vmatprep.mubr.bf16.mxu0 %v5485
      %6354 = vmatmul.mubr.bf16.gmra.mrb[0].mxu0 %v5484
      %v6355 = vpop.f32.mrb[0].mxu0
      %v6356 = vadd.f32 %v6099, %v6355
      %v6357 = vpop.f32.mrb[0].mxu0
      %v6358 = vpop.f32.mrb[0].mxu0
      %v6359 = vadd.f32 %v6102, %v6358
      %v6360 = vpop.f32.mrb[0].mxu0
      %6361 = vmatprep.mubr.bf16.mxu0 %v5490
      %6362 = vmatmul.mubr.bf16.gmra.mrb[0].mxu0 %v5489
      %v6363 = vpop.f32.mrb[0].mxu0
      %v6364 = vadd.f32 %v6107, %v6363
      %v6365 = vpop.f32.mrb[0].mxu0
      %v6366 = vpop.f32.mrb[0].mxu0
      %v6367 = vadd.f32 %v6110, %v6366
      %v6368 = vpop.f32.mrb[0].mxu0
      %6369 = vmatprep.mubr.bf16.mxu0 %v5495
      %6370 = vmatmul.mubr.bf16.gmra.mrb[0].mxu0 %v5494
      %v6371 = vpop.f32.mrb[0].mxu0
      %v6372 = vadd.f32 %v6115, %v6371
      %v6373 = vpop.f32.mrb[0].mxu0
      %v6374 = vpop.f32.mrb[0].mxu0
      %v6375 = vadd.f32 %v6118, %v6374
      %v6376 = vpop.f32.mrb[0].mxu0
      %6377 = vmatprep.mubr.bf16.mxu0 %v5500
      %6378 = vmatmul.mubr.bf16.gmra.mrb[0].mxu0 %v5499
      %v6379 = vpop.f32.mrb[0].mxu0
      %v6380 = vadd.f32 %v6123, %v6379
      %v6381 = vpop.f32.mrb[0].mxu0
      %v6382 = vpop.f32.mrb[0].mxu0
      %v6383 = vadd.f32 %v6126, %v6382
      %v6384 = vpop.f32.mrb[0].mxu0
      %6385 = vmatprep.mubr.bf16.mxu0 %v5505
      %6386 = vmatmul.mubr.bf16.gmra.mrb[0].mxu0 %v5504
      %v6387 = vpop.f32.mrb[0].mxu0
      %v6388 = vadd.f32 %v6131, %v6387
      %v6389 = vpop.f32.mrb[0].mxu0
      %v6390 = vpop.f32.mrb[0].mxu0
      %v6391 = vadd.f32 %v6134, %v6390
      %v6392 = vpop.f32.mrb[0].mxu0
      %6393 = vmatprep.mubr.bf16.mxu0 %v5510
      %6394 = vmatmul.mubr.bf16.gmra.mrb[0].mxu0 %v5509
      %v6395 = vpop.f32.mrb[0].mxu0
      %v6396 = vadd.f32 %v6139, %v6395
      %v6397 = vpop.f32.mrb[0].mxu0
      %v6398 = vpop.f32.mrb[0].mxu0
      %v6399 = vadd.f32 %v6142, %v6398
      %v6400 = vpop.f32.mrb[0].mxu0
      %6401 = vmatprep.mubr.bf16.mxu0 %v5515
      %6402 = vmatmul.mubr.bf16.gmra.mrb[0].mxu0 %v5514
      %v6403 = vpop.f32.mrb[0].mxu0
      %v6404 = vadd.f32 %v6147, %v6403
      %v6405 = vpop.f32.mrb[0].mxu0
      %v6406 = vpop.f32.mrb[0].mxu0
      %v6407 = vadd.f32 %v6150, %v6406
      %v6408 = vpop.f32.mrb[0].mxu0
      %6409 = vdwg.mxu0
      %6410 = vmatprep.subr.bf16.mxu0 0
      %6411 = vmatpush1.bf16.msra.mxu0 %v5772
      %6412 = vmatprep.subr.bf16.mxu0 0
      %6413 = vmatpush1.bf16.msra.mxu0 %v5773
      %6414 = vmatprep.subr.bf16.mxu0 0
      %6415 = vmatpush1.bf16.msra.mxu0 %v5774
      %6416 = vmatprep.subr.bf16.mxu0 0
      %6417 = vmatpush1.bf16.msra.mxu0 %v5775
      %6418 = vmatprep.subr.bf16.mxu0 0
      %6419 = vmatpush1.bf16.msra.mxu0 0
      %6420 = vmatprep.subr.bf16.mxu0 0
      %6421 = vmatpush1.bf16.msra.mxu0 0
      %6422 = vmatprep.subr.bf16.mxu0 0
      %6423 = vmatpush1.bf16.msra.mxu0 0
      %6424 = vmatprep.subr.bf16.mxu0 0
      %6425 = vmatpush1.bf16.msra.mxu0 0
      %6426 = vmatprep.subr.bf16.mxu0 0
      %6427 = vmatpush1.bf16.msra.mxu0 0
      %6428 = vmatprep.subr.bf16.mxu0 0
      %6429 = vmatpush1.bf16.msra.mxu0 0
      %6430 = vmatprep.subr.bf16.mxu0 0
      %6431 = vmatpush1.bf16.msra.mxu0 0
      %6432 = vmatprep.subr.bf16.mxu0 0
      %6433 = vmatpush1.bf16.msra.mxu0 0
      %6434 = vmatprep.subr.bf16.mxu0 0
      %6435 = vmatpush1.bf16.msra.mxu0 0
      %6436 = vmatprep.subr.bf16.mxu0 0
      %6437 = vmatpush1.bf16.msra.mxu0 0
      %6438 = vmatprep.subr.bf16.mxu0 0
      %6439 = vmatpush1.bf16.msra.mxu0 0
      %6440 = vmatprep.subr.bf16.mxu0 0
      %6441 = vmatpush1.bf16.msra.mxu0 0
      %6442 = vmatprep.mubr.bf16.mxu0 0
      %6443 = vmatmul.mubr.bf16.gmra.mrb[0].mxu0 %v5813
      %v6444 = vpop.f32.mrb[0].mxu0
      %v6445 = vadd.f32 %v6188, %v6444
      %v6446 = vpop.f32.mrb[0].mxu0
      %v6447 = vpop.f32.mrb[0].mxu0
      %v6448 = vadd.f32 %v6191, %v6447
      %v6449 = vpop.f32.mrb[0].mxu0
      %6450 = vmatprep.mubr.bf16.mxu0 0
      %6451 = vmatmul.mubr.bf16.gmra.mrb[0].mxu0 %v5816
      %v6452 = vpop.f32.mrb[0].mxu0
      %v6453 = vadd.f32 %v6196, %v6452
      %v6454 = vpop.f32.mrb[0].mxu0
      %v6455 = vpop.f32.mrb[0].mxu0
      %v6456 = vadd.f32 %v6199, %v6455
      %v6457 = vpop.f32.mrb[0].mxu0
      %6458 = vmatprep.mubr.bf16.mxu0 0
      %6459 = vmatmul.mubr.bf16.gmra.mrb[0].mxu0 %v5819
      %v6460 = vpop.f32.mrb[0].mxu0
      %v6461 = vadd.f32 %v6204, %v6460
      %v6462 = vpop.f32.mrb[0].mxu0
      %v6463 = vpop.f32.mrb[0].mxu0
      %v6464 = vadd.f32 %v6207, %v6463
      %v6465 = vpop.f32.mrb[0].mxu0
      %6466 = vmatprep.mubr.bf16.mxu0 0
      %6467 = vmatmul.mubr.bf16.gmra.mrb[0].mxu0 %v5822
      %v6468 = vpop.f32.mrb[0].mxu0
      %v6469 = vadd.f32 %v6212, %v6468
      %v6470 = vpop.f32.mrb[0].mxu0
      %v6471 = vpop.f32.mrb[0].mxu0
      %v6472 = vadd.f32 %v6215, %v6471
      %v6473 = vpop.f32.mrb[0].mxu0
      %6474 = vmatprep.mubr.bf16.mxu0 0
      %6475 = vmatmul.mubr.bf16.gmra.mrb[0].mxu0 %v5825
      %v6476 = vpop.f32.mrb[0].mxu0
      %v6477 = vadd.f32 %v6220, %v6476
      %v6478 = vpop.f32.mrb[0].mxu0
      %v6479 = vpop.f32.mrb[0].mxu0
      %v6480 = vadd.f32 %v6223, %v6479
      %v6481 = vpop.f32.mrb[0].mxu0
      %6482 = vmatprep.mubr.bf16.mxu0 0
      %6483 = vmatmul.mubr.bf16.gmra.mrb[0].mxu0 %v5828
      %v6484 = vpop.f32.mrb[0].mxu0
      %v6485 = vadd.f32 %v6228, %v6484
      %v6486 = vpop.f32.mrb[0].mxu0
      %v6487 = vpop.f32.mrb[0].mxu0
      %v6488 = vadd.f32 %v6231, %v6487
      %v6489 = vpop.f32.mrb[0].mxu0
      %6490 = vmatprep.mubr.bf16.mxu0 0
      %6491 = vmatmul.mubr.bf16.gmra.mrb[0].mxu0 %v5831
      %v6492 = vpop.f32.mrb[0].mxu0
      %v6493 = vadd.f32 %v6236, %v6492
      %v6494 = vpop.f32.mrb[0].mxu0
      %v6495 = vpop.f32.mrb[0].mxu0
      %v6496 = vadd.f32 %v6239, %v6495
      %v6497 = vpop.f32.mrb[0].mxu0
      %6498 = vmatprep.mubr.bf16.mxu0 0
      %6499 = vmatmul.mubr.bf16.gmra.mrb[0].mxu0 %v5834
      %v6500 = vpop.f32.mrb[0].mxu0
      %v6501 = vadd.f32 %v6244, %v6500
      %v6502 = vpop.f32.mrb[0].mxu0
      %v6503 = vpop.f32.mrb[0].mxu0
      %v6504 = vadd.f32 %v6247, %v6503
      %v6505 = vpop.f32.mrb[0].mxu0
      %6506 = vmatprep.mubr.bf16.mxu0 0
      %6507 = vmatmul.mubr.bf16.gmra.mrb[0].mxu0 %v5837
      %v6508 = vpop.f32.mrb[0].mxu0
      %v6509 = vadd.f32 %v6252, %v6508
      %v6510 = vpop.f32.mrb[0].mxu0
      %v6511 = vpop.f32.mrb[0].mxu0
      %v6512 = vadd.f32 %v6255, %v6511
      %v6513 = vpop.f32.mrb[0].mxu0
      %6514 = vmatprep.mubr.bf16.mxu0 0
      %6515 = vmatmul.mubr.bf16.gmra.mrb[0].mxu0 %v5840
      %v6516 = vpop.f32.mrb[0].mxu0
      %v6517 = vadd.f32 %v6260, %v6516
      %v6518 = vpop.f32.mrb[0].mxu0
      %v6519 = vpop.f32.mrb[0].mxu0
      %v6520 = vadd.f32 %v6263, %v6519
      %v6521 = vpop.f32.mrb[0].mxu0
      %6522 = vmatprep.mubr.bf16.mxu0 0
      %6523 = vmatmul.mubr.bf16.gmra.mrb[0].mxu0 %v5843
      %v6524 = vpop.f32.mrb[0].mxu0
      %v6525 = vadd.f32 %v6268, %v6524
      %v6526 = vpop.f32.mrb[0].mxu0
      %v6527 = vpop.f32.mrb[0].mxu0
      %v6528 = vadd.f32 %v6271, %v6527
      %v6529 = vpop.f32.mrb[0].mxu0
      %6530 = vmatprep.mubr.bf16.mxu0 0
      %6531 = vmatmul.mubr.bf16.gmra.mrb[0].mxu0 %v5846
      %v6532 = vpop.f32.mrb[0].mxu0
      %v6533 = vadd.f32 %v6276, %v6532
      %v6534 = vpop.f32.mrb[0].mxu0
      %v6535 = vpop.f32.mrb[0].mxu0
      %v6536 = vadd.f32 %v6279, %v6535
      %v6537 = vpop.f32.mrb[0].mxu0
      %6538 = vmatprep.mubr.bf16.mxu0 0
      %6539 = vmatmul.mubr.bf16.gmra.mrb[0].mxu0 %v5849
      %v6540 = vpop.f32.mrb[0].mxu0
      %v6541 = vadd.f32 %v6284, %v6540
      %v6542 = vpop.f32.mrb[0].mxu0
      %v6543 = vpop.f32.mrb[0].mxu0
      %v6544 = vadd.f32 %v6287, %v6543
      %v6545 = vpop.f32.mrb[0].mxu0
      %6546 = vmatprep.mubr.bf16.mxu0 0
      %6547 = vmatmul.mubr.bf16.gmra.mrb[0].mxu0 %v5852
      %v6548 = vpop.f32.mrb[0].mxu0
      %v6549 = vadd.f32 %v6292, %v6548
      %v6550 = vpop.f32.mrb[0].mxu0
      %v6551 = vpop.f32.mrb[0].mxu0
      %v6552 = vadd.f32 %v6295, %v6551
      %v6553 = vpop.f32.mrb[0].mxu0
      %6554 = vmatprep.mubr.bf16.mxu0 0
      %6555 = vmatmul.mubr.bf16.gmra.mrb[0].mxu0 %v5855
      %v6556 = vpop.f32.mrb[0].mxu0
      %v6557 = vadd.f32 %v6300, %v6556
      %v6558 = vpop.f32.mrb[0].mxu0
      %v6559 = vpop.f32.mrb[0].mxu0
      %v6560 = vadd.f32 %v6303, %v6559
      %v6561 = vpop.f32.mrb[0].mxu0
      %6562 = vmatprep.mubr.bf16.mxu0 0
      %6563 = vmatmul.mubr.bf16.gmra.mrb[0].mxu0 %v5858
      %v6564 = vpop.f32.mrb[0].mxu0
      %v6565 = vadd.f32 %v6308, %v6564
      %v6566 = vpop.f32.mrb[0].mxu0
      %v6567 = vpop.f32.mrb[0].mxu0
      %v6568 = vadd.f32 %v6311, %v6567
      %v6569 = vpop.f32.mrb[0].mxu0
      %6570 = vmatprep.mubr.bf16.mxu0 0
      %6571 = vmatmul.mubr.bf16.gmra.mrb[0].mxu0 %v5861
      %v6572 = vpop.f32.mrb[0].mxu0
      %v6573 = vadd.f32 %v6316, %v6572
      %v6574 = vpop.f32.mrb[0].mxu0
      %v6575 = vpop.f32.mrb[0].mxu0
      %v6576 = vadd.f32 %v6319, %v6575
      %v6577 = vpop.f32.mrb[0].mxu0
      %6578 = vmatprep.mubr.bf16.mxu0 0
      %6579 = vmatmul.mubr.bf16.gmra.mrb[0].mxu0 %v5864
      %v6580 = vpop.f32.mrb[0].mxu0
      %v6581 = vadd.f32 %v6324, %v6580
      %v6582 = vpop.f32.mrb[0].mxu0
      %v6583 = vpop.f32.mrb[0].mxu0
      %v6584 = vadd.f32 %v6327, %v6583
      %v6585 = vpop.f32.mrb[0].mxu0
      %6586 = vmatprep.mubr.bf16.mxu0 0
      %6587 = vmatmul.mubr.bf16.gmra.mrb[0].mxu0 %v5867
      %v6588 = vpop.f32.mrb[0].mxu0
      %v6589 = vadd.f32 %v6332, %v6588
      %v6590 = vpop.f32.mrb[0].mxu0
      %v6591 = vpop.f32.mrb[0].mxu0
      %v6592 = vadd.f32 %v6335, %v6591
      %v6593 = vpop.f32.mrb[0].mxu0
      %6594 = vmatprep.mubr.bf16.mxu0 0
      %6595 = vmatmul.mubr.bf16.gmra.mrb[0].mxu0 %v5870
      %v6596 = vpop.f32.mrb[0].mxu0
      %v6597 = vadd.f32 %v6340, %v6596
      %v6598 = vpop.f32.mrb[0].mxu0
      %v6599 = vpop.f32.mrb[0].mxu0
      %v6600 = vadd.f32 %v6343, %v6599
      %v6601 = vpop.f32.mrb[0].mxu0
      %6602 = vmatprep.mubr.bf16.mxu0 0
      %6603 = vmatmul.mubr.bf16.gmra.mrb[0].mxu0 %v5873
      %v6604 = vpop.f32.mrb[0].mxu0
      %v6605 = vadd.f32 %v6348, %v6604
      %v6606 = vpop.f32.mrb[0].mxu0
      %v6607 = vpop.f32.mrb[0].mxu0
      %v6608 = vadd.f32 %v6351, %v6607
      %v6609 = vpop.f32.mrb[0].mxu0
      %6610 = vmatprep.mubr.bf16.mxu0 0
      %6611 = vmatmul.mubr.bf16.gmra.mrb[0].mxu0 %v5876
      %v6612 = vpop.f32.mrb[0].mxu0
      %v6613 = vadd.f32 %v6356, %v6612
      %v6614 = vpop.f32.mrb[0].mxu0
      %v6615 = vpop.f32.mrb[0].mxu0
      %v6616 = vadd.f32 %v6359, %v6615
      %v6617 = vpop.f32.mrb[0].mxu0
      %6618 = vmatprep.mubr.bf16.mxu0 0
      %6619 = vmatmul.mubr.bf16.gmra.mrb[0].mxu0 %v5879
      %v6620 = vpop.f32.mrb[0].mxu0
      %v6621 = vadd.f32 %v6364, %v6620
      %v6622 = vpop.f32.mrb[0].mxu0
      %v6623 = vpop.f32.mrb[0].mxu0
      %v6624 = vadd.f32 %v6367, %v6623
      %v6625 = vpop.f32.mrb[0].mxu0
      %6626 = vmatprep.mubr.bf16.mxu0 0
      %6627 = vmatmul.mubr.bf16.gmra.mrb[0].mxu0 %v5882
      %v6628 = vpop.f32.mrb[0].mxu0
      %v6629 = vadd.f32 %v6372, %v6628
      %v6630 = vpop.f32.mrb[0].mxu0
      %v6631 = vpop.f32.mrb[0].mxu0
      %v6632 = vadd.f32 %v6375, %v6631
      %v6633 = vpop.f32.mrb[0].mxu0
      %6634 = vmatprep.mubr.bf16.mxu0 0
      %6635 = vmatmul.mubr.bf16.gmra.mrb[0].mxu0 %v5885
      %v6636 = vpop.f32.mrb[0].mxu0
      %v6637 = vadd.f32 %v6380, %v6636
      %v6638 = vpop.f32.mrb[0].mxu0
      %v6639 = vpop.f32.mrb[0].mxu0
      %v6640 = vadd.f32 %v6383, %v6639
      %v6641 = vpop.f32.mrb[0].mxu0
      %6642 = vmatprep.mubr.bf16.mxu0 0
      %6643 = vmatmul.mubr.bf16.gmra.mrb[0].mxu0 %v5888
      %v6644 = vpop.f32.mrb[0].mxu0
      %v6645 = vadd.f32 %v6388, %v6644
      %v6646 = vpop.f32.mrb[0].mxu0
      %v6647 = vpop.f32.mrb[0].mxu0
      %v6648 = vadd.f32 %v6391, %v6647
      %v6649 = vpop.f32.mrb[0].mxu0
      %6650 = vmatprep.mubr.bf16.mxu0 0
      %6651 = vmatmul.mubr.bf16.gmra.mrb[0].mxu0 %v5891
      %v6652 = vpop.f32.mrb[0].mxu0
      %v6653 = vadd.f32 %v6396, %v6652
      %v6654 = vpop.f32.mrb[0].mxu0
      %v6655 = vpop.f32.mrb[0].mxu0
      %v6656 = vadd.f32 %v6399, %v6655
      %v6657 = vpop.f32.mrb[0].mxu0
      %6658 = vmatprep.mubr.bf16.mxu0 0
      %6659 = vmatmul.mubr.bf16.gmra.mrb[0].mxu0 %v5894
      %v6660 = vpop.f32.mrb[0].mxu0
      %v6661 = vadd.f32 %v6404, %v6660
      %v6662 = vpop.f32.mrb[0].mxu0
      %v6663 = vpop.f32.mrb[0].mxu0
      %v6664 = vadd.f32 %v6407, %v6663
      %v6665 = vpop.f32.mrb[0].mxu0
      %6666 = vdwg.mxu0
      %v6667 = vmul.f32 %v6445, 0.2
      %v6668 = vmul.f32 %v6448, 0.2
      %v6669 = vmul.f32 %v6453, 0.2
      %v6670 = vmul.f32 %v6456, 0.2
      %v6671 = vmul.f32 %v6461, 0.2
      %v6672 = vmul.f32 %v6464, 0.2
      %v6673 = vmul.f32 %v6469, 0.2
      %v6674 = vmul.f32 %v6472, 0.2
      %v6675 = vmul.f32 %v6477, 0.2
      %v6676 = vmul.f32 %v6480, 0.2
      %v6677 = vmul.f32 %v6485, 0.2
      %v6678 = vmul.f32 %v6488, 0.2
      %v6679 = vmul.f32 %v6493, 0.2
      %v6680 = vmul.f32 %v6496, 0.2
      %v6681 = vmul.f32 %v6501, 0.2
      %v6682 = vmul.f32 %v6504, 0.2
      %v6683 = vmul.f32 %v6509, 0.2
      %v6684 = vmul.f32 %v6512, 0.2
      %v6685 = vmul.f32 %v6517, 0.2
      %v6686 = vmul.f32 %v6520, 0.2
      %v6687 = vmul.f32 %v6525, 0.2
      %v6688 = vmul.f32 %v6528, 0.2
      %v6689 = vmul.f32 %v6533, 0.2
      %v6690 = vmul.f32 %v6536, 0.2
      %v6691 = vmul.f32 %v6541, 0.2
      %v6692 = vmul.f32 %v6544, 0.2
      %v6693 = vmul.f32 %v6549, 0.2
      %v6694 = vmul.f32 %v6552, 0.2
      %v6695 = vmul.f32 %v6557, 0.2
      %v6696 = vmul.f32 %v6560, 0.2
      %v6697 = vmul.f32 %v6565, 0.2
      %v6698 = vmul.f32 %v6568, 0.2
      %v6699 = vmul.f32 %v6573, 0.2
      %v6700 = vmul.f32 %v6576, 0.2
      %v6701 = vmul.f32 %v6581, 0.2
      %v6702 = vmul.f32 %v6584, 0.2
      %v6703 = vmul.f32 %v6589, 0.2
      %v6704 = vmul.f32 %v6592, 0.2
      %v6705 = vmul.f32 %v6597, 0.2
      %v6706 = vmul.f32 %v6600, 0.2
      %v6707 = vmul.f32 %v6605, 0.2
      %v6708 = vmul.f32 %v6608, 0.2
      %v6709 = vmul.f32 %v6613, 0.2
      %v6710 = vmul.f32 %v6616, 0.2
      %v6711 = vmul.f32 %v6621, 0.2
      %v6712 = vmul.f32 %v6624, 0.2
      %v6713 = vmul.f32 %v6629, 0.2
      %v6714 = vmul.f32 %v6632, 0.2
      %v6715 = vmul.f32 %v6637, 0.2
      %v6716 = vmul.f32 %v6640, 0.2
      %v6717 = vmul.f32 %v6645, 0.2
      %v6718 = vmul.f32 %v6648, 0.2
      %v6719 = vmul.f32 %v6653, 0.2
      %v6720 = vmul.f32 %v6656, 0.2
      %v6721 = vmul.f32 %v6661, 0.2
      %v6722 = vmul.f32 %v6664, 0.2
      %v6723 = vmax.f32 %v6445, %v6667
      %v6724 = vmax.f32 %v6448, %v6668
      %v6725 = vmax.f32 %v6453, %v6669
      %v6726 = vmax.f32 %v6456, %v6670
      %v6727 = vmax.f32 %v6461, %v6671
      %v6728 = vmax.f32 %v6464, %v6672
      %v6729 = vmax.f32 %v6469, %v6673
      %v6730 = vmax.f32 %v6472, %v6674
      %v6731 = vmax.f32 %v6477, %v6675
      %v6732 = vmax.f32 %v6480, %v6676
      %v6733 = vmax.f32 %v6485, %v6677
      %v6734 = vmax.f32 %v6488, %v6678
      %v6735 = vmax.f32 %v6493, %v6679
      %v6736 = vmax.f32 %v6496, %v6680
      %v6737 = vmax.f32 %v6501, %v6681
      %v6738 = vmax.f32 %v6504, %v6682
      %v6739 = vmax.f32 %v6509, %v6683
      %v6740 = vmax.f32 %v6512, %v6684
      %v6741 = vmax.f32 %v6517, %v6685
      %v6742 = vmax.f32 %v6520, %v6686
      %v6743 = vmax.f32 %v6525, %v6687
      %v6744 = vmax.f32 %v6528, %v6688
      %v6745 = vmax.f32 %v6533, %v6689
      %v6746 = vmax.f32 %v6536, %v6690
      %v6747 = vmax.f32 %v6541, %v6691
      %v6748 = vmax.f32 %v6544, %v6692
      %v6749 = vmax.f32 %v6549, %v6693
      %v6750 = vmax.f32 %v6552, %v6694
      %v6751 = vmax.f32 %v6557, %v6695
      %v6752 = vmax.f32 %v6560, %v6696
      %v6753 = vmax.f32 %v6565, %v6697
      %v6754 = vmax.f32 %v6568, %v6698
      %v6755 = vmax.f32 %v6573, %v6699
      %v6756 = vmax.f32 %v6576, %v6700
      %v6757 = vmax.f32 %v6581, %v6701
      %v6758 = vmax.f32 %v6584, %v6702
      %v6759 = vmax.f32 %v6589, %v6703
      %v6760 = vmax.f32 %v6592, %v6704
      %v6761 = vmax.f32 %v6597, %v6705
      %v6762 = vmax.f32 %v6600, %v6706
      %v6763 = vmax.f32 %v6605, %v6707
      %v6764 = vmax.f32 %v6608, %v6708
      %v6765 = vmax.f32 %v6613, %v6709
      %v6766 = vmax.f32 %v6616, %v6710
      %v6767 = vmax.f32 %v6621, %v6711
      %v6768 = vmax.f32 %v6624, %v6712
      %v6769 = vmax.f32 %v6629, %v6713
      %v6770 = vmax.f32 %v6632, %v6714
      %v6771 = vmax.f32 %v6637, %v6715
      %v6772 = vmax.f32 %v6640, %v6716
      %v6773 = vmax.f32 %v6645, %v6717
      %v6774 = vmax.f32 %v6648, %v6718
      %v6775 = vmax.f32 %v6653, %v6719
      %v6776 = vmax.f32 %v6656, %v6720
      %v6777 = vmax.f32 %v6661, %v6721
      %v6778 = vmax.f32 %v6664, %v6722
      %v6779 = vld [vmem:[%s6] sm:$0xff]
      %v6780 = vld [vmem:[%s6 + $0x8] sm:$0xff]
      %v6781 = vld [vmem:[%s6 + $0x10] sm:$0xff]
      %v6782 = vld [vmem:[%s6 + $0x18] sm:$0xff]
      %v6783 = vld [vmem:[%s6 + $0x20] sm:$0xff]
      %v6784 = vld [vmem:[%s6 + $0x28] sm:$0xff]
      %v6785 = vld [vmem:[%s6 + $0x30] sm:$0xff]
      %v6786 = vmul.f32 %v6723, %v6779
      %v6787 = vmul.f32 %v6724, %v6780
      %v6788 = vmul.f32 %v6725, %v6781
      %v6789 = vmul.f32 %v6726, %v6782
      %v6790 = vmul.f32 %v6727, %v6783
      %v6791 = vmul.f32 %v6728, %v6784
      %v6792 = vmul.f32 %v6729, %v6785
      %v6793 = vmul.f32 %v6730, %v6779
      %v6794 = vmul.f32 %v6731, %v6780
      %v6795 = vmul.f32 %v6732, %v6781
      %v6796 = vmul.f32 %v6733, %v6782
      %v6797 = vmul.f32 %v6734, %v6783
      %v6798 = vmul.f32 %v6735, %v6784
      %v6799 = vmul.f32 %v6736, %v6785
      %v6800 = vmul.f32 %v6737, %v6779
      %v6801 = vmul.f32 %v6738, %v6780
      %v6802 = vmul.f32 %v6739, %v6781
      %v6803 = vmul.f32 %v6740, %v6782
      %v6804 = vmul.f32 %v6741, %v6783
      %v6805 = vmul.f32 %v6742, %v6784
      %v6806 = vmul.f32 %v6743, %v6785
      %v6807 = vmul.f32 %v6744, %v6779
      %v6808 = vmul.f32 %v6745, %v6780
      %v6809 = vmul.f32 %v6746, %v6781
      %v6810 = vmul.f32 %v6747, %v6782
      %v6811 = vmul.f32 %v6748, %v6783
      %v6812 = vmul.f32 %v6749, %v6784
      %v6813 = vmul.f32 %v6750, %v6785
      %v6814 = vmul.f32 %v6751, %v6779
      %v6815 = vmul.f32 %v6752, %v6780
      %v6816 = vmul.f32 %v6753, %v6781
      %v6817 = vmul.f32 %v6754, %v6782
      %v6818 = vmul.f32 %v6755, %v6783
      %v6819 = vmul.f32 %v6756, %v6784
      %v6820 = vmul.f32 %v6757, %v6785
      %v6821 = vmul.f32 %v6758, %v6779
      %v6822 = vmul.f32 %v6759, %v6780
      %v6823 = vmul.f32 %v6760, %v6781
      %v6824 = vmul.f32 %v6761, %v6782
      %v6825 = vmul.f32 %v6762, %v6783
      %v6826 = vmul.f32 %v6763, %v6784
      %v6827 = vmul.f32 %v6764, %v6785
      %v6828 = vmul.f32 %v6765, %v6779
      %v6829 = vmul.f32 %v6766, %v6780
      %v6830 = vmul.f32 %v6767, %v6781
      %v6831 = vmul.f32 %v6768, %v6782
      %v6832 = vmul.f32 %v6769, %v6783
      %v6833 = vmul.f32 %v6770, %v6784
      %v6834 = vmul.f32 %v6771, %v6785
      %v6835 = vmul.f32 %v6772, %v6779
      %v6836 = vmul.f32 %v6773, %v6780
      %v6837 = vmul.f32 %v6774, %v6781
      %v6838 = vmul.f32 %v6775, %v6782
      %v6839 = vmul.f32 %v6776, %v6783
      %v6840 = vmul.f32 %v6777, %v6784
      %v6841 = vmul.f32 %v6778, %v6785
      %6842 = vadd.xlane.f32.xlu0 %v6786
      %v6843 = vpop.xlane.xlu0 %6842
      %6844 = vadd.xlane.f32.xlu0 %v6787
      %v6845 = vpop.xlane.xlu0 %6844
      %6846 = vadd.xlane.f32.xlu0 %v6788
      %v6847 = vpop.xlane.xlu0 %6846
      %6848 = vadd.xlane.f32.xlu0 %v6789
      %v6849 = vpop.xlane.xlu0 %6848
      %6850 = vadd.xlane.f32.xlu0 %v6790
      %v6851 = vpop.xlane.xlu0 %6850
      %6852 = vadd.xlane.f32.xlu0 %v6791
      %v6853 = vpop.xlane.xlu0 %6852
      %6854 = vadd.xlane.f32.xlu0 %v6792
      %v6855 = vpop.xlane.xlu0 %6854
      %6856 = vadd.xlane.f32.xlu0 %v6793
      %v6857 = vpop.xlane.xlu0 %6856
      %6858 = vadd.xlane.f32.xlu0 %v6794
      %v6859 = vpop.xlane.xlu0 %6858
      %6860 = vadd.xlane.f32.xlu0 %v6795
      %v6861 = vpop.xlane.xlu0 %6860
      %6862 = vadd.xlane.f32.xlu0 %v6796
      %v6863 = vpop.xlane.xlu0 %6862
      %6864 = vadd.xlane.f32.xlu0 %v6797
      %v6865 = vpop.xlane.xlu0 %6864
      %6866 = vadd.xlane.f32.xlu0 %v6798
      %v6867 = vpop.xlane.xlu0 %6866
      %6868 = vadd.xlane.f32.xlu0 %v6799
      %v6869 = vpop.xlane.xlu0 %6868
      %6870 = vadd.xlane.f32.xlu0 %v6800
      %v6871 = vpop.xlane.xlu0 %6870
      %6872 = vadd.xlane.f32.xlu0 %v6801
      %v6873 = vpop.xlane.xlu0 %6872
      %6874 = vadd.xlane.f32.xlu0 %v6802
      %v6875 = vpop.xlane.xlu0 %6874
      %6876 = vadd.xlane.f32.xlu0 %v6803
      %v6877 = vpop.xlane.xlu0 %6876
      %6878 = vadd.xlane.f32.xlu0 %v6804
      %v6879 = vpop.xlane.xlu0 %6878
      %6880 = vadd.xlane.f32.xlu0 %v6805
      %v6881 = vpop.xlane.xlu0 %6880
      %6882 = vadd.xlane.f32.xlu0 %v6806
      %v6883 = vpop.xlane.xlu0 %6882
      %6884 = vadd.xlane.f32.xlu0 %v6807
      %v6885 = vpop.xlane.xlu0 %6884
      %6886 = vadd.xlane.f32.xlu0 %v6808
      %v6887 = vpop.xlane.xlu0 %6886
      %6888 = vadd.xlane.f32.xlu0 %v6809
      %v6889 = vpop.xlane.xlu0 %6888
      %6890 = vadd.xlane.f32.xlu0 %v6810
      %v6891 = vpop.xlane.xlu0 %6890
      %6892 = vadd.xlane.f32.xlu0 %v6811
      %v6893 = vpop.xlane.xlu0 %6892
      %6894 = vadd.xlane.f32.xlu0 %v6812
      %v6895 = vpop.xlane.xlu0 %6894
      %6896 = vadd.xlane.f32.xlu0 %v6813
      %v6897 = vpop.xlane.xlu0 %6896
      %6898 = vadd.xlane.f32.xlu0 %v6814
      %v6899 = vpop.xlane.xlu0 %6898
      %6900 = vadd.xlane.f32.xlu0 %v6815
      %v6901 = vpop.xlane.xlu0 %6900
      %6902 = vadd.xlane.f32.xlu0 %v6816
      %v6903 = vpop.xlane.xlu0 %6902
      %6904 = vadd.xlane.f32.xlu0 %v6817
      %v6905 = vpop.xlane.xlu0 %6904
      %6906 = vadd.xlane.f32.xlu0 %v6818
      %v6907 = vpop.xlane.xlu0 %6906
      %6908 = vadd.xlane.f32.xlu0 %v6819
      %v6909 = vpop.xlane.xlu0 %6908
      %6910 = vadd.xlane.f32.xlu0 %v6820
      %v6911 = vpop.xlane.xlu0 %6910
      %6912 = vadd.xlane.f32.xlu0 %v6821
      %v6913 = vpop.xlane.xlu0 %6912
      %6914 = vadd.xlane.f32.xlu0 %v6822
      %v6915 = vpop.xlane.xlu0 %6914
      %6916 = vadd.xlane.f32.xlu0 %v6823
      %v6917 = vpop.xlane.xlu0 %6916
      %6918 = vadd.xlane.f32.xlu0 %v6824
      %v6919 = vpop.xlane.xlu0 %6918
      %6920 = vadd.xlane.f32.xlu0 %v6825
      %v6921 = vpop.xlane.xlu0 %6920
      %6922 = vadd.xlane.f32.xlu0 %v6826
      %v6923 = vpop.xlane.xlu0 %6922
      %6924 = vadd.xlane.f32.xlu0 %v6827
      %v6925 = vpop.xlane.xlu0 %6924
      %6926 = vadd.xlane.f32.xlu0 %v6828
      %v6927 = vpop.xlane.xlu0 %6926
      %6928 = vadd.xlane.f32.xlu0 %v6829
      %v6929 = vpop.xlane.xlu0 %6928
      %6930 = vadd.xlane.f32.xlu0 %v6830
      %v6931 = vpop.xlane.xlu0 %6930
      %6932 = vadd.xlane.f32.xlu0 %v6831
      %v6933 = vpop.xlane.xlu0 %6932
      %6934 = vadd.xlane.f32.xlu0 %v6832
      %v6935 = vpop.xlane.xlu0 %6934
      %6936 = vadd.xlane.f32.xlu0 %v6833
      %v6937 = vpop.xlane.xlu0 %6936
      %6938 = vadd.xlane.f32.xlu0 %v6834
      %v6939 = vpop.xlane.xlu0 %6938
      %6940 = vadd.xlane.f32.xlu0 %v6835
      %v6941 = vpop.xlane.xlu0 %6940
      %6942 = vadd.xlane.f32.xlu0 %v6836
      %v6943 = vpop.xlane.xlu0 %6942
      %6944 = vadd.xlane.f32.xlu0 %v6837
      %v6945 = vpop.xlane.xlu0 %6944
      %6946 = vadd.xlane.f32.xlu0 %v6838
      %v6947 = vpop.xlane.xlu0 %6946
      %6948 = vadd.xlane.f32.xlu0 %v6839
      %v6949 = vpop.xlane.xlu0 %6948
      %6950 = vadd.xlane.f32.xlu0 %v6840
      %v6951 = vpop.xlane.xlu0 %6950
      %6952 = vadd.xlane.f32.xlu0 %v6841
      %v6953 = vpop.xlane.xlu0 %6952
      %v7010 = vlaneseq
      %v7011 = vand.u32 %v7010, 127
      %v7012 = vlaneseq
      %v7013 = vshrl.u32 %v7012, 7
      %v7014 = vsub.s32 %v7011, %v7013
      %v7015 = vrot.slane %v6843, %v7014
      %v7016 = vadd.s32 %v7011, 4294967288
      %v7017 = vlaneseq
      %v7018 = vshrl.u32 %v7017, 7
      %v7019 = vsub.s32 %v7016, %v7018
      %v7020 = vrot.slane %v6845, %v7019
      %vm7021 = vcmask 130112
      %v7022 = vsel %vm7021, %v7020, %v7015
      %v7023 = vadd.s32 %v7011, 4294967280
      %v7024 = vlaneseq
      %v7025 = vshrl.u32 %v7024, 7
      %v7026 = vsub.s32 %v7023, %v7025
      %v7027 = vrot.slane %v6847, %v7026
      %vm7028 = vcmask 195712
      %v7029 = vsel %vm7028, %v7027, %v7022
      %v7030 = vadd.s32 %v7011, 4294967272
      %v7031 = vlaneseq
      %v7032 = vshrl.u32 %v7031, 7
      %v7033 = vsub.s32 %v7030, %v7032
      %v7034 = vrot.slane %v6849, %v7033
      %vm7035 = vcmask 261312
      %v7036 = vsel %vm7035, %v7034, %v7029
      %v7037 = vadd.s32 %v7011, 4294967264
      %v7038 = vlaneseq
      %v7039 = vshrl.u32 %v7038, 7
      %v7040 = vsub.s32 %v7037, %v7039
      %v7041 = vrot.slane %v6851, %v7040
      %vm7042 = vcmask 326912
      %v7043 = vsel %vm7042, %v7041, %v7036
      %v7044 = vadd.s32 %v7011, 4294967256
      %v7045 = vlaneseq
      %v7046 = vshrl.u32 %v7045, 7
      %v7047 = vsub.s32 %v7044, %v7046
      %v7048 = vrot.slane %v6853, %v7047
      %vm7049 = vcmask 392512
      %v7050 = vsel %vm7049, %v7048, %v7043
      %v7051 = vadd.s32 %v7011, 4294967248
      %v7052 = vlaneseq
      %v7053 = vshrl.u32 %v7052, 7
      %v7054 = vsub.s32 %v7051, %v7053
      %v7055 = vrot.slane %v6855, %v7054
      %vm7056 = vcmask 458112
      %v7057 = vsel %vm7056, %v7055, %v7050
      %v7058 = vlaneseq
      %v7059 = vshrl.u32 %v7058, 7
      %v7060 = vsub.s32 %v7011, %v7059
      %v7061 = vrot.slane %v6857, %v7060
      %v7062 = vlaneseq
      %v7063 = vshrl.u32 %v7062, 7
      %v7064 = vsub.s32 %v7016, %v7063
      %v7065 = vrot.slane %v6859, %v7064
      %v7066 = vsel %vm7021, %v7065, %v7061
      %v7067 = vlaneseq
      %v7068 = vshrl.u32 %v7067, 7
      %v7069 = vsub.s32 %v7023, %v7068
      %v7070 = vrot.slane %v6861, %v7069
      %v7071 = vsel %vm7028, %v7070, %v7066
      %v7072 = vlaneseq
      %v7073 = vshrl.u32 %v7072, 7
      %v7074 = vsub.s32 %v7030, %v7073
      %v7075 = vrot.slane %v6863, %v7074
      %v7076 = vsel %vm7035, %v7075, %v7071
      %v7077 = vlaneseq
      %v7078 = vshrl.u32 %v7077, 7
      %v7079 = vsub.s32 %v7037, %v7078
      %v7080 = vrot.slane %v6865, %v7079
      %v7081 = vsel %vm7042, %v7080, %v7076
      %v7082 = vlaneseq
      %v7083 = vshrl.u32 %v7082, 7
      %v7084 = vsub.s32 %v7044, %v7083
      %v7085 = vrot.slane %v6867, %v7084
      %v7086 = vsel %vm7049, %v7085, %v7081
      %v7087 = vlaneseq
      %v7088 = vshrl.u32 %v7087, 7
      %v7089 = vsub.s32 %v7051, %v7088
      %v7090 = vrot.slane %v6869, %v7089
      %v7091 = vsel %vm7056, %v7090, %v7086
      %v7092 = vlaneseq
      %v7093 = vshrl.u32 %v7092, 7
      %v7094 = vsub.s32 %v7011, %v7093
      %v7095 = vrot.slane %v6871, %v7094
      %v7096 = vlaneseq
      %v7097 = vshrl.u32 %v7096, 7
      %v7098 = vsub.s32 %v7016, %v7097
      %v7099 = vrot.slane %v6873, %v7098
      %v7100 = vsel %vm7021, %v7099, %v7095
      %v7101 = vlaneseq
      %v7102 = vshrl.u32 %v7101, 7
      %v7103 = vsub.s32 %v7023, %v7102
      %v7104 = vrot.slane %v6875, %v7103
      %v7105 = vsel %vm7028, %v7104, %v7100
      %v7106 = vlaneseq
      %v7107 = vshrl.u32 %v7106, 7
      %v7108 = vsub.s32 %v7030, %v7107
      %v7109 = vrot.slane %v6877, %v7108
      %v7110 = vsel %vm7035, %v7109, %v7105
      %v7111 = vlaneseq
      %v7112 = vshrl.u32 %v7111, 7
      %v7113 = vsub.s32 %v7037, %v7112
      %v7114 = vrot.slane %v6879, %v7113
      %v7115 = vsel %vm7042, %v7114, %v7110
      %v7116 = vlaneseq
      %v7117 = vshrl.u32 %v7116, 7
      %v7118 = vsub.s32 %v7044, %v7117
      %v7119 = vrot.slane %v6881, %v7118
      %v7120 = vsel %vm7049, %v7119, %v7115
      %v7121 = vlaneseq
      %v7122 = vshrl.u32 %v7121, 7
      %v7123 = vsub.s32 %v7051, %v7122
      %v7124 = vrot.slane %v6883, %v7123
      %v7125 = vsel %vm7056, %v7124, %v7120
      %v7126 = vlaneseq
      %v7127 = vshrl.u32 %v7126, 7
      %v7128 = vsub.s32 %v7011, %v7127
      %v7129 = vrot.slane %v6885, %v7128
      %v7130 = vlaneseq
      %v7131 = vshrl.u32 %v7130, 7
      %v7132 = vsub.s32 %v7016, %v7131
      %v7133 = vrot.slane %v6887, %v7132
      %v7134 = vsel %vm7021, %v7133, %v7129
      %v7135 = vlaneseq
      %v7136 = vshrl.u32 %v7135, 7
      %v7137 = vsub.s32 %v7023, %v7136
      %v7138 = vrot.slane %v6889, %v7137
      %v7139 = vsel %vm7028, %v7138, %v7134
      %v7140 = vlaneseq
      %v7141 = vshrl.u32 %v7140, 7
      %v7142 = vsub.s32 %v7030, %v7141
      %v7143 = vrot.slane %v6891, %v7142
      %v7144 = vsel %vm7035, %v7143, %v7139
      %v7145 = vlaneseq
      %v7146 = vshrl.u32 %v7145, 7
      %v7147 = vsub.s32 %v7037, %v7146
      %v7148 = vrot.slane %v6893, %v7147
      %v7149 = vsel %vm7042, %v7148, %v7144
      %v7150 = vlaneseq
      %v7151 = vshrl.u32 %v7150, 7
      %v7152 = vsub.s32 %v7044, %v7151
      %v7153 = vrot.slane %v6895, %v7152
      %v7154 = vsel %vm7049, %v7153, %v7149
      %v7155 = vlaneseq
      %v7156 = vshrl.u32 %v7155, 7
      %v7157 = vsub.s32 %v7051, %v7156
      %v7158 = vrot.slane %v6897, %v7157
      %v7159 = vsel %vm7056, %v7158, %v7154
      %v7160 = vlaneseq
      %v7161 = vshrl.u32 %v7160, 7
      %v7162 = vsub.s32 %v7011, %v7161
      %v7163 = vrot.slane %v6899, %v7162
      %v7164 = vlaneseq
      %v7165 = vshrl.u32 %v7164, 7
      %v7166 = vsub.s32 %v7016, %v7165
      %v7167 = vrot.slane %v6901, %v7166
      %v7168 = vsel %vm7021, %v7167, %v7163
      %v7169 = vlaneseq
      %v7170 = vshrl.u32 %v7169, 7
      %v7171 = vsub.s32 %v7023, %v7170
      %v7172 = vrot.slane %v6903, %v7171
      %v7173 = vsel %vm7028, %v7172, %v7168
      %v7174 = vlaneseq
      %v7175 = vshrl.u32 %v7174, 7
      %v7176 = vsub.s32 %v7030, %v7175
      %v7177 = vrot.slane %v6905, %v7176
      %v7178 = vsel %vm7035, %v7177, %v7173
      %v7179 = vlaneseq
      %v7180 = vshrl.u32 %v7179, 7
      %v7181 = vsub.s32 %v7037, %v7180
      %v7182 = vrot.slane %v6907, %v7181
      %v7183 = vsel %vm7042, %v7182, %v7178
      %v7184 = vlaneseq
      %v7185 = vshrl.u32 %v7184, 7
      %v7186 = vsub.s32 %v7044, %v7185
      %v7187 = vrot.slane %v6909, %v7186
      %v7188 = vsel %vm7049, %v7187, %v7183
      %v7189 = vlaneseq
      %v7190 = vshrl.u32 %v7189, 7
      %v7191 = vsub.s32 %v7051, %v7190
      %v7192 = vrot.slane %v6911, %v7191
      %v7193 = vsel %vm7056, %v7192, %v7188
      %v7194 = vlaneseq
      %v7195 = vshrl.u32 %v7194, 7
      %v7196 = vsub.s32 %v7011, %v7195
      %v7197 = vrot.slane %v6913, %v7196
      %v7198 = vlaneseq
      %v7199 = vshrl.u32 %v7198, 7
      %v7200 = vsub.s32 %v7016, %v7199
      %v7201 = vrot.slane %v6915, %v7200
      %v7202 = vsel %vm7021, %v7201, %v7197
      %v7203 = vlaneseq
      %v7204 = vshrl.u32 %v7203, 7
      %v7205 = vsub.s32 %v7023, %v7204
      %v7206 = vrot.slane %v6917, %v7205
      %v7207 = vsel %vm7028, %v7206, %v7202
      %v7208 = vlaneseq
      %v7209 = vshrl.u32 %v7208, 7
      %v7210 = vsub.s32 %v7030, %v7209
      %v7211 = vrot.slane %v6919, %v7210
      %v7212 = vsel %vm7035, %v7211, %v7207
      %v7213 = vlaneseq
      %v7214 = vshrl.u32 %v7213, 7
      %v7215 = vsub.s32 %v7037, %v7214
      %v7216 = vrot.slane %v6921, %v7215
      %v7217 = vsel %vm7042, %v7216, %v7212
      %v7218 = vlaneseq
      %v7219 = vshrl.u32 %v7218, 7
      %v7220 = vsub.s32 %v7044, %v7219
      %v7221 = vrot.slane %v6923, %v7220
      %v7222 = vsel %vm7049, %v7221, %v7217
      %v7223 = vlaneseq
      %v7224 = vshrl.u32 %v7223, 7
      %v7225 = vsub.s32 %v7051, %v7224
      %v7226 = vrot.slane %v6925, %v7225
      %v7227 = vsel %vm7056, %v7226, %v7222
      %v7228 = vlaneseq
      %v7229 = vshrl.u32 %v7228, 7
      %v7230 = vsub.s32 %v7011, %v7229
      %v7231 = vrot.slane %v6927, %v7230
      %v7232 = vlaneseq
      %v7233 = vshrl.u32 %v7232, 7
      %v7234 = vsub.s32 %v7016, %v7233
      %v7235 = vrot.slane %v6929, %v7234
      %v7236 = vsel %vm7021, %v7235, %v7231
      %v7237 = vlaneseq
      %v7238 = vshrl.u32 %v7237, 7
      %v7239 = vsub.s32 %v7023, %v7238
      %v7240 = vrot.slane %v6931, %v7239
      %v7241 = vsel %vm7028, %v7240, %v7236
      %v7242 = vlaneseq
      %v7243 = vshrl.u32 %v7242, 7
      %v7244 = vsub.s32 %v7030, %v7243
      %v7245 = vrot.slane %v6933, %v7244
      %v7246 = vsel %vm7035, %v7245, %v7241
      %v7247 = vlaneseq
      %v7248 = vshrl.u32 %v7247, 7
      %v7249 = vsub.s32 %v7037, %v7248
      %v7250 = vrot.slane %v6935, %v7249
      %v7251 = vsel %vm7042, %v7250, %v7246
      %v7252 = vlaneseq
      %v7253 = vshrl.u32 %v7252, 7
      %v7254 = vsub.s32 %v7044, %v7253
      %v7255 = vrot.slane %v6937, %v7254
      %v7256 = vsel %vm7049, %v7255, %v7251
      %v7257 = vlaneseq
      %v7258 = vshrl.u32 %v7257, 7
      %v7259 = vsub.s32 %v7051, %v7258
      %v7260 = vrot.slane %v6939, %v7259
      %v7261 = vsel %vm7056, %v7260, %v7256
      %v7262 = vlaneseq
      %v7263 = vshrl.u32 %v7262, 7
      %v7264 = vsub.s32 %v7011, %v7263
      %v7265 = vrot.slane %v6941, %v7264
      %v7266 = vlaneseq
      %v7267 = vshrl.u32 %v7266, 7
      %v7268 = vsub.s32 %v7016, %v7267
      %v7269 = vrot.slane %v6943, %v7268
      %v7270 = vsel %vm7021, %v7269, %v7265
      %v7271 = vlaneseq
      %v7272 = vshrl.u32 %v7271, 7
      %v7273 = vsub.s32 %v7023, %v7272
      %v7274 = vrot.slane %v6945, %v7273
      %v7275 = vsel %vm7028, %v7274, %v7270
      %v7276 = vlaneseq
      %v7277 = vshrl.u32 %v7276, 7
      %v7278 = vsub.s32 %v7030, %v7277
      %v7279 = vrot.slane %v6947, %v7278
      %v7280 = vsel %vm7035, %v7279, %v7275
      %v7281 = vlaneseq
      %v7282 = vshrl.u32 %v7281, 7
      %v7283 = vsub.s32 %v7037, %v7282
      %v7284 = vrot.slane %v6949, %v7283
      %v7285 = vsel %vm7042, %v7284, %v7280
      %v7286 = vlaneseq
      %v7287 = vshrl.u32 %v7286, 7
      %v7288 = vsub.s32 %v7044, %v7287
      %v7289 = vrot.slane %v6951, %v7288
      %v7290 = vsel %vm7049, %v7289, %v7285
      %v7291 = vlaneseq
      %v7292 = vshrl.u32 %v7291, 7
      %v7293 = vsub.s32 %v7051, %v7292
      %v7294 = vrot.slane %v6953, %v7293
      %v7295 = vsel %vm7056, %v7294, %v7290
      %vm7296 = vcmask 1041409
      %v7297 = vsel %vm7296, %v7091, %v7057
      %vm7298 = vcmask 1042434
      %v7299 = vsel %vm7298, %v7125, %v7297
      %vm7300 = vcmask 1043459
      %v7301 = vsel %vm7300, %v7159, %v7299
      %vm7302 = vcmask 1044484
      %v7303 = vsel %vm7302, %v7193, %v7301
      %vm7304 = vcmask 1045509
      %v7305 = vsel %vm7304, %v7227, %v7303
      %vm7306 = vcmask 1046534
      %v7307 = vsel %vm7306, %v7261, %v7305
      %vm7308 = vcmask 1047559
      %v7309 = vsel %vm7308, %v7295, %v7307
      %vm7311 = vcmask 457728
      %v7312 = vsel %vm7311, %v7309, 0.0
      %7313 = vadd.xlane.f32.xlu0 %v7312
      %v7314 = vpop.xlane.xlu0 %7313
      %s7315 = sld [smem:[#allocation4]]
      %v7316 = vstv %s7315
      %v7317 = vadd.f32 %v7314, %v7316
      %v7318 = vand.u32 2147483647, %v7317
      %v7319 = vsub.f32 0.0, %v7318
      %v7320 = vmul.f32 %v7319, 1.442695
      %v7321 = vpow.pop %v7320
      %v7322 = vadd.f32 %v7321, 1.0
      %v7323 = vrcp.pop %v7322
      %v7324 = vmul.f32 1.0, %v7323
      %vm7325 = vcmp.ge.f32.partialorder %v7317, 0.0
      %v7326 = vsub.f32 1.0, %v7324
      %v7327 = vsel %vm7325, %v7324, %v7326
      %vm7328 = vcmask 7168
      %7329 = vst.msk [vmem:[%s309] sm:$0xff] %vm7328, %v7327
      %p7330 = scmp.lt.s32.totalorder %s20, 1
      %s7331 = scalar_select %p7330, %s20, 1
      %s7332 = smul.addr %s7331, 8
      %s7333 = scalar_lea.vmem %s8, %s7332
      // Predicated region
      $region53: #{discriminator_forward.1} parent=51 // pred_check
        %p7334 = pneg %p211
      $region54: #{discriminator_forward.1} parent=51 // pred_check_branch
        %7336 = sbr.rel (%p7334) target = $region56
      $region55: #{discriminator_forward.1} parent=51 // pred_region
        _
      $region56: #{discriminator_forward.1} parent=51 // pred_fallthru
        _
    $region52: #{discriminator_forward.1} parent=5 // pred_fallthru
      _
    %p7337 = scmp.le.s32.totalorder 2, %s15
    // Predicated region
    $region57: #{discriminator_forward.1} parent=5 // pred_check
      %p7338 = pneg %p7337
    $region58: #{discriminator_forward.1} parent=5 // pred_check_branch
      %7340 = sbr.rel (%p7338) target = $region60
    $region59: #{discriminator_forward.1} parent=5 // pred_region
      %s7341 = ssub.s32 %s15, 2
      // Predicated region
      $region61: #{discriminator_forward.1} parent=59 // pred_check
        %p7342 = pneg %p217
      $region62: #{discriminator_forward.1} parent=59 // pred_check_branch
        %7344 = sbr.rel (%p7342) target = $region64
      $region63: #{discriminator_forward.1} parent=59 // pred_region
        %p7345 = scmp.lt.s32.totalorder %s21, 1
        %s7346 = scalar_select %p7345, %s21, 1
        %s7347 = smul.addr %s7346, 8
        %s7348 = scalar_lea.vmem %s8, %s7347
      $region64: #{discriminator_forward.1} parent=59 // pred_fallthru
        _
    $region60: #{discriminator_forward.1} parent=5 // pred_fallthru
      _
  $region6: #{discriminator_forward.1} parent=0 // loop_footer
    %s19 = sadd.s32 1, %s15
  $region7: #{discriminator_forward.1} parent=0 // loop_footer_branch
    %14 = sbr.rel target = $region3
  $region8: #{discriminator_forward.1} parent=0 // loop_exit
    _

</llo_original>
